<compile_context>
chip_gen: v7x
topology: tpu7x:2x2x1
jax: 0.10.0
libtpu: 0.0.40
codegen_flags: <defaults>
</compile_context>

<pallas_src>
import functools

import jax
import jax.numpy as jnp
from jax.experimental import pallas as pl
from jax.experimental.pallas import tpu as pltpu


FILTER = 256
NUM_X_FREQ = 6
NUM_D_FREQ = 3
IN_X = 2 * NUM_X_FREQ * 3 + 3    # 39
IN_D = 2 * NUM_D_FREQ * 3 + 3    # 21
PACK = 128                       # lane-dense packed input width (x | d | zeros)
OUT_W = 128                      # lane-dense output slab width


def _nerf_kernel(
    xd_ref,
    w1, b1, w2, b2, w3, b3, w4, b4, w5, b5,
    w6a, w6b, b6, w7, b7, w8, b8,
    w9s, b9s,
    w10a, w10b, b10,
    w11, b11,
    out_ref,
):
    # Packed input slab: cols 0:39 = x, cols 39:60 = d, rest zero.
    xd = xd_ref[...].astype(jnp.bfloat16)

    def dense(h_bf16, w, b):
        # bf16 x bf16 matmul on the MXU, f32 accumulation, f32 bias add.
        return jnp.dot(h_bf16, w[...], preferred_element_type=jnp.float32) + b[...]

    def relu_bf(v_f32):
        # ReLU in f32 (VPU), then narrow to bf16 for the next matmul.
        return jnp.maximum(v_f32, 0.0).astype(jnp.bfloat16)

    out = relu_bf(dense(xd, w1, b1))       # layer_1 (w1 row-padded to 128)
    out = relu_bf(dense(out, w2, b2))
    out = relu_bf(dense(out, w3, b3))
    out = relu_bf(dense(out, w4, b4))
    out = relu_bf(dense(out, w5, b5))

    # layer_6 on cat([out, x]) == out @ W6a + x @ W6b + b6  (W6b row-padded)
    out = relu_bf(dense(out, w6a, b6)
                  + jnp.dot(xd, w6b[...], preferred_element_type=jnp.float32))
    out = relu_bf(dense(out, w7, b7))
    out = relu_bf(dense(out, w8, b8))

    # Fused layer_9 + sigma head: w9s = [w9 | wsigma | 0], shape (256, 384).
    h9 = dense(out, w9s, b9s)                                # (tm, 384) f32
    sigma = h9[:, FILTER:FILTER + 1]                         # (tm, 1) f32, no activation
    out9 = h9[:, :FILTER].astype(jnp.bfloat16)               # layer_9 output, no activation

    # layer_10 on cat([out9, d]) == out9 @ W10a + d @ W10b + b10 (W10b row-padded)
    out10 = relu_bf(dense(out9, w10a, b10)
                    + jnp.dot(xd, w10b[...], preferred_element_type=jnp.float32))

    # layer_11 padded to 128 lanes; sigmoid in f32.
    rgb_full = jax.nn.sigmoid(dense(out10, w11, b11))        # (tm, 128) f32, lanes 0:3 = rgb

    # Single lane-dense output slab: lanes 0:3 = rgb, lanes 3: = sigma (broadcast).
    lane = jax.lax.broadcasted_iota(jnp.int32, rgb_full.shape, 1)
    slab = jnp.where(lane < 3, rgb_full, sigma)
    out_ref[...] = slab.astype(out_ref.dtype)


def init_params(key, filter_size=FILTER):
    """Deterministic parameter init (PyTorch-Linear-like uniform scaling).

    Weights are returned already transposed to (in, out); biases as (1, out).
    """
    dims = [
        ("1", IN_X, filter_size),
        ("2", filter_size, filter_size),
        ("3", filter_size, filter_size),
        ("4", filter_size, filter_size),
        ("5", filter_size, filter_size),
        ("6", filter_size + IN_X, filter_size),
        ("7", filter_size, filter_size),
        ("8", filter_size, filter_size),
        ("sigma", filter_size, 1),
        ("9", filter_size, filter_size),
        ("10", filter_size + IN_D, 128),
        ("11", 128, 3),
    ]
    params = {}
    for name, fan_in, fan_out in dims:
        key, kw, kb = jax.random.split(key, 3)
        bound = 1.0 / jnp.sqrt(jnp.float32(fan_in))
        params[f"w{name}"] = jax.random.uniform(
            kw, (fan_in, fan_out), jnp.float32, -bound, bound)
        params[f"b{name}"] = jax.random.uniform(
            kb, (1, fan_out), jnp.float32, -bound, bound)
    return params


@functools.partial(jax.jit, static_argnames=("tm",))
def nerf_forward(x, d, params, *, tm=512):
    assert tm % 8 == 0
    N = x.shape[0]
    n_pad = pl.cdiv(N, tm) * tm
    bf16 = jnp.bfloat16
    f32 = jnp.float32

    # --- pack x | d into one lane-dense (n_pad, 128) slab ------------------
    xd = jnp.zeros((n_pad, PACK), f32)
    xd = xd.at[:N, :IN_X].set(x)
    xd = xd.at[:N, IN_X:IN_X + IN_D].set(d)

    # --- weight prep: split concat-layers, row-pad skip weights, fuse sigma,
    #     lane-pad the final head, cast everything to bf16 -------------------
    def pad_rows(w, rows, row_off):
        return jnp.zeros((rows, w.shape[1]), w.dtype).at[
            row_off:row_off + w.shape[0]].set(w)

    w1p = pad_rows(params["w1"], PACK, 0).astype(bf16)                 # x rows 0:39
    w6a = params["w6"][:FILTER].astype(bf16)                           # (256, 256)
    w6bp = pad_rows(params["w6"][FILTER:], PACK, 0).astype(bf16)       # x rows 0:39
    w10a = params["w10"][:FILTER].astype(bf16)                         # (256, 128)
    w10bp = pad_rows(params["w10"][FILTER:], PACK, IN_X).astype(bf16)  # d rows 39:60

    # Fused layer_9 + sigma head: (256, 384), cols 0:256 = w9, col 256 = wsigma.
    w9s = jnp.zeros((FILTER, FILTER + 128), f32)
    w9s = w9s.at[:, :FILTER].set(params["w9"])
    w9s = w9s.at[:, FILTER:FILTER + 1].set(params["wsigma"])
    w9s = w9s.astype(bf16)
    b9s = jnp.zeros((1, FILTER + 128), f32)
    b9s = b9s.at[:, :FILTER].set(params["b9"])
    b9s = b9s.at[:, FILTER:FILTER + 1].set(params["bsigma"])

    # Lane-dense final head: (128, 128) / (1, 128), cols 0:3 = layer_11.
    w11p = jnp.zeros((128, OUT_W), f32).at[:, :3].set(params["w11"]).astype(bf16)
    b11p = jnp.zeros((1, OUT_W), f32).at[:, :3].set(params["b11"])

    weight_args = [
        w1p, params["b1"],
        params["w2"].astype(bf16), params["b2"],
        params["w3"].astype(bf16), params["b3"],
        params["w4"].astype(bf16), params["b4"],
        params["w5"].astype(bf16), params["b5"],
        w6a, w6bp, params["b6"],
        params["w7"].astype(bf16), params["b7"],
        params["w8"].astype(bf16), params["b8"],
        w9s, b9s,
        w10a, w10bp, params["b10"],
        w11p, b11p,
    ]

    def full_spec(arr):
        # Weights/biases: whole array resident for every grid step
        # (constant index_map -> no re-DMA across steps).
        return pl.BlockSpec(arr.shape, lambda i: (0,) * arr.ndim)

    in_specs = ([pl.BlockSpec((tm, PACK), lambda i: (i, 0))]
                + [full_spec(w) for w in weight_args])
    out_specs = pl.BlockSpec((tm, OUT_W), lambda i: (i, 0))

    out = pl.pallas_call(
        _nerf_kernel,
        out_shape=jax.ShapeDtypeStruct((n_pad, OUT_W), jnp.float32),
        grid_spec=pltpu.PrefetchScalarGridSpec(
            num_scalar_prefetch=0,
            grid=(n_pad // tm,),
            in_specs=in_specs,
            out_specs=out_specs,
        ),
        compiler_params=pltpu.CompilerParams(
            dimension_semantics=("parallel",),
            vmem_limit_bytes=64 * 1024 * 1024),
    )(xd, *weight_args)

    rgb = out[:N, :3]
    sigma = out[:N, 3:4]
    return rgb, sigma


def nerf_reference(x, d, params):
    """Pure-JAX f32 reference matching the PyTorch module."""
    relu = jax.nn.relu
    out = relu(x @ params["w1"] + params["b1"])
    out = relu(out @ params["w2"] + params["b2"])
    out = relu(out @ params["w3"] + params["b3"])
    out = relu(out @ params["w4"] + params["b4"])
    out = relu(out @ params["w5"] + params["b5"])
    out = relu(jnp.concatenate([out, x], axis=1) @ params["w6"] + params["b6"])
    out = relu(out @ params["w7"] + params["b7"])
    out = relu(out @ params["w8"] + params["b8"])
    sigma = out @ params["wsigma"] + params["bsigma"]
    out = out @ params["w9"] + params["b9"]
    out = relu(jnp.concatenate([out, d], axis=1) @ params["w10"] + params["b10"])
    rgb = jax.nn.sigmoid(out @ params["w11"] + params["b11"])
    return rgb, sigma


if __name__ == "__main__":
    key = jax.random.PRNGKey(0)
    kp, kx, kd = jax.random.split(key, 3)

    params = init_params(kp)

    N = 2048  # number of sample points (rows); 4 grid steps at tm=512
    x = jax.random.normal(kx, (N, IN_X), jnp.float32)   # positional encoding of xyz
    d = jax.random.normal(kd, (N, IN_D), jnp.float32)   # positional encoding of dir

    rgb, sigma = nerf_forward(x, d, params, tm=512)
    jax.block_until_ready((rgb, sigma))

    assert rgb.shape == (N, 3) and sigma.shape == (N, 1)
    assert bool(jnp.all(jnp.isfinite(rgb))) and bool(jnp.all(jnp.isfinite(sigma)))
    assert bool(jnp.all((rgb >= 0.0) & (rgb <= 1.0)))   # sigmoid range check

    # Compare against pure-JAX f32 reference (generous tolerance for bf16 matmuls).
    rgb_ref, sigma_ref = nerf_reference(x, d, params)
    assert float(jnp.max(jnp.abs(rgb - rgb_ref))) < 5e-2
    assert float(jnp.max(jnp.abs(sigma - sigma_ref))) < 5e-2

    print("KERNEL_OK")
</pallas_src>

<mosaic_0001>
module attributes {stable_mosaic.version = 11 : i64} {
  func.func @_nerf_kernel(%arg0: i32, %arg1: memref<512x128xf32, #tpu.memory_space<vmem>>, %arg2: memref<128x256xbf16, #tpu.memory_space<vmem>>, %arg3: memref<1x256xf32, #tpu.memory_space<vmem>>, %arg4: memref<256x256xbf16, #tpu.memory_space<vmem>>, %arg5: memref<1x256xf32, #tpu.memory_space<vmem>>, %arg6: memref<256x256xbf16, #tpu.memory_space<vmem>>, %arg7: memref<1x256xf32, #tpu.memory_space<vmem>>, %arg8: memref<256x256xbf16, #tpu.memory_space<vmem>>, %arg9: memref<1x256xf32, #tpu.memory_space<vmem>>, %arg10: memref<256x256xbf16, #tpu.memory_space<vmem>>, %arg11: memref<1x256xf32, #tpu.memory_space<vmem>>, %arg12: memref<256x256xbf16, #tpu.memory_space<vmem>>, %arg13: memref<128x256xbf16, #tpu.memory_space<vmem>>, %arg14: memref<1x256xf32, #tpu.memory_space<vmem>>, %arg15: memref<256x256xbf16, #tpu.memory_space<vmem>>, %arg16: memref<1x256xf32, #tpu.memory_space<vmem>>, %arg17: memref<256x256xbf16, #tpu.memory_space<vmem>>, %arg18: memref<1x256xf32, #tpu.memory_space<vmem>>, %arg19: memref<256x384xbf16, #tpu.memory_space<vmem>>, %arg20: memref<1x384xf32, #tpu.memory_space<vmem>>, %arg21: memref<256x128xbf16, #tpu.memory_space<vmem>>, %arg22: memref<128x128xbf16, #tpu.memory_space<vmem>>, %arg23: memref<1x128xf32, #tpu.memory_space<vmem>>, %arg24: memref<128x128xbf16, #tpu.memory_space<vmem>>, %arg25: memref<1x128xf32, #tpu.memory_space<vmem>>, %arg26: memref<512x128xf32, #tpu.memory_space<vmem>>) attributes {dimension_semantics = [#tpu.dimension_semantics<parallel>], iteration_bounds = array<i64: 4>, scalar_prefetch = 0 : i64, scratch_operands = 0 : i64, tpu.core_type = #tpu.core_type<tc>, window_params = [{transform_indices = @transform_0, window_bounds = array<i64: 512, 128>}, {pipeline_mode = #tpu.pipeline_mode<synchronous>, transform_indices = @transform_1, window_bounds = array<i64: 128, 256>}, {pipeline_mode = #tpu.pipeline_mode<synchronous>, transform_indices = @transform_2, window_bounds = array<i64: 1, 256>}, {pipeline_mode = #tpu.pipeline_mode<synchronous>, transform_indices = @transform_3, window_bounds = array<i64: 256, 256>}, {pipeline_mode = #tpu.pipeline_mode<synchronous>, transform_indices = @transform_4, window_bounds = array<i64: 1, 256>}, {pipeline_mode = #tpu.pipeline_mode<synchronous>, transform_indices = @transform_5, window_bounds = array<i64: 256, 256>}, {pipeline_mode = #tpu.pipeline_mode<synchronous>, transform_indices = @transform_6, window_bounds = array<i64: 1, 256>}, {pipeline_mode = #tpu.pipeline_mode<synchronous>, transform_indices = @transform_7, window_bounds = array<i64: 256, 256>}, {pipeline_mode = #tpu.pipeline_mode<synchronous>, transform_indices = @transform_8, window_bounds = array<i64: 1, 256>}, {pipeline_mode = #tpu.pipeline_mode<synchronous>, transform_indices = @transform_9, window_bounds = array<i64: 256, 256>}, {pipeline_mode = #tpu.pipeline_mode<synchronous>, transform_indices = @transform_10, window_bounds = array<i64: 1, 256>}, {pipeline_mode = #tpu.pipeline_mode<synchronous>, transform_indices = @transform_11, window_bounds = array<i64: 256, 256>}, {pipeline_mode = #tpu.pipeline_mode<synchronous>, transform_indices = @transform_12, window_bounds = array<i64: 128, 256>}, {pipeline_mode = #tpu.pipeline_mode<synchronous>, transform_indices = @transform_13, window_bounds = array<i64: 1, 256>}, {pipeline_mode = #tpu.pipeline_mode<synchronous>, transform_indices = @transform_14, window_bounds = array<i64: 256, 256>}, {pipeline_mode = #tpu.pipeline_mode<synchronous>, transform_indices = @transform_15, window_bounds = array<i64: 1, 256>}, {pipeline_mode = #tpu.pipeline_mode<synchronous>, transform_indices = @transform_16, window_bounds = array<i64: 256, 256>}, {pipeline_mode = #tpu.pipeline_mode<synchronous>, transform_indices = @transform_17, window_bounds = array<i64: 1, 256>}, {pipeline_mode = #tpu.pipeline_mode<synchronous>, transform_indices = @transform_18, window_bounds = array<i64: 256, 384>}, {pipeline_mode = #tpu.pipeline_mode<synchronous>, transform_indices = @transform_19, window_bounds = array<i64: 1, 384>}, {pipeline_mode = #tpu.pipeline_mode<synchronous>, transform_indices = @transform_20, window_bounds = array<i64: 256, 128>}, {pipeline_mode = #tpu.pipeline_mode<synchronous>, transform_indices = @transform_21, window_bounds = array<i64: 128, 128>}, {pipeline_mode = #tpu.pipeline_mode<synchronous>, transform_indices = @transform_22, window_bounds = array<i64: 1, 128>}, {pipeline_mode = #tpu.pipeline_mode<synchronous>, transform_indices = @transform_23, window_bounds = array<i64: 128, 128>}, {pipeline_mode = #tpu.pipeline_mode<synchronous>, transform_indices = @transform_24, window_bounds = array<i64: 1, 128>}, {transform_indices = @transform_25, window_bounds = array<i64: 512, 128>}]} {
    %c0 = arith.constant 0 : index
    %c0_0 = arith.constant 0 : index
    %0 = vector.load %arg1[%c0, %c0_0] : memref<512x128xf32, #tpu.memory_space<vmem>>, vector<512x128xf32>
    %1 = arith.truncf %0 : vector<512x128xf32> to vector<512x128xbf16>
    %c0_1 = arith.constant 0 : index
    %c0_2 = arith.constant 0 : index
    %2 = vector.load %arg2[%c0_1, %c0_2] : memref<128x256xbf16, #tpu.memory_space<vmem>>, vector<128x256xbf16>
    %cst = arith.constant dense<0.000000e+00> : vector<512x256xf32>
    %3 = tpu.matmul %1, %2, %cst {dimension_numbers = #tpu.dot_dimension_numbers<[1], [0], [0], [1], [0, 0, 1, 1], [], []>} : vector<512x128xbf16>, vector<128x256xbf16>, vector<512x256xf32> -> vector<512x256xf32>
    %c0_3 = arith.constant 0 : index
    %c0_4 = arith.constant 0 : index
    %4 = vector.load %arg3[%c0_3, %c0_4] : memref<1x256xf32, #tpu.memory_space<vmem>>, vector<1x256xf32>
    %5 = vector.broadcast %4 : vector<1x256xf32> to vector<512x256xf32>
    %6 = arith.addf %3, %5 : vector<512x256xf32>
    %cst_5 = arith.constant 0.000000e+00 : f32
    %7 = vector.broadcast %cst_5 : f32 to vector<512x256xf32>
    %8 = arith.maximumf %6, %7 : vector<512x256xf32>
    %9 = arith.truncf %8 : vector<512x256xf32> to vector<512x256xbf16>
    %c0_6 = arith.constant 0 : index
    %c0_7 = arith.constant 0 : index
    %10 = vector.load %arg4[%c0_6, %c0_7] : memref<256x256xbf16, #tpu.memory_space<vmem>>, vector<256x256xbf16>
    %cst_8 = arith.constant dense<0.000000e+00> : vector<512x256xf32>
    %11 = tpu.matmul %9, %10, %cst_8 {dimension_numbers = #tpu.dot_dimension_numbers<[1], [0], [0], [1], [0, 0, 1, 1], [], []>} : vector<512x256xbf16>, vector<256x256xbf16>, vector<512x256xf32> -> vector<512x256xf32>
    %c0_9 = arith.constant 0 : index
    %c0_10 = arith.constant 0 : index
    %12 = vector.load %arg5[%c0_9, %c0_10] : memref<1x256xf32, #tpu.memory_space<vmem>>, vector<1x256xf32>
    %13 = vector.broadcast %12 : vector<1x256xf32> to vector<512x256xf32>
    %14 = arith.addf %11, %13 : vector<512x256xf32>
    %cst_11 = arith.constant 0.000000e+00 : f32
    %15 = vector.broadcast %cst_11 : f32 to vector<512x256xf32>
    %16 = arith.maximumf %14, %15 : vector<512x256xf32>
    %17 = arith.truncf %16 : vector<512x256xf32> to vector<512x256xbf16>
    %c0_12 = arith.constant 0 : index
    %c0_13 = arith.constant 0 : index
    %18 = vector.load %arg6[%c0_12, %c0_13] : memref<256x256xbf16, #tpu.memory_space<vmem>>, vector<256x256xbf16>
    %cst_14 = arith.constant dense<0.000000e+00> : vector<512x256xf32>
    %19 = tpu.matmul %17, %18, %cst_14 {dimension_numbers = #tpu.dot_dimension_numbers<[1], [0], [0], [1], [0, 0, 1, 1], [], []>} : vector<512x256xbf16>, vector<256x256xbf16>, vector<512x256xf32> -> vector<512x256xf32>
    %c0_15 = arith.constant 0 : index
    %c0_16 = arith.constant 0 : index
    %20 = vector.load %arg7[%c0_15, %c0_16] : memref<1x256xf32, #tpu.memory_space<vmem>>, vector<1x256xf32>
    %21 = vector.broadcast %20 : vector<1x256xf32> to vector<512x256xf32>
    %22 = arith.addf %19, %21 : vector<512x256xf32>
    %cst_17 = arith.constant 0.000000e+00 : f32
    %23 = vector.broadcast %cst_17 : f32 to vector<512x256xf32>
    %24 = arith.maximumf %22, %23 : vector<512x256xf32>
    %25 = arith.truncf %24 : vector<512x256xf32> to vector<512x256xbf16>
    %c0_18 = arith.constant 0 : index
    %c0_19 = arith.constant 0 : index
    %26 = vector.load %arg8[%c0_18, %c0_19] : memref<256x256xbf16, #tpu.memory_space<vmem>>, vector<256x256xbf16>
    %cst_20 = arith.constant dense<0.000000e+00> : vector<512x256xf32>
    %27 = tpu.matmul %25, %26, %cst_20 {dimension_numbers = #tpu.dot_dimension_numbers<[1], [0], [0], [1], [0, 0, 1, 1], [], []>} : vector<512x256xbf16>, vector<256x256xbf16>, vector<512x256xf32> -> vector<512x256xf32>
    %c0_21 = arith.constant 0 : index
    %c0_22 = arith.constant 0 : index
    %28 = vector.load %arg9[%c0_21, %c0_22] : memref<1x256xf32, #tpu.memory_space<vmem>>, vector<1x256xf32>
    %29 = vector.broadcast %28 : vector<1x256xf32> to vector<512x256xf32>
    %30 = arith.addf %27, %29 : vector<512x256xf32>
    %cst_23 = arith.constant 0.000000e+00 : f32
    %31 = vector.broadcast %cst_23 : f32 to vector<512x256xf32>
    %32 = arith.maximumf %30, %31 : vector<512x256xf32>
    %33 = arith.truncf %32 : vector<512x256xf32> to vector<512x256xbf16>
    %c0_24 = arith.constant 0 : index
    %c0_25 = arith.constant 0 : index
    %34 = vector.load %arg10[%c0_24, %c0_25] : memref<256x256xbf16, #tpu.memory_space<vmem>>, vector<256x256xbf16>
    %cst_26 = arith.constant dense<0.000000e+00> : vector<512x256xf32>
    %35 = tpu.matmul %33, %34, %cst_26 {dimension_numbers = #tpu.dot_dimension_numbers<[1], [0], [0], [1], [0, 0, 1, 1], [], []>} : vector<512x256xbf16>, vector<256x256xbf16>, vector<512x256xf32> -> vector<512x256xf32>
    %c0_27 = arith.constant 0 : index
    %c0_28 = arith.constant 0 : index
    %36 = vector.load %arg11[%c0_27, %c0_28] : memref<1x256xf32, #tpu.memory_space<vmem>>, vector<1x256xf32>
    %37 = vector.broadcast %36 : vector<1x256xf32> to vector<512x256xf32>
    %38 = arith.addf %35, %37 : vector<512x256xf32>
    %cst_29 = arith.constant 0.000000e+00 : f32
    %39 = vector.broadcast %cst_29 : f32 to vector<512x256xf32>
    %40 = arith.maximumf %38, %39 : vector<512x256xf32>
    %41 = arith.truncf %40 : vector<512x256xf32> to vector<512x256xbf16>
    %c0_30 = arith.constant 0 : index
    %c0_31 = arith.constant 0 : index
    %42 = vector.load %arg12[%c0_30, %c0_31] : memref<256x256xbf16, #tpu.memory_space<vmem>>, vector<256x256xbf16>
    %cst_32 = arith.constant dense<0.000000e+00> : vector<512x256xf32>
    %43 = tpu.matmul %41, %42, %cst_32 {dimension_numbers = #tpu.dot_dimension_numbers<[1], [0], [0], [1], [0, 0, 1, 1], [], []>} : vector<512x256xbf16>, vector<256x256xbf16>, vector<512x256xf32> -> vector<512x256xf32>
    %c0_33 = arith.constant 0 : index
    %c0_34 = arith.constant 0 : index
    %44 = vector.load %arg14[%c0_33, %c0_34] : memref<1x256xf32, #tpu.memory_space<vmem>>, vector<1x256xf32>
    %45 = vector.broadcast %44 : vector<1x256xf32> to vector<512x256xf32>
    %46 = arith.addf %43, %45 : vector<512x256xf32>
    %c0_35 = arith.constant 0 : index
    %c0_36 = arith.constant 0 : index
    %47 = vector.load %arg13[%c0_35, %c0_36] : memref<128x256xbf16, #tpu.memory_space<vmem>>, vector<128x256xbf16>
    %cst_37 = arith.constant dense<0.000000e+00> : vector<512x256xf32>
    %48 = tpu.matmul %1, %47, %cst_37 {dimension_numbers = #tpu.dot_dimension_numbers<[1], [0], [0], [1], [0, 0, 1, 1], [], []>} : vector<512x128xbf16>, vector<128x256xbf16>, vector<512x256xf32> -> vector<512x256xf32>
    %49 = arith.addf %46, %48 : vector<512x256xf32>
    %cst_38 = arith.constant 0.000000e+00 : f32
    %50 = vector.broadcast %cst_38 : f32 to vector<512x256xf32>
    %51 = arith.maximumf %49, %50 : vector<512x256xf32>
    %52 = arith.truncf %51 : vector<512x256xf32> to vector<512x256xbf16>
    %c0_39 = arith.constant 0 : index
    %c0_40 = arith.constant 0 : index
    %53 = vector.load %arg15[%c0_39, %c0_40] : memref<256x256xbf16, #tpu.memory_space<vmem>>, vector<256x256xbf16>
    %cst_41 = arith.constant dense<0.000000e+00> : vector<512x256xf32>
    %54 = tpu.matmul %52, %53, %cst_41 {dimension_numbers = #tpu.dot_dimension_numbers<[1], [0], [0], [1], [0, 0, 1, 1], [], []>} : vector<512x256xbf16>, vector<256x256xbf16>, vector<512x256xf32> -> vector<512x256xf32>
    %c0_42 = arith.constant 0 : index
    %c0_43 = arith.constant 0 : index
    %55 = vector.load %arg16[%c0_42, %c0_43] : memref<1x256xf32, #tpu.memory_space<vmem>>, vector<1x256xf32>
    %56 = vector.broadcast %55 : vector<1x256xf32> to vector<512x256xf32>
    %57 = arith.addf %54, %56 : vector<512x256xf32>
    %cst_44 = arith.constant 0.000000e+00 : f32
    %58 = vector.broadcast %cst_44 : f32 to vector<512x256xf32>
    %59 = arith.maximumf %57, %58 : vector<512x256xf32>
    %60 = arith.truncf %59 : vector<512x256xf32> to vector<512x256xbf16>
    %c0_45 = arith.constant 0 : index
    %c0_46 = arith.constant 0 : index
    %61 = vector.load %arg17[%c0_45, %c0_46] : memref<256x256xbf16, #tpu.memory_space<vmem>>, vector<256x256xbf16>
    %cst_47 = arith.constant dense<0.000000e+00> : vector<512x256xf32>
    %62 = tpu.matmul %60, %61, %cst_47 {dimension_numbers = #tpu.dot_dimension_numbers<[1], [0], [0], [1], [0, 0, 1, 1], [], []>} : vector<512x256xbf16>, vector<256x256xbf16>, vector<512x256xf32> -> vector<512x256xf32>
    %c0_48 = arith.constant 0 : index
    %c0_49 = arith.constant 0 : index
    %63 = vector.load %arg18[%c0_48, %c0_49] : memref<1x256xf32, #tpu.memory_space<vmem>>, vector<1x256xf32>
    %64 = vector.broadcast %63 : vector<1x256xf32> to vector<512x256xf32>
    %65 = arith.addf %62, %64 : vector<512x256xf32>
    %cst_50 = arith.constant 0.000000e+00 : f32
    %66 = vector.broadcast %cst_50 : f32 to vector<512x256xf32>
    %67 = arith.maximumf %65, %66 : vector<512x256xf32>
    %68 = arith.truncf %67 : vector<512x256xf32> to vector<512x256xbf16>
    %c0_51 = arith.constant 0 : index
    %c0_52 = arith.constant 0 : index
    %69 = vector.load %arg19[%c0_51, %c0_52] : memref<256x384xbf16, #tpu.memory_space<vmem>>, vector<256x384xbf16>
    %cst_53 = arith.constant dense<0.000000e+00> : vector<512x384xf32>
    %70 = tpu.matmul %68, %69, %cst_53 {dimension_numbers = #tpu.dot_dimension_numbers<[1], [0], [0], [1], [0, 0, 1, 1], [], []>} : vector<512x256xbf16>, vector<256x384xbf16>, vector<512x384xf32> -> vector<512x384xf32>
    %c0_54 = arith.constant 0 : index
    %c0_55 = arith.constant 0 : index
    %71 = vector.load %arg20[%c0_54, %c0_55] : memref<1x384xf32, #tpu.memory_space<vmem>>, vector<1x384xf32>
    %72 = vector.broadcast %71 : vector<1x384xf32> to vector<512x384xf32>
    %73 = arith.addf %70, %72 : vector<512x384xf32>
    %74 = vector.extract_strided_slice %73 {offsets = [0, 256], sizes = [512, 1], strides = [1, 1]} : vector<512x384xf32> to vector<512x1xf32>
    %75 = vector.extract_strided_slice %73 {offsets = [0, 0], sizes = [512, 256], strides = [1, 1]} : vector<512x384xf32> to vector<512x256xf32>
    %76 = arith.truncf %75 : vector<512x256xf32> to vector<512x256xbf16>
    %c0_56 = arith.constant 0 : index
    %c0_57 = arith.constant 0 : index
    %77 = vector.load %arg21[%c0_56, %c0_57] : memref<256x128xbf16, #tpu.memory_space<vmem>>, vector<256x128xbf16>
    %cst_58 = arith.constant dense<0.000000e+00> : vector<512x128xf32>
    %78 = tpu.matmul %76, %77, %cst_58 {dimension_numbers = #tpu.dot_dimension_numbers<[1], [0], [0], [1], [0, 0, 1, 1], [], []>} : vector<512x256xbf16>, vector<256x128xbf16>, vector<512x128xf32> -> vector<512x128xf32>
    %c0_59 = arith.constant 0 : index
    %c0_60 = arith.constant 0 : index
    %79 = vector.load %arg23[%c0_59, %c0_60] : memref<1x128xf32, #tpu.memory_space<vmem>>, vector<1x128xf32>
    %80 = vector.broadcast %79 : vector<1x128xf32> to vector<512x128xf32>
    %81 = arith.addf %78, %80 : vector<512x128xf32>
    %c0_61 = arith.constant 0 : index
    %c0_62 = arith.constant 0 : index
    %82 = vector.load %arg22[%c0_61, %c0_62] : memref<128x128xbf16, #tpu.memory_space<vmem>>, vector<128x128xbf16>
    %cst_63 = arith.constant dense<0.000000e+00> : vector<512x128xf32>
    %83 = tpu.matmul %1, %82, %cst_63 {dimension_numbers = #tpu.dot_dimension_numbers<[1], [0], [0], [1], [0, 0, 1, 1], [], []>} : vector<512x128xbf16>, vector<128x128xbf16>, vector<512x128xf32> -> vector<512x128xf32>
    %84 = arith.addf %81, %83 : vector<512x128xf32>
    %cst_64 = arith.constant 0.000000e+00 : f32
    %85 = vector.broadcast %cst_64 : f32 to vector<512x128xf32>
    %86 = arith.maximumf %84, %85 : vector<512x128xf32>
    %87 = arith.truncf %86 : vector<512x128xf32> to vector<512x128xbf16>
    %c0_65 = arith.constant 0 : index
    %c0_66 = arith.constant 0 : index
    %88 = vector.load %arg24[%c0_65, %c0_66] : memref<128x128xbf16, #tpu.memory_space<vmem>>, vector<128x128xbf16>
    %cst_67 = arith.constant dense<0.000000e+00> : vector<512x128xf32>
    %89 = tpu.matmul %87, %88, %cst_67 {dimension_numbers = #tpu.dot_dimension_numbers<[1], [0], [0], [1], [0, 0, 1, 1], [], []>} : vector<512x128xbf16>, vector<128x128xbf16>, vector<512x128xf32> -> vector<512x128xf32>
    %c0_68 = arith.constant 0 : index
    %c0_69 = arith.constant 0 : index
    %90 = vector.load %arg25[%c0_68, %c0_69] : memref<1x128xf32, #tpu.memory_space<vmem>>, vector<1x128xf32>
    %91 = vector.broadcast %90 : vector<1x128xf32> to vector<512x128xf32>
    %92 = arith.addf %89, %91 : vector<512x128xf32>
    %93 = arith.negf %92 : vector<512x128xf32>
    %94 = math.exp %93 : vector<512x128xf32>
    %cst_70 = arith.constant 1.000000e+00 : f32
    %95 = vector.broadcast %cst_70 : f32 to vector<512x128xf32>
    %96 = arith.addf %95, %94 : vector<512x128xf32>
    %97 = arith.divf %95, %96 : vector<512x128xf32>
    %98 = tpu.iota {dimensions = array<i32: 1>} : vector<512x128xi32>
    %c3_i32 = arith.constant 3 : i32
    %99 = vector.broadcast %c3_i32 : i32 to vector<512x128xi32>
    %100 = arith.cmpi slt, %98, %99 : vector<512x128xi32>
    %101 = vector.shape_cast %74 : vector<512x1xf32> to vector<512x1xf32>
    %102 = vector.broadcast %101 : vector<512x1xf32> to vector<512x128xf32>
    %103 = arith.select %100, %97, %102 : vector<512x128xi1>, vector<512x128xf32>
    %c0_71 = arith.constant 0 : index
    %c0_72 = arith.constant 0 : index
    %104 = vector.load %arg26[%c0_71, %c0_72] : memref<512x128xf32, #tpu.memory_space<vmem>>, vector<512x128xf32>
    tpu.vector_store %arg26[%c0_71, %c0_72], %103 {strides = array<i32>} : memref<512x128xf32, #tpu.memory_space<vmem>>, vector<512x128xf32>,
    return
  }
  func.func @transform_0(%arg0: i32) -> (i32, i32) {
    %c0_i32 = arith.constant 0 : i32
    %c0_i32_0 = arith.constant 0 : i32
    return %arg0, %c0_i32 : i32, i32
  }
  func.func @transform_1(%arg0: i32) -> (i32, i32) {
    %c0_i32 = arith.constant 0 : i32
    %c0_i32_0 = arith.constant 0 : i32
    %c0_i32_1 = arith.constant 0 : i32
    return %c0_i32, %c0_i32_0 : i32, i32
  }
  func.func @transform_2(%arg0: i32) -> (i32, i32) {
    %c0_i32 = arith.constant 0 : i32
    %c0_i32_0 = arith.constant 0 : i32
    %c0_i32_1 = arith.constant 0 : i32
    return %c0_i32, %c0_i32_0 : i32, i32
  }
  func.func @transform_3(%arg0: i32) -> (i32, i32) {
    %c0_i32 = arith.constant 0 : i32
    %c0_i32_0 = arith.constant 0 : i32
    %c0_i32_1 = arith.constant 0 : i32
    return %c0_i32, %c0_i32_0 : i32, i32
  }
  func.func @transform_4(%arg0: i32) -> (i32, i32) {
    %c0_i32 = arith.constant 0 : i32
    %c0_i32_0 = arith.constant 0 : i32
    %c0_i32_1 = arith.constant 0 : i32
    return %c0_i32, %c0_i32_0 : i32, i32
  }
  func.func @transform_5(%arg0: i32) -> (i32, i32) {
    %c0_i32 = arith.constant 0 : i32
    %c0_i32_0 = arith.constant 0 : i32
    %c0_i32_1 = arith.constant 0 : i32
    return %c0_i32, %c0_i32_0 : i32, i32
  }
  func.func @transform_6(%arg0: i32) -> (i32, i32) {
    %c0_i32 = arith.constant 0 : i32
    %c0_i32_0 = arith.constant 0 : i32
    %c0_i32_1 = arith.constant 0 : i32
    return %c0_i32, %c0_i32_0 : i32, i32
  }
  func.func @transform_7(%arg0: i32) -> (i32, i32) {
    %c0_i32 = arith.constant 0 : i32
    %c0_i32_0 = arith.constant 0 : i32
    %c0_i32_1 = arith.constant 0 : i32
    return %c0_i32, %c0_i32_0 : i32, i32
  }
  func.func @transform_8(%arg0: i32) -> (i32, i32) {
    %c0_i32 = arith.constant 0 : i32
    %c0_i32_0 = arith.constant 0 : i32
    %c0_i32_1 = arith.constant 0 : i32
    return %c0_i32, %c0_i32_0 : i32, i32
  }
  func.func @transform_9(%arg0: i32) -> (i32, i32) {
    %c0_i32 = arith.constant 0 : i32
    %c0_i32_0 = arith.constant 0 : i32
    %c0_i32_1 = arith.constant 0 : i32
    return %c0_i32, %c0_i32_0 : i32, i32
  }
  func.func @transform_10(%arg0: i32) -> (i32, i32) {
    %c0_i32 = arith.constant 0 : i32
    %c0_i32_0 = arith.constant 0 : i32
    %c0_i32_1 = arith.constant 0 : i32
    return %c0_i32, %c0_i32_0 : i32, i32
  }
  func.func @transform_11(%arg0: i32) -> (i32, i32) {
    %c0_i32 = arith.constant 0 : i32
    %c0_i32_0 = arith.constant 0 : i32
    %c0_i32_1 = arith.constant 0 : i32
    return %c0_i32, %c0_i32_0 : i32, i32
  }
  func.func @transform_12(%arg0: i32) -> (i32, i32) {
    %c0_i32 = arith.constant 0 : i32
    %c0_i32_0 = arith.constant 0 : i32
    %c0_i32_1 = arith.constant 0 : i32
    return %c0_i32, %c0_i32_0 : i32, i32
  }
  func.func @transform_13(%arg0: i32) -> (i32, i32) {
    %c0_i32 = arith.constant 0 : i32
    %c0_i32_0 = arith.constant 0 : i32
    %c0_i32_1 = arith.constant 0 : i32
    return %c0_i32, %c0_i32_0 : i32, i32
  }
  func.func @transform_14(%arg0: i32) -> (i32, i32) {
    %c0_i32 = arith.constant 0 : i32
    %c0_i32_0 = arith.constant 0 : i32
    %c0_i32_1 = arith.constant 0 : i32
    return %c0_i32, %c0_i32_0 : i32, i32
  }
  func.func @transform_15(%arg0: i32) -> (i32, i32) {
    %c0_i32 = arith.constant 0 : i32
    %c0_i32_0 = arith.constant 0 : i32
    %c0_i32_1 = arith.constant 0 : i32
    return %c0_i32, %c0_i32_0 : i32, i32
  }
  func.func @transform_16(%arg0: i32) -> (i32, i32) {
    %c0_i32 = arith.constant 0 : i32
    %c0_i32_0 = arith.constant 0 : i32
    %c0_i32_1 = arith.constant 0 : i32
    return %c0_i32, %c0_i32_0 : i32, i32
  }
  func.func @transform_17(%arg0: i32) -> (i32, i32) {
    %c0_i32 = arith.constant 0 : i32
    %c0_i32_0 = arith.constant 0 : i32
    %c0_i32_1 = arith.constant 0 : i32
    return %c0_i32, %c0_i32_0 : i32, i32
  }
  func.func @transform_18(%arg0: i32) -> (i32, i32) {
    %c0_i32 = arith.constant 0 : i32
    %c0_i32_0 = arith.constant 0 : i32
    %c0_i32_1 = arith.constant 0 : i32
    return %c0_i32, %c0_i32_0 : i32, i32
  }
  func.func @transform_19(%arg0: i32) -> (i32, i32) {
    %c0_i32 = arith.constant 0 : i32
    %c0_i32_0 = arith.constant 0 : i32
    %c0_i32_1 = arith.constant 0 : i32
    return %c0_i32, %c0_i32_0 : i32, i32
  }
  func.func @transform_20(%arg0: i32) -> (i32, i32) {
    %c0_i32 = arith.constant 0 : i32
    %c0_i32_0 = arith.constant 0 : i32
    %c0_i32_1 = arith.constant 0 : i32
    return %c0_i32, %c0_i32_0 : i32, i32
  }
  func.func @transform_21(%arg0: i32) -> (i32, i32) {
    %c0_i32 = arith.constant 0 : i32
    %c0_i32_0 = arith.constant 0 : i32
    %c0_i32_1 = arith.constant 0 : i32
    return %c0_i32, %c0_i32_0 : i32, i32
  }
  func.func @transform_22(%arg0: i32) -> (i32, i32) {
    %c0_i32 = arith.constant 0 : i32
    %c0_i32_0 = arith.constant 0 : i32
    %c0_i32_1 = arith.constant 0 : i32
    return %c0_i32, %c0_i32_0 : i32, i32
  }
  func.func @transform_23(%arg0: i32) -> (i32, i32) {
    %c0_i32 = arith.constant 0 : i32
    %c0_i32_0 = arith.constant 0 : i32
    %c0_i32_1 = arith.constant 0 : i32
    return %c0_i32, %c0_i32_0 : i32, i32
  }
  func.func @transform_24(%arg0: i32) -> (i32, i32) {
    %c0_i32 = arith.constant 0 : i32
    %c0_i32_0 = arith.constant 0 : i32
    %c0_i32_1 = arith.constant 0 : i32
    return %c0_i32, %c0_i32_0 : i32, i32
  }
  func.func @transform_25(%arg0: i32) -> (i32, i32) {
    %c0_i32 = arith.constant 0 : i32
    %c0_i32_0 = arith.constant 0 : i32
    return %arg0, %c0_i32 : i32, i32
  }
}

</mosaic_0001>

<llo_original>
// kernel: nerf_forward.1
$region0: #{nerf_forward.1}
  #allocation0 [shape = 'u32[]', space=smem, size = 0x4, offset = 0x4, fixed_abs, tag = 'smem constant byte address 0x4 - core index']
  #allocation1 [shape = 'u32[144,128]{1,0:T(1,128)}', space=vmem, size = 0x12000, scoped, tag = 'internal scratch']
  %s0 = inlined_call_operand.hbm [shape: f32[2048,128], index: 0, kind: input, shape index: {}]
  %s1 = inlined_call_operand.hbm [shape: bf16[128,256], index: 1, kind: input, shape index: {}]
  %s2 = inlined_call_operand.hbm [shape: f32[1,256], index: 2, kind: input, shape index: {}]
  %s3 = inlined_call_operand.hbm [shape: bf16[256,256], index: 3, kind: input, shape index: {}]
  %s4 = inlined_call_operand.hbm [shape: f32[1,256], index: 4, kind: input, shape index: {}]
  %s5 = inlined_call_operand.hbm [shape: bf16[256,256], index: 5, kind: input, shape index: {}]
  %s6 = inlined_call_operand.hbm [shape: f32[1,256], index: 6, kind: input, shape index: {}]
  %s7 = inlined_call_operand.hbm [shape: bf16[256,256], index: 7, kind: input, shape index: {}]
  %s8 = inlined_call_operand.hbm [shape: f32[1,256], index: 8, kind: input, shape index: {}]
  %s9 = inlined_call_operand.hbm [shape: bf16[256,256], index: 9, kind: input, shape index: {}]
  %s10 = inlined_call_operand.hbm [shape: f32[1,256], index: 10, kind: input, shape index: {}]
  %s11 = inlined_call_operand.hbm [shape: bf16[256,256], index: 11, kind: input, shape index: {}]
  %s12 = inlined_call_operand.hbm [shape: bf16[128,256], index: 12, kind: input, shape index: {}]
  %s13 = inlined_call_operand.hbm [shape: f32[1,256], index: 13, kind: input, shape index: {}]
  %s14 = inlined_call_operand.hbm [shape: bf16[256,256], index: 14, kind: input, shape index: {}]
  %s15 = inlined_call_operand.hbm [shape: f32[1,256], index: 15, kind: input, shape index: {}]
  %s16 = inlined_call_operand.hbm [shape: bf16[256,256], index: 16, kind: input, shape index: {}]
  %s17 = inlined_call_operand.hbm [shape: f32[1,256], index: 17, kind: input, shape index: {}]
  %s18 = inlined_call_operand.hbm [shape: bf16[256,384], index: 18, kind: input, shape index: {}]
  %s19 = inlined_call_operand.hbm [shape: f32[1,384], index: 19, kind: input, shape index: {}]
  %s20 = inlined_call_operand.hbm [shape: bf16[256,128], index: 20, kind: input, shape index: {}]
  %s21 = inlined_call_operand.hbm [shape: bf16[128,128], index: 21, kind: input, shape index: {}]
  %s22 = inlined_call_operand.hbm [shape: f32[1,128], index: 22, kind: input, shape index: {}]
  %s23 = inlined_call_operand.hbm [shape: bf16[128,128], index: 23, kind: input, shape index: {}]
  %s24 = inlined_call_operand.hbm [shape: f32[1,128], index: 24, kind: input, shape index: {}]
  %s25 = inlined_call_operand.hbm [shape: f32[2048,128], index: 25, kind: output, shape index: {}]
  %s26 = sld [smem:[#allocation0]]
  $region233: #{nerf_forward.1} parent=0
    _
  %s28 = ssub.s32 1, %s26
  %s29 = scalar_select 0, %s28, %s26
  $region1: #{nerf_forward.1} parent=0
    #allocation2 [shape = 'u8[524288]{0}', space=vmem, size = 0x80000, scoped, tag = 'input window, operand 0']
    #allocation3 [shape = 's32[2]{0}', space=sflag, size = 0x8, scoped, tag = 'scoped memory for nerf_forward.1']
    #allocation4 [shape = 's32[2]{0}', space=sflag, size = 0x8, scoped, tag = 'scoped memory for nerf_forward.1']
    #allocation5 [shape = 'u8[65536]{0}', space=vmem, size = 0x10000, scoped, tag = 'input window, operand 1, single buffered']
    #allocation6 [shape = 's32[1]{0}', space=sflag, size = 0x4, scoped, tag = 'scoped memory for nerf_forward.1']
    #allocation7 [shape = 'u8[1024]{0}', space=vmem, size = 0x400, scoped, tag = 'input window, operand 2, single buffered']
    #allocation8 [shape = 'u8[131072]{0}', space=vmem, size = 0x20000, scoped, tag = 'input window, operand 3, single buffered']
    #allocation9 [shape = 's32[1]{0}', space=sflag, size = 0x4, scoped, tag = 'scoped memory for nerf_forward.1']
    #allocation10 [shape = 'u8[1024]{0}', space=vmem, size = 0x400, scoped, tag = 'input window, operand 4, single buffered']
    #allocation11 [shape = 'u8[131072]{0}', space=vmem, size = 0x20000, scoped, tag = 'input window, operand 5, single buffered']
    #allocation12 [shape = 's32[1]{0}', space=sflag, size = 0x4, scoped, tag = 'scoped memory for nerf_forward.1']
    #allocation13 [shape = 'u8[1024]{0}', space=vmem, size = 0x400, scoped, tag = 'input window, operand 6, single buffered']
    #allocation14 [shape = 'u8[131072]{0}', space=vmem, size = 0x20000, scoped, tag = 'input window, operand 7, single buffered']
    #allocation15 [shape = 's32[1]{0}', space=sflag, size = 0x4, scoped, tag = 'scoped memory for nerf_forward.1']
    #allocation16 [shape = 'u8[1024]{0}', space=vmem, size = 0x400, scoped, tag = 'input window, operand 8, single buffered']
    #allocation17 [shape = 'u8[131072]{0}', space=vmem, size = 0x20000, scoped, tag = 'input window, operand 9, single buffered']
    #allocation18 [shape = 's32[1]{0}', space=sflag, size = 0x4, scoped, tag = 'scoped memory for nerf_forward.1']
    #allocation19 [shape = 'u8[1024]{0}', space=vmem, size = 0x400, scoped, tag = 'input window, operand 10, single buffered']
    #allocation20 [shape = 'u8[131072]{0}', space=vmem, size = 0x20000, scoped, tag = 'input window, operand 11, single buffered']
    #allocation21 [shape = 's32[1]{0}', space=sflag, size = 0x4, scoped, tag = 'scoped memory for nerf_forward.1']
    #allocation22 [shape = 'u8[65536]{0}', space=vmem, size = 0x10000, scoped, tag = 'input window, operand 12, single buffered']
    #allocation23 [shape = 'u8[1024]{0}', space=vmem, size = 0x400, scoped, tag = 'input window, operand 13, single buffered']
    #allocation24 [shape = 's32[1]{0}', space=sflag, size = 0x4, scoped, tag = 'scoped memory for nerf_forward.1']
    #allocation25 [shape = 'u8[131072]{0}', space=vmem, size = 0x20000, scoped, tag = 'input window, operand 14, single buffered']
    #allocation26 [shape = 'u8[1024]{0}', space=vmem, size = 0x400, scoped, tag = 'input window, operand 15, single buffered']
    #allocation27 [shape = 's32[1]{0}', space=sflag, size = 0x4, scoped, tag = 'scoped memory for nerf_forward.1']
    #allocation28 [shape = 'u8[131072]{0}', space=vmem, size = 0x20000, scoped, tag = 'input window, operand 16, single buffered']
    #allocation29 [shape = 'u8[1024]{0}', space=vmem, size = 0x400, scoped, tag = 'input window, operand 17, single buffered']
    #allocation30 [shape = 's32[1]{0}', space=sflag, size = 0x4, scoped, tag = 'scoped memory for nerf_forward.1']
    #allocation31 [shape = 'u8[196608]{0}', space=vmem, size = 0x30000, scoped, tag = 'input window, operand 18, single buffered']
    #allocation32 [shape = 'u8[1536]{0}', space=vmem, size = 0x800, scoped, tag = 'input window, operand 19, single buffered']
    #allocation33 [shape = 's32[1]{0}', space=sflag, size = 0x4, scoped, tag = 'scoped memory for nerf_forward.1']
    #allocation34 [shape = 'u8[65536]{0}', space=vmem, size = 0x10000, scoped, tag = 'input window, operand 20, single buffered']
    #allocation35 [shape = 'u8[32768]{0}', space=vmem, size = 0x8000, scoped, tag = 'input window, operand 21, single buffered']
    #allocation36 [shape = 's32[1]{0}', space=sflag, size = 0x4, scoped, tag = 'scoped memory for nerf_forward.1']
    #allocation37 [shape = 'u8[512]{0}', space=vmem, size = 0x400, scoped, tag = 'input window, operand 22, single buffered']
    #allocation38 [shape = 'u8[32768]{0}', space=vmem, size = 0x8000, scoped, tag = 'input window, operand 23, single buffered']
    #allocation39 [shape = 's32[1]{0}', space=sflag, size = 0x4, scoped, tag = 'scoped memory for nerf_forward.1']
    #allocation40 [shape = 'u8[512]{0}', space=vmem, size = 0x400, scoped, tag = 'input window, operand 24, single buffered']
    #allocation41 [shape = 'u8[524288]{0}', space=vmem, size = 0x80000, scoped, tag = 'output window, operand 0']
    %30 = vsyncpa [#allocation3], 0
    %s31 = scalar_lea.sflag [#allocation3], 1
    %32 = vsyncpa %s31, 0
    %33 = vsyncpa [#allocation6], 0
    %34 = vsyncpa [#allocation9], 0
    %35 = vsyncpa [#allocation12], 0
    %36 = vsyncpa [#allocation15], 0
    %37 = vsyncpa [#allocation18], 0
    %38 = vsyncpa [#allocation21], 0
    %39 = vsyncpa [#allocation24], 0
    %40 = vsyncpa [#allocation27], 0
    %41 = vsyncpa [#allocation30], 0
    %42 = vsyncpa [#allocation33], 0
    %43 = vsyncpa [#allocation36], 0
    %44 = vsyncpa [#allocation39], 0
    %45 = vsyncpa [#allocation4], 0
    %s46 = scalar_lea.sflag [#allocation4], 1
    %47 = vsyncpa %s46, 0
    loop: start=0, step=1, limit=6
    $region2: #{nerf_forward.1} parent=1 // loop_pre_header
      _
    $region3: #{nerf_forward.1} parent=1 // loop_header
      %s49 = sphi 0, %s53
      %p50 = scmp.ge.s32.totalorder %s49, 6
      %s59 = sphi 0, %s61
      %s62 = sphi 0, %s59
      %s63 = sphi 0, %s62
      %s79 = sphi 0, %s63
      %s83 = sphi 0, %s83
      %s85 = sphi 0, %s83
      %s86 = sphi 0, %s85
      %s100 = sphi 0, %s86
      %s104 = sphi 0, %s104
      %s106 = sphi 0, %s104
      %s107 = sphi 0, %s106
      %s121 = sphi 0, %s107
      %s125 = sphi 0, %s125
      %s127 = sphi 0, %s125
      %s128 = sphi 0, %s127
      %s142 = sphi 0, %s128
      %s146 = sphi 0, %s146
      %s148 = sphi 0, %s146
      %s149 = sphi 0, %s148
      %s163 = sphi 0, %s149
      %s167 = sphi 0, %s167
      %s169 = sphi 0, %s167
      %s170 = sphi 0, %s169
      %s184 = sphi 0, %s170
      %s188 = sphi 0, %s188
      %s190 = sphi 0, %s188
      %s191 = sphi 0, %s190
      %s205 = sphi 0, %s191
      %s209 = sphi 0, %s209
      %s211 = sphi 0, %s209
      %s212 = sphi 0, %s211
      %s226 = sphi 0, %s212
      %s230 = sphi 0, %s230
      %s232 = sphi 0, %s230
      %s233 = sphi 0, %s232
      %s247 = sphi 0, %s233
      %s251 = sphi 0, %s251
      %s253 = sphi 0, %s251
      %s254 = sphi 0, %s253
      %s268 = sphi 0, %s254
      %s272 = sphi 0, %s272
      %s274 = sphi 0, %s272
      %s275 = sphi 0, %s274
      %s289 = sphi 0, %s275
      %s293 = sphi 0, %s293
      %s295 = sphi 0, %s293
      %s296 = sphi 0, %s295
      %s310 = sphi 0, %s296
      %s314 = sphi 0, %s314
      %s316 = sphi 0, %s314
      %s317 = sphi 0, %s316
      %s331 = sphi 0, %s317
      %s335 = sphi 0, %s335
      %s337 = sphi 0, %s335
      %s338 = sphi 0, %s337
      %s352 = sphi 0, %s338
      %s356 = sphi 0, %s356
      %s358 = sphi 0, %s356
      %s359 = sphi 0, %s358
      %s373 = sphi 0, %s359
      %s377 = sphi 0, %s377
      %s379 = sphi 0, %s377
      %s380 = sphi 0, %s379
      %s394 = sphi 0, %s380
      %s398 = sphi 0, %s398
      %s400 = sphi 0, %s398
      %s401 = sphi 0, %s400
      %s415 = sphi 0, %s401
      %s419 = sphi 0, %s419
      %s421 = sphi 0, %s419
      %s422 = sphi 0, %s421
      %s436 = sphi 0, %s422
      %s440 = sphi 0, %s440
      %s442 = sphi 0, %s440
      %s443 = sphi 0, %s442
      %s457 = sphi 0, %s443
      %s461 = sphi 0, %s461
      %s463 = sphi 0, %s461
      %s464 = sphi 0, %s463
      %s478 = sphi 0, %s464
      %s482 = sphi 0, %s482
      %s484 = sphi 0, %s482
      %s485 = sphi 0, %s484
      %s499 = sphi 0, %s485
      %s503 = sphi 0, %s503
      %s505 = sphi 0, %s503
      %s506 = sphi 0, %s505
      %s520 = sphi 0, %s506
      %s524 = sphi 0, %s524
      %s526 = sphi 0, %s524
      %s527 = sphi 0, %s526
      %s541 = sphi 0, %s527
      %s545 = sphi 0, %s545
      %s547 = sphi 0, %s545
      %s548 = sphi 0, %s547
      %s562 = sphi 0, %s548
      %s566 = sphi 0, %s566
      %s568 = sphi 0, %s566
      %s569 = sphi 0, %s568
      %s583 = sphi 0, %s569
      %s589 = sphi 0, %s591
      %s592 = sphi 0, %s589
      %s593 = sphi 0, %s592
      %s609 = sphi 0, %s593
    $region4: #{nerf_forward.1} parent=1 // loop_header_branch
      %52 = sbr.rel (%p50) target = $region8
    $region5: #{nerf_forward.1} parent=1 // loop_body
      %s54 = ssub.s32 %s49, 1
      %s55 = ssub.s32 %s49, 2
      %s56 = sadd.s32 %s49, 1
      %s57 = ssub.s32 %s49, %s56
      %p58 = scmp.eq.s32.totalorder %s57, 0
      %s60 = sadd.s32 %s59, 1
      %s61 = scalar_select %p58, %s59, %s60
      %p64 = pneg %p58
      %p65 = scmp.eq.s32.totalorder %s49, 3
      %p66 = por %p64, %p65
      %p67 = scmp.ne.s32.totalorder %s59, %s62
      %p68 = scmp.eq.s32.totalorder %s49, 0
      %p69 = por %p67, %p68
      %p70 = scmp.ne.s32.totalorder %s59, %s62
      %p71 = scmp.eq.s32.totalorder %s54, 3
      %p72 = por %p70, %p71
      %p73 = scmp.ne.s32.totalorder %s62, %s63
      %p74 = scmp.eq.s32.totalorder %s54, 0
      %p75 = por %p73, %p74
      %p76 = scmp.ne.s32.totalorder %s62, %s63
      %p77 = scmp.eq.s32.totalorder %s55, 3
      %p78 = por %p76, %p77
      %p80 = scmp.ne.s32.totalorder %s63, %s79
      %p81 = scmp.eq.s32.totalorder %s55, 0
      %p82 = por %p80, %p81
      %s84 = sadd.s32 %s83, 1
      %p87 = scmp.eq.s32.totalorder %s49, 3
      %p88 = scmp.ne.s32.totalorder %s83, %s85
      %p89 = scmp.eq.s32.totalorder %s49, 0
      %p90 = por %p88, %p89
      %p91 = scmp.ne.s32.totalorder %s83, %s85
      %p92 = scmp.eq.s32.totalorder %s54, 3
      %p93 = por %p91, %p92
      %p94 = scmp.ne.s32.totalorder %s85, %s86
      %p95 = scmp.eq.s32.totalorder %s54, 0
      %p96 = por %p94, %p95
      %p97 = scmp.ne.s32.totalorder %s85, %s86
      %p98 = scmp.eq.s32.totalorder %s55, 3
      %p99 = por %p97, %p98
      %p101 = scmp.ne.s32.totalorder %s86, %s100
      %p102 = scmp.eq.s32.totalorder %s55, 0
      %p103 = por %p101, %p102
      %s105 = sadd.s32 %s104, 1
      %p108 = scmp.eq.s32.totalorder %s49, 3
      %p109 = scmp.ne.s32.totalorder %s104, %s106
      %p110 = scmp.eq.s32.totalorder %s49, 0
      %p111 = por %p109, %p110
      %p112 = scmp.ne.s32.totalorder %s104, %s106
      %p113 = scmp.eq.s32.totalorder %s54, 3
      %p114 = por %p112, %p113
      %p115 = scmp.ne.s32.totalorder %s106, %s107
      %p116 = scmp.eq.s32.totalorder %s54, 0
      %p117 = por %p115, %p116
      %p118 = scmp.ne.s32.totalorder %s106, %s107
      %p119 = scmp.eq.s32.totalorder %s55, 3
      %p120 = por %p118, %p119
      %p122 = scmp.ne.s32.totalorder %s107, %s121
      %p123 = scmp.eq.s32.totalorder %s55, 0
      %p124 = por %p122, %p123
      %s126 = sadd.s32 %s125, 1
      %p129 = scmp.eq.s32.totalorder %s49, 3
      %p130 = scmp.ne.s32.totalorder %s125, %s127
      %p131 = scmp.eq.s32.totalorder %s49, 0
      %p132 = por %p130, %p131
      %p133 = scmp.ne.s32.totalorder %s125, %s127
      %p134 = scmp.eq.s32.totalorder %s54, 3
      %p135 = por %p133, %p134
      %p136 = scmp.ne.s32.totalorder %s127, %s128
      %p137 = scmp.eq.s32.totalorder %s54, 0
      %p138 = por %p136, %p137
      %p139 = scmp.ne.s32.totalorder %s127, %s128
      %p140 = scmp.eq.s32.totalorder %s55, 3
      %p141 = por %p139, %p140
      %p143 = scmp.ne.s32.totalorder %s128, %s142
      %p144 = scmp.eq.s32.totalorder %s55, 0
      %p145 = por %p143, %p144
      %s147 = sadd.s32 %s146, 1
      %p150 = scmp.eq.s32.totalorder %s49, 3
      %p151 = scmp.ne.s32.totalorder %s146, %s148
      %p152 = scmp.eq.s32.totalorder %s49, 0
      %p153 = por %p151, %p152
      %p154 = scmp.ne.s32.totalorder %s146, %s148
      %p155 = scmp.eq.s32.totalorder %s54, 3
      %p156 = por %p154, %p155
      %p157 = scmp.ne.s32.totalorder %s148, %s149
      %p158 = scmp.eq.s32.totalorder %s54, 0
      %p159 = por %p157, %p158
      %p160 = scmp.ne.s32.totalorder %s148, %s149
      %p161 = scmp.eq.s32.totalorder %s55, 3
      %p162 = por %p160, %p161
      %p164 = scmp.ne.s32.totalorder %s149, %s163
      %p165 = scmp.eq.s32.totalorder %s55, 0
      %p166 = por %p164, %p165
      %s168 = sadd.s32 %s167, 1
      %p171 = scmp.eq.s32.totalorder %s49, 3
      %p172 = scmp.ne.s32.totalorder %s167, %s169
      %p173 = scmp.eq.s32.totalorder %s49, 0
      %p174 = por %p172, %p173
      %p175 = scmp.ne.s32.totalorder %s167, %s169
      %p176 = scmp.eq.s32.totalorder %s54, 3
      %p177 = por %p175, %p176
      %p178 = scmp.ne.s32.totalorder %s169, %s170
      %p179 = scmp.eq.s32.totalorder %s54, 0
      %p180 = por %p178, %p179
      %p181 = scmp.ne.s32.totalorder %s169, %s170
      %p182 = scmp.eq.s32.totalorder %s55, 3
      %p183 = por %p181, %p182
      %p185 = scmp.ne.s32.totalorder %s170, %s184
      %p186 = scmp.eq.s32.totalorder %s55, 0
      %p187 = por %p185, %p186
      %s189 = sadd.s32 %s188, 1
      %p192 = scmp.eq.s32.totalorder %s49, 3
      %p193 = scmp.ne.s32.totalorder %s188, %s190
      %p194 = scmp.eq.s32.totalorder %s49, 0
      %p195 = por %p193, %p194
      %p196 = scmp.ne.s32.totalorder %s188, %s190
      %p197 = scmp.eq.s32.totalorder %s54, 3
      %p198 = por %p196, %p197
      %p199 = scmp.ne.s32.totalorder %s190, %s191
      %p200 = scmp.eq.s32.totalorder %s54, 0
      %p201 = por %p199, %p200
      %p202 = scmp.ne.s32.totalorder %s190, %s191
      %p203 = scmp.eq.s32.totalorder %s55, 3
      %p204 = por %p202, %p203
      %p206 = scmp.ne.s32.totalorder %s191, %s205
      %p207 = scmp.eq.s32.totalorder %s55, 0
      %p208 = por %p206, %p207
      %s210 = sadd.s32 %s209, 1
      %p213 = scmp.eq.s32.totalorder %s49, 3
      %p214 = scmp.ne.s32.totalorder %s209, %s211
      %p215 = scmp.eq.s32.totalorder %s49, 0
      %p216 = por %p214, %p215
      %p217 = scmp.ne.s32.totalorder %s209, %s211
      %p218 = scmp.eq.s32.totalorder %s54, 3
      %p219 = por %p217, %p218
      %p220 = scmp.ne.s32.totalorder %s211, %s212
      %p221 = scmp.eq.s32.totalorder %s54, 0
      %p222 = por %p220, %p221
      %p223 = scmp.ne.s32.totalorder %s211, %s212
      %p224 = scmp.eq.s32.totalorder %s55, 3
      %p225 = por %p223, %p224
      %p227 = scmp.ne.s32.totalorder %s212, %s226
      %p228 = scmp.eq.s32.totalorder %s55, 0
      %p229 = por %p227, %p228
      %s231 = sadd.s32 %s230, 1
      %p234 = scmp.eq.s32.totalorder %s49, 3
      %p235 = scmp.ne.s32.totalorder %s230, %s232
      %p236 = scmp.eq.s32.totalorder %s49, 0
      %p237 = por %p235, %p236
      %p238 = scmp.ne.s32.totalorder %s230, %s232
      %p239 = scmp.eq.s32.totalorder %s54, 3
      %p240 = por %p238, %p239
      %p241 = scmp.ne.s32.totalorder %s232, %s233
      %p242 = scmp.eq.s32.totalorder %s54, 0
      %p243 = por %p241, %p242
      %p244 = scmp.ne.s32.totalorder %s232, %s233
      %p245 = scmp.eq.s32.totalorder %s55, 3
      %p246 = por %p244, %p245
      %p248 = scmp.ne.s32.totalorder %s233, %s247
      %p249 = scmp.eq.s32.totalorder %s55, 0
      %p250 = por %p248, %p249
      %s252 = sadd.s32 %s251, 1
      %p255 = scmp.eq.s32.totalorder %s49, 3
      %p256 = scmp.ne.s32.totalorder %s251, %s253
      %p257 = scmp.eq.s32.totalorder %s49, 0
      %p258 = por %p256, %p257
      %p259 = scmp.ne.s32.totalorder %s251, %s253
      %p260 = scmp.eq.s32.totalorder %s54, 3
      %p261 = por %p259, %p260
      %p262 = scmp.ne.s32.totalorder %s253, %s254
      %p263 = scmp.eq.s32.totalorder %s54, 0
      %p264 = por %p262, %p263
      %p265 = scmp.ne.s32.totalorder %s253, %s254
      %p266 = scmp.eq.s32.totalorder %s55, 3
      %p267 = por %p265, %p266
      %p269 = scmp.ne.s32.totalorder %s254, %s268
      %p270 = scmp.eq.s32.totalorder %s55, 0
      %p271 = por %p269, %p270
      %s273 = sadd.s32 %s272, 1
      %p276 = scmp.eq.s32.totalorder %s49, 3
      %p277 = scmp.ne.s32.totalorder %s272, %s274
      %p278 = scmp.eq.s32.totalorder %s49, 0
      %p279 = por %p277, %p278
      %p280 = scmp.ne.s32.totalorder %s272, %s274
      %p281 = scmp.eq.s32.totalorder %s54, 3
      %p282 = por %p280, %p281
      %p283 = scmp.ne.s32.totalorder %s274, %s275
      %p284 = scmp.eq.s32.totalorder %s54, 0
      %p285 = por %p283, %p284
      %p286 = scmp.ne.s32.totalorder %s274, %s275
      %p287 = scmp.eq.s32.totalorder %s55, 3
      %p288 = por %p286, %p287
      %p290 = scmp.ne.s32.totalorder %s275, %s289
      %p291 = scmp.eq.s32.totalorder %s55, 0
      %p292 = por %p290, %p291
      %s294 = sadd.s32 %s293, 1
      %p297 = scmp.eq.s32.totalorder %s49, 3
      %p298 = scmp.ne.s32.totalorder %s293, %s295
      %p299 = scmp.eq.s32.totalorder %s49, 0
      %p300 = por %p298, %p299
      %p301 = scmp.ne.s32.totalorder %s293, %s295
      %p302 = scmp.eq.s32.totalorder %s54, 3
      %p303 = por %p301, %p302
      %p304 = scmp.ne.s32.totalorder %s295, %s296
      %p305 = scmp.eq.s32.totalorder %s54, 0
      %p306 = por %p304, %p305
      %p307 = scmp.ne.s32.totalorder %s295, %s296
      %p308 = scmp.eq.s32.totalorder %s55, 3
      %p309 = por %p307, %p308
      %p311 = scmp.ne.s32.totalorder %s296, %s310
      %p312 = scmp.eq.s32.totalorder %s55, 0
      %p313 = por %p311, %p312
      %s315 = sadd.s32 %s314, 1
      %p318 = scmp.eq.s32.totalorder %s49, 3
      %p319 = scmp.ne.s32.totalorder %s314, %s316
      %p320 = scmp.eq.s32.totalorder %s49, 0
      %p321 = por %p319, %p320
      %p322 = scmp.ne.s32.totalorder %s314, %s316
      %p323 = scmp.eq.s32.totalorder %s54, 3
      %p324 = por %p322, %p323
      %p325 = scmp.ne.s32.totalorder %s316, %s317
      %p326 = scmp.eq.s32.totalorder %s54, 0
      %p327 = por %p325, %p326
      %p328 = scmp.ne.s32.totalorder %s316, %s317
      %p329 = scmp.eq.s32.totalorder %s55, 3
      %p330 = por %p328, %p329
      %p332 = scmp.ne.s32.totalorder %s317, %s331
      %p333 = scmp.eq.s32.totalorder %s55, 0
      %p334 = por %p332, %p333
      %s336 = sadd.s32 %s335, 1
      %p339 = scmp.eq.s32.totalorder %s49, 3
      %p340 = scmp.ne.s32.totalorder %s335, %s337
      %p341 = scmp.eq.s32.totalorder %s49, 0
      %p342 = por %p340, %p341
      %p343 = scmp.ne.s32.totalorder %s335, %s337
      %p344 = scmp.eq.s32.totalorder %s54, 3
      %p345 = por %p343, %p344
      %p346 = scmp.ne.s32.totalorder %s337, %s338
      %p347 = scmp.eq.s32.totalorder %s54, 0
      %p348 = por %p346, %p347
      %p349 = scmp.ne.s32.totalorder %s337, %s338
      %p350 = scmp.eq.s32.totalorder %s55, 3
      %p351 = por %p349, %p350
      %p353 = scmp.ne.s32.totalorder %s338, %s352
      %p354 = scmp.eq.s32.totalorder %s55, 0
      %p355 = por %p353, %p354
      %s357 = sadd.s32 %s356, 1
      %p360 = scmp.eq.s32.totalorder %s49, 3
      %p361 = scmp.ne.s32.totalorder %s356, %s358
      %p362 = scmp.eq.s32.totalorder %s49, 0
      %p363 = por %p361, %p362
      %p364 = scmp.ne.s32.totalorder %s356, %s358
      %p365 = scmp.eq.s32.totalorder %s54, 3
      %p366 = por %p364, %p365
      %p367 = scmp.ne.s32.totalorder %s358, %s359
      %p368 = scmp.eq.s32.totalorder %s54, 0
      %p369 = por %p367, %p368
      %p370 = scmp.ne.s32.totalorder %s358, %s359
      %p371 = scmp.eq.s32.totalorder %s55, 3
      %p372 = por %p370, %p371
      %p374 = scmp.ne.s32.totalorder %s359, %s373
      %p375 = scmp.eq.s32.totalorder %s55, 0
      %p376 = por %p374, %p375
      %s378 = sadd.s32 %s377, 1
      %p381 = scmp.eq.s32.totalorder %s49, 3
      %p382 = scmp.ne.s32.totalorder %s377, %s379
      %p383 = scmp.eq.s32.totalorder %s49, 0
      %p384 = por %p382, %p383
      %p385 = scmp.ne.s32.totalorder %s377, %s379
      %p386 = scmp.eq.s32.totalorder %s54, 3
      %p387 = por %p385, %p386
      %p388 = scmp.ne.s32.totalorder %s379, %s380
      %p389 = scmp.eq.s32.totalorder %s54, 0
      %p390 = por %p388, %p389
      %p391 = scmp.ne.s32.totalorder %s379, %s380
      %p392 = scmp.eq.s32.totalorder %s55, 3
      %p393 = por %p391, %p392
      %p395 = scmp.ne.s32.totalorder %s380, %s394
      %p396 = scmp.eq.s32.totalorder %s55, 0
      %p397 = por %p395, %p396
      %s399 = sadd.s32 %s398, 1
      %p402 = scmp.eq.s32.totalorder %s49, 3
      %p403 = scmp.ne.s32.totalorder %s398, %s400
      %p404 = scmp.eq.s32.totalorder %s49, 0
      %p405 = por %p403, %p404
      %p406 = scmp.ne.s32.totalorder %s398, %s400
      %p407 = scmp.eq.s32.totalorder %s54, 3
      %p408 = por %p406, %p407
      %p409 = scmp.ne.s32.totalorder %s400, %s401
      %p410 = scmp.eq.s32.totalorder %s54, 0
      %p411 = por %p409, %p410
      %p412 = scmp.ne.s32.totalorder %s400, %s401
      %p413 = scmp.eq.s32.totalorder %s55, 3
      %p414 = por %p412, %p413
      %p416 = scmp.ne.s32.totalorder %s401, %s415
      %p417 = scmp.eq.s32.totalorder %s55, 0
      %p418 = por %p416, %p417
      %s420 = sadd.s32 %s419, 1
      %p423 = scmp.eq.s32.totalorder %s49, 3
      %p424 = scmp.ne.s32.totalorder %s419, %s421
      %p425 = scmp.eq.s32.totalorder %s49, 0
      %p426 = por %p424, %p425
      %p427 = scmp.ne.s32.totalorder %s419, %s421
      %p428 = scmp.eq.s32.totalorder %s54, 3
      %p429 = por %p427, %p428
      %p430 = scmp.ne.s32.totalorder %s421, %s422
      %p431 = scmp.eq.s32.totalorder %s54, 0
      %p432 = por %p430, %p431
      %p433 = scmp.ne.s32.totalorder %s421, %s422
      %p434 = scmp.eq.s32.totalorder %s55, 3
      %p435 = por %p433, %p434
      %p437 = scmp.ne.s32.totalorder %s422, %s436
      %p438 = scmp.eq.s32.totalorder %s55, 0
      %p439 = por %p437, %p438
      %s441 = sadd.s32 %s440, 1
      %p444 = scmp.eq.s32.totalorder %s49, 3
      %p445 = scmp.ne.s32.totalorder %s440, %s442
      %p446 = scmp.eq.s32.totalorder %s49, 0
      %p447 = por %p445, %p446
      %p448 = scmp.ne.s32.totalorder %s440, %s442
      %p449 = scmp.eq.s32.totalorder %s54, 3
      %p450 = por %p448, %p449
      %p451 = scmp.ne.s32.totalorder %s442, %s443
      %p452 = scmp.eq.s32.totalorder %s54, 0
      %p453 = por %p451, %p452
      %p454 = scmp.ne.s32.totalorder %s442, %s443
      %p455 = scmp.eq.s32.totalorder %s55, 3
      %p456 = por %p454, %p455
      %p458 = scmp.ne.s32.totalorder %s443, %s457
      %p459 = scmp.eq.s32.totalorder %s55, 0
      %p460 = por %p458, %p459
      %s462 = sadd.s32 %s461, 1
      %p465 = scmp.eq.s32.totalorder %s49, 3
      %p466 = scmp.ne.s32.totalorder %s461, %s463
      %p467 = scmp.eq.s32.totalorder %s49, 0
      %p468 = por %p466, %p467
      %p469 = scmp.ne.s32.totalorder %s461, %s463
      %p470 = scmp.eq.s32.totalorder %s54, 3
      %p471 = por %p469, %p470
      %p472 = scmp.ne.s32.totalorder %s463, %s464
      %p473 = scmp.eq.s32.totalorder %s54, 0
      %p474 = por %p472, %p473
      %p475 = scmp.ne.s32.totalorder %s463, %s464
      %p476 = scmp.eq.s32.totalorder %s55, 3
      %p477 = por %p475, %p476
      %p479 = scmp.ne.s32.totalorder %s464, %s478
      %p480 = scmp.eq.s32.totalorder %s55, 0
      %p481 = por %p479, %p480
      %s483 = sadd.s32 %s482, 1
      %p486 = scmp.eq.s32.totalorder %s49, 3
      %p487 = scmp.ne.s32.totalorder %s482, %s484
      %p488 = scmp.eq.s32.totalorder %s49, 0
      %p489 = por %p487, %p488
      %p490 = scmp.ne.s32.totalorder %s482, %s484
      %p491 = scmp.eq.s32.totalorder %s54, 3
      %p492 = por %p490, %p491
      %p493 = scmp.ne.s32.totalorder %s484, %s485
      %p494 = scmp.eq.s32.totalorder %s54, 0
      %p495 = por %p493, %p494
      %p496 = scmp.ne.s32.totalorder %s484, %s485
      %p497 = scmp.eq.s32.totalorder %s55, 3
      %p498 = por %p496, %p497
      %p500 = scmp.ne.s32.totalorder %s485, %s499
      %p501 = scmp.eq.s32.totalorder %s55, 0
      %p502 = por %p500, %p501
      %s504 = sadd.s32 %s503, 1
      %p507 = scmp.eq.s32.totalorder %s49, 3
      %p508 = scmp.ne.s32.totalorder %s503, %s505
      %p509 = scmp.eq.s32.totalorder %s49, 0
      %p510 = por %p508, %p509
      %p511 = scmp.ne.s32.totalorder %s503, %s505
      %p512 = scmp.eq.s32.totalorder %s54, 3
      %p513 = por %p511, %p512
      %p514 = scmp.ne.s32.totalorder %s505, %s506
      %p515 = scmp.eq.s32.totalorder %s54, 0
      %p516 = por %p514, %p515
      %p517 = scmp.ne.s32.totalorder %s505, %s506
      %p518 = scmp.eq.s32.totalorder %s55, 3
      %p519 = por %p517, %p518
      %p521 = scmp.ne.s32.totalorder %s506, %s520
      %p522 = scmp.eq.s32.totalorder %s55, 0
      %p523 = por %p521, %p522
      %s525 = sadd.s32 %s524, 1
      %p528 = scmp.eq.s32.totalorder %s49, 3
      %p529 = scmp.ne.s32.totalorder %s524, %s526
      %p530 = scmp.eq.s32.totalorder %s49, 0
      %p531 = por %p529, %p530
      %p532 = scmp.ne.s32.totalorder %s524, %s526
      %p533 = scmp.eq.s32.totalorder %s54, 3
      %p534 = por %p532, %p533
      %p535 = scmp.ne.s32.totalorder %s526, %s527
      %p536 = scmp.eq.s32.totalorder %s54, 0
      %p537 = por %p535, %p536
      %p538 = scmp.ne.s32.totalorder %s526, %s527
      %p539 = scmp.eq.s32.totalorder %s55, 3
      %p540 = por %p538, %p539
      %p542 = scmp.ne.s32.totalorder %s527, %s541
      %p543 = scmp.eq.s32.totalorder %s55, 0
      %p544 = por %p542, %p543
      %s546 = sadd.s32 %s545, 1
      %p549 = scmp.eq.s32.totalorder %s49, 3
      %p550 = scmp.ne.s32.totalorder %s545, %s547
      %p551 = scmp.eq.s32.totalorder %s49, 0
      %p552 = por %p550, %p551
      %p553 = scmp.ne.s32.totalorder %s545, %s547
      %p554 = scmp.eq.s32.totalorder %s54, 3
      %p555 = por %p553, %p554
      %p556 = scmp.ne.s32.totalorder %s547, %s548
      %p557 = scmp.eq.s32.totalorder %s54, 0
      %p558 = por %p556, %p557
      %p559 = scmp.ne.s32.totalorder %s547, %s548
      %p560 = scmp.eq.s32.totalorder %s55, 3
      %p561 = por %p559, %p560
      %p563 = scmp.ne.s32.totalorder %s548, %s562
      %p564 = scmp.eq.s32.totalorder %s55, 0
      %p565 = por %p563, %p564
      %s567 = sadd.s32 %s566, 1
      %p570 = scmp.eq.s32.totalorder %s49, 3
      %p571 = scmp.ne.s32.totalorder %s566, %s568
      %p572 = scmp.eq.s32.totalorder %s49, 0
      %p573 = por %p571, %p572
      %p574 = scmp.ne.s32.totalorder %s566, %s568
      %p575 = scmp.eq.s32.totalorder %s54, 3
      %p576 = por %p574, %p575
      %p577 = scmp.ne.s32.totalorder %s568, %s569
      %p578 = scmp.eq.s32.totalorder %s54, 0
      %p579 = por %p577, %p578
      %p580 = scmp.ne.s32.totalorder %s568, %s569
      %p581 = scmp.eq.s32.totalorder %s55, 3
      %p582 = por %p580, %p581
      %p584 = scmp.ne.s32.totalorder %s569, %s583
      %p585 = scmp.eq.s32.totalorder %s55, 0
      %p586 = por %p584, %p585
      %s587 = ssub.s32 %s49, %s56
      %p588 = scmp.eq.s32.totalorder %s587, 0
      %s590 = sadd.s32 %s589, 1
      %s591 = scalar_select %p588, %s589, %s590
      %p594 = pneg %p588
      %p595 = scmp.eq.s32.totalorder %s49, 3
      %p596 = por %p594, %p595
      %p597 = scmp.ne.s32.totalorder %s589, %s592
      %p598 = scmp.eq.s32.totalorder %s49, 0
      %p599 = por %p597, %p598
      %p600 = scmp.ne.s32.totalorder %s589, %s592
      %p601 = scmp.eq.s32.totalorder %s54, 3
      %p602 = por %p600, %p601
      %p603 = scmp.ne.s32.totalorder %s592, %s593
      %p604 = scmp.eq.s32.totalorder %s54, 0
      %p605 = por %p603, %p604
      %p606 = scmp.ne.s32.totalorder %s592, %s593
      %p607 = scmp.eq.s32.totalorder %s55, 3
      %p608 = por %p606, %p607
      %p610 = scmp.ne.s32.totalorder %s593, %s609
      %p611 = scmp.eq.s32.totalorder %s55, 0
      %p612 = por %p610, %p611
      %p613 = scmp.le.s32.totalorder 1, %s49
      %p614 = scmp.lt.s32.totalorder %s49, 5
      %p615 = pnand %p613, %p614
      %p616 = pneg %p615
      // Predicated region
      $region9: #{nerf_forward.1} parent=5 // pred_check
        _
      $region10: #{nerf_forward.1} parent=5 // pred_check_branch
        %618 = sbr.rel (%p615) target = $region12
      $region11: #{nerf_forward.1} parent=5 // pred_region
        %s619 = ssub.s32 %s49, 1
        // Predicated region
        $region13: #{nerf_forward.1} parent=11 // pred_check
          %p620 = pneg %p96
        $region14: #{nerf_forward.1} parent=11 // pred_check_branch
          %622 = sbr.rel (%p620) target = $region16
        $region15: #{nerf_forward.1} parent=11 // pred_region
          %s624 = ssub.s32 2048, 2048
          %625 = vsyncadd [#allocation6], %s624
          %s626 = sshll.u32 [#allocation5], 4
          %s627 = int_to_ptr.vmem [resolvable:$true] %s626
          %632 = dma.hbm_to_vmem [thread:$0]  %s1, 2048, %s627, [#allocation6], 128, 128, 8
        $region16: #{nerf_forward.1} parent=11 // pred_fallthru
          _
        // Predicated region
        $region17: #{nerf_forward.1} parent=11 // pred_check
          %p633 = pneg %p117
        $region18: #{nerf_forward.1} parent=11 // pred_check_branch
          %635 = sbr.rel (%p633) target = $region20
        $region19: #{nerf_forward.1} parent=11 // pred_region
          %s637 = ssub.s32 32, 32
          %638 = vsyncadd [#allocation6], %s637
          %s640 = sshll.u32 [#allocation7], 4
          %s641 = int_to_ptr.vmem [resolvable:$true] %s640
          %643 = dma.hbm_to_vmem [thread:$0]  %s2, 32, %s641, [#allocation6]
        $region20: #{nerf_forward.1} parent=11 // pred_fallthru
          _
        // Predicated region
        $region21: #{nerf_forward.1} parent=11 // pred_check
          %p644 = pneg %p138
        $region22: #{nerf_forward.1} parent=11 // pred_check_branch
          %646 = sbr.rel (%p644) target = $region24
        $region23: #{nerf_forward.1} parent=11 // pred_region
          %s648 = ssub.s32 4096, 4096
          %649 = vsyncadd [#allocation9], %s648
          %s650 = sshll.u32 [#allocation8], 4
          %s651 = int_to_ptr.vmem [resolvable:$true] %s650
          %656 = dma.hbm_to_vmem [thread:$0]  %s3, 4096, %s651, [#allocation9], 128, 128, 8
        $region24: #{nerf_forward.1} parent=11 // pred_fallthru
          _
        // Predicated region
        $region25: #{nerf_forward.1} parent=11 // pred_check
          %p657 = pneg %p159
        $region26: #{nerf_forward.1} parent=11 // pred_check_branch
          %659 = sbr.rel (%p657) target = $region28
        $region27: #{nerf_forward.1} parent=11 // pred_region
          %s661 = ssub.s32 32, 32
          %662 = vsyncadd [#allocation9], %s661
          %s664 = sshll.u32 [#allocation10], 4
          %s665 = int_to_ptr.vmem [resolvable:$true] %s664
          %667 = dma.hbm_to_vmem [thread:$0]  %s4, 32, %s665, [#allocation9]
        $region28: #{nerf_forward.1} parent=11 // pred_fallthru
          _
        // Predicated region
        $region29: #{nerf_forward.1} parent=11 // pred_check
          %p668 = pneg %p180
        $region30: #{nerf_forward.1} parent=11 // pred_check_branch
          %670 = sbr.rel (%p668) target = $region32
        $region31: #{nerf_forward.1} parent=11 // pred_region
          %s672 = ssub.s32 4096, 4096
          %673 = vsyncadd [#allocation12], %s672
          %s674 = sshll.u32 [#allocation11], 4
          %s675 = int_to_ptr.vmem [resolvable:$true] %s674
          %680 = dma.hbm_to_vmem [thread:$0]  %s5, 4096, %s675, [#allocation12], 128, 128, 8
        $region32: #{nerf_forward.1} parent=11 // pred_fallthru
          _
        // Predicated region
        $region33: #{nerf_forward.1} parent=11 // pred_check
          %p681 = pneg %p201
        $region34: #{nerf_forward.1} parent=11 // pred_check_branch
          %683 = sbr.rel (%p681) target = $region36
        $region35: #{nerf_forward.1} parent=11 // pred_region
          %s685 = ssub.s32 32, 32
          %686 = vsyncadd [#allocation12], %s685
          %s688 = sshll.u32 [#allocation13], 4
          %s689 = int_to_ptr.vmem [resolvable:$true] %s688
          %691 = dma.hbm_to_vmem [thread:$0]  %s6, 32, %s689, [#allocation12]
        $region36: #{nerf_forward.1} parent=11 // pred_fallthru
          _
        // Predicated region
        $region37: #{nerf_forward.1} parent=11 // pred_check
          %p692 = pneg %p222
        $region38: #{nerf_forward.1} parent=11 // pred_check_branch
          %694 = sbr.rel (%p692) target = $region40
        $region39: #{nerf_forward.1} parent=11 // pred_region
          %s696 = ssub.s32 4096, 4096
          %697 = vsyncadd [#allocation15], %s696
          %s698 = sshll.u32 [#allocation14], 4
          %s699 = int_to_ptr.vmem [resolvable:$true] %s698
          %704 = dma.hbm_to_vmem [thread:$0]  %s7, 4096, %s699, [#allocation15], 128, 128, 8
        $region40: #{nerf_forward.1} parent=11 // pred_fallthru
          _
        // Predicated region
        $region41: #{nerf_forward.1} parent=11 // pred_check
          %p705 = pneg %p243
        $region42: #{nerf_forward.1} parent=11 // pred_check_branch
          %707 = sbr.rel (%p705) target = $region44
        $region43: #{nerf_forward.1} parent=11 // pred_region
          %s709 = ssub.s32 32, 32
          %710 = vsyncadd [#allocation15], %s709
          %s712 = sshll.u32 [#allocation16], 4
          %s713 = int_to_ptr.vmem [resolvable:$true] %s712
          %715 = dma.hbm_to_vmem [thread:$0]  %s8, 32, %s713, [#allocation15]
        $region44: #{nerf_forward.1} parent=11 // pred_fallthru
          _
        // Predicated region
        $region45: #{nerf_forward.1} parent=11 // pred_check
          %p716 = pneg %p264
        $region46: #{nerf_forward.1} parent=11 // pred_check_branch
          %718 = sbr.rel (%p716) target = $region48
        $region47: #{nerf_forward.1} parent=11 // pred_region
          %s720 = ssub.s32 4096, 4096
          %721 = vsyncadd [#allocation18], %s720
          %s722 = sshll.u32 [#allocation17], 4
          %s723 = int_to_ptr.vmem [resolvable:$true] %s722
          %728 = dma.hbm_to_vmem [thread:$0]  %s9, 4096, %s723, [#allocation18], 128, 128, 8
        $region48: #{nerf_forward.1} parent=11 // pred_fallthru
          _
        // Predicated region
        $region49: #{nerf_forward.1} parent=11 // pred_check
          %p729 = pneg %p285
        $region50: #{nerf_forward.1} parent=11 // pred_check_branch
          %731 = sbr.rel (%p729) target = $region52
        $region51: #{nerf_forward.1} parent=11 // pred_region
          %s733 = ssub.s32 32, 32
          %734 = vsyncadd [#allocation18], %s733
          %s736 = sshll.u32 [#allocation19], 4
          %s737 = int_to_ptr.vmem [resolvable:$true] %s736
          %739 = dma.hbm_to_vmem [thread:$0]  %s10, 32, %s737, [#allocation18]
        $region52: #{nerf_forward.1} parent=11 // pred_fallthru
          _
        // Predicated region
        $region53: #{nerf_forward.1} parent=11 // pred_check
          %p740 = pneg %p306
        $region54: #{nerf_forward.1} parent=11 // pred_check_branch
          %742 = sbr.rel (%p740) target = $region56
        $region55: #{nerf_forward.1} parent=11 // pred_region
          %s744 = ssub.s32 4096, 4096
          %745 = vsyncadd [#allocation21], %s744
          %s746 = sshll.u32 [#allocation20], 4
          %s747 = int_to_ptr.vmem [resolvable:$true] %s746
          %752 = dma.hbm_to_vmem [thread:$0]  %s11, 4096, %s747, [#allocation21], 128, 128, 8
        $region56: #{nerf_forward.1} parent=11 // pred_fallthru
          _
        // Predicated region
        $region57: #{nerf_forward.1} parent=11 // pred_check
          %p753 = pneg %p327
        $region58: #{nerf_forward.1} parent=11 // pred_check_branch
          %755 = sbr.rel (%p753) target = $region60
        $region59: #{nerf_forward.1} parent=11 // pred_region
          %s757 = ssub.s32 2048, 2048
          %758 = vsyncadd [#allocation21], %s757
          %s759 = sshll.u32 [#allocation22], 4
          %s760 = int_to_ptr.vmem [resolvable:$true] %s759
          %765 = dma.hbm_to_vmem [thread:$0]  %s12, 2048, %s760, [#allocation21], 128, 128, 8
        $region60: #{nerf_forward.1} parent=11 // pred_fallthru
          _
        // Predicated region
        $region61: #{nerf_forward.1} parent=11 // pred_check
          %p766 = pneg %p348
        $region62: #{nerf_forward.1} parent=11 // pred_check_branch
          %768 = sbr.rel (%p766) target = $region64
        $region63: #{nerf_forward.1} parent=11 // pred_region
          %s770 = ssub.s32 32, 32
          %771 = vsyncadd [#allocation24], %s770
          %s773 = sshll.u32 [#allocation23], 4
          %s774 = int_to_ptr.vmem [resolvable:$true] %s773
          %776 = dma.hbm_to_vmem [thread:$0]  %s13, 32, %s774, [#allocation24]
        $region64: #{nerf_forward.1} parent=11 // pred_fallthru
          _
        // Predicated region
        $region65: #{nerf_forward.1} parent=11 // pred_check
          %p777 = pneg %p369
        $region66: #{nerf_forward.1} parent=11 // pred_check_branch
          %779 = sbr.rel (%p777) target = $region68
        $region67: #{nerf_forward.1} parent=11 // pred_region
          %s781 = ssub.s32 4096, 4096
          %782 = vsyncadd [#allocation24], %s781
          %s783 = sshll.u32 [#allocation25], 4
          %s784 = int_to_ptr.vmem [resolvable:$true] %s783
          %789 = dma.hbm_to_vmem [thread:$0]  %s14, 4096, %s784, [#allocation24], 128, 128, 8
        $region68: #{nerf_forward.1} parent=11 // pred_fallthru
          _
        // Predicated region
        $region69: #{nerf_forward.1} parent=11 // pred_check
          %p790 = pneg %p390
        $region70: #{nerf_forward.1} parent=11 // pred_check_branch
          %792 = sbr.rel (%p790) target = $region72
        $region71: #{nerf_forward.1} parent=11 // pred_region
          %s794 = ssub.s32 32, 32
          %795 = vsyncadd [#allocation27], %s794
          %s797 = sshll.u32 [#allocation26], 4
          %s798 = int_to_ptr.vmem [resolvable:$true] %s797
          %800 = dma.hbm_to_vmem [thread:$0]  %s15, 32, %s798, [#allocation27]
        $region72: #{nerf_forward.1} parent=11 // pred_fallthru
          _
        // Predicated region
        $region73: #{nerf_forward.1} parent=11 // pred_check
          %p801 = pneg %p411
        $region74: #{nerf_forward.1} parent=11 // pred_check_branch
          %803 = sbr.rel (%p801) target = $region76
        $region75: #{nerf_forward.1} parent=11 // pred_region
          %s805 = ssub.s32 4096, 4096
          %806 = vsyncadd [#allocation27], %s805
          %s807 = sshll.u32 [#allocation28], 4
          %s808 = int_to_ptr.vmem [resolvable:$true] %s807
          %813 = dma.hbm_to_vmem [thread:$0]  %s16, 4096, %s808, [#allocation27], 128, 128, 8
        $region76: #{nerf_forward.1} parent=11 // pred_fallthru
          _
        // Predicated region
        $region77: #{nerf_forward.1} parent=11 // pred_check
          %p814 = pneg %p432
        $region78: #{nerf_forward.1} parent=11 // pred_check_branch
          %816 = sbr.rel (%p814) target = $region80
        $region79: #{nerf_forward.1} parent=11 // pred_region
          %s818 = ssub.s32 32, 32
          %819 = vsyncadd [#allocation30], %s818
          %s821 = sshll.u32 [#allocation29], 4
          %s822 = int_to_ptr.vmem [resolvable:$true] %s821
          %824 = dma.hbm_to_vmem [thread:$0]  %s17, 32, %s822, [#allocation30]
        $region80: #{nerf_forward.1} parent=11 // pred_fallthru
          _
        // Predicated region
        $region81: #{nerf_forward.1} parent=11 // pred_check
          %p825 = pneg %p453
        $region82: #{nerf_forward.1} parent=11 // pred_check_branch
          %827 = sbr.rel (%p825) target = $region84
        $region83: #{nerf_forward.1} parent=11 // pred_region
          %s829 = ssub.s32 6144, 6144
          %830 = vsyncadd [#allocation30], %s829
          %s831 = sshll.u32 [#allocation31], 4
          %s832 = int_to_ptr.vmem [resolvable:$true] %s831
          %837 = dma.hbm_to_vmem [thread:$0]  %s18, 6144, %s832, [#allocation30], 192, 192, 12
        $region84: #{nerf_forward.1} parent=11 // pred_fallthru
          _
        // Predicated region
        $region85: #{nerf_forward.1} parent=11 // pred_check
          %p838 = pneg %p474
        $region86: #{nerf_forward.1} parent=11 // pred_check_branch
          %840 = sbr.rel (%p838) target = $region88
        $region87: #{nerf_forward.1} parent=11 // pred_region
          %s842 = ssub.s32 48, 48
          %843 = vsyncadd [#allocation33], %s842
          %s845 = sshll.u32 [#allocation32], 4
          %s846 = int_to_ptr.vmem [resolvable:$true] %s845
          %848 = dma.hbm_to_vmem [thread:$0]  %s19, 48, %s846, [#allocation33]
        $region88: #{nerf_forward.1} parent=11 // pred_fallthru
          _
        // Predicated region
        $region89: #{nerf_forward.1} parent=11 // pred_check
          %p849 = pneg %p495
        $region90: #{nerf_forward.1} parent=11 // pred_check_branch
          %851 = sbr.rel (%p849) target = $region92
        $region91: #{nerf_forward.1} parent=11 // pred_region
          %s853 = ssub.s32 2048, 2048
          %854 = vsyncadd [#allocation33], %s853
          %s855 = sshll.u32 [#allocation34], 4
          %s856 = int_to_ptr.vmem [resolvable:$true] %s855
          %861 = dma.hbm_to_vmem [thread:$0]  %s20, 2048, %s856, [#allocation33], 64, 64, 4
        $region92: #{nerf_forward.1} parent=11 // pred_fallthru
          _
        // Predicated region
        $region93: #{nerf_forward.1} parent=11 // pred_check
          %p862 = pneg %p516
        $region94: #{nerf_forward.1} parent=11 // pred_check_branch
          %864 = sbr.rel (%p862) target = $region96
        $region95: #{nerf_forward.1} parent=11 // pred_region
          %s866 = ssub.s32 1024, 1024
          %867 = vsyncadd [#allocation36], %s866
          %s868 = sshll.u32 [#allocation35], 4
          %s869 = int_to_ptr.vmem [resolvable:$true] %s868
          %874 = dma.hbm_to_vmem [thread:$0]  %s21, 1024, %s869, [#allocation36], 64, 64, 4
        $region96: #{nerf_forward.1} parent=11 // pred_fallthru
          _
        // Predicated region
        $region97: #{nerf_forward.1} parent=11 // pred_check
          %p875 = pneg %p537
        $region98: #{nerf_forward.1} parent=11 // pred_check_branch
          %877 = sbr.rel (%p875) target = $region100
        $region99: #{nerf_forward.1} parent=11 // pred_region
          %s879 = ssub.s32 16, 16
          %880 = vsyncadd [#allocation36], %s879
          %s882 = sshll.u32 [#allocation37], 4
          %s883 = int_to_ptr.vmem [resolvable:$true] %s882
          %885 = dma.hbm_to_vmem [thread:$0]  %s22, 16, %s883, [#allocation36]
        $region100: #{nerf_forward.1} parent=11 // pred_fallthru
          _
        // Predicated region
        $region101: #{nerf_forward.1} parent=11 // pred_check
          %p886 = pneg %p558
        $region102: #{nerf_forward.1} parent=11 // pred_check_branch
          %888 = sbr.rel (%p886) target = $region104
        $region103: #{nerf_forward.1} parent=11 // pred_region
          %s890 = ssub.s32 1024, 1024
          %891 = vsyncadd [#allocation39], %s890
          %s892 = sshll.u32 [#allocation38], 4
          %s893 = int_to_ptr.vmem [resolvable:$true] %s892
          %898 = dma.hbm_to_vmem [thread:$0]  %s23, 1024, %s893, [#allocation39], 64, 64, 4
        $region104: #{nerf_forward.1} parent=11 // pred_fallthru
          _
        // Predicated region
        $region105: #{nerf_forward.1} parent=11 // pred_check
          %p899 = pneg %p579
        $region106: #{nerf_forward.1} parent=11 // pred_check_branch
          %901 = sbr.rel (%p899) target = $region108
        $region107: #{nerf_forward.1} parent=11 // pred_region
          %s903 = ssub.s32 16, 16
          %904 = vsyncadd [#allocation39], %s903
          %s906 = sshll.u32 [#allocation40], 4
          %s907 = int_to_ptr.vmem [resolvable:$true] %s906
          %909 = dma.hbm_to_vmem [thread:$0]  %s24, 16, %s907, [#allocation39]
        $region108: #{nerf_forward.1} parent=11 // pred_fallthru
          _
      $region12: #{nerf_forward.1} parent=5 // pred_fallthru
        _
      %p910 = scmp.lt.s32.totalorder %s49, 4
      // Predicated region
      $region109: #{nerf_forward.1} parent=5 // pred_check
        %p911 = pneg %p910
      $region110: #{nerf_forward.1} parent=5 // pred_check_branch
        %913 = sbr.rel (%p911) target = $region112
      $region111: #{nerf_forward.1} parent=5 // pred_region
        // Predicated region
        $region113: #{nerf_forward.1} parent=111 // pred_check
          %p914 = pneg %p69
        $region114: #{nerf_forward.1} parent=111 // pred_check_branch
          %916 = sbr.rel (%p914) target = $region116
        $region115: #{nerf_forward.1} parent=111 // pred_region
          %s917 = sand.u32 %s59, 1
          %s918 = scalar_lea.sflag [#allocation3], %s917
          %s919 = sand.u32 %s59, 1
          %s920 = smul.addr %s919, 512
          %s921 = scalar_lea.vmem [#allocation2], %s920
          %s922 = smul.u32 64, %s49
          %s924 = ssub.s32 8192, 8192
          %925 = vsyncadd %s918, %s924
          %s926 = smul.addr %s922, 128
          %s927 = scalar_lea.hbm %s0, %s926
          %s928 = sshll.u32 %s921, 4
          %s929 = int_to_ptr.vmem [resolvable:$true] %s928
          %934 = dma.hbm_to_vmem [thread:$0]  %s927, 8192, %s929, %s918, 128, 128, 8
        $region116: #{nerf_forward.1} parent=111 // pred_fallthru
          _
      $region112: #{nerf_forward.1} parent=5 // pred_fallthru
        _
      %p935 = scmp.le.s32.totalorder 1, %s49
      %p936 = scmp.lt.s32.totalorder %s49, 5
      %p937 = pnand %p935, %p936
      %p938 = pneg %p937
      // Predicated region
      $region117: #{nerf_forward.1} parent=5 // pred_check
        _
      $region118: #{nerf_forward.1} parent=5 // pred_check_branch
        %940 = sbr.rel (%p937) target = $region120
      $region119: #{nerf_forward.1} parent=5 // pred_region
        %s941 = ssub.s32 %s49, 1
        %s942 = sand.u32 %s62, 1
        %s943 = scalar_lea.sflag [#allocation3], %s942
        %s944 = sand.u32 %s62, 1
        %s945 = smul.addr %s944, 512
        %s946 = scalar_lea.vmem [#allocation2], %s945
        // Predicated region
        $region121: #{nerf_forward.1} parent=119 // pred_check
          %p947 = pneg %p75
        $region122: #{nerf_forward.1} parent=119 // pred_check_branch
          %949 = sbr.rel (%p947) target = $region124
        $region123: #{nerf_forward.1} parent=119 // pred_region
          %950 = dma.done %s943, 8192
        $region124: #{nerf_forward.1} parent=119 // pred_fallthru
          _
        // Predicated region
        $region125: #{nerf_forward.1} parent=119 // pred_check
          %p951 = pneg %p96
        $region126: #{nerf_forward.1} parent=119 // pred_check_branch
          %953 = sbr.rel (%p951) target = $region128
        $region127: #{nerf_forward.1} parent=119 // pred_region
          %954 = dma.done [#allocation6], 2048
        $region128: #{nerf_forward.1} parent=119 // pred_fallthru
          _
        // Predicated region
        $region129: #{nerf_forward.1} parent=119 // pred_check
          %p955 = pneg %p117
        $region130: #{nerf_forward.1} parent=119 // pred_check_branch
          %957 = sbr.rel (%p955) target = $region132
        $region131: #{nerf_forward.1} parent=119 // pred_region
          %958 = dma.done [#allocation6], 32
        $region132: #{nerf_forward.1} parent=119 // pred_fallthru
          _
        // Predicated region
        $region133: #{nerf_forward.1} parent=119 // pred_check
          %p959 = pneg %p138
        $region134: #{nerf_forward.1} parent=119 // pred_check_branch
          %961 = sbr.rel (%p959) target = $region136
        $region135: #{nerf_forward.1} parent=119 // pred_region
          %962 = dma.done [#allocation9], 4096
        $region136: #{nerf_forward.1} parent=119 // pred_fallthru
          _
        // Predicated region
        $region137: #{nerf_forward.1} parent=119 // pred_check
          %p963 = pneg %p159
        $region138: #{nerf_forward.1} parent=119 // pred_check_branch
          %965 = sbr.rel (%p963) target = $region140
        $region139: #{nerf_forward.1} parent=119 // pred_region
          %966 = dma.done [#allocation9], 32
        $region140: #{nerf_forward.1} parent=119 // pred_fallthru
          _
        // Predicated region
        $region141: #{nerf_forward.1} parent=119 // pred_check
          %p967 = pneg %p180
        $region142: #{nerf_forward.1} parent=119 // pred_check_branch
          %969 = sbr.rel (%p967) target = $region144
        $region143: #{nerf_forward.1} parent=119 // pred_region
          %970 = dma.done [#allocation12], 4096
        $region144: #{nerf_forward.1} parent=119 // pred_fallthru
          _
        // Predicated region
        $region145: #{nerf_forward.1} parent=119 // pred_check
          %p971 = pneg %p201
        $region146: #{nerf_forward.1} parent=119 // pred_check_branch
          %973 = sbr.rel (%p971) target = $region148
        $region147: #{nerf_forward.1} parent=119 // pred_region
          %974 = dma.done [#allocation12], 32
        $region148: #{nerf_forward.1} parent=119 // pred_fallthru
          _
        // Predicated region
        $region149: #{nerf_forward.1} parent=119 // pred_check
          %p975 = pneg %p222
        $region150: #{nerf_forward.1} parent=119 // pred_check_branch
          %977 = sbr.rel (%p975) target = $region152
        $region151: #{nerf_forward.1} parent=119 // pred_region
          %978 = dma.done [#allocation15], 4096
        $region152: #{nerf_forward.1} parent=119 // pred_fallthru
          _
        // Predicated region
        $region153: #{nerf_forward.1} parent=119 // pred_check
          %p979 = pneg %p243
        $region154: #{nerf_forward.1} parent=119 // pred_check_branch
          %981 = sbr.rel (%p979) target = $region156
        $region155: #{nerf_forward.1} parent=119 // pred_region
          %982 = dma.done [#allocation15], 32
        $region156: #{nerf_forward.1} parent=119 // pred_fallthru
          _
        // Predicated region
        $region157: #{nerf_forward.1} parent=119 // pred_check
          %p983 = pneg %p264
        $region158: #{nerf_forward.1} parent=119 // pred_check_branch
          %985 = sbr.rel (%p983) target = $region160
        $region159: #{nerf_forward.1} parent=119 // pred_region
          %986 = dma.done [#allocation18], 4096
        $region160: #{nerf_forward.1} parent=119 // pred_fallthru
          _
        // Predicated region
        $region161: #{nerf_forward.1} parent=119 // pred_check
          %p987 = pneg %p285
        $region162: #{nerf_forward.1} parent=119 // pred_check_branch
          %989 = sbr.rel (%p987) target = $region164
        $region163: #{nerf_forward.1} parent=119 // pred_region
          %990 = dma.done [#allocation18], 32
        $region164: #{nerf_forward.1} parent=119 // pred_fallthru
          _
        // Predicated region
        $region165: #{nerf_forward.1} parent=119 // pred_check
          %p991 = pneg %p306
        $region166: #{nerf_forward.1} parent=119 // pred_check_branch
          %993 = sbr.rel (%p991) target = $region168
        $region167: #{nerf_forward.1} parent=119 // pred_region
          %994 = dma.done [#allocation21], 4096
        $region168: #{nerf_forward.1} parent=119 // pred_fallthru
          _
        // Predicated region
        $region169: #{nerf_forward.1} parent=119 // pred_check
          %p995 = pneg %p327
        $region170: #{nerf_forward.1} parent=119 // pred_check_branch
          %997 = sbr.rel (%p995) target = $region172
        $region171: #{nerf_forward.1} parent=119 // pred_region
          %998 = dma.done [#allocation21], 2048
        $region172: #{nerf_forward.1} parent=119 // pred_fallthru
          _
        // Predicated region
        $region173: #{nerf_forward.1} parent=119 // pred_check
          %p999 = pneg %p348
        $region174: #{nerf_forward.1} parent=119 // pred_check_branch
          %1001 = sbr.rel (%p999) target = $region176
        $region175: #{nerf_forward.1} parent=119 // pred_region
          %1002 = dma.done [#allocation24], 32
        $region176: #{nerf_forward.1} parent=119 // pred_fallthru
          _
        // Predicated region
        $region177: #{nerf_forward.1} parent=119 // pred_check
          %p1003 = pneg %p369
        $region178: #{nerf_forward.1} parent=119 // pred_check_branch
          %1005 = sbr.rel (%p1003) target = $region180
        $region179: #{nerf_forward.1} parent=119 // pred_region
          %1006 = dma.done [#allocation24], 4096
        $region180: #{nerf_forward.1} parent=119 // pred_fallthru
          _
        // Predicated region
        $region181: #{nerf_forward.1} parent=119 // pred_check
          %p1007 = pneg %p390
        $region182: #{nerf_forward.1} parent=119 // pred_check_branch
          %1009 = sbr.rel (%p1007) target = $region184
        $region183: #{nerf_forward.1} parent=119 // pred_region
          %1010 = dma.done [#allocation27], 32
        $region184: #{nerf_forward.1} parent=119 // pred_fallthru
          _
        // Predicated region
        $region185: #{nerf_forward.1} parent=119 // pred_check
          %p1011 = pneg %p411
        $region186: #{nerf_forward.1} parent=119 // pred_check_branch
          %1013 = sbr.rel (%p1011) target = $region188
        $region187: #{nerf_forward.1} parent=119 // pred_region
          %1014 = dma.done [#allocation27], 4096
        $region188: #{nerf_forward.1} parent=119 // pred_fallthru
          _
        // Predicated region
        $region189: #{nerf_forward.1} parent=119 // pred_check
          %p1015 = pneg %p432
        $region190: #{nerf_forward.1} parent=119 // pred_check_branch
          %1017 = sbr.rel (%p1015) target = $region192
        $region191: #{nerf_forward.1} parent=119 // pred_region
          %1018 = dma.done [#allocation30], 32
        $region192: #{nerf_forward.1} parent=119 // pred_fallthru
          _
        // Predicated region
        $region193: #{nerf_forward.1} parent=119 // pred_check
          %p1019 = pneg %p453
        $region194: #{nerf_forward.1} parent=119 // pred_check_branch
          %1021 = sbr.rel (%p1019) target = $region196
        $region195: #{nerf_forward.1} parent=119 // pred_region
          %1022 = dma.done [#allocation30], 6144
        $region196: #{nerf_forward.1} parent=119 // pred_fallthru
          _
        // Predicated region
        $region197: #{nerf_forward.1} parent=119 // pred_check
          %p1023 = pneg %p474
        $region198: #{nerf_forward.1} parent=119 // pred_check_branch
          %1025 = sbr.rel (%p1023) target = $region200
        $region199: #{nerf_forward.1} parent=119 // pred_region
          %1026 = dma.done [#allocation33], 48
        $region200: #{nerf_forward.1} parent=119 // pred_fallthru
          _
        // Predicated region
        $region201: #{nerf_forward.1} parent=119 // pred_check
          %p1027 = pneg %p495
        $region202: #{nerf_forward.1} parent=119 // pred_check_branch
          %1029 = sbr.rel (%p1027) target = $region204
        $region203: #{nerf_forward.1} parent=119 // pred_region
          %1030 = dma.done [#allocation33], 2048
        $region204: #{nerf_forward.1} parent=119 // pred_fallthru
          _
        // Predicated region
        $region205: #{nerf_forward.1} parent=119 // pred_check
          %p1031 = pneg %p516
        $region206: #{nerf_forward.1} parent=119 // pred_check_branch
          %1033 = sbr.rel (%p1031) target = $region208
        $region207: #{nerf_forward.1} parent=119 // pred_region
          %1034 = dma.done [#allocation36], 1024
        $region208: #{nerf_forward.1} parent=119 // pred_fallthru
          _
        // Predicated region
        $region209: #{nerf_forward.1} parent=119 // pred_check
          %p1035 = pneg %p537
        $region210: #{nerf_forward.1} parent=119 // pred_check_branch
          %1037 = sbr.rel (%p1035) target = $region212
        $region211: #{nerf_forward.1} parent=119 // pred_region
          %1038 = dma.done [#allocation36], 16
        $region212: #{nerf_forward.1} parent=119 // pred_fallthru
          _
        // Predicated region
        $region213: #{nerf_forward.1} parent=119 // pred_check
          %p1039 = pneg %p558
        $region214: #{nerf_forward.1} parent=119 // pred_check_branch
          %1041 = sbr.rel (%p1039) target = $region216
        $region215: #{nerf_forward.1} parent=119 // pred_region
          %1042 = dma.done [#allocation39], 1024
        $region216: #{nerf_forward.1} parent=119 // pred_fallthru
          _
        // Predicated region
        $region217: #{nerf_forward.1} parent=119 // pred_check
          %p1043 = pneg %p579
        $region218: #{nerf_forward.1} parent=119 // pred_check_branch
          %1045 = sbr.rel (%p1043) target = $region220
        $region219: #{nerf_forward.1} parent=119 // pred_region
          %1046 = dma.done [#allocation39], 16
        $region220: #{nerf_forward.1} parent=119 // pred_fallthru
          _
        %s1047 = sand.u32 %s62, 1
        %s1048 = scalar_lea.sflag [#allocation3], %s1047
        %s1049 = sand.u32 %s62, 1
        %s1050 = smul.addr %s1049, 512
        %s1051 = scalar_lea.vmem [#allocation2], %s1050
        %p1052 = pneg %p75
        %p1053 = pneg %p72
        %p1054 = pneg %p96
        %p1055 = pneg %p93
        %p1056 = pneg %p117
        %p1057 = pneg %p114
        %p1058 = pneg %p138
        %p1059 = pneg %p135
        %p1060 = pneg %p159
        %p1061 = pneg %p156
        %p1062 = pneg %p180
        %p1063 = pneg %p177
        %p1064 = pneg %p201
        %p1065 = pneg %p198
        %p1066 = pneg %p222
        %p1067 = pneg %p219
        %p1068 = pneg %p243
        %p1069 = pneg %p240
        %p1070 = pneg %p264
        %p1071 = pneg %p261
        %p1072 = pneg %p285
        %p1073 = pneg %p282
        %p1074 = pneg %p306
        %p1075 = pneg %p303
        %p1076 = pneg %p327
        %p1077 = pneg %p324
        %p1078 = pneg %p348
        %p1079 = pneg %p345
        %p1080 = pneg %p369
        %p1081 = pneg %p366
        %p1082 = pneg %p390
        %p1083 = pneg %p387
        %p1084 = pneg %p411
        %p1085 = pneg %p408
        %p1086 = pneg %p432
        %p1087 = pneg %p429
        %p1088 = pneg %p453
        %p1089 = pneg %p450
        %p1090 = pneg %p474
        %p1091 = pneg %p471
        %p1092 = pneg %p495
        %p1093 = pneg %p492
        %p1094 = pneg %p516
        %p1095 = pneg %p513
        %p1096 = pneg %p537
        %p1097 = pneg %p534
        %p1098 = pneg %p558
        %p1099 = pneg %p555
        %p1100 = pneg %p579
        %p1101 = pneg %p576
        %p1102 = pneg %p605
        %p1103 = pneg %p602
        %s1104 = sand.u32 %s592, 1
        %s1105 = scalar_lea.sflag [#allocation4], %s1104
        %s1106 = sand.u32 %s592, 1
        %s1107 = smul.addr %s1106, 512
        %s1108 = scalar_lea.vmem [#allocation41], %s1107
        %s1109 = smul.u32 64, %s54
        %s1110 = smul.u32 64, %s54
        %v1112 = vld [vmem:[%s946] sm:$0xff]
        %v1113 = vld [vmem:[%s946 + $0x8] sm:$0xff]
        %v1114 = vld [vmem:[%s946 + $0x10] sm:$0xff]
        %v1115 = vld [vmem:[%s946 + $0x18] sm:$0xff]
        %v1116 = vld [vmem:[%s946 + $0x20] sm:$0xff]
        %v1117 = vld [vmem:[%s946 + $0x28] sm:$0xff]
        %v1118 = vld [vmem:[%s946 + $0x30] sm:$0xff]
        %v1119 = vld [vmem:[%s946 + $0x38] sm:$0xff]
        %v1120 = vld [vmem:[%s946 + $0x40] sm:$0xff]
        %v1121 = vld [vmem:[%s946 + $0x48] sm:$0xff]
        %v1122 = vld [vmem:[%s946 + $0x50] sm:$0xff]
        %v1123 = vld [vmem:[%s946 + $0x58] sm:$0xff]
        %v1124 = vld [vmem:[%s946 + $0x60] sm:$0xff]
        %v1125 = vld [vmem:[%s946 + $0x68] sm:$0xff]
        %v1126 = vld [vmem:[%s946 + $0x70] sm:$0xff]
        %v1127 = vld [vmem:[%s946 + $0x78] sm:$0xff]
        %v1128 = vld [vmem:[%s946 + $0x80] sm:$0xff]
        %v1129 = vld [vmem:[%s946 + $0x88] sm:$0xff]
        %v1130 = vld [vmem:[%s946 + $0x90] sm:$0xff]
        %v1131 = vld [vmem:[%s946 + $0x98] sm:$0xff]
        %v1132 = vld [vmem:[%s946 + $0xa0] sm:$0xff]
        %v1133 = vld [vmem:[%s946 + $0xa8] sm:$0xff]
        %v1134 = vld [vmem:[%s946 + $0xb0] sm:$0xff]
        %v1135 = vld [vmem:[%s946 + $0xb8] sm:$0xff]
        %v1136 = vld [vmem:[%s946 + $0xc0] sm:$0xff]
        %v1137 = vld [vmem:[%s946 + $0xc8] sm:$0xff]
        %v1138 = vld [vmem:[%s946 + $0xd0] sm:$0xff]
        %v1139 = vld [vmem:[%s946 + $0xd8] sm:$0xff]
        %v1140 = vld [vmem:[%s946 + $0xe0] sm:$0xff]
        %v1141 = vld [vmem:[%s946 + $0xe8] sm:$0xff]
        %v1142 = vld [vmem:[%s946 + $0xf0] sm:$0xff]
        %v1143 = vld [vmem:[%s946 + $0xf8] sm:$0xff]
        %v1144 = vld [vmem:[%s946 + $0x100] sm:$0xff]
        %v1145 = vld [vmem:[%s946 + $0x108] sm:$0xff]
        %v1146 = vld [vmem:[%s946 + $0x110] sm:$0xff]
        %v1147 = vld [vmem:[%s946 + $0x118] sm:$0xff]
        %v1148 = vld [vmem:[%s946 + $0x120] sm:$0xff]
        %v1149 = vld [vmem:[%s946 + $0x128] sm:$0xff]
        %v1150 = vld [vmem:[%s946 + $0x130] sm:$0xff]
        %v1151 = vld [vmem:[%s946 + $0x138] sm:$0xff]
        %v1152 = vld [vmem:[%s946 + $0x140] sm:$0xff]
        %v1153 = vld [vmem:[%s946 + $0x148] sm:$0xff]
        %v1154 = vld [vmem:[%s946 + $0x150] sm:$0xff]
        %v1155 = vld [vmem:[%s946 + $0x158] sm:$0xff]
        %v1156 = vld [vmem:[%s946 + $0x160] sm:$0xff]
        %v1157 = vld [vmem:[%s946 + $0x168] sm:$0xff]
        %v1158 = vld [vmem:[%s946 + $0x170] sm:$0xff]
        %v1159 = vld [vmem:[%s946 + $0x178] sm:$0xff]
        %v1160 = vld [vmem:[%s946 + $0x180] sm:$0xff]
        %v1161 = vld [vmem:[%s946 + $0x188] sm:$0xff]
        %v1162 = vld [vmem:[%s946 + $0x190] sm:$0xff]
        %v1163 = vld [vmem:[%s946 + $0x198] sm:$0xff]
        %v1164 = vld [vmem:[%s946 + $0x1a0] sm:$0xff]
        %v1165 = vld [vmem:[%s946 + $0x1a8] sm:$0xff]
        %v1166 = vld [vmem:[%s946 + $0x1b0] sm:$0xff]
        %v1167 = vld [vmem:[%s946 + $0x1b8] sm:$0xff]
        %v1168 = vld [vmem:[%s946 + $0x1c0] sm:$0xff]
        %v1169 = vld [vmem:[%s946 + $0x1c8] sm:$0xff]
        %v1170 = vld [vmem:[%s946 + $0x1d0] sm:$0xff]
        %v1171 = vld [vmem:[%s946 + $0x1d8] sm:$0xff]
        %v1172 = vld [vmem:[%s946 + $0x1e0] sm:$0xff]
        %v1173 = vld [vmem:[%s946 + $0x1e8] sm:$0xff]
        %v1174 = vld [vmem:[%s946 + $0x1f0] sm:$0xff]
        %v1175 = vld [vmem:[%s946 + $0x1f8] sm:$0xff]
        %v1176 = vpack.c.bf16 %v1113, %v1112
        %v1177 = vpack.c.bf16 %v1115, %v1114
        %v1178 = vpack.c.bf16 %v1117, %v1116
        %v1179 = vpack.c.bf16 %v1119, %v1118
        %v1180 = vpack.c.bf16 %v1121, %v1120
        %v1181 = vpack.c.bf16 %v1123, %v1122
        %v1182 = vpack.c.bf16 %v1125, %v1124
        %v1183 = vpack.c.bf16 %v1127, %v1126
        %v1184 = vpack.c.bf16 %v1129, %v1128
        %v1185 = vpack.c.bf16 %v1131, %v1130
        %v1186 = vpack.c.bf16 %v1133, %v1132
        %v1187 = vpack.c.bf16 %v1135, %v1134
        %v1188 = vpack.c.bf16 %v1137, %v1136
        %v1189 = vpack.c.bf16 %v1139, %v1138
        %v1190 = vpack.c.bf16 %v1141, %v1140
        %v1191 = vpack.c.bf16 %v1143, %v1142
        %v1192 = vpack.c.bf16 %v1145, %v1144
        %v1193 = vpack.c.bf16 %v1147, %v1146
        %v1194 = vpack.c.bf16 %v1149, %v1148
        %v1195 = vpack.c.bf16 %v1151, %v1150
        %v1196 = vpack.c.bf16 %v1153, %v1152
        %v1197 = vpack.c.bf16 %v1155, %v1154
        %v1198 = vpack.c.bf16 %v1157, %v1156
        %v1199 = vpack.c.bf16 %v1159, %v1158
        %v1200 = vpack.c.bf16 %v1161, %v1160
        %v1201 = vpack.c.bf16 %v1163, %v1162
        %v1202 = vpack.c.bf16 %v1165, %v1164
        %v1203 = vpack.c.bf16 %v1167, %v1166
        %v1204 = vpack.c.bf16 %v1169, %v1168
        %v1205 = vpack.c.bf16 %v1171, %v1170
        %v1206 = vpack.c.bf16 %v1173, %v1172
        %v1207 = vpack.c.bf16 %v1175, %v1174
        %v1208 = vld [vmem:[#allocation5] sm:$0xff]
        %v1209 = vld [vmem:[#allocation5 + $0x8] sm:$0xff]
        %v1210 = vld [vmem:[#allocation5 + $0x10] sm:$0xff]
        %v1211 = vld [vmem:[#allocation5 + $0x18] sm:$0xff]
        %v1212 = vld [vmem:[#allocation5 + $0x20] sm:$0xff]
        %v1213 = vld [vmem:[#allocation5 + $0x28] sm:$0xff]
        %v1214 = vld [vmem:[#allocation5 + $0x30] sm:$0xff]
        %v1215 = vld [vmem:[#allocation5 + $0x38] sm:$0xff]
        %v1216 = vld [vmem:[#allocation5 + $0x40] sm:$0xff]
        %v1217 = vld [vmem:[#allocation5 + $0x48] sm:$0xff]
        %v1218 = vld [vmem:[#allocation5 + $0x50] sm:$0xff]
        %v1219 = vld [vmem:[#allocation5 + $0x58] sm:$0xff]
        %v1220 = vld [vmem:[#allocation5 + $0x60] sm:$0xff]
        %v1221 = vld [vmem:[#allocation5 + $0x68] sm:$0xff]
        %v1222 = vld [vmem:[#allocation5 + $0x70] sm:$0xff]
        %v1223 = vld [vmem:[#allocation5 + $0x78] sm:$0xff]
        %v1224 = vld [vmem:[#allocation7] sm:$0x3]
        %v1226 = vlaneseq
        %v1227 = vshrl.u32 %v1226, 7
        %v1228 = vsub.s32 0, %v1227
        %v1229 = vrot.slane %v1224, %v1228
        %v1230 = vlaneseq
        %v1231 = vshrl.u32 %v1230, 7
        %v1232 = vsub.s32 1, %v1231
        %v1233 = vrot.slane %v1224, %v1232
        %v1252 = vunpack.c.l.b16 %v1208
        %v1253 = vunpack.c.h.b16 %v1208
        %v1254 = vunpack.c.l.b16 %v1209
        %v1255 = vunpack.c.h.b16 %v1209
        %v1256 = vunpack.c.l.b16 %v1210
        %v1257 = vunpack.c.h.b16 %v1210
        %v1258 = vunpack.c.l.b16 %v1211
        %v1259 = vunpack.c.h.b16 %v1211
        %v1260 = vunpack.c.l.b16 %v1212
        %v1261 = vunpack.c.h.b16 %v1212
        %v1262 = vunpack.c.l.b16 %v1213
        %v1263 = vunpack.c.h.b16 %v1213
        %v1264 = vunpack.c.l.b16 %v1214
        %v1265 = vunpack.c.h.b16 %v1214
        %v1266 = vunpack.c.l.b16 %v1215
        %v1267 = vunpack.c.h.b16 %v1215
        %v1268 = vunpack.c.l.b16 %v1216
        %v1269 = vunpack.c.h.b16 %v1216
        %v1270 = vunpack.c.l.b16 %v1217
        %v1271 = vunpack.c.h.b16 %v1217
        %v1272 = vunpack.c.l.b16 %v1218
        %v1273 = vunpack.c.h.b16 %v1218
        %v1274 = vunpack.c.l.b16 %v1219
        %v1275 = vunpack.c.h.b16 %v1219
        %v1276 = vunpack.c.l.b16 %v1220
        %v1277 = vunpack.c.h.b16 %v1220
        %v1278 = vunpack.c.l.b16 %v1221
        %v1279 = vunpack.c.h.b16 %v1221
        %v1280 = vunpack.c.l.b16 %v1222
        %v1281 = vunpack.c.h.b16 %v1222
        %v1282 = vunpack.c.l.b16 %v1223
        %v1283 = vunpack.c.h.b16 %v1223
        %v1284 = vpack.c.b16 %v1254, %v1252
        %v1285 = vpack.c.b16 %v1255, %v1253
        %v1286 = vpack.c.b16 %v1258, %v1256
        %v1287 = vpack.c.b16 %v1259, %v1257
        %v1288 = vpack.c.b16 %v1262, %v1260
        %v1289 = vpack.c.b16 %v1263, %v1261
        %v1290 = vpack.c.b16 %v1266, %v1264
        %v1291 = vpack.c.b16 %v1267, %v1265
        %v1292 = vpack.c.b16 %v1270, %v1268
        %v1293 = vpack.c.b16 %v1271, %v1269
        %v1294 = vpack.c.b16 %v1274, %v1272
        %v1295 = vpack.c.b16 %v1275, %v1273
        %v1296 = vpack.c.b16 %v1278, %v1276
        %v1297 = vpack.c.b16 %v1279, %v1277
        %v1298 = vpack.c.b16 %v1282, %v1280
        %v1299 = vpack.c.b16 %v1283, %v1281
        %1316 = vmatprep.subr.bf16.mxu0 %v1285
        %1317 = vmatpush1.bf16.msra.mxu0 %v1284
        %1318 = vmatprep.subr.bf16.mxu0 %v1287
        %1319 = vmatpush1.bf16.msra.mxu0 %v1286
        %1320 = vmatprep.subr.bf16.mxu0 %v1289
        %1321 = vmatpush1.bf16.msra.mxu0 %v1288
        %1322 = vmatprep.subr.bf16.mxu0 %v1291
        %1323 = vmatpush1.bf16.msra.mxu0 %v1290
        %1324 = vmatprep.subr.bf16.mxu0 %v1293
        %1325 = vmatpush1.bf16.msra.mxu0 %v1292
        %1326 = vmatprep.subr.bf16.mxu0 %v1295
        %1327 = vmatpush1.bf16.msra.mxu0 %v1294
        %1328 = vmatprep.subr.bf16.mxu0 %v1297
        %1329 = vmatpush1.bf16.msra.mxu0 %v1296
        %1330 = vmatprep.subr.bf16.mxu0 %v1299
        %1331 = vmatpush1.bf16.msra.mxu0 %v1298
        %1332 = vmatprep.subr.bf16.mxu0 0
        %1333 = vmatpush1.bf16.msra.mxu0 0
        %1334 = vmatprep.subr.bf16.mxu0 0
        %1335 = vmatpush1.bf16.msra.mxu0 0
        %1336 = vmatprep.subr.bf16.mxu0 0
        %1337 = vmatpush1.bf16.msra.mxu0 0
        %1338 = vmatprep.subr.bf16.mxu0 0
        %1339 = vmatpush1.bf16.msra.mxu0 0
        %1340 = vmatprep.subr.bf16.mxu0 0
        %1341 = vmatpush1.bf16.msra.mxu0 0
        %1342 = vmatprep.subr.bf16.mxu0 0
        %1343 = vmatpush1.bf16.msra.mxu0 0
        %1344 = vmatprep.subr.bf16.mxu0 0
        %1345 = vmatpush1.bf16.msra.mxu0 0
        %1346 = vmatprep.subr.bf16.mxu0 0
        %1347 = vmatpush1.bf16.msra.mxu0 0
        %1348 = vmatprep.mubr.bf16.mxu0 0
        %1349 = vmatmul.mubr.bf16.gmra.mrb[0].mxu0 %v1176
        %v1350 = vpop.f32.mrb[0].mxu0
        %v1351 = vadd.f32 %v1229, %v1350
        %v1352 = vpop.f32.mrb[0].mxu0
        %v1353 = vadd.f32 %v1233, %v1352
        %v1354 = vpop.f32.mrb[0].mxu0
        %v1355 = vadd.f32 %v1229, %v1354
        %v1356 = vpop.f32.mrb[0].mxu0
        %v1357 = vadd.f32 %v1233, %v1356
        %1358 = vmatprep.mubr.bf16.mxu0 0
        %1359 = vmatmul.mubr.bf16.gmra.mrb[0].mxu0 %v1177
        %v1360 = vpop.f32.mrb[0].mxu0
        %v1361 = vadd.f32 %v1229, %v1360
        %v1362 = vpop.f32.mrb[0].mxu0
        %v1363 = vadd.f32 %v1233, %v1362
        %v1364 = vpop.f32.mrb[0].mxu0
        %v1365 = vadd.f32 %v1229, %v1364
        %v1366 = vpop.f32.mrb[0].mxu0
        %v1367 = vadd.f32 %v1233, %v1366
        %1368 = vmatprep.mubr.bf16.mxu0 0
        %1369 = vmatmul.mubr.bf16.gmra.mrb[0].mxu0 %v1178
        %v1370 = vpop.f32.mrb[0].mxu0
        %v1371 = vadd.f32 %v1229, %v1370
        %v1372 = vpop.f32.mrb[0].mxu0
        %v1373 = vadd.f32 %v1233, %v1372
        %v1374 = vpop.f32.mrb[0].mxu0
        %v1375 = vadd.f32 %v1229, %v1374
        %v1376 = vpop.f32.mrb[0].mxu0
        %v1377 = vadd.f32 %v1233, %v1376
        %1378 = vmatprep.mubr.bf16.mxu0 0
        %1379 = vmatmul.mubr.bf16.gmra.mrb[0].mxu0 %v1179
        %v1380 = vpop.f32.mrb[0].mxu0
        %v1381 = vadd.f32 %v1229, %v1380
        %v1382 = vpop.f32.mrb[0].mxu0
        %v1383 = vadd.f32 %v1233, %v1382
        %v1384 = vpop.f32.mrb[0].mxu0
        %v1385 = vadd.f32 %v1229, %v1384
        %v1386 = vpop.f32.mrb[0].mxu0
        %v1387 = vadd.f32 %v1233, %v1386
        %1388 = vmatprep.mubr.bf16.mxu0 0
        %1389 = vmatmul.mubr.bf16.gmra.mrb[0].mxu0 %v1180
        %v1390 = vpop.f32.mrb[0].mxu0
        %v1391 = vadd.f32 %v1229, %v1390
        %v1392 = vpop.f32.mrb[0].mxu0
        %v1393 = vadd.f32 %v1233, %v1392
        %v1394 = vpop.f32.mrb[0].mxu0
        %v1395 = vadd.f32 %v1229, %v1394
        %v1396 = vpop.f32.mrb[0].mxu0
        %v1397 = vadd.f32 %v1233, %v1396
        %1398 = vmatprep.mubr.bf16.mxu0 0
        %1399 = vmatmul.mubr.bf16.gmra.mrb[0].mxu0 %v1181
        %v1400 = vpop.f32.mrb[0].mxu0
        %v1401 = vadd.f32 %v1229, %v1400
        %v1402 = vpop.f32.mrb[0].mxu0
        %v1403 = vadd.f32 %v1233, %v1402
        %v1404 = vpop.f32.mrb[0].mxu0
        %v1405 = vadd.f32 %v1229, %v1404
        %v1406 = vpop.f32.mrb[0].mxu0
        %v1407 = vadd.f32 %v1233, %v1406
        %1408 = vmatprep.mubr.bf16.mxu0 0
        %1409 = vmatmul.mubr.bf16.gmra.mrb[0].mxu0 %v1182
        %v1410 = vpop.f32.mrb[0].mxu0
        %v1411 = vadd.f32 %v1229, %v1410
        %v1412 = vpop.f32.mrb[0].mxu0
        %v1413 = vadd.f32 %v1233, %v1412
        %v1414 = vpop.f32.mrb[0].mxu0
        %v1415 = vadd.f32 %v1229, %v1414
        %v1416 = vpop.f32.mrb[0].mxu0
        %v1417 = vadd.f32 %v1233, %v1416
        %1418 = vmatprep.mubr.bf16.mxu0 0
        %1419 = vmatmul.mubr.bf16.gmra.mrb[0].mxu0 %v1183
        %v1420 = vpop.f32.mrb[0].mxu0
        %v1421 = vadd.f32 %v1229, %v1420
        %v1422 = vpop.f32.mrb[0].mxu0
        %v1423 = vadd.f32 %v1233, %v1422
        %v1424 = vpop.f32.mrb[0].mxu0
        %v1425 = vadd.f32 %v1229, %v1424
        %v1426 = vpop.f32.mrb[0].mxu0
        %v1427 = vadd.f32 %v1233, %v1426
        %1428 = vmatprep.mubr.bf16.mxu0 0
        %1429 = vmatmul.mubr.bf16.gmra.mrb[0].mxu0 %v1184
        %v1430 = vpop.f32.mrb[0].mxu0
        %v1431 = vadd.f32 %v1229, %v1430
        %v1432 = vpop.f32.mrb[0].mxu0
        %v1433 = vadd.f32 %v1233, %v1432
        %v1434 = vpop.f32.mrb[0].mxu0
        %v1435 = vadd.f32 %v1229, %v1434
        %v1436 = vpop.f32.mrb[0].mxu0
        %v1437 = vadd.f32 %v1233, %v1436
        %1438 = vmatprep.mubr.bf16.mxu0 0
        %1439 = vmatmul.mubr.bf16.gmra.mrb[0].mxu0 %v1185
        %v1440 = vpop.f32.mrb[0].mxu0
        %v1441 = vadd.f32 %v1229, %v1440
        %v1442 = vpop.f32.mrb[0].mxu0
        %v1443 = vadd.f32 %v1233, %v1442
        %v1444 = vpop.f32.mrb[0].mxu0
        %v1445 = vadd.f32 %v1229, %v1444
        %v1446 = vpop.f32.mrb[0].mxu0
        %v1447 = vadd.f32 %v1233, %v1446
        %1448 = vmatprep.mubr.bf16.mxu0 0
        %1449 = vmatmul.mubr.bf16.gmra.mrb[0].mxu0 %v1186
        %v1450 = vpop.f32.mrb[0].mxu0
        %v1451 = vadd.f32 %v1229, %v1450
        %v1452 = vpop.f32.mrb[0].mxu0
        %v1453 = vadd.f32 %v1233, %v1452
        %v1454 = vpop.f32.mrb[0].mxu0
        %v1455 = vadd.f32 %v1229, %v1454
        %v1456 = vpop.f32.mrb[0].mxu0
        %v1457 = vadd.f32 %v1233, %v1456
        %1458 = vmatprep.mubr.bf16.mxu0 0
        %1459 = vmatmul.mubr.bf16.gmra.mrb[0].mxu0 %v1187
        %v1460 = vpop.f32.mrb[0].mxu0
        %v1461 = vadd.f32 %v1229, %v1460
        %v1462 = vpop.f32.mrb[0].mxu0
        %v1463 = vadd.f32 %v1233, %v1462
        %v1464 = vpop.f32.mrb[0].mxu0
        %v1465 = vadd.f32 %v1229, %v1464
        %v1466 = vpop.f32.mrb[0].mxu0
        %v1467 = vadd.f32 %v1233, %v1466
        %1468 = vmatprep.mubr.bf16.mxu0 0
        %1469 = vmatmul.mubr.bf16.gmra.mrb[0].mxu0 %v1188
        %v1470 = vpop.f32.mrb[0].mxu0
        %v1471 = vadd.f32 %v1229, %v1470
        %v1472 = vpop.f32.mrb[0].mxu0
        %v1473 = vadd.f32 %v1233, %v1472
        %v1474 = vpop.f32.mrb[0].mxu0
        %v1475 = vadd.f32 %v1229, %v1474
        %v1476 = vpop.f32.mrb[0].mxu0
        %v1477 = vadd.f32 %v1233, %v1476
        %1478 = vmatprep.mubr.bf16.mxu0 0
        %1479 = vmatmul.mubr.bf16.gmra.mrb[0].mxu0 %v1189
        %v1480 = vpop.f32.mrb[0].mxu0
        %v1481 = vadd.f32 %v1229, %v1480
        %v1482 = vpop.f32.mrb[0].mxu0
        %v1483 = vadd.f32 %v1233, %v1482
        %v1484 = vpop.f32.mrb[0].mxu0
        %v1485 = vadd.f32 %v1229, %v1484
        %v1486 = vpop.f32.mrb[0].mxu0
        %v1487 = vadd.f32 %v1233, %v1486
        %1488 = vmatprep.mubr.bf16.mxu0 0
        %1489 = vmatmul.mubr.bf16.gmra.mrb[0].mxu0 %v1190
        %v1490 = vpop.f32.mrb[0].mxu0
        %v1491 = vadd.f32 %v1229, %v1490
        %v1492 = vpop.f32.mrb[0].mxu0
        %v1493 = vadd.f32 %v1233, %v1492
        %v1494 = vpop.f32.mrb[0].mxu0
        %v1495 = vadd.f32 %v1229, %v1494
        %v1496 = vpop.f32.mrb[0].mxu0
        %v1497 = vadd.f32 %v1233, %v1496
        %1498 = vmatprep.mubr.bf16.mxu0 0
        %1499 = vmatmul.mubr.bf16.gmra.mrb[0].mxu0 %v1191
        %v1500 = vpop.f32.mrb[0].mxu0
        %v1501 = vadd.f32 %v1229, %v1500
        %v1502 = vpop.f32.mrb[0].mxu0
        %v1503 = vadd.f32 %v1233, %v1502
        %v1504 = vpop.f32.mrb[0].mxu0
        %v1505 = vadd.f32 %v1229, %v1504
        %v1506 = vpop.f32.mrb[0].mxu0
        %v1507 = vadd.f32 %v1233, %v1506
        %1508 = vmatprep.mubr.bf16.mxu0 0
        %1509 = vmatmul.mubr.bf16.gmra.mrb[0].mxu0 %v1192
        %v1510 = vpop.f32.mrb[0].mxu0
        %v1511 = vadd.f32 %v1229, %v1510
        %v1512 = vpop.f32.mrb[0].mxu0
        %v1513 = vadd.f32 %v1233, %v1512
        %v1514 = vpop.f32.mrb[0].mxu0
        %v1515 = vadd.f32 %v1229, %v1514
        %v1516 = vpop.f32.mrb[0].mxu0
        %v1517 = vadd.f32 %v1233, %v1516
        %1518 = vmatprep.mubr.bf16.mxu0 0
        %1519 = vmatmul.mubr.bf16.gmra.mrb[0].mxu0 %v1193
        %v1520 = vpop.f32.mrb[0].mxu0
        %v1521 = vadd.f32 %v1229, %v1520
        %v1522 = vpop.f32.mrb[0].mxu0
        %v1523 = vadd.f32 %v1233, %v1522
        %v1524 = vpop.f32.mrb[0].mxu0
        %v1525 = vadd.f32 %v1229, %v1524
        %v1526 = vpop.f32.mrb[0].mxu0
        %v1527 = vadd.f32 %v1233, %v1526
        %1528 = vmatprep.mubr.bf16.mxu0 0
        %1529 = vmatmul.mubr.bf16.gmra.mrb[0].mxu0 %v1194
        %v1530 = vpop.f32.mrb[0].mxu0
        %v1531 = vadd.f32 %v1229, %v1530
        %v1532 = vpop.f32.mrb[0].mxu0
        %v1533 = vadd.f32 %v1233, %v1532
        %v1534 = vpop.f32.mrb[0].mxu0
        %v1535 = vadd.f32 %v1229, %v1534
        %v1536 = vpop.f32.mrb[0].mxu0
        %v1537 = vadd.f32 %v1233, %v1536
        %1538 = vmatprep.mubr.bf16.mxu0 0
        %1539 = vmatmul.mubr.bf16.gmra.mrb[0].mxu0 %v1195
        %v1540 = vpop.f32.mrb[0].mxu0
        %v1541 = vadd.f32 %v1229, %v1540
        %v1542 = vpop.f32.mrb[0].mxu0
        %v1543 = vadd.f32 %v1233, %v1542
        %v1544 = vpop.f32.mrb[0].mxu0
        %v1545 = vadd.f32 %v1229, %v1544
        %v1546 = vpop.f32.mrb[0].mxu0
        %v1547 = vadd.f32 %v1233, %v1546
        %1548 = vmatprep.mubr.bf16.mxu0 0
        %1549 = vmatmul.mubr.bf16.gmra.mrb[0].mxu0 %v1196
        %v1550 = vpop.f32.mrb[0].mxu0
        %v1551 = vadd.f32 %v1229, %v1550
        %v1552 = vpop.f32.mrb[0].mxu0
        %v1553 = vadd.f32 %v1233, %v1552
        %v1554 = vpop.f32.mrb[0].mxu0
        %v1555 = vadd.f32 %v1229, %v1554
        %v1556 = vpop.f32.mrb[0].mxu0
        %v1557 = vadd.f32 %v1233, %v1556
        %1558 = vmatprep.mubr.bf16.mxu0 0
        %1559 = vmatmul.mubr.bf16.gmra.mrb[0].mxu0 %v1197
        %v1560 = vpop.f32.mrb[0].mxu0
        %v1561 = vadd.f32 %v1229, %v1560
        %v1562 = vpop.f32.mrb[0].mxu0
        %v1563 = vadd.f32 %v1233, %v1562
        %v1564 = vpop.f32.mrb[0].mxu0
        %v1565 = vadd.f32 %v1229, %v1564
        %v1566 = vpop.f32.mrb[0].mxu0
        %v1567 = vadd.f32 %v1233, %v1566
        %1568 = vmatprep.mubr.bf16.mxu0 0
        %1569 = vmatmul.mubr.bf16.gmra.mrb[0].mxu0 %v1198
        %v1570 = vpop.f32.mrb[0].mxu0
        %v1571 = vadd.f32 %v1229, %v1570
        %v1572 = vpop.f32.mrb[0].mxu0
        %v1573 = vadd.f32 %v1233, %v1572
        %v1574 = vpop.f32.mrb[0].mxu0
        %v1575 = vadd.f32 %v1229, %v1574
        %v1576 = vpop.f32.mrb[0].mxu0
        %v1577 = vadd.f32 %v1233, %v1576
        %1578 = vmatprep.mubr.bf16.mxu0 0
        %1579 = vmatmul.mubr.bf16.gmra.mrb[0].mxu0 %v1199
        %v1580 = vpop.f32.mrb[0].mxu0
        %v1581 = vadd.f32 %v1229, %v1580
        %v1582 = vpop.f32.mrb[0].mxu0
        %v1583 = vadd.f32 %v1233, %v1582
        %v1584 = vpop.f32.mrb[0].mxu0
        %v1585 = vadd.f32 %v1229, %v1584
        %v1586 = vpop.f32.mrb[0].mxu0
        %v1587 = vadd.f32 %v1233, %v1586
        %1588 = vmatprep.mubr.bf16.mxu0 0
        %1589 = vmatmul.mubr.bf16.gmra.mrb[0].mxu0 %v1200
        %v1590 = vpop.f32.mrb[0].mxu0
        %v1591 = vadd.f32 %v1229, %v1590
        %v1592 = vpop.f32.mrb[0].mxu0
        %v1593 = vadd.f32 %v1233, %v1592
        %v1594 = vpop.f32.mrb[0].mxu0
        %v1595 = vadd.f32 %v1229, %v1594
        %v1596 = vpop.f32.mrb[0].mxu0
        %v1597 = vadd.f32 %v1233, %v1596
        %1598 = vmatprep.mubr.bf16.mxu0 0
        %1599 = vmatmul.mubr.bf16.gmra.mrb[0].mxu0 %v1201
        %v1600 = vpop.f32.mrb[0].mxu0
        %v1601 = vadd.f32 %v1229, %v1600
        %v1602 = vpop.f32.mrb[0].mxu0
        %v1603 = vadd.f32 %v1233, %v1602
        %v1604 = vpop.f32.mrb[0].mxu0
        %v1605 = vadd.f32 %v1229, %v1604
        %v1606 = vpop.f32.mrb[0].mxu0
        %v1607 = vadd.f32 %v1233, %v1606
        %1608 = vmatprep.mubr.bf16.mxu0 0
        %1609 = vmatmul.mubr.bf16.gmra.mrb[0].mxu0 %v1202
        %v1610 = vpop.f32.mrb[0].mxu0
        %v1611 = vadd.f32 %v1229, %v1610
        %v1612 = vpop.f32.mrb[0].mxu0
        %v1613 = vadd.f32 %v1233, %v1612
        %v1614 = vpop.f32.mrb[0].mxu0
        %v1615 = vadd.f32 %v1229, %v1614
        %v1616 = vpop.f32.mrb[0].mxu0
        %v1617 = vadd.f32 %v1233, %v1616
        %1618 = vmatprep.mubr.bf16.mxu0 0
        %1619 = vmatmul.mubr.bf16.gmra.mrb[0].mxu0 %v1203
        %v1620 = vpop.f32.mrb[0].mxu0
        %v1621 = vadd.f32 %v1229, %v1620
        %v1622 = vpop.f32.mrb[0].mxu0
        %v1623 = vadd.f32 %v1233, %v1622
        %v1624 = vpop.f32.mrb[0].mxu0
        %v1625 = vadd.f32 %v1229, %v1624
        %v1626 = vpop.f32.mrb[0].mxu0
        %v1627 = vadd.f32 %v1233, %v1626
        %1628 = vmatprep.mubr.bf16.mxu0 0
        %1629 = vmatmul.mubr.bf16.gmra.mrb[0].mxu0 %v1204
        %v1630 = vpop.f32.mrb[0].mxu0
        %v1631 = vadd.f32 %v1229, %v1630
        %v1632 = vpop.f32.mrb[0].mxu0
        %v1633 = vadd.f32 %v1233, %v1632
        %v1634 = vpop.f32.mrb[0].mxu0
        %v1635 = vadd.f32 %v1229, %v1634
        %v1636 = vpop.f32.mrb[0].mxu0
        %v1637 = vadd.f32 %v1233, %v1636
        %1638 = vmatprep.mubr.bf16.mxu0 0
        %1639 = vmatmul.mubr.bf16.gmra.mrb[0].mxu0 %v1205
        %v1640 = vpop.f32.mrb[0].mxu0
        %v1641 = vadd.f32 %v1229, %v1640
        %v1642 = vpop.f32.mrb[0].mxu0
        %v1643 = vadd.f32 %v1233, %v1642
        %v1644 = vpop.f32.mrb[0].mxu0
        %v1645 = vadd.f32 %v1229, %v1644
        %v1646 = vpop.f32.mrb[0].mxu0
        %v1647 = vadd.f32 %v1233, %v1646
        %1648 = vmatprep.mubr.bf16.mxu0 0
        %1649 = vmatmul.mubr.bf16.gmra.mrb[0].mxu0 %v1206
        %v1650 = vpop.f32.mrb[0].mxu0
        %v1651 = vadd.f32 %v1229, %v1650
        %v1652 = vpop.f32.mrb[0].mxu0
        %v1653 = vadd.f32 %v1233, %v1652
        %v1654 = vpop.f32.mrb[0].mxu0
        %v1655 = vadd.f32 %v1229, %v1654
        %v1656 = vpop.f32.mrb[0].mxu0
        %v1657 = vadd.f32 %v1233, %v1656
        %1658 = vmatprep.mubr.bf16.mxu0 0
        %1659 = vmatmul.mubr.bf16.gmra.mrb[0].mxu0 %v1207
        %v1660 = vpop.f32.mrb[0].mxu0
        %v1661 = vadd.f32 %v1229, %v1660
        %v1662 = vpop.f32.mrb[0].mxu0
        %v1663 = vadd.f32 %v1233, %v1662
        %v1664 = vpop.f32.mrb[0].mxu0
        %v1665 = vadd.f32 %v1229, %v1664
        %v1666 = vpop.f32.mrb[0].mxu0
        %v1667 = vadd.f32 %v1233, %v1666
        %1668 = vdwg.mxu0
        %v1669 = vmax.f32 %v1351, 0.0
        %v1670 = vmax.f32 %v1353, 0.0
        %v1671 = vmax.f32 %v1355, 0.0
        %v1672 = vmax.f32 %v1357, 0.0
        %v1673 = vmax.f32 %v1361, 0.0
        %v1674 = vmax.f32 %v1363, 0.0
        %v1675 = vmax.f32 %v1365, 0.0
        %v1676 = vmax.f32 %v1367, 0.0
        %v1677 = vmax.f32 %v1371, 0.0
        %v1678 = vmax.f32 %v1373, 0.0
        %v1679 = vmax.f32 %v1375, 0.0
        %v1680 = vmax.f32 %v1377, 0.0
        %v1681 = vmax.f32 %v1381, 0.0
        %v1682 = vmax.f32 %v1383, 0.0
        %v1683 = vmax.f32 %v1385, 0.0
        %v1684 = vmax.f32 %v1387, 0.0
        %v1685 = vmax.f32 %v1391, 0.0
        %v1686 = vmax.f32 %v1393, 0.0
        %v1687 = vmax.f32 %v1395, 0.0
        %v1688 = vmax.f32 %v1397, 0.0
        %v1689 = vmax.f32 %v1401, 0.0
        %v1690 = vmax.f32 %v1403, 0.0
        %v1691 = vmax.f32 %v1405, 0.0
        %v1692 = vmax.f32 %v1407, 0.0
        %v1693 = vmax.f32 %v1411, 0.0
        %v1694 = vmax.f32 %v1413, 0.0
        %v1695 = vmax.f32 %v1415, 0.0
        %v1696 = vmax.f32 %v1417, 0.0
        %v1697 = vmax.f32 %v1421, 0.0
        %v1698 = vmax.f32 %v1423, 0.0
        %v1699 = vmax.f32 %v1425, 0.0
        %v1700 = vmax.f32 %v1427, 0.0
        %v1701 = vmax.f32 %v1431, 0.0
        %v1702 = vmax.f32 %v1433, 0.0
        %v1703 = vmax.f32 %v1435, 0.0
        %v1704 = vmax.f32 %v1437, 0.0
        %v1705 = vmax.f32 %v1441, 0.0
        %v1706 = vmax.f32 %v1443, 0.0
        %v1707 = vmax.f32 %v1445, 0.0
        %v1708 = vmax.f32 %v1447, 0.0
        %v1709 = vmax.f32 %v1451, 0.0
        %v1710 = vmax.f32 %v1453, 0.0
        %v1711 = vmax.f32 %v1455, 0.0
        %v1712 = vmax.f32 %v1457, 0.0
        %v1713 = vmax.f32 %v1461, 0.0
        %v1714 = vmax.f32 %v1463, 0.0
        %v1715 = vmax.f32 %v1465, 0.0
        %v1716 = vmax.f32 %v1467, 0.0
        %v1717 = vmax.f32 %v1471, 0.0
        %v1718 = vmax.f32 %v1473, 0.0
        %v1719 = vmax.f32 %v1475, 0.0
        %v1720 = vmax.f32 %v1477, 0.0
        %v1721 = vmax.f32 %v1481, 0.0
        %v1722 = vmax.f32 %v1483, 0.0
        %v1723 = vmax.f32 %v1485, 0.0
        %v1724 = vmax.f32 %v1487, 0.0
        %v1725 = vmax.f32 %v1491, 0.0
        %v1726 = vmax.f32 %v1493, 0.0
        %v1727 = vmax.f32 %v1495, 0.0
        %v1728 = vmax.f32 %v1497, 0.0
        %v1729 = vmax.f32 %v1501, 0.0
        %v1730 = vmax.f32 %v1503, 0.0
        %v1731 = vmax.f32 %v1505, 0.0
        %v1732 = vmax.f32 %v1507, 0.0
        %v1733 = vmax.f32 %v1511, 0.0
        %v1734 = vmax.f32 %v1513, 0.0
        %v1735 = vmax.f32 %v1515, 0.0
        %v1736 = vmax.f32 %v1517, 0.0
        %v1737 = vmax.f32 %v1521, 0.0
        %v1738 = vmax.f32 %v1523, 0.0
        %v1739 = vmax.f32 %v1525, 0.0
        %v1740 = vmax.f32 %v1527, 0.0
        %v1741 = vmax.f32 %v1531, 0.0
        %v1742 = vmax.f32 %v1533, 0.0
        %v1743 = vmax.f32 %v1535, 0.0
        %v1744 = vmax.f32 %v1537, 0.0
        %v1745 = vmax.f32 %v1541, 0.0
        %v1746 = vmax.f32 %v1543, 0.0
        %v1747 = vmax.f32 %v1545, 0.0
        %v1748 = vmax.f32 %v1547, 0.0
        %v1749 = vmax.f32 %v1551, 0.0
        %v1750 = vmax.f32 %v1553, 0.0
        %v1751 = vmax.f32 %v1555, 0.0
        %v1752 = vmax.f32 %v1557, 0.0
        %v1753 = vmax.f32 %v1561, 0.0
        %v1754 = vmax.f32 %v1563, 0.0
        %v1755 = vmax.f32 %v1565, 0.0
        %v1756 = vmax.f32 %v1567, 0.0
        %v1757 = vmax.f32 %v1571, 0.0
        %v1758 = vmax.f32 %v1573, 0.0
        %v1759 = vmax.f32 %v1575, 0.0
        %v1760 = vmax.f32 %v1577, 0.0
        %v1761 = vmax.f32 %v1581, 0.0
        %v1762 = vmax.f32 %v1583, 0.0
        %v1763 = vmax.f32 %v1585, 0.0
        %v1764 = vmax.f32 %v1587, 0.0
        %v1765 = vmax.f32 %v1591, 0.0
        %v1766 = vmax.f32 %v1593, 0.0
        %v1767 = vmax.f32 %v1595, 0.0
        %v1768 = vmax.f32 %v1597, 0.0
        %v1769 = vmax.f32 %v1601, 0.0
        %v1770 = vmax.f32 %v1603, 0.0
        %v1771 = vmax.f32 %v1605, 0.0
        %v1772 = vmax.f32 %v1607, 0.0
        %v1773 = vmax.f32 %v1611, 0.0
        %v1774 = vmax.f32 %v1613, 0.0
        %v1775 = vmax.f32 %v1615, 0.0
        %v1776 = vmax.f32 %v1617, 0.0
        %v1777 = vmax.f32 %v1621, 0.0
        %v1778 = vmax.f32 %v1623, 0.0
        %v1779 = vmax.f32 %v1625, 0.0
        %v1780 = vmax.f32 %v1627, 0.0
        %v1781 = vmax.f32 %v1631, 0.0
        %v1782 = vmax.f32 %v1633, 0.0
        %v1783 = vmax.f32 %v1635, 0.0
        %v1784 = vmax.f32 %v1637, 0.0
        %v1785 = vmax.f32 %v1641, 0.0
        %v1786 = vmax.f32 %v1643, 0.0
        %v1787 = vmax.f32 %v1645, 0.0
        %v1788 = vmax.f32 %v1647, 0.0
        %v1789 = vmax.f32 %v1651, 0.0
        %v1790 = vmax.f32 %v1653, 0.0
        %v1791 = vmax.f32 %v1655, 0.0
        %v1792 = vmax.f32 %v1657, 0.0
        %v1793 = vmax.f32 %v1661, 0.0
        %v1794 = vmax.f32 %v1663, 0.0
        %v1795 = vmax.f32 %v1665, 0.0
        %v1796 = vmax.f32 %v1667, 0.0
        %v1797 = vpack.c.bf16 %v1671, %v1669
        %v1798 = vpack.c.bf16 %v1672, %v1670
        %v1799 = vpack.c.bf16 %v1675, %v1673
        %v1800 = vpack.c.bf16 %v1676, %v1674
        %v1801 = vpack.c.bf16 %v1679, %v1677
        %v1802 = vpack.c.bf16 %v1680, %v1678
        %v1803 = vpack.c.bf16 %v1683, %v1681
        %v1804 = vpack.c.bf16 %v1684, %v1682
        %v1805 = vpack.c.bf16 %v1687, %v1685
        %v1806 = vpack.c.bf16 %v1688, %v1686
        %v1807 = vpack.c.bf16 %v1691, %v1689
        %v1808 = vpack.c.bf16 %v1692, %v1690
        %v1809 = vpack.c.bf16 %v1695, %v1693
        %v1810 = vpack.c.bf16 %v1696, %v1694
        %v1811 = vpack.c.bf16 %v1699, %v1697
        %v1812 = vpack.c.bf16 %v1700, %v1698
        %v1813 = vpack.c.bf16 %v1703, %v1701
        %v1814 = vpack.c.bf16 %v1704, %v1702
        %v1815 = vpack.c.bf16 %v1707, %v1705
        %v1816 = vpack.c.bf16 %v1708, %v1706
        %v1817 = vpack.c.bf16 %v1711, %v1709
        %v1818 = vpack.c.bf16 %v1712, %v1710
        %v1819 = vpack.c.bf16 %v1715, %v1713
        %v1820 = vpack.c.bf16 %v1716, %v1714
        %v1821 = vpack.c.bf16 %v1719, %v1717
        %v1822 = vpack.c.bf16 %v1720, %v1718
        %v1823 = vpack.c.bf16 %v1723, %v1721
        %v1824 = vpack.c.bf16 %v1724, %v1722
        %v1825 = vpack.c.bf16 %v1727, %v1725
        %v1826 = vpack.c.bf16 %v1728, %v1726
        %v1827 = vpack.c.bf16 %v1731, %v1729
        %v1828 = vpack.c.bf16 %v1732, %v1730
        %v1829 = vpack.c.bf16 %v1735, %v1733
        %v1830 = vpack.c.bf16 %v1736, %v1734
        %v1831 = vpack.c.bf16 %v1739, %v1737
        %v1832 = vpack.c.bf16 %v1740, %v1738
        %v1833 = vpack.c.bf16 %v1743, %v1741
        %v1834 = vpack.c.bf16 %v1744, %v1742
        %v1835 = vpack.c.bf16 %v1747, %v1745
        %v1836 = vpack.c.bf16 %v1748, %v1746
        %v1837 = vpack.c.bf16 %v1751, %v1749
        %v1838 = vpack.c.bf16 %v1752, %v1750
        %v1839 = vpack.c.bf16 %v1755, %v1753
        %v1840 = vpack.c.bf16 %v1756, %v1754
        %v1841 = vpack.c.bf16 %v1759, %v1757
        %v1842 = vpack.c.bf16 %v1760, %v1758
        %v1843 = vpack.c.bf16 %v1763, %v1761
        %v1844 = vpack.c.bf16 %v1764, %v1762
        %v1845 = vpack.c.bf16 %v1767, %v1765
        %v1846 = vpack.c.bf16 %v1768, %v1766
        %v1847 = vpack.c.bf16 %v1771, %v1769
        %v1848 = vpack.c.bf16 %v1772, %v1770
        %v1849 = vpack.c.bf16 %v1775, %v1773
        %v1850 = vpack.c.bf16 %v1776, %v1774
        %v1851 = vpack.c.bf16 %v1779, %v1777
        %v1852 = vpack.c.bf16 %v1780, %v1778
        %v1853 = vpack.c.bf16 %v1783, %v1781
        %v1854 = vpack.c.bf16 %v1784, %v1782
        %v1855 = vpack.c.bf16 %v1787, %v1785
        %v1856 = vpack.c.bf16 %v1788, %v1786
        %v1857 = vpack.c.bf16 %v1791, %v1789
        %v1858 = vpack.c.bf16 %v1792, %v1790
        %v1859 = vpack.c.bf16 %v1795, %v1793
        %v1860 = vpack.c.bf16 %v1796, %v1794
        %v1861 = vld [vmem:[#allocation8] sm:$0xff]
        %v1862 = vld [vmem:[#allocation8 + $0x8] sm:$0xff]
        %v1863 = vld [vmem:[#allocation8 + $0x10] sm:$0xff]
        %v1864 = vld [vmem:[#allocation8 + $0x18] sm:$0xff]
        %v1865 = vld [vmem:[#allocation8 + $0x20] sm:$0xff]
        %v1866 = vld [vmem:[#allocation8 + $0x28] sm:$0xff]
        %v1867 = vld [vmem:[#allocation8 + $0x30] sm:$0xff]
        %v1868 = vld [vmem:[#allocation8 + $0x38] sm:$0xff]
        %v1869 = vld [vmem:[#allocation8 + $0x40] sm:$0xff]
        %v1870 = vld [vmem:[#allocation8 + $0x48] sm:$0xff]
        %v1871 = vld [vmem:[#allocation8 + $0x50] sm:$0xff]
        %v1872 = vld [vmem:[#allocation8 + $0x58] sm:$0xff]
        %v1873 = vld [vmem:[#allocation8 + $0x60] sm:$0xff]
        %v1874 = vld [vmem:[#allocation8 + $0x68] sm:$0xff]
        %v1875 = vld [vmem:[#allocation8 + $0x70] sm:$0xff]
        %v1876 = vld [vmem:[#allocation8 + $0x78] sm:$0xff]
        %v1877 = vld [vmem:[#allocation8 + $0x80] sm:$0xff]
        %v1878 = vld [vmem:[#allocation8 + $0x88] sm:$0xff]
        %v1879 = vld [vmem:[#allocation8 + $0x90] sm:$0xff]
        %v1880 = vld [vmem:[#allocation8 + $0x98] sm:$0xff]
        %v1881 = vld [vmem:[#allocation8 + $0xa0] sm:$0xff]
        %v1882 = vld [vmem:[#allocation8 + $0xa8] sm:$0xff]
        %v1883 = vld [vmem:[#allocation8 + $0xb0] sm:$0xff]
        %v1884 = vld [vmem:[#allocation8 + $0xb8] sm:$0xff]
        %v1885 = vld [vmem:[#allocation8 + $0xc0] sm:$0xff]
        %v1886 = vld [vmem:[#allocation8 + $0xc8] sm:$0xff]
        %v1887 = vld [vmem:[#allocation8 + $0xd0] sm:$0xff]
        %v1888 = vld [vmem:[#allocation8 + $0xd8] sm:$0xff]
        %v1889 = vld [vmem:[#allocation8 + $0xe0] sm:$0xff]
        %v1890 = vld [vmem:[#allocation8 + $0xe8] sm:$0xff]
        %v1891 = vld [vmem:[#allocation8 + $0xf0] sm:$0xff]
        %v1892 = vld [vmem:[#allocation8 + $0xf8] sm:$0xff]
        %v1893 = vld [vmem:[#allocation10] sm:$0x3]
        %v1895 = vlaneseq
        %v1896 = vshrl.u32 %v1895, 7
        %v1897 = vsub.s32 0, %v1896
        %v1898 = vrot.slane %v1893, %v1897
        %v1899 = vlaneseq
        %v1900 = vshrl.u32 %v1899, 7
        %v1901 = vsub.s32 1, %v1900
        %v1902 = vrot.slane %v1893, %v1901
        %v1937 = vunpack.c.l.b16 %v1861
        %v1938 = vunpack.c.h.b16 %v1861
        %v1939 = vunpack.c.l.b16 %v1862
        %v1940 = vunpack.c.h.b16 %v1862
        %v1941 = vunpack.c.l.b16 %v1863
        %v1942 = vunpack.c.h.b16 %v1863
        %v1943 = vunpack.c.l.b16 %v1864
        %v1944 = vunpack.c.h.b16 %v1864
        %v1945 = vunpack.c.l.b16 %v1865
        %v1946 = vunpack.c.h.b16 %v1865
        %v1947 = vunpack.c.l.b16 %v1866
        %v1948 = vunpack.c.h.b16 %v1866
        %v1949 = vunpack.c.l.b16 %v1867
        %v1950 = vunpack.c.h.b16 %v1867
        %v1951 = vunpack.c.l.b16 %v1868
        %v1952 = vunpack.c.h.b16 %v1868
        %v1953 = vunpack.c.l.b16 %v1869
        %v1954 = vunpack.c.h.b16 %v1869
        %v1955 = vunpack.c.l.b16 %v1870
        %v1956 = vunpack.c.h.b16 %v1870
        %v1957 = vunpack.c.l.b16 %v1871
        %v1958 = vunpack.c.h.b16 %v1871
        %v1959 = vunpack.c.l.b16 %v1872
        %v1960 = vunpack.c.h.b16 %v1872
        %v1961 = vunpack.c.l.b16 %v1873
        %v1962 = vunpack.c.h.b16 %v1873
        %v1963 = vunpack.c.l.b16 %v1874
        %v1964 = vunpack.c.h.b16 %v1874
        %v1965 = vunpack.c.l.b16 %v1875
        %v1966 = vunpack.c.h.b16 %v1875
        %v1967 = vunpack.c.l.b16 %v1876
        %v1968 = vunpack.c.h.b16 %v1876
        %v1969 = vunpack.c.l.b16 %v1877
        %v1970 = vunpack.c.h.b16 %v1877
        %v1971 = vunpack.c.l.b16 %v1878
        %v1972 = vunpack.c.h.b16 %v1878
        %v1973 = vunpack.c.l.b16 %v1879
        %v1974 = vunpack.c.h.b16 %v1879
        %v1975 = vunpack.c.l.b16 %v1880
        %v1976 = vunpack.c.h.b16 %v1880
        %v1977 = vunpack.c.l.b16 %v1881
        %v1978 = vunpack.c.h.b16 %v1881
        %v1979 = vunpack.c.l.b16 %v1882
        %v1980 = vunpack.c.h.b16 %v1882
        %v1981 = vunpack.c.l.b16 %v1883
        %v1982 = vunpack.c.h.b16 %v1883
        %v1983 = vunpack.c.l.b16 %v1884
        %v1984 = vunpack.c.h.b16 %v1884
        %v1985 = vunpack.c.l.b16 %v1885
        %v1986 = vunpack.c.h.b16 %v1885
        %v1987 = vunpack.c.l.b16 %v1886
        %v1988 = vunpack.c.h.b16 %v1886
        %v1989 = vunpack.c.l.b16 %v1887
        %v1990 = vunpack.c.h.b16 %v1887
        %v1991 = vunpack.c.l.b16 %v1888
        %v1992 = vunpack.c.h.b16 %v1888
        %v1993 = vunpack.c.l.b16 %v1889
        %v1994 = vunpack.c.h.b16 %v1889
        %v1995 = vunpack.c.l.b16 %v1890
        %v1996 = vunpack.c.h.b16 %v1890
        %v1997 = vunpack.c.l.b16 %v1891
        %v1998 = vunpack.c.h.b16 %v1891
        %v1999 = vunpack.c.l.b16 %v1892
        %v2000 = vunpack.c.h.b16 %v1892
        %v2001 = vpack.c.b16 %v1939, %v1937
        %v2002 = vpack.c.b16 %v1940, %v1938
        %v2003 = vpack.c.b16 %v1943, %v1941
        %v2004 = vpack.c.b16 %v1944, %v1942
        %v2005 = vpack.c.b16 %v1947, %v1945
        %v2006 = vpack.c.b16 %v1948, %v1946
        %v2007 = vpack.c.b16 %v1951, %v1949
        %v2008 = vpack.c.b16 %v1952, %v1950
        %v2009 = vpack.c.b16 %v1955, %v1953
        %v2010 = vpack.c.b16 %v1956, %v1954
        %v2011 = vpack.c.b16 %v1959, %v1957
        %v2012 = vpack.c.b16 %v1960, %v1958
        %v2013 = vpack.c.b16 %v1963, %v1961
        %v2014 = vpack.c.b16 %v1964, %v1962
        %v2015 = vpack.c.b16 %v1967, %v1965
        %v2016 = vpack.c.b16 %v1968, %v1966
        %v2017 = vpack.c.b16 %v1971, %v1969
        %v2018 = vpack.c.b16 %v1972, %v1970
        %v2019 = vpack.c.b16 %v1975, %v1973
        %v2020 = vpack.c.b16 %v1976, %v1974
        %v2021 = vpack.c.b16 %v1979, %v1977
        %v2022 = vpack.c.b16 %v1980, %v1978
        %v2023 = vpack.c.b16 %v1983, %v1981
        %v2024 = vpack.c.b16 %v1984, %v1982
        %v2025 = vpack.c.b16 %v1987, %v1985
        %v2026 = vpack.c.b16 %v1988, %v1986
        %v2027 = vpack.c.b16 %v1991, %v1989
        %v2028 = vpack.c.b16 %v1992, %v1990
        %v2029 = vpack.c.b16 %v1995, %v1993
        %v2030 = vpack.c.b16 %v1996, %v1994
        %v2031 = vpack.c.b16 %v1999, %v1997
        %v2032 = vpack.c.b16 %v2000, %v1998
        %2065 = vmatprep.subr.bf16.mxu0 %v2002
        %2066 = vmatpush1.bf16.msra.mxu0 %v2001
        %2067 = vmatprep.subr.bf16.mxu0 %v2004
        %2068 = vmatpush1.bf16.msra.mxu0 %v2003
        %2069 = vmatprep.subr.bf16.mxu0 %v2006
        %2070 = vmatpush1.bf16.msra.mxu0 %v2005
        %2071 = vmatprep.subr.bf16.mxu0 %v2008
        %2072 = vmatpush1.bf16.msra.mxu0 %v2007
        %2073 = vmatprep.subr.bf16.mxu0 %v2010
        %2074 = vmatpush1.bf16.msra.mxu0 %v2009
        %2075 = vmatprep.subr.bf16.mxu0 %v2012
        %2076 = vmatpush1.bf16.msra.mxu0 %v2011
        %2077 = vmatprep.subr.bf16.mxu0 %v2014
        %2078 = vmatpush1.bf16.msra.mxu0 %v2013
        %2079 = vmatprep.subr.bf16.mxu0 %v2016
        %2080 = vmatpush1.bf16.msra.mxu0 %v2015
        %2081 = vmatprep.subr.bf16.mxu0 %v2018
        %2082 = vmatpush1.bf16.msra.mxu0 %v2017
        %2083 = vmatprep.subr.bf16.mxu0 %v2020
        %2084 = vmatpush1.bf16.msra.mxu0 %v2019
        %2085 = vmatprep.subr.bf16.mxu0 %v2022
        %2086 = vmatpush1.bf16.msra.mxu0 %v2021
        %2087 = vmatprep.subr.bf16.mxu0 %v2024
        %2088 = vmatpush1.bf16.msra.mxu0 %v2023
        %2089 = vmatprep.subr.bf16.mxu0 %v2026
        %2090 = vmatpush1.bf16.msra.mxu0 %v2025
        %2091 = vmatprep.subr.bf16.mxu0 %v2028
        %2092 = vmatpush1.bf16.msra.mxu0 %v2027
        %2093 = vmatprep.subr.bf16.mxu0 %v2030
        %2094 = vmatpush1.bf16.msra.mxu0 %v2029
        %2095 = vmatprep.subr.bf16.mxu0 %v2032
        %2096 = vmatpush1.bf16.msra.mxu0 %v2031
        %2097 = vmatprep.mubr.bf16.mxu0 %v1798
        %2098 = vmatmul.mubr.bf16.gmra.mrb[0].mxu0 %v1797
        %v2099 = vpop.f32.mrb[0].mxu0
        %v2100 = vadd.f32 %v1898, %v2099
        %v2101 = vpop.f32.mrb[0].mxu0
        %v2102 = vadd.f32 %v1902, %v2101
        %v2103 = vpop.f32.mrb[0].mxu0
        %v2104 = vadd.f32 %v1898, %v2103
        %v2105 = vpop.f32.mrb[0].mxu0
        %v2106 = vadd.f32 %v1902, %v2105
        %2107 = vmatprep.mubr.bf16.mxu0 %v1800
        %2108 = vmatmul.mubr.bf16.gmra.mrb[0].mxu0 %v1799
        %v2109 = vpop.f32.mrb[0].mxu0
        %v2110 = vadd.f32 %v1898, %v2109
        %v2111 = vpop.f32.mrb[0].mxu0
        %v2112 = vadd.f32 %v1902, %v2111
        %v2113 = vpop.f32.mrb[0].mxu0
        %v2114 = vadd.f32 %v1898, %v2113
        %v2115 = vpop.f32.mrb[0].mxu0
        %v2116 = vadd.f32 %v1902, %v2115
        %2117 = vmatprep.mubr.bf16.mxu0 %v1802
        %2118 = vmatmul.mubr.bf16.gmra.mrb[0].mxu0 %v1801
        %v2119 = vpop.f32.mrb[0].mxu0
        %v2120 = vadd.f32 %v1898, %v2119
        %v2121 = vpop.f32.mrb[0].mxu0
        %v2122 = vadd.f32 %v1902, %v2121
        %v2123 = vpop.f32.mrb[0].mxu0
        %v2124 = vadd.f32 %v1898, %v2123
        %v2125 = vpop.f32.mrb[0].mxu0
        %v2126 = vadd.f32 %v1902, %v2125
        %2127 = vmatprep.mubr.bf16.mxu0 %v1804
        %2128 = vmatmul.mubr.bf16.gmra.mrb[0].mxu0 %v1803
        %v2129 = vpop.f32.mrb[0].mxu0
        %v2130 = vadd.f32 %v1898, %v2129
        %v2131 = vpop.f32.mrb[0].mxu0
        %v2132 = vadd.f32 %v1902, %v2131
        %v2133 = vpop.f32.mrb[0].mxu0
        %v2134 = vadd.f32 %v1898, %v2133
        %v2135 = vpop.f32.mrb[0].mxu0
        %v2136 = vadd.f32 %v1902, %v2135
        %2137 = vmatprep.mubr.bf16.mxu0 %v1806
        %2138 = vmatmul.mubr.bf16.gmra.mrb[0].mxu0 %v1805
        %v2139 = vpop.f32.mrb[0].mxu0
        %v2140 = vadd.f32 %v1898, %v2139
        %v2141 = vpop.f32.mrb[0].mxu0
        %v2142 = vadd.f32 %v1902, %v2141
        %v2143 = vpop.f32.mrb[0].mxu0
        %v2144 = vadd.f32 %v1898, %v2143
        %v2145 = vpop.f32.mrb[0].mxu0
        %v2146 = vadd.f32 %v1902, %v2145
        %2147 = vmatprep.mubr.bf16.mxu0 %v1808
        %2148 = vmatmul.mubr.bf16.gmra.mrb[0].mxu0 %v1807
        %v2149 = vpop.f32.mrb[0].mxu0
        %v2150 = vadd.f32 %v1898, %v2149
        %v2151 = vpop.f32.mrb[0].mxu0
        %v2152 = vadd.f32 %v1902, %v2151
        %v2153 = vpop.f32.mrb[0].mxu0
        %v2154 = vadd.f32 %v1898, %v2153
        %v2155 = vpop.f32.mrb[0].mxu0
        %v2156 = vadd.f32 %v1902, %v2155
        %2157 = vmatprep.mubr.bf16.mxu0 %v1810
        %2158 = vmatmul.mubr.bf16.gmra.mrb[0].mxu0 %v1809
        %v2159 = vpop.f32.mrb[0].mxu0
        %v2160 = vadd.f32 %v1898, %v2159
        %v2161 = vpop.f32.mrb[0].mxu0
        %v2162 = vadd.f32 %v1902, %v2161
        %v2163 = vpop.f32.mrb[0].mxu0
        %v2164 = vadd.f32 %v1898, %v2163
        %v2165 = vpop.f32.mrb[0].mxu0
        %v2166 = vadd.f32 %v1902, %v2165
        %2167 = vmatprep.mubr.bf16.mxu0 %v1812
        %2168 = vmatmul.mubr.bf16.gmra.mrb[0].mxu0 %v1811
        %v2169 = vpop.f32.mrb[0].mxu0
        %v2170 = vadd.f32 %v1898, %v2169
        %v2171 = vpop.f32.mrb[0].mxu0
        %v2172 = vadd.f32 %v1902, %v2171
        %v2173 = vpop.f32.mrb[0].mxu0
        %v2174 = vadd.f32 %v1898, %v2173
        %v2175 = vpop.f32.mrb[0].mxu0
        %v2176 = vadd.f32 %v1902, %v2175
        %2177 = vmatprep.mubr.bf16.mxu0 %v1814
        %2178 = vmatmul.mubr.bf16.gmra.mrb[0].mxu0 %v1813
        %v2179 = vpop.f32.mrb[0].mxu0
        %v2180 = vadd.f32 %v1898, %v2179
        %v2181 = vpop.f32.mrb[0].mxu0
        %v2182 = vadd.f32 %v1902, %v2181
        %v2183 = vpop.f32.mrb[0].mxu0
        %v2184 = vadd.f32 %v1898, %v2183
        %v2185 = vpop.f32.mrb[0].mxu0
        %v2186 = vadd.f32 %v1902, %v2185
        %2187 = vmatprep.mubr.bf16.mxu0 %v1816
        %2188 = vmatmul.mubr.bf16.gmra.mrb[0].mxu0 %v1815
        %v2189 = vpop.f32.mrb[0].mxu0
        %v2190 = vadd.f32 %v1898, %v2189
        %v2191 = vpop.f32.mrb[0].mxu0
        %v2192 = vadd.f32 %v1902, %v2191
        %v2193 = vpop.f32.mrb[0].mxu0
        %v2194 = vadd.f32 %v1898, %v2193
        %v2195 = vpop.f32.mrb[0].mxu0
        %v2196 = vadd.f32 %v1902, %v2195
        %2197 = vmatprep.mubr.bf16.mxu0 %v1818
        %2198 = vmatmul.mubr.bf16.gmra.mrb[0].mxu0 %v1817
        %v2199 = vpop.f32.mrb[0].mxu0
        %v2200 = vadd.f32 %v1898, %v2199
        %v2201 = vpop.f32.mrb[0].mxu0
        %v2202 = vadd.f32 %v1902, %v2201
        %v2203 = vpop.f32.mrb[0].mxu0
        %v2204 = vadd.f32 %v1898, %v2203
        %v2205 = vpop.f32.mrb[0].mxu0
        %v2206 = vadd.f32 %v1902, %v2205
        %2207 = vmatprep.mubr.bf16.mxu0 %v1820
        %2208 = vmatmul.mubr.bf16.gmra.mrb[0].mxu0 %v1819
        %v2209 = vpop.f32.mrb[0].mxu0
        %v2210 = vadd.f32 %v1898, %v2209
        %v2211 = vpop.f32.mrb[0].mxu0
        %v2212 = vadd.f32 %v1902, %v2211
        %v2213 = vpop.f32.mrb[0].mxu0
        %v2214 = vadd.f32 %v1898, %v2213
        %v2215 = vpop.f32.mrb[0].mxu0
        %v2216 = vadd.f32 %v1902, %v2215
        %2217 = vmatprep.mubr.bf16.mxu0 %v1822
        %2218 = vmatmul.mubr.bf16.gmra.mrb[0].mxu0 %v1821
        %v2219 = vpop.f32.mrb[0].mxu0
        %v2220 = vadd.f32 %v1898, %v2219
        %v2221 = vpop.f32.mrb[0].mxu0
        %v2222 = vadd.f32 %v1902, %v2221
        %v2223 = vpop.f32.mrb[0].mxu0
        %v2224 = vadd.f32 %v1898, %v2223
        %v2225 = vpop.f32.mrb[0].mxu0
        %v2226 = vadd.f32 %v1902, %v2225
        %2227 = vmatprep.mubr.bf16.mxu0 %v1824
        %2228 = vmatmul.mubr.bf16.gmra.mrb[0].mxu0 %v1823
        %v2229 = vpop.f32.mrb[0].mxu0
        %v2230 = vadd.f32 %v1898, %v2229
        %v2231 = vpop.f32.mrb[0].mxu0
        %v2232 = vadd.f32 %v1902, %v2231
        %v2233 = vpop.f32.mrb[0].mxu0
        %v2234 = vadd.f32 %v1898, %v2233
        %v2235 = vpop.f32.mrb[0].mxu0
        %v2236 = vadd.f32 %v1902, %v2235
        %2237 = vmatprep.mubr.bf16.mxu0 %v1826
        %2238 = vmatmul.mubr.bf16.gmra.mrb[0].mxu0 %v1825
        %v2239 = vpop.f32.mrb[0].mxu0
        %v2240 = vadd.f32 %v1898, %v2239
        %v2241 = vpop.f32.mrb[0].mxu0
        %v2242 = vadd.f32 %v1902, %v2241
        %v2243 = vpop.f32.mrb[0].mxu0
        %v2244 = vadd.f32 %v1898, %v2243
        %v2245 = vpop.f32.mrb[0].mxu0
        %v2246 = vadd.f32 %v1902, %v2245
        %2247 = vmatprep.mubr.bf16.mxu0 %v1828
        %2248 = vmatmul.mubr.bf16.gmra.mrb[0].mxu0 %v1827
        %v2249 = vpop.f32.mrb[0].mxu0
        %v2250 = vadd.f32 %v1898, %v2249
        %v2251 = vpop.f32.mrb[0].mxu0
        %v2252 = vadd.f32 %v1902, %v2251
        %v2253 = vpop.f32.mrb[0].mxu0
        %v2254 = vadd.f32 %v1898, %v2253
        %v2255 = vpop.f32.mrb[0].mxu0
        %v2256 = vadd.f32 %v1902, %v2255
        %2257 = vmatprep.mubr.bf16.mxu0 %v1830
        %2258 = vmatmul.mubr.bf16.gmra.mrb[0].mxu0 %v1829
        %v2259 = vpop.f32.mrb[0].mxu0
        %v2260 = vadd.f32 %v1898, %v2259
        %v2261 = vpop.f32.mrb[0].mxu0
        %v2262 = vadd.f32 %v1902, %v2261
        %v2263 = vpop.f32.mrb[0].mxu0
        %v2264 = vadd.f32 %v1898, %v2263
        %v2265 = vpop.f32.mrb[0].mxu0
        %v2266 = vadd.f32 %v1902, %v2265
        %2267 = vmatprep.mubr.bf16.mxu0 %v1832
        %2268 = vmatmul.mubr.bf16.gmra.mrb[0].mxu0 %v1831
        %v2269 = vpop.f32.mrb[0].mxu0
        %v2270 = vadd.f32 %v1898, %v2269
        %v2271 = vpop.f32.mrb[0].mxu0
        %v2272 = vadd.f32 %v1902, %v2271
        %v2273 = vpop.f32.mrb[0].mxu0
        %v2274 = vadd.f32 %v1898, %v2273
        %v2275 = vpop.f32.mrb[0].mxu0
        %v2276 = vadd.f32 %v1902, %v2275
        %2277 = vmatprep.mubr.bf16.mxu0 %v1834
        %2278 = vmatmul.mubr.bf16.gmra.mrb[0].mxu0 %v1833
        %v2279 = vpop.f32.mrb[0].mxu0
        %v2280 = vadd.f32 %v1898, %v2279
        %v2281 = vpop.f32.mrb[0].mxu0
        %v2282 = vadd.f32 %v1902, %v2281
        %v2283 = vpop.f32.mrb[0].mxu0
        %v2284 = vadd.f32 %v1898, %v2283
        %v2285 = vpop.f32.mrb[0].mxu0
        %v2286 = vadd.f32 %v1902, %v2285
        %2287 = vmatprep.mubr.bf16.mxu0 %v1836
        %2288 = vmatmul.mubr.bf16.gmra.mrb[0].mxu0 %v1835
        %v2289 = vpop.f32.mrb[0].mxu0
        %v2290 = vadd.f32 %v1898, %v2289
        %v2291 = vpop.f32.mrb[0].mxu0
        %v2292 = vadd.f32 %v1902, %v2291
        %v2293 = vpop.f32.mrb[0].mxu0
        %v2294 = vadd.f32 %v1898, %v2293
        %v2295 = vpop.f32.mrb[0].mxu0
        %v2296 = vadd.f32 %v1902, %v2295
        %2297 = vmatprep.mubr.bf16.mxu0 %v1838
        %2298 = vmatmul.mubr.bf16.gmra.mrb[0].mxu0 %v1837
        %v2299 = vpop.f32.mrb[0].mxu0
        %v2300 = vadd.f32 %v1898, %v2299
        %v2301 = vpop.f32.mrb[0].mxu0
        %v2302 = vadd.f32 %v1902, %v2301
        %v2303 = vpop.f32.mrb[0].mxu0
        %v2304 = vadd.f32 %v1898, %v2303
        %v2305 = vpop.f32.mrb[0].mxu0
        %v2306 = vadd.f32 %v1902, %v2305
        %2307 = vmatprep.mubr.bf16.mxu0 %v1840
        %2308 = vmatmul.mubr.bf16.gmra.mrb[0].mxu0 %v1839
        %v2309 = vpop.f32.mrb[0].mxu0
        %v2310 = vadd.f32 %v1898, %v2309
        %v2311 = vpop.f32.mrb[0].mxu0
        %v2312 = vadd.f32 %v1902, %v2311
        %v2313 = vpop.f32.mrb[0].mxu0
        %v2314 = vadd.f32 %v1898, %v2313
        %v2315 = vpop.f32.mrb[0].mxu0
        %v2316 = vadd.f32 %v1902, %v2315
        %2317 = vmatprep.mubr.bf16.mxu0 %v1842
        %2318 = vmatmul.mubr.bf16.gmra.mrb[0].mxu0 %v1841
        %v2319 = vpop.f32.mrb[0].mxu0
        %v2320 = vadd.f32 %v1898, %v2319
        %v2321 = vpop.f32.mrb[0].mxu0
        %v2322 = vadd.f32 %v1902, %v2321
        %v2323 = vpop.f32.mrb[0].mxu0
        %v2324 = vadd.f32 %v1898, %v2323
        %v2325 = vpop.f32.mrb[0].mxu0
        %v2326 = vadd.f32 %v1902, %v2325
        %2327 = vmatprep.mubr.bf16.mxu0 %v1844
        %2328 = vmatmul.mubr.bf16.gmra.mrb[0].mxu0 %v1843
        %v2329 = vpop.f32.mrb[0].mxu0
        %v2330 = vadd.f32 %v1898, %v2329
        %v2331 = vpop.f32.mrb[0].mxu0
        %v2332 = vadd.f32 %v1902, %v2331
        %v2333 = vpop.f32.mrb[0].mxu0
        %v2334 = vadd.f32 %v1898, %v2333
        %v2335 = vpop.f32.mrb[0].mxu0
        %v2336 = vadd.f32 %v1902, %v2335
        %2337 = vmatprep.mubr.bf16.mxu0 %v1846
        %2338 = vmatmul.mubr.bf16.gmra.mrb[0].mxu0 %v1845
        %v2339 = vpop.f32.mrb[0].mxu0
        %v2340 = vadd.f32 %v1898, %v2339
        %v2341 = vpop.f32.mrb[0].mxu0
        %v2342 = vadd.f32 %v1902, %v2341
        %v2343 = vpop.f32.mrb[0].mxu0
        %v2344 = vadd.f32 %v1898, %v2343
        %v2345 = vpop.f32.mrb[0].mxu0
        %v2346 = vadd.f32 %v1902, %v2345
        %2347 = vmatprep.mubr.bf16.mxu0 %v1848
        %2348 = vmatmul.mubr.bf16.gmra.mrb[0].mxu0 %v1847
        %v2349 = vpop.f32.mrb[0].mxu0
        %v2350 = vadd.f32 %v1898, %v2349
        %v2351 = vpop.f32.mrb[0].mxu0
        %v2352 = vadd.f32 %v1902, %v2351
        %v2353 = vpop.f32.mrb[0].mxu0
        %v2354 = vadd.f32 %v1898, %v2353
        %v2355 = vpop.f32.mrb[0].mxu0
        %v2356 = vadd.f32 %v1902, %v2355
        %2357 = vmatprep.mubr.bf16.mxu0 %v1850
        %2358 = vmatmul.mubr.bf16.gmra.mrb[0].mxu0 %v1849
        %v2359 = vpop.f32.mrb[0].mxu0
        %v2360 = vadd.f32 %v1898, %v2359
        %v2361 = vpop.f32.mrb[0].mxu0
        %v2362 = vadd.f32 %v1902, %v2361
        %v2363 = vpop.f32.mrb[0].mxu0
        %v2364 = vadd.f32 %v1898, %v2363
        %v2365 = vpop.f32.mrb[0].mxu0
        %v2366 = vadd.f32 %v1902, %v2365
        %2367 = vmatprep.mubr.bf16.mxu0 %v1852
        %2368 = vmatmul.mubr.bf16.gmra.mrb[0].mxu0 %v1851
        %v2369 = vpop.f32.mrb[0].mxu0
        %v2370 = vadd.f32 %v1898, %v2369
        %v2371 = vpop.f32.mrb[0].mxu0
        %v2372 = vadd.f32 %v1902, %v2371
        %v2373 = vpop.f32.mrb[0].mxu0
        %v2374 = vadd.f32 %v1898, %v2373
        %v2375 = vpop.f32.mrb[0].mxu0
        %v2376 = vadd.f32 %v1902, %v2375
        %2377 = vmatprep.mubr.bf16.mxu0 %v1854
        %2378 = vmatmul.mubr.bf16.gmra.mrb[0].mxu0 %v1853
        %v2379 = vpop.f32.mrb[0].mxu0
        %v2380 = vadd.f32 %v1898, %v2379
        %v2381 = vpop.f32.mrb[0].mxu0
        %v2382 = vadd.f32 %v1902, %v2381
        %v2383 = vpop.f32.mrb[0].mxu0
        %v2384 = vadd.f32 %v1898, %v2383
        %v2385 = vpop.f32.mrb[0].mxu0
        %v2386 = vadd.f32 %v1902, %v2385
        %2387 = vmatprep.mubr.bf16.mxu0 %v1856
        %2388 = vmatmul.mubr.bf16.gmra.mrb[0].mxu0 %v1855
        %v2389 = vpop.f32.mrb[0].mxu0
        %v2390 = vadd.f32 %v1898, %v2389
        %v2391 = vpop.f32.mrb[0].mxu0
        %v2392 = vadd.f32 %v1902, %v2391
        %v2393 = vpop.f32.mrb[0].mxu0
        %v2394 = vadd.f32 %v1898, %v2393
        %v2395 = vpop.f32.mrb[0].mxu0
        %v2396 = vadd.f32 %v1902, %v2395
        %2397 = vmatprep.mubr.bf16.mxu0 %v1858
        %2398 = vmatmul.mubr.bf16.gmra.mrb[0].mxu0 %v1857
        %v2399 = vpop.f32.mrb[0].mxu0
        %v2400 = vadd.f32 %v1898, %v2399
        %v2401 = vpop.f32.mrb[0].mxu0
        %v2402 = vadd.f32 %v1902, %v2401
        %v2403 = vpop.f32.mrb[0].mxu0
        %v2404 = vadd.f32 %v1898, %v2403
        %v2405 = vpop.f32.mrb[0].mxu0
        %v2406 = vadd.f32 %v1902, %v2405
        %2407 = vmatprep.mubr.bf16.mxu0 %v1860
        %2408 = vmatmul.mubr.bf16.gmra.mrb[0].mxu0 %v1859
        %v2409 = vpop.f32.mrb[0].mxu0
        %v2410 = vadd.f32 %v1898, %v2409
        %v2411 = vpop.f32.mrb[0].mxu0
        %v2412 = vadd.f32 %v1902, %v2411
        %v2413 = vpop.f32.mrb[0].mxu0
        %v2414 = vadd.f32 %v1898, %v2413
        %v2415 = vpop.f32.mrb[0].mxu0
        %v2416 = vadd.f32 %v1902, %v2415
        %2417 = vdwg.mxu0
        %v2418 = vmax.f32 %v2100, 0.0
        %v2419 = vmax.f32 %v2102, 0.0
        %v2420 = vmax.f32 %v2104, 0.0
        %v2421 = vmax.f32 %v2106, 0.0
        %v2422 = vmax.f32 %v2110, 0.0
        %v2423 = vmax.f32 %v2112, 0.0
        %v2424 = vmax.f32 %v2114, 0.0
        %v2425 = vmax.f32 %v2116, 0.0
        %v2426 = vmax.f32 %v2120, 0.0
        %v2427 = vmax.f32 %v2122, 0.0
        %v2428 = vmax.f32 %v2124, 0.0
        %v2429 = vmax.f32 %v2126, 0.0
        %v2430 = vmax.f32 %v2130, 0.0
        %v2431 = vmax.f32 %v2132, 0.0
        %v2432 = vmax.f32 %v2134, 0.0
        %v2433 = vmax.f32 %v2136, 0.0
        %v2434 = vmax.f32 %v2140, 0.0
        %v2435 = vmax.f32 %v2142, 0.0
        %v2436 = vmax.f32 %v2144, 0.0
        %v2437 = vmax.f32 %v2146, 0.0
        %v2438 = vmax.f32 %v2150, 0.0
        %v2439 = vmax.f32 %v2152, 0.0
        %v2440 = vmax.f32 %v2154, 0.0
        %v2441 = vmax.f32 %v2156, 0.0
        %v2442 = vmax.f32 %v2160, 0.0
        %v2443 = vmax.f32 %v2162, 0.0
        %v2444 = vmax.f32 %v2164, 0.0
        %v2445 = vmax.f32 %v2166, 0.0
        %v2446 = vmax.f32 %v2170, 0.0
        %v2447 = vmax.f32 %v2172, 0.0
        %v2448 = vmax.f32 %v2174, 0.0
        %v2449 = vmax.f32 %v2176, 0.0
        %v2450 = vmax.f32 %v2180, 0.0
        %v2451 = vmax.f32 %v2182, 0.0
        %v2452 = vmax.f32 %v2184, 0.0
        %v2453 = vmax.f32 %v2186, 0.0
        %v2454 = vmax.f32 %v2190, 0.0
        %v2455 = vmax.f32 %v2192, 0.0
        %v2456 = vmax.f32 %v2194, 0.0
        %v2457 = vmax.f32 %v2196, 0.0
        %v2458 = vmax.f32 %v2200, 0.0
        %v2459 = vmax.f32 %v2202, 0.0
        %v2460 = vmax.f32 %v2204, 0.0
        %v2461 = vmax.f32 %v2206, 0.0
        %v2462 = vmax.f32 %v2210, 0.0
        %v2463 = vmax.f32 %v2212, 0.0
        %v2464 = vmax.f32 %v2214, 0.0
        %v2465 = vmax.f32 %v2216, 0.0
        %v2466 = vmax.f32 %v2220, 0.0
        %v2467 = vmax.f32 %v2222, 0.0
        %v2468 = vmax.f32 %v2224, 0.0
        %v2469 = vmax.f32 %v2226, 0.0
        %v2470 = vmax.f32 %v2230, 0.0
        %v2471 = vmax.f32 %v2232, 0.0
        %v2472 = vmax.f32 %v2234, 0.0
        %v2473 = vmax.f32 %v2236, 0.0
        %v2474 = vmax.f32 %v2240, 0.0
        %v2475 = vmax.f32 %v2242, 0.0
        %v2476 = vmax.f32 %v2244, 0.0
        %v2477 = vmax.f32 %v2246, 0.0
        %v2478 = vmax.f32 %v2250, 0.0
        %v2479 = vmax.f32 %v2252, 0.0
        %v2480 = vmax.f32 %v2254, 0.0
        %v2481 = vmax.f32 %v2256, 0.0
        %v2482 = vmax.f32 %v2260, 0.0
        %v2483 = vmax.f32 %v2262, 0.0
        %v2484 = vmax.f32 %v2264, 0.0
        %v2485 = vmax.f32 %v2266, 0.0
        %v2486 = vmax.f32 %v2270, 0.0
        %v2487 = vmax.f32 %v2272, 0.0
        %v2488 = vmax.f32 %v2274, 0.0
        %v2489 = vmax.f32 %v2276, 0.0
        %v2490 = vmax.f32 %v2280, 0.0
        %v2491 = vmax.f32 %v2282, 0.0
        %v2492 = vmax.f32 %v2284, 0.0
        %v2493 = vmax.f32 %v2286, 0.0
        %v2494 = vmax.f32 %v2290, 0.0
        %v2495 = vmax.f32 %v2292, 0.0
        %v2496 = vmax.f32 %v2294, 0.0
        %v2497 = vmax.f32 %v2296, 0.0
        %v2498 = vmax.f32 %v2300, 0.0
        %v2499 = vmax.f32 %v2302, 0.0
        %v2500 = vmax.f32 %v2304, 0.0
        %v2501 = vmax.f32 %v2306, 0.0
        %v2502 = vmax.f32 %v2310, 0.0
        %v2503 = vmax.f32 %v2312, 0.0
        %v2504 = vmax.f32 %v2314, 0.0
        %v2505 = vmax.f32 %v2316, 0.0
        %v2506 = vmax.f32 %v2320, 0.0
        %v2507 = vmax.f32 %v2322, 0.0
        %v2508 = vmax.f32 %v2324, 0.0
        %v2509 = vmax.f32 %v2326, 0.0
        %v2510 = vmax.f32 %v2330, 0.0
        %v2511 = vmax.f32 %v2332, 0.0
        %v2512 = vmax.f32 %v2334, 0.0
        %v2513 = vmax.f32 %v2336, 0.0
        %v2514 = vmax.f32 %v2340, 0.0
        %v2515 = vmax.f32 %v2342, 0.0
        %v2516 = vmax.f32 %v2344, 0.0
        %v2517 = vmax.f32 %v2346, 0.0
        %v2518 = vmax.f32 %v2350, 0.0
        %v2519 = vmax.f32 %v2352, 0.0
        %v2520 = vmax.f32 %v2354, 0.0
        %v2521 = vmax.f32 %v2356, 0.0
        %v2522 = vmax.f32 %v2360, 0.0
        %v2523 = vmax.f32 %v2362, 0.0
        %v2524 = vmax.f32 %v2364, 0.0
        %v2525 = vmax.f32 %v2366, 0.0
        %v2526 = vmax.f32 %v2370, 0.0
        %v2527 = vmax.f32 %v2372, 0.0
        %v2528 = vmax.f32 %v2374, 0.0
        %v2529 = vmax.f32 %v2376, 0.0
        %v2530 = vmax.f32 %v2380, 0.0
        %v2531 = vmax.f32 %v2382, 0.0
        %v2532 = vmax.f32 %v2384, 0.0
        %v2533 = vmax.f32 %v2386, 0.0
        %v2534 = vmax.f32 %v2390, 0.0
        %v2535 = vmax.f32 %v2392, 0.0
        %v2536 = vmax.f32 %v2394, 0.0
        %v2537 = vmax.f32 %v2396, 0.0
        %v2538 = vmax.f32 %v2400, 0.0
        %v2539 = vmax.f32 %v2402, 0.0
        %v2540 = vmax.f32 %v2404, 0.0
        %v2541 = vmax.f32 %v2406, 0.0
        %v2542 = vmax.f32 %v2410, 0.0
        %v2543 = vmax.f32 %v2412, 0.0
        %v2544 = vmax.f32 %v2414, 0.0
        %v2545 = vmax.f32 %v2416, 0.0
        %v2546 = vpack.c.bf16 %v2420, %v2418
        %v2547 = vpack.c.bf16 %v2421, %v2419
        %v2548 = vpack.c.bf16 %v2424, %v2422
        %v2549 = vpack.c.bf16 %v2425, %v2423
        %v2550 = vpack.c.bf16 %v2428, %v2426
        %v2551 = vpack.c.bf16 %v2429, %v2427
        %v2552 = vpack.c.bf16 %v2432, %v2430
        %v2553 = vpack.c.bf16 %v2433, %v2431
        %v2554 = vpack.c.bf16 %v2436, %v2434
        %v2555 = vpack.c.bf16 %v2437, %v2435
        %v2556 = vpack.c.bf16 %v2440, %v2438
        %v2557 = vpack.c.bf16 %v2441, %v2439
        %v2558 = vpack.c.bf16 %v2444, %v2442
        %v2559 = vpack.c.bf16 %v2445, %v2443
        %v2560 = vpack.c.bf16 %v2448, %v2446
        %v2561 = vpack.c.bf16 %v2449, %v2447
        %v2562 = vpack.c.bf16 %v2452, %v2450
        %v2563 = vpack.c.bf16 %v2453, %v2451
        %v2564 = vpack.c.bf16 %v2456, %v2454
        %v2565 = vpack.c.bf16 %v2457, %v2455
        %v2566 = vpack.c.bf16 %v2460, %v2458
        %v2567 = vpack.c.bf16 %v2461, %v2459
        %v2568 = vpack.c.bf16 %v2464, %v2462
        %v2569 = vpack.c.bf16 %v2465, %v2463
        %v2570 = vpack.c.bf16 %v2468, %v2466
        %v2571 = vpack.c.bf16 %v2469, %v2467
        %v2572 = vpack.c.bf16 %v2472, %v2470
        %v2573 = vpack.c.bf16 %v2473, %v2471
        %v2574 = vpack.c.bf16 %v2476, %v2474
        %v2575 = vpack.c.bf16 %v2477, %v2475
        %v2576 = vpack.c.bf16 %v2480, %v2478
        %v2577 = vpack.c.bf16 %v2481, %v2479
        %v2578 = vpack.c.bf16 %v2484, %v2482
        %v2579 = vpack.c.bf16 %v2485, %v2483
        %v2580 = vpack.c.bf16 %v2488, %v2486
        %v2581 = vpack.c.bf16 %v2489, %v2487
        %v2582 = vpack.c.bf16 %v2492, %v2490
        %v2583 = vpack.c.bf16 %v2493, %v2491
        %v2584 = vpack.c.bf16 %v2496, %v2494
        %v2585 = vpack.c.bf16 %v2497, %v2495
        %v2586 = vpack.c.bf16 %v2500, %v2498
        %v2587 = vpack.c.bf16 %v2501, %v2499
        %v2588 = vpack.c.bf16 %v2504, %v2502
        %v2589 = vpack.c.bf16 %v2505, %v2503
        %v2590 = vpack.c.bf16 %v2508, %v2506
        %v2591 = vpack.c.bf16 %v2509, %v2507
        %v2592 = vpack.c.bf16 %v2512, %v2510
        %v2593 = vpack.c.bf16 %v2513, %v2511
        %v2594 = vpack.c.bf16 %v2516, %v2514
        %v2595 = vpack.c.bf16 %v2517, %v2515
        %v2596 = vpack.c.bf16 %v2520, %v2518
        %v2597 = vpack.c.bf16 %v2521, %v2519
        %v2598 = vpack.c.bf16 %v2524, %v2522
        %v2599 = vpack.c.bf16 %v2525, %v2523
        %v2600 = vpack.c.bf16 %v2528, %v2526
        %v2601 = vpack.c.bf16 %v2529, %v2527
        %v2602 = vpack.c.bf16 %v2532, %v2530
        %v2603 = vpack.c.bf16 %v2533, %v2531
        %v2604 = vpack.c.bf16 %v2536, %v2534
        %v2605 = vpack.c.bf16 %v2537, %v2535
        %v2606 = vpack.c.bf16 %v2540, %v2538
        %v2607 = vpack.c.bf16 %v2541, %v2539
        %v2608 = vpack.c.bf16 %v2544, %v2542
        %v2609 = vpack.c.bf16 %v2545, %v2543
        %v2610 = vld [vmem:[#allocation11] sm:$0xff]
        %v2611 = vld [vmem:[#allocation11 + $0x8] sm:$0xff]
        %v2612 = vld [vmem:[#allocation11 + $0x10] sm:$0xff]
        %v2613 = vld [vmem:[#allocation11 + $0x18] sm:$0xff]
        %v2614 = vld [vmem:[#allocation11 + $0x20] sm:$0xff]
        %v2615 = vld [vmem:[#allocation11 + $0x28] sm:$0xff]
        %v2616 = vld [vmem:[#allocation11 + $0x30] sm:$0xff]
        %v2617 = vld [vmem:[#allocation11 + $0x38] sm:$0xff]
        %v2618 = vld [vmem:[#allocation11 + $0x40] sm:$0xff]
        %v2619 = vld [vmem:[#allocation11 + $0x48] sm:$0xff]
        %v2620 = vld [vmem:[#allocation11 + $0x50] sm:$0xff]
        %v2621 = vld [vmem:[#allocation11 + $0x58] sm:$0xff]
        %v2622 = vld [vmem:[#allocation11 + $0x60] sm:$0xff]
        %v2623 = vld [vmem:[#allocation11 + $0x68] sm:$0xff]
        %v2624 = vld [vmem:[#allocation11 + $0x70] sm:$0xff]
        %v2625 = vld [vmem:[#allocation11 + $0x78] sm:$0xff]
        %v2626 = vld [vmem:[#allocation11 + $0x80] sm:$0xff]
        %v2627 = vld [vmem:[#allocation11 + $0x88] sm:$0xff]
        %v2628 = vld [vmem:[#allocation11 + $0x90] sm:$0xff]
        %v2629 = vld [vmem:[#allocation11 + $0x98] sm:$0xff]
        %v2630 = vld [vmem:[#allocation11 + $0xa0] sm:$0xff]
        %v2631 = vld [vmem:[#allocation11 + $0xa8] sm:$0xff]
        %v2632 = vld [vmem:[#allocation11 + $0xb0] sm:$0xff]
        %v2633 = vld [vmem:[#allocation11 + $0xb8] sm:$0xff]
        %v2634 = vld [vmem:[#allocation11 + $0xc0] sm:$0xff]
        %v2635 = vld [vmem:[#allocation11 + $0xc8] sm:$0xff]
        %v2636 = vld [vmem:[#allocation11 + $0xd0] sm:$0xff]
        %v2637 = vld [vmem:[#allocation11 + $0xd8] sm:$0xff]
        %v2638 = vld [vmem:[#allocation11 + $0xe0] sm:$0xff]
        %v2639 = vld [vmem:[#allocation11 + $0xe8] sm:$0xff]
        %v2640 = vld [vmem:[#allocation11 + $0xf0] sm:$0xff]
        %v2641 = vld [vmem:[#allocation11 + $0xf8] sm:$0xff]
        %v2642 = vld [vmem:[#allocation13] sm:$0x3]
        %v2644 = vlaneseq
        %v2645 = vshrl.u32 %v2644, 7
        %v2646 = vsub.s32 0, %v2645
        %v2647 = vrot.slane %v2642, %v2646
        %v2648 = vlaneseq
        %v2649 = vshrl.u32 %v2648, 7
        %v2650 = vsub.s32 1, %v2649
        %v2651 = vrot.slane %v2642, %v2650
        %v2686 = vunpack.c.l.b16 %v2610
        %v2687 = vunpack.c.h.b16 %v2610
        %v2688 = vunpack.c.l.b16 %v2611
        %v2689 = vunpack.c.h.b16 %v2611
        %v2690 = vunpack.c.l.b16 %v2612
        %v2691 = vunpack.c.h.b16 %v2612
        %v2692 = vunpack.c.l.b16 %v2613
        %v2693 = vunpack.c.h.b16 %v2613
        %v2694 = vunpack.c.l.b16 %v2614
        %v2695 = vunpack.c.h.b16 %v2614
        %v2696 = vunpack.c.l.b16 %v2615
        %v2697 = vunpack.c.h.b16 %v2615
        %v2698 = vunpack.c.l.b16 %v2616
        %v2699 = vunpack.c.h.b16 %v2616
        %v2700 = vunpack.c.l.b16 %v2617
        %v2701 = vunpack.c.h.b16 %v2617
        %v2702 = vunpack.c.l.b16 %v2618
        %v2703 = vunpack.c.h.b16 %v2618
        %v2704 = vunpack.c.l.b16 %v2619
        %v2705 = vunpack.c.h.b16 %v2619
        %v2706 = vunpack.c.l.b16 %v2620
        %v2707 = vunpack.c.h.b16 %v2620
        %v2708 = vunpack.c.l.b16 %v2621
        %v2709 = vunpack.c.h.b16 %v2621
        %v2710 = vunpack.c.l.b16 %v2622
        %v2711 = vunpack.c.h.b16 %v2622
        %v2712 = vunpack.c.l.b16 %v2623
        %v2713 = vunpack.c.h.b16 %v2623
        %v2714 = vunpack.c.l.b16 %v2624
        %v2715 = vunpack.c.h.b16 %v2624
        %v2716 = vunpack.c.l.b16 %v2625
        %v2717 = vunpack.c.h.b16 %v2625
        %v2718 = vunpack.c.l.b16 %v2626
        %v2719 = vunpack.c.h.b16 %v2626
        %v2720 = vunpack.c.l.b16 %v2627
        %v2721 = vunpack.c.h.b16 %v2627
        %v2722 = vunpack.c.l.b16 %v2628
        %v2723 = vunpack.c.h.b16 %v2628
        %v2724 = vunpack.c.l.b16 %v2629
        %v2725 = vunpack.c.h.b16 %v2629
        %v2726 = vunpack.c.l.b16 %v2630
        %v2727 = vunpack.c.h.b16 %v2630
        %v2728 = vunpack.c.l.b16 %v2631
        %v2729 = vunpack.c.h.b16 %v2631
        %v2730 = vunpack.c.l.b16 %v2632
        %v2731 = vunpack.c.h.b16 %v2632
        %v2732 = vunpack.c.l.b16 %v2633
        %v2733 = vunpack.c.h.b16 %v2633
        %v2734 = vunpack.c.l.b16 %v2634
        %v2735 = vunpack.c.h.b16 %v2634
        %v2736 = vunpack.c.l.b16 %v2635
        %v2737 = vunpack.c.h.b16 %v2635
        %v2738 = vunpack.c.l.b16 %v2636
        %v2739 = vunpack.c.h.b16 %v2636
        %v2740 = vunpack.c.l.b16 %v2637
        %v2741 = vunpack.c.h.b16 %v2637
        %v2742 = vunpack.c.l.b16 %v2638
        %v2743 = vunpack.c.h.b16 %v2638
        %v2744 = vunpack.c.l.b16 %v2639
        %v2745 = vunpack.c.h.b16 %v2639
        %v2746 = vunpack.c.l.b16 %v2640
        %v2747 = vunpack.c.h.b16 %v2640
        %v2748 = vunpack.c.l.b16 %v2641
        %v2749 = vunpack.c.h.b16 %v2641
        %v2750 = vpack.c.b16 %v2688, %v2686
        %v2751 = vpack.c.b16 %v2689, %v2687
        %v2752 = vpack.c.b16 %v2692, %v2690
        %v2753 = vpack.c.b16 %v2693, %v2691
        %v2754 = vpack.c.b16 %v2696, %v2694
        %v2755 = vpack.c.b16 %v2697, %v2695
        %v2756 = vpack.c.b16 %v2700, %v2698
        %v2757 = vpack.c.b16 %v2701, %v2699
        %v2758 = vpack.c.b16 %v2704, %v2702
        %v2759 = vpack.c.b16 %v2705, %v2703
        %v2760 = vpack.c.b16 %v2708, %v2706
        %v2761 = vpack.c.b16 %v2709, %v2707
        %v2762 = vpack.c.b16 %v2712, %v2710
        %v2763 = vpack.c.b16 %v2713, %v2711
        %v2764 = vpack.c.b16 %v2716, %v2714
        %v2765 = vpack.c.b16 %v2717, %v2715
        %v2766 = vpack.c.b16 %v2720, %v2718
        %v2767 = vpack.c.b16 %v2721, %v2719
        %v2768 = vpack.c.b16 %v2724, %v2722
        %v2769 = vpack.c.b16 %v2725, %v2723
        %v2770 = vpack.c.b16 %v2728, %v2726
        %v2771 = vpack.c.b16 %v2729, %v2727
        %v2772 = vpack.c.b16 %v2732, %v2730
        %v2773 = vpack.c.b16 %v2733, %v2731
        %v2774 = vpack.c.b16 %v2736, %v2734
        %v2775 = vpack.c.b16 %v2737, %v2735
        %v2776 = vpack.c.b16 %v2740, %v2738
        %v2777 = vpack.c.b16 %v2741, %v2739
        %v2778 = vpack.c.b16 %v2744, %v2742
        %v2779 = vpack.c.b16 %v2745, %v2743
        %v2780 = vpack.c.b16 %v2748, %v2746
        %v2781 = vpack.c.b16 %v2749, %v2747
        %2814 = vmatprep.subr.bf16.mxu0 %v2751
        %2815 = vmatpush1.bf16.msra.mxu0 %v2750
        %2816 = vmatprep.subr.bf16.mxu0 %v2753
        %2817 = vmatpush1.bf16.msra.mxu0 %v2752
        %2818 = vmatprep.subr.bf16.mxu0 %v2755
        %2819 = vmatpush1.bf16.msra.mxu0 %v2754
        %2820 = vmatprep.subr.bf16.mxu0 %v2757
        %2821 = vmatpush1.bf16.msra.mxu0 %v2756
        %2822 = vmatprep.subr.bf16.mxu0 %v2759
        %2823 = vmatpush1.bf16.msra.mxu0 %v2758
        %2824 = vmatprep.subr.bf16.mxu0 %v2761
        %2825 = vmatpush1.bf16.msra.mxu0 %v2760
        %2826 = vmatprep.subr.bf16.mxu0 %v2763
        %2827 = vmatpush1.bf16.msra.mxu0 %v2762
        %2828 = vmatprep.subr.bf16.mxu0 %v2765
        %2829 = vmatpush1.bf16.msra.mxu0 %v2764
        %2830 = vmatprep.subr.bf16.mxu0 %v2767
        %2831 = vmatpush1.bf16.msra.mxu0 %v2766
        %2832 = vmatprep.subr.bf16.mxu0 %v2769
        %2833 = vmatpush1.bf16.msra.mxu0 %v2768
        %2834 = vmatprep.subr.bf16.mxu0 %v2771
        %2835 = vmatpush1.bf16.msra.mxu0 %v2770
        %2836 = vmatprep.subr.bf16.mxu0 %v2773
        %2837 = vmatpush1.bf16.msra.mxu0 %v2772
        %2838 = vmatprep.subr.bf16.mxu0 %v2775
        %2839 = vmatpush1.bf16.msra.mxu0 %v2774
        %2840 = vmatprep.subr.bf16.mxu0 %v2777
        %2841 = vmatpush1.bf16.msra.mxu0 %v2776
        %2842 = vmatprep.subr.bf16.mxu0 %v2779
        %2843 = vmatpush1.bf16.msra.mxu0 %v2778
        %2844 = vmatprep.subr.bf16.mxu0 %v2781
        %2845 = vmatpush1.bf16.msra.mxu0 %v2780
        %2846 = vmatprep.mubr.bf16.mxu0 %v2547
        %2847 = vmatmul.mubr.bf16.gmra.mrb[0].mxu0 %v2546
        %v2848 = vpop.f32.mrb[0].mxu0
        %v2849 = vadd.f32 %v2647, %v2848
        %v2850 = vpop.f32.mrb[0].mxu0
        %v2851 = vadd.f32 %v2651, %v2850
        %v2852 = vpop.f32.mrb[0].mxu0
        %v2853 = vadd.f32 %v2647, %v2852
        %v2854 = vpop.f32.mrb[0].mxu0
        %v2855 = vadd.f32 %v2651, %v2854
        %2856 = vmatprep.mubr.bf16.mxu0 %v2549
        %2857 = vmatmul.mubr.bf16.gmra.mrb[0].mxu0 %v2548
        %v2858 = vpop.f32.mrb[0].mxu0
        %v2859 = vadd.f32 %v2647, %v2858
        %v2860 = vpop.f32.mrb[0].mxu0
        %v2861 = vadd.f32 %v2651, %v2860
        %v2862 = vpop.f32.mrb[0].mxu0
        %v2863 = vadd.f32 %v2647, %v2862
        %v2864 = vpop.f32.mrb[0].mxu0
        %v2865 = vadd.f32 %v2651, %v2864
        %2866 = vmatprep.mubr.bf16.mxu0 %v2551
        %2867 = vmatmul.mubr.bf16.gmra.mrb[0].mxu0 %v2550
        %v2868 = vpop.f32.mrb[0].mxu0
        %v2869 = vadd.f32 %v2647, %v2868
        %v2870 = vpop.f32.mrb[0].mxu0
        %v2871 = vadd.f32 %v2651, %v2870
        %v2872 = vpop.f32.mrb[0].mxu0
        %v2873 = vadd.f32 %v2647, %v2872
        %v2874 = vpop.f32.mrb[0].mxu0
        %v2875 = vadd.f32 %v2651, %v2874
        %2876 = vmatprep.mubr.bf16.mxu0 %v2553
        %2877 = vmatmul.mubr.bf16.gmra.mrb[0].mxu0 %v2552
        %v2878 = vpop.f32.mrb[0].mxu0
        %v2879 = vadd.f32 %v2647, %v2878
        %v2880 = vpop.f32.mrb[0].mxu0
        %v2881 = vadd.f32 %v2651, %v2880
        %v2882 = vpop.f32.mrb[0].mxu0
        %v2883 = vadd.f32 %v2647, %v2882
        %v2884 = vpop.f32.mrb[0].mxu0
        %v2885 = vadd.f32 %v2651, %v2884
        %2886 = vmatprep.mubr.bf16.mxu0 %v2555
        %2887 = vmatmul.mubr.bf16.gmra.mrb[0].mxu0 %v2554
        %v2888 = vpop.f32.mrb[0].mxu0
        %v2889 = vadd.f32 %v2647, %v2888
        %v2890 = vpop.f32.mrb[0].mxu0
        %v2891 = vadd.f32 %v2651, %v2890
        %v2892 = vpop.f32.mrb[0].mxu0
        %v2893 = vadd.f32 %v2647, %v2892
        %v2894 = vpop.f32.mrb[0].mxu0
        %v2895 = vadd.f32 %v2651, %v2894
        %2896 = vmatprep.mubr.bf16.mxu0 %v2557
        %2897 = vmatmul.mubr.bf16.gmra.mrb[0].mxu0 %v2556
        %v2898 = vpop.f32.mrb[0].mxu0
        %v2899 = vadd.f32 %v2647, %v2898
        %v2900 = vpop.f32.mrb[0].mxu0
        %v2901 = vadd.f32 %v2651, %v2900
        %v2902 = vpop.f32.mrb[0].mxu0
        %v2903 = vadd.f32 %v2647, %v2902
        %v2904 = vpop.f32.mrb[0].mxu0
        %v2905 = vadd.f32 %v2651, %v2904
        %2906 = vmatprep.mubr.bf16.mxu0 %v2559
        %2907 = vmatmul.mubr.bf16.gmra.mrb[0].mxu0 %v2558
        %v2908 = vpop.f32.mrb[0].mxu0
        %v2909 = vadd.f32 %v2647, %v2908
        %v2910 = vpop.f32.mrb[0].mxu0
        %v2911 = vadd.f32 %v2651, %v2910
        %v2912 = vpop.f32.mrb[0].mxu0
        %v2913 = vadd.f32 %v2647, %v2912
        %v2914 = vpop.f32.mrb[0].mxu0
        %v2915 = vadd.f32 %v2651, %v2914
        %2916 = vmatprep.mubr.bf16.mxu0 %v2561
        %2917 = vmatmul.mubr.bf16.gmra.mrb[0].mxu0 %v2560
        %v2918 = vpop.f32.mrb[0].mxu0
        %v2919 = vadd.f32 %v2647, %v2918
        %v2920 = vpop.f32.mrb[0].mxu0
        %v2921 = vadd.f32 %v2651, %v2920
        %v2922 = vpop.f32.mrb[0].mxu0
        %v2923 = vadd.f32 %v2647, %v2922
        %v2924 = vpop.f32.mrb[0].mxu0
        %v2925 = vadd.f32 %v2651, %v2924
        %2926 = vmatprep.mubr.bf16.mxu0 %v2563
        %2927 = vmatmul.mubr.bf16.gmra.mrb[0].mxu0 %v2562
        %v2928 = vpop.f32.mrb[0].mxu0
        %v2929 = vadd.f32 %v2647, %v2928
        %v2930 = vpop.f32.mrb[0].mxu0
        %v2931 = vadd.f32 %v2651, %v2930
        %v2932 = vpop.f32.mrb[0].mxu0
        %v2933 = vadd.f32 %v2647, %v2932
        %v2934 = vpop.f32.mrb[0].mxu0
        %v2935 = vadd.f32 %v2651, %v2934
        %2936 = vmatprep.mubr.bf16.mxu0 %v2565
        %2937 = vmatmul.mubr.bf16.gmra.mrb[0].mxu0 %v2564
        %v2938 = vpop.f32.mrb[0].mxu0
        %v2939 = vadd.f32 %v2647, %v2938
        %v2940 = vpop.f32.mrb[0].mxu0
        %v2941 = vadd.f32 %v2651, %v2940
        %v2942 = vpop.f32.mrb[0].mxu0
        %v2943 = vadd.f32 %v2647, %v2942
        %v2944 = vpop.f32.mrb[0].mxu0
        %v2945 = vadd.f32 %v2651, %v2944
        %2946 = vmatprep.mubr.bf16.mxu0 %v2567
        %2947 = vmatmul.mubr.bf16.gmra.mrb[0].mxu0 %v2566
        %v2948 = vpop.f32.mrb[0].mxu0
        %v2949 = vadd.f32 %v2647, %v2948
        %v2950 = vpop.f32.mrb[0].mxu0
        %v2951 = vadd.f32 %v2651, %v2950
        %v2952 = vpop.f32.mrb[0].mxu0
        %v2953 = vadd.f32 %v2647, %v2952
        %v2954 = vpop.f32.mrb[0].mxu0
        %v2955 = vadd.f32 %v2651, %v2954
        %2956 = vmatprep.mubr.bf16.mxu0 %v2569
        %2957 = vmatmul.mubr.bf16.gmra.mrb[0].mxu0 %v2568
        %v2958 = vpop.f32.mrb[0].mxu0
        %v2959 = vadd.f32 %v2647, %v2958
        %v2960 = vpop.f32.mrb[0].mxu0
        %v2961 = vadd.f32 %v2651, %v2960
        %v2962 = vpop.f32.mrb[0].mxu0
        %v2963 = vadd.f32 %v2647, %v2962
        %v2964 = vpop.f32.mrb[0].mxu0
        %v2965 = vadd.f32 %v2651, %v2964
        %2966 = vmatprep.mubr.bf16.mxu0 %v2571
        %2967 = vmatmul.mubr.bf16.gmra.mrb[0].mxu0 %v2570
        %v2968 = vpop.f32.mrb[0].mxu0
        %v2969 = vadd.f32 %v2647, %v2968
        %v2970 = vpop.f32.mrb[0].mxu0
        %v2971 = vadd.f32 %v2651, %v2970
        %v2972 = vpop.f32.mrb[0].mxu0
        %v2973 = vadd.f32 %v2647, %v2972
        %v2974 = vpop.f32.mrb[0].mxu0
        %v2975 = vadd.f32 %v2651, %v2974
        %2976 = vmatprep.mubr.bf16.mxu0 %v2573
        %2977 = vmatmul.mubr.bf16.gmra.mrb[0].mxu0 %v2572
        %v2978 = vpop.f32.mrb[0].mxu0
        %v2979 = vadd.f32 %v2647, %v2978
        %v2980 = vpop.f32.mrb[0].mxu0
        %v2981 = vadd.f32 %v2651, %v2980
        %v2982 = vpop.f32.mrb[0].mxu0
        %v2983 = vadd.f32 %v2647, %v2982
        %v2984 = vpop.f32.mrb[0].mxu0
        %v2985 = vadd.f32 %v2651, %v2984
        %2986 = vmatprep.mubr.bf16.mxu0 %v2575
        %2987 = vmatmul.mubr.bf16.gmra.mrb[0].mxu0 %v2574
        %v2988 = vpop.f32.mrb[0].mxu0
        %v2989 = vadd.f32 %v2647, %v2988
        %v2990 = vpop.f32.mrb[0].mxu0
        %v2991 = vadd.f32 %v2651, %v2990
        %v2992 = vpop.f32.mrb[0].mxu0
        %v2993 = vadd.f32 %v2647, %v2992
        %v2994 = vpop.f32.mrb[0].mxu0
        %v2995 = vadd.f32 %v2651, %v2994
        %2996 = vmatprep.mubr.bf16.mxu0 %v2577
        %2997 = vmatmul.mubr.bf16.gmra.mrb[0].mxu0 %v2576
        %v2998 = vpop.f32.mrb[0].mxu0
        %v2999 = vadd.f32 %v2647, %v2998
        %v3000 = vpop.f32.mrb[0].mxu0
        %v3001 = vadd.f32 %v2651, %v3000
        %v3002 = vpop.f32.mrb[0].mxu0
        %v3003 = vadd.f32 %v2647, %v3002
        %v3004 = vpop.f32.mrb[0].mxu0
        %v3005 = vadd.f32 %v2651, %v3004
        %3006 = vmatprep.mubr.bf16.mxu0 %v2579
        %3007 = vmatmul.mubr.bf16.gmra.mrb[0].mxu0 %v2578
        %v3008 = vpop.f32.mrb[0].mxu0
        %v3009 = vadd.f32 %v2647, %v3008
        %v3010 = vpop.f32.mrb[0].mxu0
        %v3011 = vadd.f32 %v2651, %v3010
        %v3012 = vpop.f32.mrb[0].mxu0
        %v3013 = vadd.f32 %v2647, %v3012
        %v3014 = vpop.f32.mrb[0].mxu0
        %v3015 = vadd.f32 %v2651, %v3014
        %3016 = vmatprep.mubr.bf16.mxu0 %v2581
        %3017 = vmatmul.mubr.bf16.gmra.mrb[0].mxu0 %v2580
        %v3018 = vpop.f32.mrb[0].mxu0
        %v3019 = vadd.f32 %v2647, %v3018
        %v3020 = vpop.f32.mrb[0].mxu0
        %v3021 = vadd.f32 %v2651, %v3020
        %v3022 = vpop.f32.mrb[0].mxu0
        %v3023 = vadd.f32 %v2647, %v3022
        %v3024 = vpop.f32.mrb[0].mxu0
        %v3025 = vadd.f32 %v2651, %v3024
        %3026 = vmatprep.mubr.bf16.mxu0 %v2583
        %3027 = vmatmul.mubr.bf16.gmra.mrb[0].mxu0 %v2582
        %v3028 = vpop.f32.mrb[0].mxu0
        %v3029 = vadd.f32 %v2647, %v3028
        %v3030 = vpop.f32.mrb[0].mxu0
        %v3031 = vadd.f32 %v2651, %v3030
        %v3032 = vpop.f32.mrb[0].mxu0
        %v3033 = vadd.f32 %v2647, %v3032
        %v3034 = vpop.f32.mrb[0].mxu0
        %v3035 = vadd.f32 %v2651, %v3034
        %3036 = vmatprep.mubr.bf16.mxu0 %v2585
        %3037 = vmatmul.mubr.bf16.gmra.mrb[0].mxu0 %v2584
        %v3038 = vpop.f32.mrb[0].mxu0
        %v3039 = vadd.f32 %v2647, %v3038
        %v3040 = vpop.f32.mrb[0].mxu0
        %v3041 = vadd.f32 %v2651, %v3040
        %v3042 = vpop.f32.mrb[0].mxu0
        %v3043 = vadd.f32 %v2647, %v3042
        %v3044 = vpop.f32.mrb[0].mxu0
        %v3045 = vadd.f32 %v2651, %v3044
        %3046 = vmatprep.mubr.bf16.mxu0 %v2587
        %3047 = vmatmul.mubr.bf16.gmra.mrb[0].mxu0 %v2586
        %v3048 = vpop.f32.mrb[0].mxu0
        %v3049 = vadd.f32 %v2647, %v3048
        %v3050 = vpop.f32.mrb[0].mxu0
        %v3051 = vadd.f32 %v2651, %v3050
        %v3052 = vpop.f32.mrb[0].mxu0
        %v3053 = vadd.f32 %v2647, %v3052
        %v3054 = vpop.f32.mrb[0].mxu0
        %v3055 = vadd.f32 %v2651, %v3054
        %3056 = vmatprep.mubr.bf16.mxu0 %v2589
        %3057 = vmatmul.mubr.bf16.gmra.mrb[0].mxu0 %v2588
        %v3058 = vpop.f32.mrb[0].mxu0
        %v3059 = vadd.f32 %v2647, %v3058
        %v3060 = vpop.f32.mrb[0].mxu0
        %v3061 = vadd.f32 %v2651, %v3060
        %v3062 = vpop.f32.mrb[0].mxu0
        %v3063 = vadd.f32 %v2647, %v3062
        %v3064 = vpop.f32.mrb[0].mxu0
        %v3065 = vadd.f32 %v2651, %v3064
        %3066 = vmatprep.mubr.bf16.mxu0 %v2591
        %3067 = vmatmul.mubr.bf16.gmra.mrb[0].mxu0 %v2590
        %v3068 = vpop.f32.mrb[0].mxu0
        %v3069 = vadd.f32 %v2647, %v3068
        %v3070 = vpop.f32.mrb[0].mxu0
        %v3071 = vadd.f32 %v2651, %v3070
        %v3072 = vpop.f32.mrb[0].mxu0
        %v3073 = vadd.f32 %v2647, %v3072
        %v3074 = vpop.f32.mrb[0].mxu0
        %v3075 = vadd.f32 %v2651, %v3074
        %3076 = vmatprep.mubr.bf16.mxu0 %v2593
        %3077 = vmatmul.mubr.bf16.gmra.mrb[0].mxu0 %v2592
        %v3078 = vpop.f32.mrb[0].mxu0
        %v3079 = vadd.f32 %v2647, %v3078
        %v3080 = vpop.f32.mrb[0].mxu0
        %v3081 = vadd.f32 %v2651, %v3080
        %v3082 = vpop.f32.mrb[0].mxu0
        %v3083 = vadd.f32 %v2647, %v3082
        %v3084 = vpop.f32.mrb[0].mxu0
        %v3085 = vadd.f32 %v2651, %v3084
        %3086 = vmatprep.mubr.bf16.mxu0 %v2595
        %3087 = vmatmul.mubr.bf16.gmra.mrb[0].mxu0 %v2594
        %v3088 = vpop.f32.mrb[0].mxu0
        %v3089 = vadd.f32 %v2647, %v3088
        %v3090 = vpop.f32.mrb[0].mxu0
        %v3091 = vadd.f32 %v2651, %v3090
        %v3092 = vpop.f32.mrb[0].mxu0
        %v3093 = vadd.f32 %v2647, %v3092
        %v3094 = vpop.f32.mrb[0].mxu0
        %v3095 = vadd.f32 %v2651, %v3094
        %3096 = vmatprep.mubr.bf16.mxu0 %v2597
        %3097 = vmatmul.mubr.bf16.gmra.mrb[0].mxu0 %v2596
        %v3098 = vpop.f32.mrb[0].mxu0
        %v3099 = vadd.f32 %v2647, %v3098
        %v3100 = vpop.f32.mrb[0].mxu0
        %v3101 = vadd.f32 %v2651, %v3100
        %v3102 = vpop.f32.mrb[0].mxu0
        %v3103 = vadd.f32 %v2647, %v3102
        %v3104 = vpop.f32.mrb[0].mxu0
        %v3105 = vadd.f32 %v2651, %v3104
        %3106 = vmatprep.mubr.bf16.mxu0 %v2599
        %3107 = vmatmul.mubr.bf16.gmra.mrb[0].mxu0 %v2598
        %v3108 = vpop.f32.mrb[0].mxu0
        %v3109 = vadd.f32 %v2647, %v3108
        %v3110 = vpop.f32.mrb[0].mxu0
        %v3111 = vadd.f32 %v2651, %v3110
        %v3112 = vpop.f32.mrb[0].mxu0
        %v3113 = vadd.f32 %v2647, %v3112
        %v3114 = vpop.f32.mrb[0].mxu0
        %v3115 = vadd.f32 %v2651, %v3114
        %3116 = vmatprep.mubr.bf16.mxu0 %v2601
        %3117 = vmatmul.mubr.bf16.gmra.mrb[0].mxu0 %v2600
        %v3118 = vpop.f32.mrb[0].mxu0
        %v3119 = vadd.f32 %v2647, %v3118
        %v3120 = vpop.f32.mrb[0].mxu0
        %v3121 = vadd.f32 %v2651, %v3120
        %v3122 = vpop.f32.mrb[0].mxu0
        %v3123 = vadd.f32 %v2647, %v3122
        %v3124 = vpop.f32.mrb[0].mxu0
        %v3125 = vadd.f32 %v2651, %v3124
        %3126 = vmatprep.mubr.bf16.mxu0 %v2603
        %3127 = vmatmul.mubr.bf16.gmra.mrb[0].mxu0 %v2602
        %v3128 = vpop.f32.mrb[0].mxu0
        %v3129 = vadd.f32 %v2647, %v3128
        %v3130 = vpop.f32.mrb[0].mxu0
        %v3131 = vadd.f32 %v2651, %v3130
        %v3132 = vpop.f32.mrb[0].mxu0
        %v3133 = vadd.f32 %v2647, %v3132
        %v3134 = vpop.f32.mrb[0].mxu0
        %v3135 = vadd.f32 %v2651, %v3134
        %3136 = vmatprep.mubr.bf16.mxu0 %v2605
        %3137 = vmatmul.mubr.bf16.gmra.mrb[0].mxu0 %v2604
        %v3138 = vpop.f32.mrb[0].mxu0
        %v3139 = vadd.f32 %v2647, %v3138
        %v3140 = vpop.f32.mrb[0].mxu0
        %v3141 = vadd.f32 %v2651, %v3140
        %v3142 = vpop.f32.mrb[0].mxu0
        %v3143 = vadd.f32 %v2647, %v3142
        %v3144 = vpop.f32.mrb[0].mxu0
        %v3145 = vadd.f32 %v2651, %v3144
        %3146 = vmatprep.mubr.bf16.mxu0 %v2607
        %3147 = vmatmul.mubr.bf16.gmra.mrb[0].mxu0 %v2606
        %v3148 = vpop.f32.mrb[0].mxu0
        %v3149 = vadd.f32 %v2647, %v3148
        %v3150 = vpop.f32.mrb[0].mxu0
        %v3151 = vadd.f32 %v2651, %v3150
        %v3152 = vpop.f32.mrb[0].mxu0
        %v3153 = vadd.f32 %v2647, %v3152
        %v3154 = vpop.f32.mrb[0].mxu0
        %v3155 = vadd.f32 %v2651, %v3154
        %3156 = vmatprep.mubr.bf16.mxu0 %v2609
        %3157 = vmatmul.mubr.bf16.gmra.mrb[0].mxu0 %v2608
        %v3158 = vpop.f32.mrb[0].mxu0
        %v3159 = vadd.f32 %v2647, %v3158
        %v3160 = vpop.f32.mrb[0].mxu0
        %v3161 = vadd.f32 %v2651, %v3160
        %v3162 = vpop.f32.mrb[0].mxu0
        %v3163 = vadd.f32 %v2647, %v3162
        %v3164 = vpop.f32.mrb[0].mxu0
        %v3165 = vadd.f32 %v2651, %v3164
        %3166 = vdwg.mxu0
        %v3167 = vmax.f32 %v2849, 0.0
        %v3168 = vmax.f32 %v2851, 0.0
        %v3169 = vmax.f32 %v2853, 0.0
        %v3170 = vmax.f32 %v2855, 0.0
        %v3171 = vmax.f32 %v2859, 0.0
        %v3172 = vmax.f32 %v2861, 0.0
        %v3173 = vmax.f32 %v2863, 0.0
        %v3174 = vmax.f32 %v2865, 0.0
        %v3175 = vmax.f32 %v2869, 0.0
        %v3176 = vmax.f32 %v2871, 0.0
        %v3177 = vmax.f32 %v2873, 0.0
        %v3178 = vmax.f32 %v2875, 0.0
        %v3179 = vmax.f32 %v2879, 0.0
        %v3180 = vmax.f32 %v2881, 0.0
        %v3181 = vmax.f32 %v2883, 0.0
        %v3182 = vmax.f32 %v2885, 0.0
        %v3183 = vmax.f32 %v2889, 0.0
        %v3184 = vmax.f32 %v2891, 0.0
        %v3185 = vmax.f32 %v2893, 0.0
        %v3186 = vmax.f32 %v2895, 0.0
        %v3187 = vmax.f32 %v2899, 0.0
        %v3188 = vmax.f32 %v2901, 0.0
        %v3189 = vmax.f32 %v2903, 0.0
        %v3190 = vmax.f32 %v2905, 0.0
        %v3191 = vmax.f32 %v2909, 0.0
        %v3192 = vmax.f32 %v2911, 0.0
        %v3193 = vmax.f32 %v2913, 0.0
        %v3194 = vmax.f32 %v2915, 0.0
        %v3195 = vmax.f32 %v2919, 0.0
        %v3196 = vmax.f32 %v2921, 0.0
        %v3197 = vmax.f32 %v2923, 0.0
        %v3198 = vmax.f32 %v2925, 0.0
        %v3199 = vmax.f32 %v2929, 0.0
        %v3200 = vmax.f32 %v2931, 0.0
        %v3201 = vmax.f32 %v2933, 0.0
        %v3202 = vmax.f32 %v2935, 0.0
        %v3203 = vmax.f32 %v2939, 0.0
        %v3204 = vmax.f32 %v2941, 0.0
        %v3205 = vmax.f32 %v2943, 0.0
        %v3206 = vmax.f32 %v2945, 0.0
        %v3207 = vmax.f32 %v2949, 0.0
        %v3208 = vmax.f32 %v2951, 0.0
        %v3209 = vmax.f32 %v2953, 0.0
        %v3210 = vmax.f32 %v2955, 0.0
        %v3211 = vmax.f32 %v2959, 0.0
        %v3212 = vmax.f32 %v2961, 0.0
        %v3213 = vmax.f32 %v2963, 0.0
        %v3214 = vmax.f32 %v2965, 0.0
        %v3215 = vmax.f32 %v2969, 0.0
        %v3216 = vmax.f32 %v2971, 0.0
        %v3217 = vmax.f32 %v2973, 0.0
        %v3218 = vmax.f32 %v2975, 0.0
        %v3219 = vmax.f32 %v2979, 0.0
        %v3220 = vmax.f32 %v2981, 0.0
        %v3221 = vmax.f32 %v2983, 0.0
        %v3222 = vmax.f32 %v2985, 0.0
        %v3223 = vmax.f32 %v2989, 0.0
        %v3224 = vmax.f32 %v2991, 0.0
        %v3225 = vmax.f32 %v2993, 0.0
        %v3226 = vmax.f32 %v2995, 0.0
        %v3227 = vmax.f32 %v2999, 0.0
        %v3228 = vmax.f32 %v3001, 0.0
        %v3229 = vmax.f32 %v3003, 0.0
        %v3230 = vmax.f32 %v3005, 0.0
        %v3231 = vmax.f32 %v3009, 0.0
        %v3232 = vmax.f32 %v3011, 0.0
        %v3233 = vmax.f32 %v3013, 0.0
        %v3234 = vmax.f32 %v3015, 0.0
        %v3235 = vmax.f32 %v3019, 0.0
        %v3236 = vmax.f32 %v3021, 0.0
        %v3237 = vmax.f32 %v3023, 0.0
        %v3238 = vmax.f32 %v3025, 0.0
        %v3239 = vmax.f32 %v3029, 0.0
        %v3240 = vmax.f32 %v3031, 0.0
        %v3241 = vmax.f32 %v3033, 0.0
        %v3242 = vmax.f32 %v3035, 0.0
        %v3243 = vmax.f32 %v3039, 0.0
        %v3244 = vmax.f32 %v3041, 0.0
        %v3245 = vmax.f32 %v3043, 0.0
        %v3246 = vmax.f32 %v3045, 0.0
        %v3247 = vmax.f32 %v3049, 0.0
        %v3248 = vmax.f32 %v3051, 0.0
        %v3249 = vmax.f32 %v3053, 0.0
        %v3250 = vmax.f32 %v3055, 0.0
        %v3251 = vmax.f32 %v3059, 0.0
        %v3252 = vmax.f32 %v3061, 0.0
        %v3253 = vmax.f32 %v3063, 0.0
        %v3254 = vmax.f32 %v3065, 0.0
        %v3255 = vmax.f32 %v3069, 0.0
        %v3256 = vmax.f32 %v3071, 0.0
        %v3257 = vmax.f32 %v3073, 0.0
        %v3258 = vmax.f32 %v3075, 0.0
        %v3259 = vmax.f32 %v3079, 0.0
        %v3260 = vmax.f32 %v3081, 0.0
        %v3261 = vmax.f32 %v3083, 0.0
        %v3262 = vmax.f32 %v3085, 0.0
        %v3263 = vmax.f32 %v3089, 0.0
        %v3264 = vmax.f32 %v3091, 0.0
        %v3265 = vmax.f32 %v3093, 0.0
        %v3266 = vmax.f32 %v3095, 0.0
        %v3267 = vmax.f32 %v3099, 0.0
        %v3268 = vmax.f32 %v3101, 0.0
        %v3269 = vmax.f32 %v3103, 0.0
        %v3270 = vmax.f32 %v3105, 0.0
        %v3271 = vmax.f32 %v3109, 0.0
        %v3272 = vmax.f32 %v3111, 0.0
        %v3273 = vmax.f32 %v3113, 0.0
        %v3274 = vmax.f32 %v3115, 0.0
        %v3275 = vmax.f32 %v3119, 0.0
        %v3276 = vmax.f32 %v3121, 0.0
        %v3277 = vmax.f32 %v3123, 0.0
        %v3278 = vmax.f32 %v3125, 0.0
        %v3279 = vmax.f32 %v3129, 0.0
        %v3280 = vmax.f32 %v3131, 0.0
        %v3281 = vmax.f32 %v3133, 0.0
        %v3282 = vmax.f32 %v3135, 0.0
        %v3283 = vmax.f32 %v3139, 0.0
        %v3284 = vmax.f32 %v3141, 0.0
        %v3285 = vmax.f32 %v3143, 0.0
        %v3286 = vmax.f32 %v3145, 0.0
        %v3287 = vmax.f32 %v3149, 0.0
        %v3288 = vmax.f32 %v3151, 0.0
        %v3289 = vmax.f32 %v3153, 0.0
        %v3290 = vmax.f32 %v3155, 0.0
        %v3291 = vmax.f32 %v3159, 0.0
        %v3292 = vmax.f32 %v3161, 0.0
        %v3293 = vmax.f32 %v3163, 0.0
        %v3294 = vmax.f32 %v3165, 0.0
        %v3295 = vpack.c.bf16 %v3169, %v3167
        %v3296 = vpack.c.bf16 %v3170, %v3168
        %v3297 = vpack.c.bf16 %v3173, %v3171
        %v3298 = vpack.c.bf16 %v3174, %v3172
        %v3299 = vpack.c.bf16 %v3177, %v3175
        %v3300 = vpack.c.bf16 %v3178, %v3176
        %v3301 = vpack.c.bf16 %v3181, %v3179
        %v3302 = vpack.c.bf16 %v3182, %v3180
        %v3303 = vpack.c.bf16 %v3185, %v3183
        %v3304 = vpack.c.bf16 %v3186, %v3184
        %v3305 = vpack.c.bf16 %v3189, %v3187
        %v3306 = vpack.c.bf16 %v3190, %v3188
        %v3307 = vpack.c.bf16 %v3193, %v3191
        %v3308 = vpack.c.bf16 %v3194, %v3192
        %v3309 = vpack.c.bf16 %v3197, %v3195
        %v3310 = vpack.c.bf16 %v3198, %v3196
        %v3311 = vpack.c.bf16 %v3201, %v3199
        %v3312 = vpack.c.bf16 %v3202, %v3200
        %v3313 = vpack.c.bf16 %v3205, %v3203
        %v3314 = vpack.c.bf16 %v3206, %v3204
        %v3315 = vpack.c.bf16 %v3209, %v3207
        %v3316 = vpack.c.bf16 %v3210, %v3208
        %v3317 = vpack.c.bf16 %v3213, %v3211
        %v3318 = vpack.c.bf16 %v3214, %v3212
        %v3319 = vpack.c.bf16 %v3217, %v3215
        %v3320 = vpack.c.bf16 %v3218, %v3216
        %v3321 = vpack.c.bf16 %v3221, %v3219
        %v3322 = vpack.c.bf16 %v3222, %v3220
        %v3323 = vpack.c.bf16 %v3225, %v3223
        %v3324 = vpack.c.bf16 %v3226, %v3224
        %v3325 = vpack.c.bf16 %v3229, %v3227
        %v3326 = vpack.c.bf16 %v3230, %v3228
        %v3327 = vpack.c.bf16 %v3233, %v3231
        %v3328 = vpack.c.bf16 %v3234, %v3232
        %v3329 = vpack.c.bf16 %v3237, %v3235
        %v3330 = vpack.c.bf16 %v3238, %v3236
        %v3331 = vpack.c.bf16 %v3241, %v3239
        %v3332 = vpack.c.bf16 %v3242, %v3240
        %v3333 = vpack.c.bf16 %v3245, %v3243
        %v3334 = vpack.c.bf16 %v3246, %v3244
        %v3335 = vpack.c.bf16 %v3249, %v3247
        %v3336 = vpack.c.bf16 %v3250, %v3248
        %v3337 = vpack.c.bf16 %v3253, %v3251
        %v3338 = vpack.c.bf16 %v3254, %v3252
        %v3339 = vpack.c.bf16 %v3257, %v3255
        %v3340 = vpack.c.bf16 %v3258, %v3256
        %v3341 = vpack.c.bf16 %v3261, %v3259
        %v3342 = vpack.c.bf16 %v3262, %v3260
        %v3343 = vpack.c.bf16 %v3265, %v3263
        %v3344 = vpack.c.bf16 %v3266, %v3264
        %v3345 = vpack.c.bf16 %v3269, %v3267
        %v3346 = vpack.c.bf16 %v3270, %v3268
        %v3347 = vpack.c.bf16 %v3273, %v3271
        %v3348 = vpack.c.bf16 %v3274, %v3272
        %v3349 = vpack.c.bf16 %v3277, %v3275
        %v3350 = vpack.c.bf16 %v3278, %v3276
        %v3351 = vpack.c.bf16 %v3281, %v3279
        %v3352 = vpack.c.bf16 %v3282, %v3280
        %v3353 = vpack.c.bf16 %v3285, %v3283
        %v3354 = vpack.c.bf16 %v3286, %v3284
        %v3355 = vpack.c.bf16 %v3289, %v3287
        %v3356 = vpack.c.bf16 %v3290, %v3288
        %v3357 = vpack.c.bf16 %v3293, %v3291
        %v3358 = vpack.c.bf16 %v3294, %v3292
        %v3359 = vld [vmem:[#allocation14] sm:$0xff]
        %v3360 = vld [vmem:[#allocation14 + $0x8] sm:$0xff]
        %v3361 = vld [vmem:[#allocation14 + $0x10] sm:$0xff]
        %v3362 = vld [vmem:[#allocation14 + $0x18] sm:$0xff]
        %v3363 = vld [vmem:[#allocation14 + $0x20] sm:$0xff]
        %v3364 = vld [vmem:[#allocation14 + $0x28] sm:$0xff]
        %v3365 = vld [vmem:[#allocation14 + $0x30] sm:$0xff]
        %v3366 = vld [vmem:[#allocation14 + $0x38] sm:$0xff]
        %v3367 = vld [vmem:[#allocation14 + $0x40] sm:$0xff]
        %v3368 = vld [vmem:[#allocation14 + $0x48] sm:$0xff]
        %v3369 = vld [vmem:[#allocation14 + $0x50] sm:$0xff]
        %v3370 = vld [vmem:[#allocation14 + $0x58] sm:$0xff]
        %v3371 = vld [vmem:[#allocation14 + $0x60] sm:$0xff]
        %v3372 = vld [vmem:[#allocation14 + $0x68] sm:$0xff]
        %v3373 = vld [vmem:[#allocation14 + $0x70] sm:$0xff]
        %v3374 = vld [vmem:[#allocation14 + $0x78] sm:$0xff]
        %v3375 = vld [vmem:[#allocation14 + $0x80] sm:$0xff]
        %v3376 = vld [vmem:[#allocation14 + $0x88] sm:$0xff]
        %v3377 = vld [vmem:[#allocation14 + $0x90] sm:$0xff]
        %v3378 = vld [vmem:[#allocation14 + $0x98] sm:$0xff]
        %v3379 = vld [vmem:[#allocation14 + $0xa0] sm:$0xff]
        %v3380 = vld [vmem:[#allocation14 + $0xa8] sm:$0xff]
        %v3381 = vld [vmem:[#allocation14 + $0xb0] sm:$0xff]
        %v3382 = vld [vmem:[#allocation14 + $0xb8] sm:$0xff]
        %v3383 = vld [vmem:[#allocation14 + $0xc0] sm:$0xff]
        %v3384 = vld [vmem:[#allocation14 + $0xc8] sm:$0xff]
        %v3385 = vld [vmem:[#allocation14 + $0xd0] sm:$0xff]
        %v3386 = vld [vmem:[#allocation14 + $0xd8] sm:$0xff]
        %v3387 = vld [vmem:[#allocation14 + $0xe0] sm:$0xff]
        %v3388 = vld [vmem:[#allocation14 + $0xe8] sm:$0xff]
        %v3389 = vld [vmem:[#allocation14 + $0xf0] sm:$0xff]
        %v3390 = vld [vmem:[#allocation14 + $0xf8] sm:$0xff]
        %v3391 = vld [vmem:[#allocation16] sm:$0x3]
        %v3393 = vlaneseq
        %v3394 = vshrl.u32 %v3393, 7
        %v3395 = vsub.s32 0, %v3394
        %v3396 = vrot.slane %v3391, %v3395
        %v3397 = vlaneseq
        %v3398 = vshrl.u32 %v3397, 7
        %v3399 = vsub.s32 1, %v3398
        %v3400 = vrot.slane %v3391, %v3399
        %v3435 = vunpack.c.l.b16 %v3359
        %v3436 = vunpack.c.h.b16 %v3359
        %v3437 = vunpack.c.l.b16 %v3360
        %v3438 = vunpack.c.h.b16 %v3360
        %v3439 = vunpack.c.l.b16 %v3361
        %v3440 = vunpack.c.h.b16 %v3361
        %v3441 = vunpack.c.l.b16 %v3362
        %v3442 = vunpack.c.h.b16 %v3362
        %v3443 = vunpack.c.l.b16 %v3363
        %v3444 = vunpack.c.h.b16 %v3363
        %v3445 = vunpack.c.l.b16 %v3364
        %v3446 = vunpack.c.h.b16 %v3364
        %v3447 = vunpack.c.l.b16 %v3365
        %v3448 = vunpack.c.h.b16 %v3365
        %v3449 = vunpack.c.l.b16 %v3366
        %v3450 = vunpack.c.h.b16 %v3366
        %v3451 = vunpack.c.l.b16 %v3367
        %v3452 = vunpack.c.h.b16 %v3367
        %v3453 = vunpack.c.l.b16 %v3368
        %v3454 = vunpack.c.h.b16 %v3368
        %v3455 = vunpack.c.l.b16 %v3369
        %v3456 = vunpack.c.h.b16 %v3369
        %v3457 = vunpack.c.l.b16 %v3370
        %v3458 = vunpack.c.h.b16 %v3370
        %v3459 = vunpack.c.l.b16 %v3371
        %v3460 = vunpack.c.h.b16 %v3371
        %v3461 = vunpack.c.l.b16 %v3372
        %v3462 = vunpack.c.h.b16 %v3372
        %v3463 = vunpack.c.l.b16 %v3373
        %v3464 = vunpack.c.h.b16 %v3373
        %v3465 = vunpack.c.l.b16 %v3374
        %v3466 = vunpack.c.h.b16 %v3374
        %v3467 = vunpack.c.l.b16 %v3375
        %v3468 = vunpack.c.h.b16 %v3375
        %v3469 = vunpack.c.l.b16 %v3376
        %v3470 = vunpack.c.h.b16 %v3376
        %v3471 = vunpack.c.l.b16 %v3377
        %v3472 = vunpack.c.h.b16 %v3377
        %v3473 = vunpack.c.l.b16 %v3378
        %v3474 = vunpack.c.h.b16 %v3378
        %v3475 = vunpack.c.l.b16 %v3379
        %v3476 = vunpack.c.h.b16 %v3379
        %v3477 = vunpack.c.l.b16 %v3380
        %v3478 = vunpack.c.h.b16 %v3380
        %v3479 = vunpack.c.l.b16 %v3381
        %v3480 = vunpack.c.h.b16 %v3381
        %v3481 = vunpack.c.l.b16 %v3382
        %v3482 = vunpack.c.h.b16 %v3382
        %v3483 = vunpack.c.l.b16 %v3383
        %v3484 = vunpack.c.h.b16 %v3383
        %v3485 = vunpack.c.l.b16 %v3384
        %v3486 = vunpack.c.h.b16 %v3384
        %v3487 = vunpack.c.l.b16 %v3385
        %v3488 = vunpack.c.h.b16 %v3385
        %v3489 = vunpack.c.l.b16 %v3386
        %v3490 = vunpack.c.h.b16 %v3386
        %v3491 = vunpack.c.l.b16 %v3387
        %v3492 = vunpack.c.h.b16 %v3387
        %v3493 = vunpack.c.l.b16 %v3388
        %v3494 = vunpack.c.h.b16 %v3388
        %v3495 = vunpack.c.l.b16 %v3389
        %v3496 = vunpack.c.h.b16 %v3389
        %v3497 = vunpack.c.l.b16 %v3390
        %v3498 = vunpack.c.h.b16 %v3390
        %v3499 = vpack.c.b16 %v3437, %v3435
        %v3500 = vpack.c.b16 %v3438, %v3436
        %v3501 = vpack.c.b16 %v3441, %v3439
        %v3502 = vpack.c.b16 %v3442, %v3440
        %v3503 = vpack.c.b16 %v3445, %v3443
        %v3504 = vpack.c.b16 %v3446, %v3444
        %v3505 = vpack.c.b16 %v3449, %v3447
        %v3506 = vpack.c.b16 %v3450, %v3448
        %v3507 = vpack.c.b16 %v3453, %v3451
        %v3508 = vpack.c.b16 %v3454, %v3452
        %v3509 = vpack.c.b16 %v3457, %v3455
        %v3510 = vpack.c.b16 %v3458, %v3456
        %v3511 = vpack.c.b16 %v3461, %v3459
        %v3512 = vpack.c.b16 %v3462, %v3460
        %v3513 = vpack.c.b16 %v3465, %v3463
        %v3514 = vpack.c.b16 %v3466, %v3464
        %v3515 = vpack.c.b16 %v3469, %v3467
        %v3516 = vpack.c.b16 %v3470, %v3468
        %v3517 = vpack.c.b16 %v3473, %v3471
        %v3518 = vpack.c.b16 %v3474, %v3472
        %v3519 = vpack.c.b16 %v3477, %v3475
        %v3520 = vpack.c.b16 %v3478, %v3476
        %v3521 = vpack.c.b16 %v3481, %v3479
        %v3522 = vpack.c.b16 %v3482, %v3480
        %v3523 = vpack.c.b16 %v3485, %v3483
        %v3524 = vpack.c.b16 %v3486, %v3484
        %v3525 = vpack.c.b16 %v3489, %v3487
        %v3526 = vpack.c.b16 %v3490, %v3488
        %v3527 = vpack.c.b16 %v3493, %v3491
        %v3528 = vpack.c.b16 %v3494, %v3492
        %v3529 = vpack.c.b16 %v3497, %v3495
        %v3530 = vpack.c.b16 %v3498, %v3496
        %3563 = vmatprep.subr.bf16.mxu0 %v3500
        %3564 = vmatpush1.bf16.msra.mxu0 %v3499
        %3565 = vmatprep.subr.bf16.mxu0 %v3502
        %3566 = vmatpush1.bf16.msra.mxu0 %v3501
        %3567 = vmatprep.subr.bf16.mxu0 %v3504
        %3568 = vmatpush1.bf16.msra.mxu0 %v3503
        %3569 = vmatprep.subr.bf16.mxu0 %v3506
        %3570 = vmatpush1.bf16.msra.mxu0 %v3505
        %3571 = vmatprep.subr.bf16.mxu0 %v3508
        %3572 = vmatpush1.bf16.msra.mxu0 %v3507
        %3573 = vmatprep.subr.bf16.mxu0 %v3510
        %3574 = vmatpush1.bf16.msra.mxu0 %v3509
        %3575 = vmatprep.subr.bf16.mxu0 %v3512
        %3576 = vmatpush1.bf16.msra.mxu0 %v3511
        %3577 = vmatprep.subr.bf16.mxu0 %v3514
        %3578 = vmatpush1.bf16.msra.mxu0 %v3513
        %3579 = vmatprep.subr.bf16.mxu0 %v3516
        %3580 = vmatpush1.bf16.msra.mxu0 %v3515
        %3581 = vmatprep.subr.bf16.mxu0 %v3518
        %3582 = vmatpush1.bf16.msra.mxu0 %v3517
        %3583 = vmatprep.subr.bf16.mxu0 %v3520
        %3584 = vmatpush1.bf16.msra.mxu0 %v3519
        %3585 = vmatprep.subr.bf16.mxu0 %v3522
        %3586 = vmatpush1.bf16.msra.mxu0 %v3521
        %3587 = vmatprep.subr.bf16.mxu0 %v3524
        %3588 = vmatpush1.bf16.msra.mxu0 %v3523
        %3589 = vmatprep.subr.bf16.mxu0 %v3526
        %3590 = vmatpush1.bf16.msra.mxu0 %v3525
        %3591 = vmatprep.subr.bf16.mxu0 %v3528
        %3592 = vmatpush1.bf16.msra.mxu0 %v3527
        %3593 = vmatprep.subr.bf16.mxu0 %v3530
        %3594 = vmatpush1.bf16.msra.mxu0 %v3529
        %3595 = vmatprep.mubr.bf16.mxu0 %v3296
        %3596 = vmatmul.mubr.bf16.gmra.mrb[0].mxu0 %v3295
        %v3597 = vpop.f32.mrb[0].mxu0
        %v3598 = vadd.f32 %v3396, %v3597
        %v3599 = vpop.f32.mrb[0].mxu0
        %v3600 = vadd.f32 %v3400, %v3599
        %v3601 = vpop.f32.mrb[0].mxu0
        %v3602 = vadd.f32 %v3396, %v3601
        %v3603 = vpop.f32.mrb[0].mxu0
        %v3604 = vadd.f32 %v3400, %v3603
        %3605 = vmatprep.mubr.bf16.mxu0 %v3298
        %3606 = vmatmul.mubr.bf16.gmra.mrb[0].mxu0 %v3297
        %v3607 = vpop.f32.mrb[0].mxu0
        %v3608 = vadd.f32 %v3396, %v3607
        %v3609 = vpop.f32.mrb[0].mxu0
        %v3610 = vadd.f32 %v3400, %v3609
        %v3611 = vpop.f32.mrb[0].mxu0
        %v3612 = vadd.f32 %v3396, %v3611
        %v3613 = vpop.f32.mrb[0].mxu0
        %v3614 = vadd.f32 %v3400, %v3613
        %3615 = vmatprep.mubr.bf16.mxu0 %v3300
        %3616 = vmatmul.mubr.bf16.gmra.mrb[0].mxu0 %v3299
        %v3617 = vpop.f32.mrb[0].mxu0
        %v3618 = vadd.f32 %v3396, %v3617
        %v3619 = vpop.f32.mrb[0].mxu0
        %v3620 = vadd.f32 %v3400, %v3619
        %v3621 = vpop.f32.mrb[0].mxu0
        %v3622 = vadd.f32 %v3396, %v3621
        %v3623 = vpop.f32.mrb[0].mxu0
        %v3624 = vadd.f32 %v3400, %v3623
        %3625 = vmatprep.mubr.bf16.mxu0 %v3302
        %3626 = vmatmul.mubr.bf16.gmra.mrb[0].mxu0 %v3301
        %v3627 = vpop.f32.mrb[0].mxu0
        %v3628 = vadd.f32 %v3396, %v3627
        %v3629 = vpop.f32.mrb[0].mxu0
        %v3630 = vadd.f32 %v3400, %v3629
        %v3631 = vpop.f32.mrb[0].mxu0
        %v3632 = vadd.f32 %v3396, %v3631
        %v3633 = vpop.f32.mrb[0].mxu0
        %v3634 = vadd.f32 %v3400, %v3633
        %3635 = vmatprep.mubr.bf16.mxu0 %v3304
        %3636 = vmatmul.mubr.bf16.gmra.mrb[0].mxu0 %v3303
        %v3637 = vpop.f32.mrb[0].mxu0
        %v3638 = vadd.f32 %v3396, %v3637
        %v3639 = vpop.f32.mrb[0].mxu0
        %v3640 = vadd.f32 %v3400, %v3639
        %v3641 = vpop.f32.mrb[0].mxu0
        %v3642 = vadd.f32 %v3396, %v3641
        %v3643 = vpop.f32.mrb[0].mxu0
        %v3644 = vadd.f32 %v3400, %v3643
        %3645 = vmatprep.mubr.bf16.mxu0 %v3306
        %3646 = vmatmul.mubr.bf16.gmra.mrb[0].mxu0 %v3305
        %v3647 = vpop.f32.mrb[0].mxu0
        %v3648 = vadd.f32 %v3396, %v3647
        %v3649 = vpop.f32.mrb[0].mxu0
        %v3650 = vadd.f32 %v3400, %v3649
        %v3651 = vpop.f32.mrb[0].mxu0
        %v3652 = vadd.f32 %v3396, %v3651
        %v3653 = vpop.f32.mrb[0].mxu0
        %v3654 = vadd.f32 %v3400, %v3653
        %3655 = vmatprep.mubr.bf16.mxu0 %v3308
        %3656 = vmatmul.mubr.bf16.gmra.mrb[0].mxu0 %v3307
        %v3657 = vpop.f32.mrb[0].mxu0
        %v3658 = vadd.f32 %v3396, %v3657
        %v3659 = vpop.f32.mrb[0].mxu0
        %v3660 = vadd.f32 %v3400, %v3659
        %v3661 = vpop.f32.mrb[0].mxu0
        %v3662 = vadd.f32 %v3396, %v3661
        %v3663 = vpop.f32.mrb[0].mxu0
        %v3664 = vadd.f32 %v3400, %v3663
        %3665 = vmatprep.mubr.bf16.mxu0 %v3310
        %3666 = vmatmul.mubr.bf16.gmra.mrb[0].mxu0 %v3309
        %v3667 = vpop.f32.mrb[0].mxu0
        %v3668 = vadd.f32 %v3396, %v3667
        %v3669 = vpop.f32.mrb[0].mxu0
        %v3670 = vadd.f32 %v3400, %v3669
        %v3671 = vpop.f32.mrb[0].mxu0
        %v3672 = vadd.f32 %v3396, %v3671
        %v3673 = vpop.f32.mrb[0].mxu0
        %v3674 = vadd.f32 %v3400, %v3673
        %3675 = vmatprep.mubr.bf16.mxu0 %v3312
        %3676 = vmatmul.mubr.bf16.gmra.mrb[0].mxu0 %v3311
        %v3677 = vpop.f32.mrb[0].mxu0
        %v3678 = vadd.f32 %v3396, %v3677
        %v3679 = vpop.f32.mrb[0].mxu0
        %v3680 = vadd.f32 %v3400, %v3679
        %v3681 = vpop.f32.mrb[0].mxu0
        %v3682 = vadd.f32 %v3396, %v3681
        %v3683 = vpop.f32.mrb[0].mxu0
        %v3684 = vadd.f32 %v3400, %v3683
        %3685 = vmatprep.mubr.bf16.mxu0 %v3314
        %3686 = vmatmul.mubr.bf16.gmra.mrb[0].mxu0 %v3313
        %v3687 = vpop.f32.mrb[0].mxu0
        %v3688 = vadd.f32 %v3396, %v3687
        %v3689 = vpop.f32.mrb[0].mxu0
        %v3690 = vadd.f32 %v3400, %v3689
        %v3691 = vpop.f32.mrb[0].mxu0
        %v3692 = vadd.f32 %v3396, %v3691
        %v3693 = vpop.f32.mrb[0].mxu0
        %v3694 = vadd.f32 %v3400, %v3693
        %3695 = vmatprep.mubr.bf16.mxu0 %v3316
        %3696 = vmatmul.mubr.bf16.gmra.mrb[0].mxu0 %v3315
        %v3697 = vpop.f32.mrb[0].mxu0
        %v3698 = vadd.f32 %v3396, %v3697
        %v3699 = vpop.f32.mrb[0].mxu0
        %v3700 = vadd.f32 %v3400, %v3699
        %v3701 = vpop.f32.mrb[0].mxu0
        %v3702 = vadd.f32 %v3396, %v3701
        %v3703 = vpop.f32.mrb[0].mxu0
        %v3704 = vadd.f32 %v3400, %v3703
        %3705 = vmatprep.mubr.bf16.mxu0 %v3318
        %3706 = vmatmul.mubr.bf16.gmra.mrb[0].mxu0 %v3317
        %v3707 = vpop.f32.mrb[0].mxu0
        %v3708 = vadd.f32 %v3396, %v3707
        %v3709 = vpop.f32.mrb[0].mxu0
        %v3710 = vadd.f32 %v3400, %v3709
        %v3711 = vpop.f32.mrb[0].mxu0
        %v3712 = vadd.f32 %v3396, %v3711
        %v3713 = vpop.f32.mrb[0].mxu0
        %v3714 = vadd.f32 %v3400, %v3713
        %3715 = vmatprep.mubr.bf16.mxu0 %v3320
        %3716 = vmatmul.mubr.bf16.gmra.mrb[0].mxu0 %v3319
        %v3717 = vpop.f32.mrb[0].mxu0
        %v3718 = vadd.f32 %v3396, %v3717
        %v3719 = vpop.f32.mrb[0].mxu0
        %v3720 = vadd.f32 %v3400, %v3719
        %v3721 = vpop.f32.mrb[0].mxu0
        %v3722 = vadd.f32 %v3396, %v3721
        %v3723 = vpop.f32.mrb[0].mxu0
        %v3724 = vadd.f32 %v3400, %v3723
        %3725 = vmatprep.mubr.bf16.mxu0 %v3322
        %3726 = vmatmul.mubr.bf16.gmra.mrb[0].mxu0 %v3321
        %v3727 = vpop.f32.mrb[0].mxu0
        %v3728 = vadd.f32 %v3396, %v3727
        %v3729 = vpop.f32.mrb[0].mxu0
        %v3730 = vadd.f32 %v3400, %v3729
        %v3731 = vpop.f32.mrb[0].mxu0
        %v3732 = vadd.f32 %v3396, %v3731
        %v3733 = vpop.f32.mrb[0].mxu0
        %v3734 = vadd.f32 %v3400, %v3733
        %3735 = vmatprep.mubr.bf16.mxu0 %v3324
        %3736 = vmatmul.mubr.bf16.gmra.mrb[0].mxu0 %v3323
        %v3737 = vpop.f32.mrb[0].mxu0
        %v3738 = vadd.f32 %v3396, %v3737
        %v3739 = vpop.f32.mrb[0].mxu0
        %v3740 = vadd.f32 %v3400, %v3739
        %v3741 = vpop.f32.mrb[0].mxu0
        %v3742 = vadd.f32 %v3396, %v3741
        %v3743 = vpop.f32.mrb[0].mxu0
        %v3744 = vadd.f32 %v3400, %v3743
        %3745 = vmatprep.mubr.bf16.mxu0 %v3326
        %3746 = vmatmul.mubr.bf16.gmra.mrb[0].mxu0 %v3325
        %v3747 = vpop.f32.mrb[0].mxu0
        %v3748 = vadd.f32 %v3396, %v3747
        %v3749 = vpop.f32.mrb[0].mxu0
        %v3750 = vadd.f32 %v3400, %v3749
        %v3751 = vpop.f32.mrb[0].mxu0
        %v3752 = vadd.f32 %v3396, %v3751
        %v3753 = vpop.f32.mrb[0].mxu0
        %v3754 = vadd.f32 %v3400, %v3753
        %3755 = vmatprep.mubr.bf16.mxu0 %v3328
        %3756 = vmatmul.mubr.bf16.gmra.mrb[0].mxu0 %v3327
        %v3757 = vpop.f32.mrb[0].mxu0
        %v3758 = vadd.f32 %v3396, %v3757
        %v3759 = vpop.f32.mrb[0].mxu0
        %v3760 = vadd.f32 %v3400, %v3759
        %v3761 = vpop.f32.mrb[0].mxu0
        %v3762 = vadd.f32 %v3396, %v3761
        %v3763 = vpop.f32.mrb[0].mxu0
        %v3764 = vadd.f32 %v3400, %v3763
        %3765 = vmatprep.mubr.bf16.mxu0 %v3330
        %3766 = vmatmul.mubr.bf16.gmra.mrb[0].mxu0 %v3329
        %v3767 = vpop.f32.mrb[0].mxu0
        %v3768 = vadd.f32 %v3396, %v3767
        %v3769 = vpop.f32.mrb[0].mxu0
        %v3770 = vadd.f32 %v3400, %v3769
        %v3771 = vpop.f32.mrb[0].mxu0
        %v3772 = vadd.f32 %v3396, %v3771
        %v3773 = vpop.f32.mrb[0].mxu0
        %v3774 = vadd.f32 %v3400, %v3773
        %3775 = vmatprep.mubr.bf16.mxu0 %v3332
        %3776 = vmatmul.mubr.bf16.gmra.mrb[0].mxu0 %v3331
        %v3777 = vpop.f32.mrb[0].mxu0
        %v3778 = vadd.f32 %v3396, %v3777
        %v3779 = vpop.f32.mrb[0].mxu0
        %v3780 = vadd.f32 %v3400, %v3779
        %v3781 = vpop.f32.mrb[0].mxu0
        %v3782 = vadd.f32 %v3396, %v3781
        %v3783 = vpop.f32.mrb[0].mxu0
        %v3784 = vadd.f32 %v3400, %v3783
        %3785 = vmatprep.mubr.bf16.mxu0 %v3334
        %3786 = vmatmul.mubr.bf16.gmra.mrb[0].mxu0 %v3333
        %v3787 = vpop.f32.mrb[0].mxu0
        %v3788 = vadd.f32 %v3396, %v3787
        %v3789 = vpop.f32.mrb[0].mxu0
        %v3790 = vadd.f32 %v3400, %v3789
        %v3791 = vpop.f32.mrb[0].mxu0
        %v3792 = vadd.f32 %v3396, %v3791
        %v3793 = vpop.f32.mrb[0].mxu0
        %v3794 = vadd.f32 %v3400, %v3793
        %3795 = vmatprep.mubr.bf16.mxu0 %v3336
        %3796 = vmatmul.mubr.bf16.gmra.mrb[0].mxu0 %v3335
        %v3797 = vpop.f32.mrb[0].mxu0
        %v3798 = vadd.f32 %v3396, %v3797
        %v3799 = vpop.f32.mrb[0].mxu0
        %v3800 = vadd.f32 %v3400, %v3799
        %v3801 = vpop.f32.mrb[0].mxu0
        %v3802 = vadd.f32 %v3396, %v3801
        %v3803 = vpop.f32.mrb[0].mxu0
        %v3804 = vadd.f32 %v3400, %v3803
        %3805 = vmatprep.mubr.bf16.mxu0 %v3338
        %3806 = vmatmul.mubr.bf16.gmra.mrb[0].mxu0 %v3337
        %v3807 = vpop.f32.mrb[0].mxu0
        %v3808 = vadd.f32 %v3396, %v3807
        %v3809 = vpop.f32.mrb[0].mxu0
        %v3810 = vadd.f32 %v3400, %v3809
        %v3811 = vpop.f32.mrb[0].mxu0
        %v3812 = vadd.f32 %v3396, %v3811
        %v3813 = vpop.f32.mrb[0].mxu0
        %v3814 = vadd.f32 %v3400, %v3813
        %3815 = vmatprep.mubr.bf16.mxu0 %v3340
        %3816 = vmatmul.mubr.bf16.gmra.mrb[0].mxu0 %v3339
        %v3817 = vpop.f32.mrb[0].mxu0
        %v3818 = vadd.f32 %v3396, %v3817
        %v3819 = vpop.f32.mrb[0].mxu0
        %v3820 = vadd.f32 %v3400, %v3819
        %v3821 = vpop.f32.mrb[0].mxu0
        %v3822 = vadd.f32 %v3396, %v3821
        %v3823 = vpop.f32.mrb[0].mxu0
        %v3824 = vadd.f32 %v3400, %v3823
        %3825 = vmatprep.mubr.bf16.mxu0 %v3342
        %3826 = vmatmul.mubr.bf16.gmra.mrb[0].mxu0 %v3341
        %v3827 = vpop.f32.mrb[0].mxu0
        %v3828 = vadd.f32 %v3396, %v3827
        %v3829 = vpop.f32.mrb[0].mxu0
        %v3830 = vadd.f32 %v3400, %v3829
        %v3831 = vpop.f32.mrb[0].mxu0
        %v3832 = vadd.f32 %v3396, %v3831
        %v3833 = vpop.f32.mrb[0].mxu0
        %v3834 = vadd.f32 %v3400, %v3833
        %3835 = vmatprep.mubr.bf16.mxu0 %v3344
        %3836 = vmatmul.mubr.bf16.gmra.mrb[0].mxu0 %v3343
        %v3837 = vpop.f32.mrb[0].mxu0
        %v3838 = vadd.f32 %v3396, %v3837
        %v3839 = vpop.f32.mrb[0].mxu0
        %v3840 = vadd.f32 %v3400, %v3839
        %v3841 = vpop.f32.mrb[0].mxu0
        %v3842 = vadd.f32 %v3396, %v3841
        %v3843 = vpop.f32.mrb[0].mxu0
        %v3844 = vadd.f32 %v3400, %v3843
        %3845 = vmatprep.mubr.bf16.mxu0 %v3346
        %3846 = vmatmul.mubr.bf16.gmra.mrb[0].mxu0 %v3345
        %v3847 = vpop.f32.mrb[0].mxu0
        %v3848 = vadd.f32 %v3396, %v3847
        %v3849 = vpop.f32.mrb[0].mxu0
        %v3850 = vadd.f32 %v3400, %v3849
        %v3851 = vpop.f32.mrb[0].mxu0
        %v3852 = vadd.f32 %v3396, %v3851
        %v3853 = vpop.f32.mrb[0].mxu0
        %v3854 = vadd.f32 %v3400, %v3853
        %3855 = vmatprep.mubr.bf16.mxu0 %v3348
        %3856 = vmatmul.mubr.bf16.gmra.mrb[0].mxu0 %v3347
        %v3857 = vpop.f32.mrb[0].mxu0
        %v3858 = vadd.f32 %v3396, %v3857
        %v3859 = vpop.f32.mrb[0].mxu0
        %v3860 = vadd.f32 %v3400, %v3859
        %v3861 = vpop.f32.mrb[0].mxu0
        %v3862 = vadd.f32 %v3396, %v3861
        %v3863 = vpop.f32.mrb[0].mxu0
        %v3864 = vadd.f32 %v3400, %v3863
        %3865 = vmatprep.mubr.bf16.mxu0 %v3350
        %3866 = vmatmul.mubr.bf16.gmra.mrb[0].mxu0 %v3349
        %v3867 = vpop.f32.mrb[0].mxu0
        %v3868 = vadd.f32 %v3396, %v3867
        %v3869 = vpop.f32.mrb[0].mxu0
        %v3870 = vadd.f32 %v3400, %v3869
        %v3871 = vpop.f32.mrb[0].mxu0
        %v3872 = vadd.f32 %v3396, %v3871
        %v3873 = vpop.f32.mrb[0].mxu0
        %v3874 = vadd.f32 %v3400, %v3873
        %3875 = vmatprep.mubr.bf16.mxu0 %v3352
        %3876 = vmatmul.mubr.bf16.gmra.mrb[0].mxu0 %v3351
        %v3877 = vpop.f32.mrb[0].mxu0
        %v3878 = vadd.f32 %v3396, %v3877
        %v3879 = vpop.f32.mrb[0].mxu0
        %v3880 = vadd.f32 %v3400, %v3879
        %v3881 = vpop.f32.mrb[0].mxu0
        %v3882 = vadd.f32 %v3396, %v3881
        %v3883 = vpop.f32.mrb[0].mxu0
        %v3884 = vadd.f32 %v3400, %v3883
        %3885 = vmatprep.mubr.bf16.mxu0 %v3354
        %3886 = vmatmul.mubr.bf16.gmra.mrb[0].mxu0 %v3353
        %v3887 = vpop.f32.mrb[0].mxu0
        %v3888 = vadd.f32 %v3396, %v3887
        %v3889 = vpop.f32.mrb[0].mxu0
        %v3890 = vadd.f32 %v3400, %v3889
        %v3891 = vpop.f32.mrb[0].mxu0
        %v3892 = vadd.f32 %v3396, %v3891
        %v3893 = vpop.f32.mrb[0].mxu0
        %v3894 = vadd.f32 %v3400, %v3893
        %3895 = vmatprep.mubr.bf16.mxu0 %v3356
        %3896 = vmatmul.mubr.bf16.gmra.mrb[0].mxu0 %v3355
        %v3897 = vpop.f32.mrb[0].mxu0
        %v3898 = vadd.f32 %v3396, %v3897
        %v3899 = vpop.f32.mrb[0].mxu0
        %v3900 = vadd.f32 %v3400, %v3899
        %v3901 = vpop.f32.mrb[0].mxu0
        %v3902 = vadd.f32 %v3396, %v3901
        %v3903 = vpop.f32.mrb[0].mxu0
        %v3904 = vadd.f32 %v3400, %v3903
        %3905 = vmatprep.mubr.bf16.mxu0 %v3358
        %3906 = vmatmul.mubr.bf16.gmra.mrb[0].mxu0 %v3357
        %v3907 = vpop.f32.mrb[0].mxu0
        %v3908 = vadd.f32 %v3396, %v3907
        %v3909 = vpop.f32.mrb[0].mxu0
        %v3910 = vadd.f32 %v3400, %v3909
        %v3911 = vpop.f32.mrb[0].mxu0
        %v3912 = vadd.f32 %v3396, %v3911
        %v3913 = vpop.f32.mrb[0].mxu0
        %v3914 = vadd.f32 %v3400, %v3913
        %3915 = vdwg.mxu0
        %v3916 = vmax.f32 %v3598, 0.0
        %v3917 = vmax.f32 %v3600, 0.0
        %v3918 = vmax.f32 %v3602, 0.0
        %v3919 = vmax.f32 %v3604, 0.0
        %v3920 = vmax.f32 %v3608, 0.0
        %v3921 = vmax.f32 %v3610, 0.0
        %v3922 = vmax.f32 %v3612, 0.0
        %v3923 = vmax.f32 %v3614, 0.0
        %v3924 = vmax.f32 %v3618, 0.0
        %v3925 = vmax.f32 %v3620, 0.0
        %v3926 = vmax.f32 %v3622, 0.0
        %v3927 = vmax.f32 %v3624, 0.0
        %v3928 = vmax.f32 %v3628, 0.0
        %v3929 = vmax.f32 %v3630, 0.0
        %v3930 = vmax.f32 %v3632, 0.0
        %v3931 = vmax.f32 %v3634, 0.0
        %v3932 = vmax.f32 %v3638, 0.0
        %v3933 = vmax.f32 %v3640, 0.0
        %v3934 = vmax.f32 %v3642, 0.0
        %v3935 = vmax.f32 %v3644, 0.0
        %v3936 = vmax.f32 %v3648, 0.0
        %v3937 = vmax.f32 %v3650, 0.0
        %v3938 = vmax.f32 %v3652, 0.0
        %v3939 = vmax.f32 %v3654, 0.0
        %v3940 = vmax.f32 %v3658, 0.0
        %v3941 = vmax.f32 %v3660, 0.0
        %v3942 = vmax.f32 %v3662, 0.0
        %v3943 = vmax.f32 %v3664, 0.0
        %v3944 = vmax.f32 %v3668, 0.0
        %v3945 = vmax.f32 %v3670, 0.0
        %v3946 = vmax.f32 %v3672, 0.0
        %v3947 = vmax.f32 %v3674, 0.0
        %v3948 = vmax.f32 %v3678, 0.0
        %v3949 = vmax.f32 %v3680, 0.0
        %v3950 = vmax.f32 %v3682, 0.0
        %v3951 = vmax.f32 %v3684, 0.0
        %v3952 = vmax.f32 %v3688, 0.0
        %v3953 = vmax.f32 %v3690, 0.0
        %v3954 = vmax.f32 %v3692, 0.0
        %v3955 = vmax.f32 %v3694, 0.0
        %v3956 = vmax.f32 %v3698, 0.0
        %v3957 = vmax.f32 %v3700, 0.0
        %v3958 = vmax.f32 %v3702, 0.0
        %v3959 = vmax.f32 %v3704, 0.0
        %v3960 = vmax.f32 %v3708, 0.0
        %v3961 = vmax.f32 %v3710, 0.0
        %v3962 = vmax.f32 %v3712, 0.0
        %v3963 = vmax.f32 %v3714, 0.0
        %v3964 = vmax.f32 %v3718, 0.0
        %v3965 = vmax.f32 %v3720, 0.0
        %v3966 = vmax.f32 %v3722, 0.0
        %v3967 = vmax.f32 %v3724, 0.0
        %v3968 = vmax.f32 %v3728, 0.0
        %v3969 = vmax.f32 %v3730, 0.0
        %v3970 = vmax.f32 %v3732, 0.0
        %v3971 = vmax.f32 %v3734, 0.0
        %v3972 = vmax.f32 %v3738, 0.0
        %v3973 = vmax.f32 %v3740, 0.0
        %v3974 = vmax.f32 %v3742, 0.0
        %v3975 = vmax.f32 %v3744, 0.0
        %v3976 = vmax.f32 %v3748, 0.0
        %v3977 = vmax.f32 %v3750, 0.0
        %v3978 = vmax.f32 %v3752, 0.0
        %v3979 = vmax.f32 %v3754, 0.0
        %v3980 = vmax.f32 %v3758, 0.0
        %v3981 = vmax.f32 %v3760, 0.0
        %v3982 = vmax.f32 %v3762, 0.0
        %v3983 = vmax.f32 %v3764, 0.0
        %v3984 = vmax.f32 %v3768, 0.0
        %v3985 = vmax.f32 %v3770, 0.0
        %v3986 = vmax.f32 %v3772, 0.0
        %v3987 = vmax.f32 %v3774, 0.0
        %v3988 = vmax.f32 %v3778, 0.0
        %v3989 = vmax.f32 %v3780, 0.0
        %v3990 = vmax.f32 %v3782, 0.0
        %v3991 = vmax.f32 %v3784, 0.0
        %v3992 = vmax.f32 %v3788, 0.0
        %v3993 = vmax.f32 %v3790, 0.0
        %v3994 = vmax.f32 %v3792, 0.0
        %v3995 = vmax.f32 %v3794, 0.0
        %v3996 = vmax.f32 %v3798, 0.0
        %v3997 = vmax.f32 %v3800, 0.0
        %v3998 = vmax.f32 %v3802, 0.0
        %v3999 = vmax.f32 %v3804, 0.0
        %v4000 = vmax.f32 %v3808, 0.0
        %v4001 = vmax.f32 %v3810, 0.0
        %v4002 = vmax.f32 %v3812, 0.0
        %v4003 = vmax.f32 %v3814, 0.0
        %v4004 = vmax.f32 %v3818, 0.0
        %v4005 = vmax.f32 %v3820, 0.0
        %v4006 = vmax.f32 %v3822, 0.0
        %v4007 = vmax.f32 %v3824, 0.0
        %v4008 = vmax.f32 %v3828, 0.0
        %v4009 = vmax.f32 %v3830, 0.0
        %v4010 = vmax.f32 %v3832, 0.0
        %v4011 = vmax.f32 %v3834, 0.0
        %v4012 = vmax.f32 %v3838, 0.0
        %v4013 = vmax.f32 %v3840, 0.0
        %v4014 = vmax.f32 %v3842, 0.0
        %v4015 = vmax.f32 %v3844, 0.0
        %v4016 = vmax.f32 %v3848, 0.0
        %v4017 = vmax.f32 %v3850, 0.0
        %v4018 = vmax.f32 %v3852, 0.0
        %v4019 = vmax.f32 %v3854, 0.0
        %v4020 = vmax.f32 %v3858, 0.0
        %v4021 = vmax.f32 %v3860, 0.0
        %v4022 = vmax.f32 %v3862, 0.0
        %v4023 = vmax.f32 %v3864, 0.0
        %v4024 = vmax.f32 %v3868, 0.0
        %v4025 = vmax.f32 %v3870, 0.0
        %v4026 = vmax.f32 %v3872, 0.0
        %v4027 = vmax.f32 %v3874, 0.0
        %v4028 = vmax.f32 %v3878, 0.0
        %v4029 = vmax.f32 %v3880, 0.0
        %v4030 = vmax.f32 %v3882, 0.0
        %v4031 = vmax.f32 %v3884, 0.0
        %v4032 = vmax.f32 %v3888, 0.0
        %v4033 = vmax.f32 %v3890, 0.0
        %v4034 = vmax.f32 %v3892, 0.0
        %v4035 = vmax.f32 %v3894, 0.0
        %v4036 = vmax.f32 %v3898, 0.0
        %v4037 = vmax.f32 %v3900, 0.0
        %v4038 = vmax.f32 %v3902, 0.0
        %v4039 = vmax.f32 %v3904, 0.0
        %v4040 = vmax.f32 %v3908, 0.0
        %v4041 = vmax.f32 %v3910, 0.0
        %v4042 = vmax.f32 %v3912, 0.0
        %v4043 = vmax.f32 %v3914, 0.0
        %v4044 = vpack.c.bf16 %v3918, %v3916
        %v4045 = vpack.c.bf16 %v3919, %v3917
        %v4046 = vpack.c.bf16 %v3922, %v3920
        %v4047 = vpack.c.bf16 %v3923, %v3921
        %v4048 = vpack.c.bf16 %v3926, %v3924
        %v4049 = vpack.c.bf16 %v3927, %v3925
        %v4050 = vpack.c.bf16 %v3930, %v3928
        %v4051 = vpack.c.bf16 %v3931, %v3929
        %v4052 = vpack.c.bf16 %v3934, %v3932
        %v4053 = vpack.c.bf16 %v3935, %v3933
        %v4054 = vpack.c.bf16 %v3938, %v3936
        %v4055 = vpack.c.bf16 %v3939, %v3937
        %v4056 = vpack.c.bf16 %v3942, %v3940
        %v4057 = vpack.c.bf16 %v3943, %v3941
        %v4058 = vpack.c.bf16 %v3946, %v3944
        %v4059 = vpack.c.bf16 %v3947, %v3945
        %v4060 = vpack.c.bf16 %v3950, %v3948
        %v4061 = vpack.c.bf16 %v3951, %v3949
        %v4062 = vpack.c.bf16 %v3954, %v3952
        %v4063 = vpack.c.bf16 %v3955, %v3953
        %v4064 = vpack.c.bf16 %v3958, %v3956
        %v4065 = vpack.c.bf16 %v3959, %v3957
        %v4066 = vpack.c.bf16 %v3962, %v3960
        %v4067 = vpack.c.bf16 %v3963, %v3961
        %v4068 = vpack.c.bf16 %v3966, %v3964
        %v4069 = vpack.c.bf16 %v3967, %v3965
        %v4070 = vpack.c.bf16 %v3970, %v3968
        %v4071 = vpack.c.bf16 %v3971, %v3969
        %v4072 = vpack.c.bf16 %v3974, %v3972
        %v4073 = vpack.c.bf16 %v3975, %v3973
        %v4074 = vpack.c.bf16 %v3978, %v3976
        %v4075 = vpack.c.bf16 %v3979, %v3977
        %v4076 = vpack.c.bf16 %v3982, %v3980
        %v4077 = vpack.c.bf16 %v3983, %v3981
        %v4078 = vpack.c.bf16 %v3986, %v3984
        %v4079 = vpack.c.bf16 %v3987, %v3985
        %v4080 = vpack.c.bf16 %v3990, %v3988
        %v4081 = vpack.c.bf16 %v3991, %v3989
        %v4082 = vpack.c.bf16 %v3994, %v3992
        %v4083 = vpack.c.bf16 %v3995, %v3993
        %v4084 = vpack.c.bf16 %v3998, %v3996
        %v4085 = vpack.c.bf16 %v3999, %v3997
        %v4086 = vpack.c.bf16 %v4002, %v4000
        %v4087 = vpack.c.bf16 %v4003, %v4001
        %v4088 = vpack.c.bf16 %v4006, %v4004
        %v4089 = vpack.c.bf16 %v4007, %v4005
        %v4090 = vpack.c.bf16 %v4010, %v4008
        %v4091 = vpack.c.bf16 %v4011, %v4009
        %v4092 = vpack.c.bf16 %v4014, %v4012
        %v4093 = vpack.c.bf16 %v4015, %v4013
        %v4094 = vpack.c.bf16 %v4018, %v4016
        %v4095 = vpack.c.bf16 %v4019, %v4017
        %v4096 = vpack.c.bf16 %v4022, %v4020
        %v4097 = vpack.c.bf16 %v4023, %v4021
        %v4098 = vpack.c.bf16 %v4026, %v4024
        %v4099 = vpack.c.bf16 %v4027, %v4025
        %v4100 = vpack.c.bf16 %v4030, %v4028
        %v4101 = vpack.c.bf16 %v4031, %v4029
        %v4102 = vpack.c.bf16 %v4034, %v4032
        %v4103 = vpack.c.bf16 %v4035, %v4033
        %v4104 = vpack.c.bf16 %v4038, %v4036
        %v4105 = vpack.c.bf16 %v4039, %v4037
        %v4106 = vpack.c.bf16 %v4042, %v4040
        %v4107 = vpack.c.bf16 %v4043, %v4041
        %v4108 = vld [vmem:[#allocation17] sm:$0xff]
        %v4109 = vld [vmem:[#allocation17 + $0x8] sm:$0xff]
        %v4110 = vld [vmem:[#allocation17 + $0x10] sm:$0xff]
        %v4111 = vld [vmem:[#allocation17 + $0x18] sm:$0xff]
        %v4112 = vld [vmem:[#allocation17 + $0x20] sm:$0xff]
        %v4113 = vld [vmem:[#allocation17 + $0x28] sm:$0xff]
        %v4114 = vld [vmem:[#allocation17 + $0x30] sm:$0xff]
        %v4115 = vld [vmem:[#allocation17 + $0x38] sm:$0xff]
        %v4116 = vld [vmem:[#allocation17 + $0x40] sm:$0xff]
        %v4117 = vld [vmem:[#allocation17 + $0x48] sm:$0xff]
        %v4118 = vld [vmem:[#allocation17 + $0x50] sm:$0xff]
        %v4119 = vld [vmem:[#allocation17 + $0x58] sm:$0xff]
        %v4120 = vld [vmem:[#allocation17 + $0x60] sm:$0xff]
        %v4121 = vld [vmem:[#allocation17 + $0x68] sm:$0xff]
        %v4122 = vld [vmem:[#allocation17 + $0x70] sm:$0xff]
        %v4123 = vld [vmem:[#allocation17 + $0x78] sm:$0xff]
        %v4124 = vld [vmem:[#allocation17 + $0x80] sm:$0xff]
        %v4125 = vld [vmem:[#allocation17 + $0x88] sm:$0xff]
        %v4126 = vld [vmem:[#allocation17 + $0x90] sm:$0xff]
        %v4127 = vld [vmem:[#allocation17 + $0x98] sm:$0xff]
        %v4128 = vld [vmem:[#allocation17 + $0xa0] sm:$0xff]
        %v4129 = vld [vmem:[#allocation17 + $0xa8] sm:$0xff]
        %v4130 = vld [vmem:[#allocation17 + $0xb0] sm:$0xff]
        %v4131 = vld [vmem:[#allocation17 + $0xb8] sm:$0xff]
        %v4132 = vld [vmem:[#allocation17 + $0xc0] sm:$0xff]
        %v4133 = vld [vmem:[#allocation17 + $0xc8] sm:$0xff]
        %v4134 = vld [vmem:[#allocation17 + $0xd0] sm:$0xff]
        %v4135 = vld [vmem:[#allocation17 + $0xd8] sm:$0xff]
        %v4136 = vld [vmem:[#allocation17 + $0xe0] sm:$0xff]
        %v4137 = vld [vmem:[#allocation17 + $0xe8] sm:$0xff]
        %v4138 = vld [vmem:[#allocation17 + $0xf0] sm:$0xff]
        %v4139 = vld [vmem:[#allocation17 + $0xf8] sm:$0xff]
        %v4140 = vld [vmem:[#allocation19] sm:$0x3]
        %v4142 = vlaneseq
        %v4143 = vshrl.u32 %v4142, 7
        %v4144 = vsub.s32 0, %v4143
        %v4145 = vrot.slane %v4140, %v4144
        %v4146 = vlaneseq
        %v4147 = vshrl.u32 %v4146, 7
        %v4148 = vsub.s32 1, %v4147
        %v4149 = vrot.slane %v4140, %v4148
        %v4184 = vunpack.c.l.b16 %v4108
        %v4185 = vunpack.c.h.b16 %v4108
        %v4186 = vunpack.c.l.b16 %v4109
        %v4187 = vunpack.c.h.b16 %v4109
        %v4188 = vunpack.c.l.b16 %v4110
        %v4189 = vunpack.c.h.b16 %v4110
        %v4190 = vunpack.c.l.b16 %v4111
        %v4191 = vunpack.c.h.b16 %v4111
        %v4192 = vunpack.c.l.b16 %v4112
        %v4193 = vunpack.c.h.b16 %v4112
        %v4194 = vunpack.c.l.b16 %v4113
        %v4195 = vunpack.c.h.b16 %v4113
        %v4196 = vunpack.c.l.b16 %v4114
        %v4197 = vunpack.c.h.b16 %v4114
        %v4198 = vunpack.c.l.b16 %v4115
        %v4199 = vunpack.c.h.b16 %v4115
        %v4200 = vunpack.c.l.b16 %v4116
        %v4201 = vunpack.c.h.b16 %v4116
        %v4202 = vunpack.c.l.b16 %v4117
        %v4203 = vunpack.c.h.b16 %v4117
        %v4204 = vunpack.c.l.b16 %v4118
        %v4205 = vunpack.c.h.b16 %v4118
        %v4206 = vunpack.c.l.b16 %v4119
        %v4207 = vunpack.c.h.b16 %v4119
        %v4208 = vunpack.c.l.b16 %v4120
        %v4209 = vunpack.c.h.b16 %v4120
        %v4210 = vunpack.c.l.b16 %v4121
        %v4211 = vunpack.c.h.b16 %v4121
        %v4212 = vunpack.c.l.b16 %v4122
        %v4213 = vunpack.c.h.b16 %v4122
        %v4214 = vunpack.c.l.b16 %v4123
        %v4215 = vunpack.c.h.b16 %v4123
        %v4216 = vunpack.c.l.b16 %v4124
        %v4217 = vunpack.c.h.b16 %v4124
        %v4218 = vunpack.c.l.b16 %v4125
        %v4219 = vunpack.c.h.b16 %v4125
        %v4220 = vunpack.c.l.b16 %v4126
        %v4221 = vunpack.c.h.b16 %v4126
        %v4222 = vunpack.c.l.b16 %v4127
        %v4223 = vunpack.c.h.b16 %v4127
        %v4224 = vunpack.c.l.b16 %v4128
        %v4225 = vunpack.c.h.b16 %v4128
        %v4226 = vunpack.c.l.b16 %v4129
        %v4227 = vunpack.c.h.b16 %v4129
        %v4228 = vunpack.c.l.b16 %v4130
        %v4229 = vunpack.c.h.b16 %v4130
        %v4230 = vunpack.c.l.b16 %v4131
        %v4231 = vunpack.c.h.b16 %v4131
        %v4232 = vunpack.c.l.b16 %v4132
        %v4233 = vunpack.c.h.b16 %v4132
        %v4234 = vunpack.c.l.b16 %v4133
        %v4235 = vunpack.c.h.b16 %v4133
        %v4236 = vunpack.c.l.b16 %v4134
        %v4237 = vunpack.c.h.b16 %v4134
        %v4238 = vunpack.c.l.b16 %v4135
        %v4239 = vunpack.c.h.b16 %v4135
        %v4240 = vunpack.c.l.b16 %v4136
        %v4241 = vunpack.c.h.b16 %v4136
        %v4242 = vunpack.c.l.b16 %v4137
        %v4243 = vunpack.c.h.b16 %v4137
        %v4244 = vunpack.c.l.b16 %v4138
        %v4245 = vunpack.c.h.b16 %v4138
        %v4246 = vunpack.c.l.b16 %v4139
        %v4247 = vunpack.c.h.b16 %v4139
        %v4248 = vpack.c.b16 %v4186, %v4184
        %v4249 = vpack.c.b16 %v4187, %v4185
        %v4250 = vpack.c.b16 %v4190, %v4188
        %v4251 = vpack.c.b16 %v4191, %v4189
        %v4252 = vpack.c.b16 %v4194, %v4192
        %v4253 = vpack.c.b16 %v4195, %v4193
        %v4254 = vpack.c.b16 %v4198, %v4196
        %v4255 = vpack.c.b16 %v4199, %v4197
        %v4256 = vpack.c.b16 %v4202, %v4200
        %v4257 = vpack.c.b16 %v4203, %v4201
        %v4258 = vpack.c.b16 %v4206, %v4204
        %v4259 = vpack.c.b16 %v4207, %v4205
        %v4260 = vpack.c.b16 %v4210, %v4208
        %v4261 = vpack.c.b16 %v4211, %v4209
        %v4262 = vpack.c.b16 %v4214, %v4212
        %v4263 = vpack.c.b16 %v4215, %v4213
        %v4264 = vpack.c.b16 %v4218, %v4216
        %v4265 = vpack.c.b16 %v4219, %v4217
        %v4266 = vpack.c.b16 %v4222, %v4220
        %v4267 = vpack.c.b16 %v4223, %v4221
        %v4268 = vpack.c.b16 %v4226, %v4224
        %v4269 = vpack.c.b16 %v4227, %v4225
        %v4270 = vpack.c.b16 %v4230, %v4228
        %v4271 = vpack.c.b16 %v4231, %v4229
        %v4272 = vpack.c.b16 %v4234, %v4232
        %v4273 = vpack.c.b16 %v4235, %v4233
        %v4274 = vpack.c.b16 %v4238, %v4236
        %v4275 = vpack.c.b16 %v4239, %v4237
        %v4276 = vpack.c.b16 %v4242, %v4240
        %v4277 = vpack.c.b16 %v4243, %v4241
        %v4278 = vpack.c.b16 %v4246, %v4244
        %v4279 = vpack.c.b16 %v4247, %v4245
        %4312 = vmatprep.subr.bf16.mxu0 %v4249
        %4313 = vmatpush1.bf16.msra.mxu0 %v4248
        %4314 = vmatprep.subr.bf16.mxu0 %v4251
        %4315 = vmatpush1.bf16.msra.mxu0 %v4250
        %4316 = vmatprep.subr.bf16.mxu0 %v4253
        %4317 = vmatpush1.bf16.msra.mxu0 %v4252
        %4318 = vmatprep.subr.bf16.mxu0 %v4255
        %4319 = vmatpush1.bf16.msra.mxu0 %v4254
        %4320 = vmatprep.subr.bf16.mxu0 %v4257
        %4321 = vmatpush1.bf16.msra.mxu0 %v4256
        %4322 = vmatprep.subr.bf16.mxu0 %v4259
        %4323 = vmatpush1.bf16.msra.mxu0 %v4258
        %4324 = vmatprep.subr.bf16.mxu0 %v4261
        %4325 = vmatpush1.bf16.msra.mxu0 %v4260
        %4326 = vmatprep.subr.bf16.mxu0 %v4263
        %4327 = vmatpush1.bf16.msra.mxu0 %v4262
        %4328 = vmatprep.subr.bf16.mxu0 %v4265
        %4329 = vmatpush1.bf16.msra.mxu0 %v4264
        %4330 = vmatprep.subr.bf16.mxu0 %v4267
        %4331 = vmatpush1.bf16.msra.mxu0 %v4266
        %4332 = vmatprep.subr.bf16.mxu0 %v4269
        %4333 = vmatpush1.bf16.msra.mxu0 %v4268
        %4334 = vmatprep.subr.bf16.mxu0 %v4271
        %4335 = vmatpush1.bf16.msra.mxu0 %v4270
        %4336 = vmatprep.subr.bf16.mxu0 %v4273
        %4337 = vmatpush1.bf16.msra.mxu0 %v4272
        %4338 = vmatprep.subr.bf16.mxu0 %v4275
        %4339 = vmatpush1.bf16.msra.mxu0 %v4274
        %4340 = vmatprep.subr.bf16.mxu0 %v4277
        %4341 = vmatpush1.bf16.msra.mxu0 %v4276
        %4342 = vmatprep.subr.bf16.mxu0 %v4279
        %4343 = vmatpush1.bf16.msra.mxu0 %v4278
        %4344 = vmatprep.mubr.bf16.mxu0 %v4045
        %4345 = vmatmul.mubr.bf16.gmra.mrb[0].mxu0 %v4044
        %v4346 = vpop.f32.mrb[0].mxu0
        %v4347 = vadd.f32 %v4145, %v4346
        %v4348 = vpop.f32.mrb[0].mxu0
        %v4349 = vadd.f32 %v4149, %v4348
        %v4350 = vpop.f32.mrb[0].mxu0
        %v4351 = vadd.f32 %v4145, %v4350
        %v4352 = vpop.f32.mrb[0].mxu0
        %v4353 = vadd.f32 %v4149, %v4352
        %4354 = vmatprep.mubr.bf16.mxu0 %v4047
        %4355 = vmatmul.mubr.bf16.gmra.mrb[0].mxu0 %v4046
        %v4356 = vpop.f32.mrb[0].mxu0
        %v4357 = vadd.f32 %v4145, %v4356
        %v4358 = vpop.f32.mrb[0].mxu0
        %v4359 = vadd.f32 %v4149, %v4358
        %v4360 = vpop.f32.mrb[0].mxu0
        %v4361 = vadd.f32 %v4145, %v4360
        %v4362 = vpop.f32.mrb[0].mxu0
        %v4363 = vadd.f32 %v4149, %v4362
        %4364 = vmatprep.mubr.bf16.mxu0 %v4049
        %4365 = vmatmul.mubr.bf16.gmra.mrb[0].mxu0 %v4048
        %v4366 = vpop.f32.mrb[0].mxu0
        %v4367 = vadd.f32 %v4145, %v4366
        %v4368 = vpop.f32.mrb[0].mxu0
        %v4369 = vadd.f32 %v4149, %v4368
        %v4370 = vpop.f32.mrb[0].mxu0
        %v4371 = vadd.f32 %v4145, %v4370
        %v4372 = vpop.f32.mrb[0].mxu0
        %v4373 = vadd.f32 %v4149, %v4372
        %4374 = vmatprep.mubr.bf16.mxu0 %v4051
        %4375 = vmatmul.mubr.bf16.gmra.mrb[0].mxu0 %v4050
        %v4376 = vpop.f32.mrb[0].mxu0
        %v4377 = vadd.f32 %v4145, %v4376
        %v4378 = vpop.f32.mrb[0].mxu0
        %v4379 = vadd.f32 %v4149, %v4378
        %v4380 = vpop.f32.mrb[0].mxu0
        %v4381 = vadd.f32 %v4145, %v4380
        %v4382 = vpop.f32.mrb[0].mxu0
        %v4383 = vadd.f32 %v4149, %v4382
        %4384 = vmatprep.mubr.bf16.mxu0 %v4053
        %4385 = vmatmul.mubr.bf16.gmra.mrb[0].mxu0 %v4052
        %v4386 = vpop.f32.mrb[0].mxu0
        %v4387 = vadd.f32 %v4145, %v4386
        %v4388 = vpop.f32.mrb[0].mxu0
        %v4389 = vadd.f32 %v4149, %v4388
        %v4390 = vpop.f32.mrb[0].mxu0
        %v4391 = vadd.f32 %v4145, %v4390
        %v4392 = vpop.f32.mrb[0].mxu0
        %v4393 = vadd.f32 %v4149, %v4392
        %4394 = vmatprep.mubr.bf16.mxu0 %v4055
        %4395 = vmatmul.mubr.bf16.gmra.mrb[0].mxu0 %v4054
        %v4396 = vpop.f32.mrb[0].mxu0
        %v4397 = vadd.f32 %v4145, %v4396
        %v4398 = vpop.f32.mrb[0].mxu0
        %v4399 = vadd.f32 %v4149, %v4398
        %v4400 = vpop.f32.mrb[0].mxu0
        %v4401 = vadd.f32 %v4145, %v4400
        %v4402 = vpop.f32.mrb[0].mxu0
        %v4403 = vadd.f32 %v4149, %v4402
        %4404 = vmatprep.mubr.bf16.mxu0 %v4057
        %4405 = vmatmul.mubr.bf16.gmra.mrb[0].mxu0 %v4056
        %v4406 = vpop.f32.mrb[0].mxu0
        %v4407 = vadd.f32 %v4145, %v4406
        %v4408 = vpop.f32.mrb[0].mxu0
        %v4409 = vadd.f32 %v4149, %v4408
        %v4410 = vpop.f32.mrb[0].mxu0
        %v4411 = vadd.f32 %v4145, %v4410
        %v4412 = vpop.f32.mrb[0].mxu0
        %v4413 = vadd.f32 %v4149, %v4412
        %4414 = vmatprep.mubr.bf16.mxu0 %v4059
        %4415 = vmatmul.mubr.bf16.gmra.mrb[0].mxu0 %v4058
        %v4416 = vpop.f32.mrb[0].mxu0
        %v4417 = vadd.f32 %v4145, %v4416
        %v4418 = vpop.f32.mrb[0].mxu0
        %v4419 = vadd.f32 %v4149, %v4418
        %v4420 = vpop.f32.mrb[0].mxu0
        %v4421 = vadd.f32 %v4145, %v4420
        %v4422 = vpop.f32.mrb[0].mxu0
        %v4423 = vadd.f32 %v4149, %v4422
        %4424 = vmatprep.mubr.bf16.mxu0 %v4061
        %4425 = vmatmul.mubr.bf16.gmra.mrb[0].mxu0 %v4060
        %v4426 = vpop.f32.mrb[0].mxu0
        %v4427 = vadd.f32 %v4145, %v4426
        %v4428 = vpop.f32.mrb[0].mxu0
        %v4429 = vadd.f32 %v4149, %v4428
        %v4430 = vpop.f32.mrb[0].mxu0
        %v4431 = vadd.f32 %v4145, %v4430
        %v4432 = vpop.f32.mrb[0].mxu0
        %v4433 = vadd.f32 %v4149, %v4432
        %4434 = vmatprep.mubr.bf16.mxu0 %v4063
        %4435 = vmatmul.mubr.bf16.gmra.mrb[0].mxu0 %v4062
        %v4436 = vpop.f32.mrb[0].mxu0
        %v4437 = vadd.f32 %v4145, %v4436
        %v4438 = vpop.f32.mrb[0].mxu0
        %v4439 = vadd.f32 %v4149, %v4438
        %v4440 = vpop.f32.mrb[0].mxu0
        %v4441 = vadd.f32 %v4145, %v4440
        %v4442 = vpop.f32.mrb[0].mxu0
        %v4443 = vadd.f32 %v4149, %v4442
        %4444 = vmatprep.mubr.bf16.mxu0 %v4065
        %4445 = vmatmul.mubr.bf16.gmra.mrb[0].mxu0 %v4064
        %v4446 = vpop.f32.mrb[0].mxu0
        %v4447 = vadd.f32 %v4145, %v4446
        %v4448 = vpop.f32.mrb[0].mxu0
        %v4449 = vadd.f32 %v4149, %v4448
        %v4450 = vpop.f32.mrb[0].mxu0
        %v4451 = vadd.f32 %v4145, %v4450
        %v4452 = vpop.f32.mrb[0].mxu0
        %v4453 = vadd.f32 %v4149, %v4452
        %4454 = vmatprep.mubr.bf16.mxu0 %v4067
        %4455 = vmatmul.mubr.bf16.gmra.mrb[0].mxu0 %v4066
        %v4456 = vpop.f32.mrb[0].mxu0
        %v4457 = vadd.f32 %v4145, %v4456
        %v4458 = vpop.f32.mrb[0].mxu0
        %v4459 = vadd.f32 %v4149, %v4458
        %v4460 = vpop.f32.mrb[0].mxu0
        %v4461 = vadd.f32 %v4145, %v4460
        %v4462 = vpop.f32.mrb[0].mxu0
        %v4463 = vadd.f32 %v4149, %v4462
        %4464 = vmatprep.mubr.bf16.mxu0 %v4069
        %4465 = vmatmul.mubr.bf16.gmra.mrb[0].mxu0 %v4068
        %v4466 = vpop.f32.mrb[0].mxu0
        %v4467 = vadd.f32 %v4145, %v4466
        %v4468 = vpop.f32.mrb[0].mxu0
        %v4469 = vadd.f32 %v4149, %v4468
        %v4470 = vpop.f32.mrb[0].mxu0
        %v4471 = vadd.f32 %v4145, %v4470
        %v4472 = vpop.f32.mrb[0].mxu0
        %v4473 = vadd.f32 %v4149, %v4472
        %4474 = vmatprep.mubr.bf16.mxu0 %v4071
        %4475 = vmatmul.mubr.bf16.gmra.mrb[0].mxu0 %v4070
        %v4476 = vpop.f32.mrb[0].mxu0
        %v4477 = vadd.f32 %v4145, %v4476
        %v4478 = vpop.f32.mrb[0].mxu0
        %v4479 = vadd.f32 %v4149, %v4478
        %v4480 = vpop.f32.mrb[0].mxu0
        %v4481 = vadd.f32 %v4145, %v4480
        %v4482 = vpop.f32.mrb[0].mxu0
        %v4483 = vadd.f32 %v4149, %v4482
        %4484 = vmatprep.mubr.bf16.mxu0 %v4073
        %4485 = vmatmul.mubr.bf16.gmra.mrb[0].mxu0 %v4072
        %v4486 = vpop.f32.mrb[0].mxu0
        %v4487 = vadd.f32 %v4145, %v4486
        %v4488 = vpop.f32.mrb[0].mxu0
        %v4489 = vadd.f32 %v4149, %v4488
        %v4490 = vpop.f32.mrb[0].mxu0
        %v4491 = vadd.f32 %v4145, %v4490
        %v4492 = vpop.f32.mrb[0].mxu0
        %v4493 = vadd.f32 %v4149, %v4492
        %4494 = vmatprep.mubr.bf16.mxu0 %v4075
        %4495 = vmatmul.mubr.bf16.gmra.mrb[0].mxu0 %v4074
        %v4496 = vpop.f32.mrb[0].mxu0
        %v4497 = vadd.f32 %v4145, %v4496
        %v4498 = vpop.f32.mrb[0].mxu0
        %v4499 = vadd.f32 %v4149, %v4498
        %v4500 = vpop.f32.mrb[0].mxu0
        %v4501 = vadd.f32 %v4145, %v4500
        %v4502 = vpop.f32.mrb[0].mxu0
        %v4503 = vadd.f32 %v4149, %v4502
        %4504 = vmatprep.mubr.bf16.mxu0 %v4077
        %4505 = vmatmul.mubr.bf16.gmra.mrb[0].mxu0 %v4076
        %v4506 = vpop.f32.mrb[0].mxu0
        %v4507 = vadd.f32 %v4145, %v4506
        %v4508 = vpop.f32.mrb[0].mxu0
        %v4509 = vadd.f32 %v4149, %v4508
        %v4510 = vpop.f32.mrb[0].mxu0
        %v4511 = vadd.f32 %v4145, %v4510
        %v4512 = vpop.f32.mrb[0].mxu0
        %v4513 = vadd.f32 %v4149, %v4512
        %4514 = vmatprep.mubr.bf16.mxu0 %v4079
        %4515 = vmatmul.mubr.bf16.gmra.mrb[0].mxu0 %v4078
        %v4516 = vpop.f32.mrb[0].mxu0
        %v4517 = vadd.f32 %v4145, %v4516
        %v4518 = vpop.f32.mrb[0].mxu0
        %v4519 = vadd.f32 %v4149, %v4518
        %v4520 = vpop.f32.mrb[0].mxu0
        %v4521 = vadd.f32 %v4145, %v4520
        %v4522 = vpop.f32.mrb[0].mxu0
        %v4523 = vadd.f32 %v4149, %v4522
        %4524 = vmatprep.mubr.bf16.mxu0 %v4081
        %4525 = vmatmul.mubr.bf16.gmra.mrb[0].mxu0 %v4080
        %v4526 = vpop.f32.mrb[0].mxu0
        %v4527 = vadd.f32 %v4145, %v4526
        %v4528 = vpop.f32.mrb[0].mxu0
        %v4529 = vadd.f32 %v4149, %v4528
        %v4530 = vpop.f32.mrb[0].mxu0
        %v4531 = vadd.f32 %v4145, %v4530
        %v4532 = vpop.f32.mrb[0].mxu0
        %v4533 = vadd.f32 %v4149, %v4532
        %4534 = vmatprep.mubr.bf16.mxu0 %v4083
        %4535 = vmatmul.mubr.bf16.gmra.mrb[0].mxu0 %v4082
        %v4536 = vpop.f32.mrb[0].mxu0
        %v4537 = vadd.f32 %v4145, %v4536
        %v4538 = vpop.f32.mrb[0].mxu0
        %v4539 = vadd.f32 %v4149, %v4538
        %v4540 = vpop.f32.mrb[0].mxu0
        %v4541 = vadd.f32 %v4145, %v4540
        %v4542 = vpop.f32.mrb[0].mxu0
        %v4543 = vadd.f32 %v4149, %v4542
        %4544 = vmatprep.mubr.bf16.mxu0 %v4085
        %4545 = vmatmul.mubr.bf16.gmra.mrb[0].mxu0 %v4084
        %v4546 = vpop.f32.mrb[0].mxu0
        %v4547 = vadd.f32 %v4145, %v4546
        %v4548 = vpop.f32.mrb[0].mxu0
        %v4549 = vadd.f32 %v4149, %v4548
        %v4550 = vpop.f32.mrb[0].mxu0
        %v4551 = vadd.f32 %v4145, %v4550
        %v4552 = vpop.f32.mrb[0].mxu0
        %v4553 = vadd.f32 %v4149, %v4552
        %4554 = vmatprep.mubr.bf16.mxu0 %v4087
        %4555 = vmatmul.mubr.bf16.gmra.mrb[0].mxu0 %v4086
        %v4556 = vpop.f32.mrb[0].mxu0
        %v4557 = vadd.f32 %v4145, %v4556
        %v4558 = vpop.f32.mrb[0].mxu0
        %v4559 = vadd.f32 %v4149, %v4558
        %v4560 = vpop.f32.mrb[0].mxu0
        %v4561 = vadd.f32 %v4145, %v4560
        %v4562 = vpop.f32.mrb[0].mxu0
        %v4563 = vadd.f32 %v4149, %v4562
        %4564 = vmatprep.mubr.bf16.mxu0 %v4089
        %4565 = vmatmul.mubr.bf16.gmra.mrb[0].mxu0 %v4088
        %v4566 = vpop.f32.mrb[0].mxu0
        %v4567 = vadd.f32 %v4145, %v4566
        %v4568 = vpop.f32.mrb[0].mxu0
        %v4569 = vadd.f32 %v4149, %v4568
        %v4570 = vpop.f32.mrb[0].mxu0
        %v4571 = vadd.f32 %v4145, %v4570
        %v4572 = vpop.f32.mrb[0].mxu0
        %v4573 = vadd.f32 %v4149, %v4572
        %4574 = vmatprep.mubr.bf16.mxu0 %v4091
        %4575 = vmatmul.mubr.bf16.gmra.mrb[0].mxu0 %v4090
        %v4576 = vpop.f32.mrb[0].mxu0
        %v4577 = vadd.f32 %v4145, %v4576
        %v4578 = vpop.f32.mrb[0].mxu0
        %v4579 = vadd.f32 %v4149, %v4578
        %v4580 = vpop.f32.mrb[0].mxu0
        %v4581 = vadd.f32 %v4145, %v4580
        %v4582 = vpop.f32.mrb[0].mxu0
        %v4583 = vadd.f32 %v4149, %v4582
        %4584 = vmatprep.mubr.bf16.mxu0 %v4093
        %4585 = vmatmul.mubr.bf16.gmra.mrb[0].mxu0 %v4092
        %v4586 = vpop.f32.mrb[0].mxu0
        %v4587 = vadd.f32 %v4145, %v4586
        %v4588 = vpop.f32.mrb[0].mxu0
        %v4589 = vadd.f32 %v4149, %v4588
        %v4590 = vpop.f32.mrb[0].mxu0
        %v4591 = vadd.f32 %v4145, %v4590
        %v4592 = vpop.f32.mrb[0].mxu0
        %v4593 = vadd.f32 %v4149, %v4592
        %4594 = vmatprep.mubr.bf16.mxu0 %v4095
        %4595 = vmatmul.mubr.bf16.gmra.mrb[0].mxu0 %v4094
        %v4596 = vpop.f32.mrb[0].mxu0
        %v4597 = vadd.f32 %v4145, %v4596
        %v4598 = vpop.f32.mrb[0].mxu0
        %v4599 = vadd.f32 %v4149, %v4598
        %v4600 = vpop.f32.mrb[0].mxu0
        %v4601 = vadd.f32 %v4145, %v4600
        %v4602 = vpop.f32.mrb[0].mxu0
        %v4603 = vadd.f32 %v4149, %v4602
        %4604 = vmatprep.mubr.bf16.mxu0 %v4097
        %4605 = vmatmul.mubr.bf16.gmra.mrb[0].mxu0 %v4096
        %v4606 = vpop.f32.mrb[0].mxu0
        %v4607 = vadd.f32 %v4145, %v4606
        %v4608 = vpop.f32.mrb[0].mxu0
        %v4609 = vadd.f32 %v4149, %v4608
        %v4610 = vpop.f32.mrb[0].mxu0
        %v4611 = vadd.f32 %v4145, %v4610
        %v4612 = vpop.f32.mrb[0].mxu0
        %v4613 = vadd.f32 %v4149, %v4612
        %4614 = vmatprep.mubr.bf16.mxu0 %v4099
        %4615 = vmatmul.mubr.bf16.gmra.mrb[0].mxu0 %v4098
        %v4616 = vpop.f32.mrb[0].mxu0
        %v4617 = vadd.f32 %v4145, %v4616
        %v4618 = vpop.f32.mrb[0].mxu0
        %v4619 = vadd.f32 %v4149, %v4618
        %v4620 = vpop.f32.mrb[0].mxu0
        %v4621 = vadd.f32 %v4145, %v4620
        %v4622 = vpop.f32.mrb[0].mxu0
        %v4623 = vadd.f32 %v4149, %v4622
        %4624 = vmatprep.mubr.bf16.mxu0 %v4101
        %4625 = vmatmul.mubr.bf16.gmra.mrb[0].mxu0 %v4100
        %v4626 = vpop.f32.mrb[0].mxu0
        %v4627 = vadd.f32 %v4145, %v4626
        %v4628 = vpop.f32.mrb[0].mxu0
        %v4629 = vadd.f32 %v4149, %v4628
        %v4630 = vpop.f32.mrb[0].mxu0
        %v4631 = vadd.f32 %v4145, %v4630
        %v4632 = vpop.f32.mrb[0].mxu0
        %v4633 = vadd.f32 %v4149, %v4632
        %4634 = vmatprep.mubr.bf16.mxu0 %v4103
        %4635 = vmatmul.mubr.bf16.gmra.mrb[0].mxu0 %v4102
        %v4636 = vpop.f32.mrb[0].mxu0
        %v4637 = vadd.f32 %v4145, %v4636
        %v4638 = vpop.f32.mrb[0].mxu0
        %v4639 = vadd.f32 %v4149, %v4638
        %v4640 = vpop.f32.mrb[0].mxu0
        %v4641 = vadd.f32 %v4145, %v4640
        %v4642 = vpop.f32.mrb[0].mxu0
        %v4643 = vadd.f32 %v4149, %v4642
        %4644 = vmatprep.mubr.bf16.mxu0 %v4105
        %4645 = vmatmul.mubr.bf16.gmra.mrb[0].mxu0 %v4104
        %v4646 = vpop.f32.mrb[0].mxu0
        %v4647 = vadd.f32 %v4145, %v4646
        %v4648 = vpop.f32.mrb[0].mxu0
        %v4649 = vadd.f32 %v4149, %v4648
        %v4650 = vpop.f32.mrb[0].mxu0
        %v4651 = vadd.f32 %v4145, %v4650
        %v4652 = vpop.f32.mrb[0].mxu0
        %v4653 = vadd.f32 %v4149, %v4652
        %4654 = vmatprep.mubr.bf16.mxu0 %v4107
        %4655 = vmatmul.mubr.bf16.gmra.mrb[0].mxu0 %v4106
        %v4656 = vpop.f32.mrb[0].mxu0
        %v4657 = vadd.f32 %v4145, %v4656
        %v4658 = vpop.f32.mrb[0].mxu0
        %v4659 = vadd.f32 %v4149, %v4658
        %v4660 = vpop.f32.mrb[0].mxu0
        %v4661 = vadd.f32 %v4145, %v4660
        %v4662 = vpop.f32.mrb[0].mxu0
        %v4663 = vadd.f32 %v4149, %v4662
        %4664 = vdwg.mxu0
        %v4665 = vmax.f32 %v4347, 0.0
        %v4666 = vmax.f32 %v4349, 0.0
        %v4667 = vmax.f32 %v4351, 0.0
        %v4668 = vmax.f32 %v4353, 0.0
        %v4669 = vmax.f32 %v4357, 0.0
        %v4670 = vmax.f32 %v4359, 0.0
        %v4671 = vmax.f32 %v4361, 0.0
        %v4672 = vmax.f32 %v4363, 0.0
        %v4673 = vmax.f32 %v4367, 0.0
        %v4674 = vmax.f32 %v4369, 0.0
        %v4675 = vmax.f32 %v4371, 0.0
        %v4676 = vmax.f32 %v4373, 0.0
        %v4677 = vmax.f32 %v4377, 0.0
        %v4678 = vmax.f32 %v4379, 0.0
        %v4679 = vmax.f32 %v4381, 0.0
        %v4680 = vmax.f32 %v4383, 0.0
        %v4681 = vmax.f32 %v4387, 0.0
        %v4682 = vmax.f32 %v4389, 0.0
        %v4683 = vmax.f32 %v4391, 0.0
        %v4684 = vmax.f32 %v4393, 0.0
        %v4685 = vmax.f32 %v4397, 0.0
        %v4686 = vmax.f32 %v4399, 0.0
        %v4687 = vmax.f32 %v4401, 0.0
        %v4688 = vmax.f32 %v4403, 0.0
        %v4689 = vmax.f32 %v4407, 0.0
        %v4690 = vmax.f32 %v4409, 0.0
        %v4691 = vmax.f32 %v4411, 0.0
        %v4692 = vmax.f32 %v4413, 0.0
        %v4693 = vmax.f32 %v4417, 0.0
        %v4694 = vmax.f32 %v4419, 0.0
        %v4695 = vmax.f32 %v4421, 0.0
        %v4696 = vmax.f32 %v4423, 0.0
        %v4697 = vmax.f32 %v4427, 0.0
        %v4698 = vmax.f32 %v4429, 0.0
        %v4699 = vmax.f32 %v4431, 0.0
        %v4700 = vmax.f32 %v4433, 0.0
        %v4701 = vmax.f32 %v4437, 0.0
        %v4702 = vmax.f32 %v4439, 0.0
        %v4703 = vmax.f32 %v4441, 0.0
        %v4704 = vmax.f32 %v4443, 0.0
        %v4705 = vmax.f32 %v4447, 0.0
        %v4706 = vmax.f32 %v4449, 0.0
        %v4707 = vmax.f32 %v4451, 0.0
        %v4708 = vmax.f32 %v4453, 0.0
        %v4709 = vmax.f32 %v4457, 0.0
        %v4710 = vmax.f32 %v4459, 0.0
        %v4711 = vmax.f32 %v4461, 0.0
        %v4712 = vmax.f32 %v4463, 0.0
        %v4713 = vmax.f32 %v4467, 0.0
        %v4714 = vmax.f32 %v4469, 0.0
        %v4715 = vmax.f32 %v4471, 0.0
        %v4716 = vmax.f32 %v4473, 0.0
        %v4717 = vmax.f32 %v4477, 0.0
        %v4718 = vmax.f32 %v4479, 0.0
        %v4719 = vmax.f32 %v4481, 0.0
        %v4720 = vmax.f32 %v4483, 0.0
        %v4721 = vmax.f32 %v4487, 0.0
        %v4722 = vmax.f32 %v4489, 0.0
        %v4723 = vmax.f32 %v4491, 0.0
        %v4724 = vmax.f32 %v4493, 0.0
        %v4725 = vmax.f32 %v4497, 0.0
        %v4726 = vmax.f32 %v4499, 0.0
        %v4727 = vmax.f32 %v4501, 0.0
        %v4728 = vmax.f32 %v4503, 0.0
        %v4729 = vmax.f32 %v4507, 0.0
        %v4730 = vmax.f32 %v4509, 0.0
        %v4731 = vmax.f32 %v4511, 0.0
        %v4732 = vmax.f32 %v4513, 0.0
        %v4733 = vmax.f32 %v4517, 0.0
        %v4734 = vmax.f32 %v4519, 0.0
        %v4735 = vmax.f32 %v4521, 0.0
        %v4736 = vmax.f32 %v4523, 0.0
        %v4737 = vmax.f32 %v4527, 0.0
        %v4738 = vmax.f32 %v4529, 0.0
        %v4739 = vmax.f32 %v4531, 0.0
        %v4740 = vmax.f32 %v4533, 0.0
        %v4741 = vmax.f32 %v4537, 0.0
        %v4742 = vmax.f32 %v4539, 0.0
        %v4743 = vmax.f32 %v4541, 0.0
        %v4744 = vmax.f32 %v4543, 0.0
        %v4745 = vmax.f32 %v4547, 0.0
        %v4746 = vmax.f32 %v4549, 0.0
        %v4747 = vmax.f32 %v4551, 0.0
        %v4748 = vmax.f32 %v4553, 0.0
        %v4749 = vmax.f32 %v4557, 0.0
        %v4750 = vmax.f32 %v4559, 0.0
        %v4751 = vmax.f32 %v4561, 0.0
        %v4752 = vmax.f32 %v4563, 0.0
        %v4753 = vmax.f32 %v4567, 0.0
        %v4754 = vmax.f32 %v4569, 0.0
        %v4755 = vmax.f32 %v4571, 0.0
        %v4756 = vmax.f32 %v4573, 0.0
        %v4757 = vmax.f32 %v4577, 0.0
        %v4758 = vmax.f32 %v4579, 0.0
        %v4759 = vmax.f32 %v4581, 0.0
        %v4760 = vmax.f32 %v4583, 0.0
        %v4761 = vmax.f32 %v4587, 0.0
        %v4762 = vmax.f32 %v4589, 0.0
        %v4763 = vmax.f32 %v4591, 0.0
        %v4764 = vmax.f32 %v4593, 0.0
        %v4765 = vmax.f32 %v4597, 0.0
        %v4766 = vmax.f32 %v4599, 0.0
        %v4767 = vmax.f32 %v4601, 0.0
        %v4768 = vmax.f32 %v4603, 0.0
        %v4769 = vmax.f32 %v4607, 0.0
        %v4770 = vmax.f32 %v4609, 0.0
        %v4771 = vmax.f32 %v4611, 0.0
        %v4772 = vmax.f32 %v4613, 0.0
        %v4773 = vmax.f32 %v4617, 0.0
        %v4774 = vmax.f32 %v4619, 0.0
        %v4775 = vmax.f32 %v4621, 0.0
        %v4776 = vmax.f32 %v4623, 0.0
        %v4777 = vmax.f32 %v4627, 0.0
        %v4778 = vmax.f32 %v4629, 0.0
        %v4779 = vmax.f32 %v4631, 0.0
        %v4780 = vmax.f32 %v4633, 0.0
        %v4781 = vmax.f32 %v4637, 0.0
        %v4782 = vmax.f32 %v4639, 0.0
        %v4783 = vmax.f32 %v4641, 0.0
        %v4784 = vmax.f32 %v4643, 0.0
        %v4785 = vmax.f32 %v4647, 0.0
        %v4786 = vmax.f32 %v4649, 0.0
        %v4787 = vmax.f32 %v4651, 0.0
        %v4788 = vmax.f32 %v4653, 0.0
        %v4789 = vmax.f32 %v4657, 0.0
        %v4790 = vmax.f32 %v4659, 0.0
        %v4791 = vmax.f32 %v4661, 0.0
        %v4792 = vmax.f32 %v4663, 0.0
        %v4793 = vpack.c.bf16 %v4667, %v4665
        %v4794 = vpack.c.bf16 %v4668, %v4666
        %v4795 = vpack.c.bf16 %v4671, %v4669
        %v4796 = vpack.c.bf16 %v4672, %v4670
        %v4797 = vpack.c.bf16 %v4675, %v4673
        %v4798 = vpack.c.bf16 %v4676, %v4674
        %v4799 = vpack.c.bf16 %v4679, %v4677
        %v4800 = vpack.c.bf16 %v4680, %v4678
        %v4801 = vpack.c.bf16 %v4683, %v4681
        %v4802 = vpack.c.bf16 %v4684, %v4682
        %v4803 = vpack.c.bf16 %v4687, %v4685
        %v4804 = vpack.c.bf16 %v4688, %v4686
        %v4805 = vpack.c.bf16 %v4691, %v4689
        %v4806 = vpack.c.bf16 %v4692, %v4690
        %v4807 = vpack.c.bf16 %v4695, %v4693
        %v4808 = vpack.c.bf16 %v4696, %v4694
        %v4809 = vpack.c.bf16 %v4699, %v4697
        %v4810 = vpack.c.bf16 %v4700, %v4698
        %v4811 = vpack.c.bf16 %v4703, %v4701
        %v4812 = vpack.c.bf16 %v4704, %v4702
        %v4813 = vpack.c.bf16 %v4707, %v4705
        %v4814 = vpack.c.bf16 %v4708, %v4706
        %v4815 = vpack.c.bf16 %v4711, %v4709
        %v4816 = vpack.c.bf16 %v4712, %v4710
        %v4817 = vpack.c.bf16 %v4715, %v4713
        %v4818 = vpack.c.bf16 %v4716, %v4714
        %v4819 = vpack.c.bf16 %v4719, %v4717
        %v4820 = vpack.c.bf16 %v4720, %v4718
        %v4821 = vpack.c.bf16 %v4723, %v4721
        %v4822 = vpack.c.bf16 %v4724, %v4722
        %v4823 = vpack.c.bf16 %v4727, %v4725
        %v4824 = vpack.c.bf16 %v4728, %v4726
        %v4825 = vpack.c.bf16 %v4731, %v4729
        %v4826 = vpack.c.bf16 %v4732, %v4730
        %v4827 = vpack.c.bf16 %v4735, %v4733
        %v4828 = vpack.c.bf16 %v4736, %v4734
        %v4829 = vpack.c.bf16 %v4739, %v4737
        %v4830 = vpack.c.bf16 %v4740, %v4738
        %v4831 = vpack.c.bf16 %v4743, %v4741
        %v4832 = vpack.c.bf16 %v4744, %v4742
        %v4833 = vpack.c.bf16 %v4747, %v4745
        %v4834 = vpack.c.bf16 %v4748, %v4746
        %v4835 = vpack.c.bf16 %v4751, %v4749
        %v4836 = vpack.c.bf16 %v4752, %v4750
        %v4837 = vpack.c.bf16 %v4755, %v4753
        %v4838 = vpack.c.bf16 %v4756, %v4754
        %v4839 = vpack.c.bf16 %v4759, %v4757
        %v4840 = vpack.c.bf16 %v4760, %v4758
        %v4841 = vpack.c.bf16 %v4763, %v4761
        %v4842 = vpack.c.bf16 %v4764, %v4762
        %v4843 = vpack.c.bf16 %v4767, %v4765
        %v4844 = vpack.c.bf16 %v4768, %v4766
        %v4845 = vpack.c.bf16 %v4771, %v4769
        %v4846 = vpack.c.bf16 %v4772, %v4770
        %v4847 = vpack.c.bf16 %v4775, %v4773
        %v4848 = vpack.c.bf16 %v4776, %v4774
        %v4849 = vpack.c.bf16 %v4779, %v4777
        %v4850 = vpack.c.bf16 %v4780, %v4778
        %v4851 = vpack.c.bf16 %v4783, %v4781
        %v4852 = vpack.c.bf16 %v4784, %v4782
        %v4853 = vpack.c.bf16 %v4787, %v4785
        %v4854 = vpack.c.bf16 %v4788, %v4786
        %v4855 = vpack.c.bf16 %v4791, %v4789
        %v4856 = vpack.c.bf16 %v4792, %v4790
        %v4857 = vld [vmem:[#allocation20] sm:$0xff]
        %v4858 = vld [vmem:[#allocation20 + $0x8] sm:$0xff]
        %v4859 = vld [vmem:[#allocation20 + $0x10] sm:$0xff]
        %v4860 = vld [vmem:[#allocation20 + $0x18] sm:$0xff]
        %v4861 = vld [vmem:[#allocation20 + $0x20] sm:$0xff]
        %v4862 = vld [vmem:[#allocation20 + $0x28] sm:$0xff]
        %v4863 = vld [vmem:[#allocation20 + $0x30] sm:$0xff]
        %v4864 = vld [vmem:[#allocation20 + $0x38] sm:$0xff]
        %v4865 = vld [vmem:[#allocation20 + $0x40] sm:$0xff]
        %v4866 = vld [vmem:[#allocation20 + $0x48] sm:$0xff]
        %v4867 = vld [vmem:[#allocation20 + $0x50] sm:$0xff]
        %v4868 = vld [vmem:[#allocation20 + $0x58] sm:$0xff]
        %v4869 = vld [vmem:[#allocation20 + $0x60] sm:$0xff]
        %v4870 = vld [vmem:[#allocation20 + $0x68] sm:$0xff]
        %v4871 = vld [vmem:[#allocation20 + $0x70] sm:$0xff]
        %v4872 = vld [vmem:[#allocation20 + $0x78] sm:$0xff]
        %v4873 = vld [vmem:[#allocation20 + $0x80] sm:$0xff]
        %v4874 = vld [vmem:[#allocation20 + $0x88] sm:$0xff]
        %v4875 = vld [vmem:[#allocation20 + $0x90] sm:$0xff]
        %v4876 = vld [vmem:[#allocation20 + $0x98] sm:$0xff]
        %v4877 = vld [vmem:[#allocation20 + $0xa0] sm:$0xff]
        %v4878 = vld [vmem:[#allocation20 + $0xa8] sm:$0xff]
        %v4879 = vld [vmem:[#allocation20 + $0xb0] sm:$0xff]
        %v4880 = vld [vmem:[#allocation20 + $0xb8] sm:$0xff]
        %v4881 = vld [vmem:[#allocation20 + $0xc0] sm:$0xff]
        %v4882 = vld [vmem:[#allocation20 + $0xc8] sm:$0xff]
        %v4883 = vld [vmem:[#allocation20 + $0xd0] sm:$0xff]
        %v4884 = vld [vmem:[#allocation20 + $0xd8] sm:$0xff]
        %v4885 = vld [vmem:[#allocation20 + $0xe0] sm:$0xff]
        %v4886 = vld [vmem:[#allocation20 + $0xe8] sm:$0xff]
        %v4887 = vld [vmem:[#allocation20 + $0xf0] sm:$0xff]
        %v4888 = vld [vmem:[#allocation20 + $0xf8] sm:$0xff]
        %v4889 = vld [vmem:[#allocation23] sm:$0x3]
        %v4891 = vlaneseq
        %v4892 = vshrl.u32 %v4891, 7
        %v4893 = vsub.s32 0, %v4892
        %v4894 = vrot.slane %v4889, %v4893
        %v4895 = vlaneseq
        %v4896 = vshrl.u32 %v4895, 7
        %v4897 = vsub.s32 1, %v4896
        %v4898 = vrot.slane %v4889, %v4897
        %v4933 = vunpack.c.l.b16 %v4857
        %v4934 = vunpack.c.h.b16 %v4857
        %v4935 = vunpack.c.l.b16 %v4858
        %v4936 = vunpack.c.h.b16 %v4858
        %v4937 = vunpack.c.l.b16 %v4859
        %v4938 = vunpack.c.h.b16 %v4859
        %v4939 = vunpack.c.l.b16 %v4860
        %v4940 = vunpack.c.h.b16 %v4860
        %v4941 = vunpack.c.l.b16 %v4861
        %v4942 = vunpack.c.h.b16 %v4861
        %v4943 = vunpack.c.l.b16 %v4862
        %v4944 = vunpack.c.h.b16 %v4862
        %v4945 = vunpack.c.l.b16 %v4863
        %v4946 = vunpack.c.h.b16 %v4863
        %v4947 = vunpack.c.l.b16 %v4864
        %v4948 = vunpack.c.h.b16 %v4864
        %v4949 = vunpack.c.l.b16 %v4865
        %v4950 = vunpack.c.h.b16 %v4865
        %v4951 = vunpack.c.l.b16 %v4866
        %v4952 = vunpack.c.h.b16 %v4866
        %v4953 = vunpack.c.l.b16 %v4867
        %v4954 = vunpack.c.h.b16 %v4867
        %v4955 = vunpack.c.l.b16 %v4868
        %v4956 = vunpack.c.h.b16 %v4868
        %v4957 = vunpack.c.l.b16 %v4869
        %v4958 = vunpack.c.h.b16 %v4869
        %v4959 = vunpack.c.l.b16 %v4870
        %v4960 = vunpack.c.h.b16 %v4870
        %v4961 = vunpack.c.l.b16 %v4871
        %v4962 = vunpack.c.h.b16 %v4871
        %v4963 = vunpack.c.l.b16 %v4872
        %v4964 = vunpack.c.h.b16 %v4872
        %v4965 = vunpack.c.l.b16 %v4873
        %v4966 = vunpack.c.h.b16 %v4873
        %v4967 = vunpack.c.l.b16 %v4874
        %v4968 = vunpack.c.h.b16 %v4874
        %v4969 = vunpack.c.l.b16 %v4875
        %v4970 = vunpack.c.h.b16 %v4875
        %v4971 = vunpack.c.l.b16 %v4876
        %v4972 = vunpack.c.h.b16 %v4876
        %v4973 = vunpack.c.l.b16 %v4877
        %v4974 = vunpack.c.h.b16 %v4877
        %v4975 = vunpack.c.l.b16 %v4878
        %v4976 = vunpack.c.h.b16 %v4878
        %v4977 = vunpack.c.l.b16 %v4879
        %v4978 = vunpack.c.h.b16 %v4879
        %v4979 = vunpack.c.l.b16 %v4880
        %v4980 = vunpack.c.h.b16 %v4880
        %v4981 = vunpack.c.l.b16 %v4881
        %v4982 = vunpack.c.h.b16 %v4881
        %v4983 = vunpack.c.l.b16 %v4882
        %v4984 = vunpack.c.h.b16 %v4882
        %v4985 = vunpack.c.l.b16 %v4883
        %v4986 = vunpack.c.h.b16 %v4883
        %v4987 = vunpack.c.l.b16 %v4884
        %v4988 = vunpack.c.h.b16 %v4884
        %v4989 = vunpack.c.l.b16 %v4885
        %v4990 = vunpack.c.h.b16 %v4885
        %v4991 = vunpack.c.l.b16 %v4886
        %v4992 = vunpack.c.h.b16 %v4886
        %v4993 = vunpack.c.l.b16 %v4887
        %v4994 = vunpack.c.h.b16 %v4887
        %v4995 = vunpack.c.l.b16 %v4888
        %v4996 = vunpack.c.h.b16 %v4888
        %v4997 = vpack.c.b16 %v4935, %v4933
        %v4998 = vpack.c.b16 %v4936, %v4934
        %v4999 = vpack.c.b16 %v4939, %v4937
        %v5000 = vpack.c.b16 %v4940, %v4938
        %v5001 = vpack.c.b16 %v4943, %v4941
        %v5002 = vpack.c.b16 %v4944, %v4942
        %v5003 = vpack.c.b16 %v4947, %v4945
        %v5004 = vpack.c.b16 %v4948, %v4946
        %v5005 = vpack.c.b16 %v4951, %v4949
        %v5006 = vpack.c.b16 %v4952, %v4950
        %v5007 = vpack.c.b16 %v4955, %v4953
        %v5008 = vpack.c.b16 %v4956, %v4954
        %v5009 = vpack.c.b16 %v4959, %v4957
        %v5010 = vpack.c.b16 %v4960, %v4958
        %v5011 = vpack.c.b16 %v4963, %v4961
        %v5012 = vpack.c.b16 %v4964, %v4962
        %v5013 = vpack.c.b16 %v4967, %v4965
        %v5014 = vpack.c.b16 %v4968, %v4966
        %v5015 = vpack.c.b16 %v4971, %v4969
        %v5016 = vpack.c.b16 %v4972, %v4970
        %v5017 = vpack.c.b16 %v4975, %v4973
        %v5018 = vpack.c.b16 %v4976, %v4974
        %v5019 = vpack.c.b16 %v4979, %v4977
        %v5020 = vpack.c.b16 %v4980, %v4978
        %v5021 = vpack.c.b16 %v4983, %v4981
        %v5022 = vpack.c.b16 %v4984, %v4982
        %v5023 = vpack.c.b16 %v4987, %v4985
        %v5024 = vpack.c.b16 %v4988, %v4986
        %v5025 = vpack.c.b16 %v4991, %v4989
        %v5026 = vpack.c.b16 %v4992, %v4990
        %v5027 = vpack.c.b16 %v4995, %v4993
        %v5028 = vpack.c.b16 %v4996, %v4994
        %5061 = vmatprep.subr.bf16.mxu0 %v4998
        %5062 = vmatpush1.bf16.msra.mxu0 %v4997
        %5063 = vmatprep.subr.bf16.mxu0 %v5000
        %5064 = vmatpush1.bf16.msra.mxu0 %v4999
        %5065 = vmatprep.subr.bf16.mxu0 %v5002
        %5066 = vmatpush1.bf16.msra.mxu0 %v5001
        %5067 = vmatprep.subr.bf16.mxu0 %v5004
        %5068 = vmatpush1.bf16.msra.mxu0 %v5003
        %5069 = vmatprep.subr.bf16.mxu0 %v5006
        %5070 = vmatpush1.bf16.msra.mxu0 %v5005
        %5071 = vmatprep.subr.bf16.mxu0 %v5008
        %5072 = vmatpush1.bf16.msra.mxu0 %v5007
        %5073 = vmatprep.subr.bf16.mxu0 %v5010
        %5074 = vmatpush1.bf16.msra.mxu0 %v5009
        %5075 = vmatprep.subr.bf16.mxu0 %v5012
        %5076 = vmatpush1.bf16.msra.mxu0 %v5011
        %5077 = vmatprep.subr.bf16.mxu0 %v5014
        %5078 = vmatpush1.bf16.msra.mxu0 %v5013
        %5079 = vmatprep.subr.bf16.mxu0 %v5016
        %5080 = vmatpush1.bf16.msra.mxu0 %v5015
        %5081 = vmatprep.subr.bf16.mxu0 %v5018
        %5082 = vmatpush1.bf16.msra.mxu0 %v5017
        %5083 = vmatprep.subr.bf16.mxu0 %v5020
        %5084 = vmatpush1.bf16.msra.mxu0 %v5019
        %5085 = vmatprep.subr.bf16.mxu0 %v5022
        %5086 = vmatpush1.bf16.msra.mxu0 %v5021
        %5087 = vmatprep.subr.bf16.mxu0 %v5024
        %5088 = vmatpush1.bf16.msra.mxu0 %v5023
        %5089 = vmatprep.subr.bf16.mxu0 %v5026
        %5090 = vmatpush1.bf16.msra.mxu0 %v5025
        %5091 = vmatprep.subr.bf16.mxu0 %v5028
        %5092 = vmatpush1.bf16.msra.mxu0 %v5027
        %5093 = vmatprep.mubr.bf16.mxu0 %v4794
        %5094 = vmatmul.mubr.bf16.gmra.mrb[0].mxu0 %v4793
        %v5095 = vpop.f32.mrb[0].mxu0
        %v5096 = vadd.f32 %v4894, %v5095
        %v5097 = vpop.f32.mrb[0].mxu0
        %v5098 = vadd.f32 %v4898, %v5097
        %v5099 = vpop.f32.mrb[0].mxu0
        %v5100 = vadd.f32 %v4894, %v5099
        %v5101 = vpop.f32.mrb[0].mxu0
        %v5102 = vadd.f32 %v4898, %v5101
        %5103 = vmatprep.mubr.bf16.mxu0 %v4796
        %5104 = vmatmul.mubr.bf16.gmra.mrb[0].mxu0 %v4795
        %v5105 = vpop.f32.mrb[0].mxu0
        %v5106 = vadd.f32 %v4894, %v5105
        %v5107 = vpop.f32.mrb[0].mxu0
        %v5108 = vadd.f32 %v4898, %v5107
        %v5109 = vpop.f32.mrb[0].mxu0
        %v5110 = vadd.f32 %v4894, %v5109
        %v5111 = vpop.f32.mrb[0].mxu0
        %v5112 = vadd.f32 %v4898, %v5111
        %5113 = vmatprep.mubr.bf16.mxu0 %v4798
        %5114 = vmatmul.mubr.bf16.gmra.mrb[0].mxu0 %v4797
        %v5115 = vpop.f32.mrb[0].mxu0
        %v5116 = vadd.f32 %v4894, %v5115
        %v5117 = vpop.f32.mrb[0].mxu0
        %v5118 = vadd.f32 %v4898, %v5117
        %v5119 = vpop.f32.mrb[0].mxu0
        %v5120 = vadd.f32 %v4894, %v5119
        %v5121 = vpop.f32.mrb[0].mxu0
        %v5122 = vadd.f32 %v4898, %v5121
        %5123 = vmatprep.mubr.bf16.mxu0 %v4800
        %5124 = vmatmul.mubr.bf16.gmra.mrb[0].mxu0 %v4799
        %v5125 = vpop.f32.mrb[0].mxu0
        %v5126 = vadd.f32 %v4894, %v5125
        %v5127 = vpop.f32.mrb[0].mxu0
        %v5128 = vadd.f32 %v4898, %v5127
        %v5129 = vpop.f32.mrb[0].mxu0
        %v5130 = vadd.f32 %v4894, %v5129
        %v5131 = vpop.f32.mrb[0].mxu0
        %v5132 = vadd.f32 %v4898, %v5131
        %5133 = vmatprep.mubr.bf16.mxu0 %v4802
        %5134 = vmatmul.mubr.bf16.gmra.mrb[0].mxu0 %v4801
        %v5135 = vpop.f32.mrb[0].mxu0
        %v5136 = vadd.f32 %v4894, %v5135
        %v5137 = vpop.f32.mrb[0].mxu0
        %v5138 = vadd.f32 %v4898, %v5137
        %v5139 = vpop.f32.mrb[0].mxu0
        %v5140 = vadd.f32 %v4894, %v5139
        %v5141 = vpop.f32.mrb[0].mxu0
        %v5142 = vadd.f32 %v4898, %v5141
        %5143 = vmatprep.mubr.bf16.mxu0 %v4804
        %5144 = vmatmul.mubr.bf16.gmra.mrb[0].mxu0 %v4803
        %v5145 = vpop.f32.mrb[0].mxu0
        %v5146 = vadd.f32 %v4894, %v5145
        %v5147 = vpop.f32.mrb[0].mxu0
        %v5148 = vadd.f32 %v4898, %v5147
        %v5149 = vpop.f32.mrb[0].mxu0
        %v5150 = vadd.f32 %v4894, %v5149
        %v5151 = vpop.f32.mrb[0].mxu0
        %v5152 = vadd.f32 %v4898, %v5151
        %5153 = vmatprep.mubr.bf16.mxu0 %v4806
        %5154 = vmatmul.mubr.bf16.gmra.mrb[0].mxu0 %v4805
        %v5155 = vpop.f32.mrb[0].mxu0
        %v5156 = vadd.f32 %v4894, %v5155
        %v5157 = vpop.f32.mrb[0].mxu0
        %v5158 = vadd.f32 %v4898, %v5157
        %v5159 = vpop.f32.mrb[0].mxu0
        %v5160 = vadd.f32 %v4894, %v5159
        %v5161 = vpop.f32.mrb[0].mxu0
        %v5162 = vadd.f32 %v4898, %v5161
        %5163 = vmatprep.mubr.bf16.mxu0 %v4808
        %5164 = vmatmul.mubr.bf16.gmra.mrb[0].mxu0 %v4807
        %v5165 = vpop.f32.mrb[0].mxu0
        %v5166 = vadd.f32 %v4894, %v5165
        %v5167 = vpop.f32.mrb[0].mxu0
        %v5168 = vadd.f32 %v4898, %v5167
        %v5169 = vpop.f32.mrb[0].mxu0
        %v5170 = vadd.f32 %v4894, %v5169
        %v5171 = vpop.f32.mrb[0].mxu0
        %v5172 = vadd.f32 %v4898, %v5171
        %5173 = vmatprep.mubr.bf16.mxu0 %v4810
        %5174 = vmatmul.mubr.bf16.gmra.mrb[0].mxu0 %v4809
        %v5175 = vpop.f32.mrb[0].mxu0
        %v5176 = vadd.f32 %v4894, %v5175
        %v5177 = vpop.f32.mrb[0].mxu0
        %v5178 = vadd.f32 %v4898, %v5177
        %v5179 = vpop.f32.mrb[0].mxu0
        %v5180 = vadd.f32 %v4894, %v5179
        %v5181 = vpop.f32.mrb[0].mxu0
        %v5182 = vadd.f32 %v4898, %v5181
        %5183 = vmatprep.mubr.bf16.mxu0 %v4812
        %5184 = vmatmul.mubr.bf16.gmra.mrb[0].mxu0 %v4811
        %v5185 = vpop.f32.mrb[0].mxu0
        %v5186 = vadd.f32 %v4894, %v5185
        %v5187 = vpop.f32.mrb[0].mxu0
        %v5188 = vadd.f32 %v4898, %v5187
        %v5189 = vpop.f32.mrb[0].mxu0
        %v5190 = vadd.f32 %v4894, %v5189
        %v5191 = vpop.f32.mrb[0].mxu0
        %v5192 = vadd.f32 %v4898, %v5191
        %5193 = vmatprep.mubr.bf16.mxu0 %v4814
        %5194 = vmatmul.mubr.bf16.gmra.mrb[0].mxu0 %v4813
        %v5195 = vpop.f32.mrb[0].mxu0
        %v5196 = vadd.f32 %v4894, %v5195
        %v5197 = vpop.f32.mrb[0].mxu0
        %v5198 = vadd.f32 %v4898, %v5197
        %v5199 = vpop.f32.mrb[0].mxu0
        %v5200 = vadd.f32 %v4894, %v5199
        %v5201 = vpop.f32.mrb[0].mxu0
        %v5202 = vadd.f32 %v4898, %v5201
        %5203 = vmatprep.mubr.bf16.mxu0 %v4816
        %5204 = vmatmul.mubr.bf16.gmra.mrb[0].mxu0 %v4815
        %v5205 = vpop.f32.mrb[0].mxu0
        %v5206 = vadd.f32 %v4894, %v5205
        %v5207 = vpop.f32.mrb[0].mxu0
        %v5208 = vadd.f32 %v4898, %v5207
        %v5209 = vpop.f32.mrb[0].mxu0
        %v5210 = vadd.f32 %v4894, %v5209
        %v5211 = vpop.f32.mrb[0].mxu0
        %v5212 = vadd.f32 %v4898, %v5211
        %5213 = vmatprep.mubr.bf16.mxu0 %v4818
        %5214 = vmatmul.mubr.bf16.gmra.mrb[0].mxu0 %v4817
        %v5215 = vpop.f32.mrb[0].mxu0
        %v5216 = vadd.f32 %v4894, %v5215
        %v5217 = vpop.f32.mrb[0].mxu0
        %v5218 = vadd.f32 %v4898, %v5217
        %v5219 = vpop.f32.mrb[0].mxu0
        %v5220 = vadd.f32 %v4894, %v5219
        %v5221 = vpop.f32.mrb[0].mxu0
        %v5222 = vadd.f32 %v4898, %v5221
        %5223 = vmatprep.mubr.bf16.mxu0 %v4820
        %5224 = vmatmul.mubr.bf16.gmra.mrb[0].mxu0 %v4819
        %v5225 = vpop.f32.mrb[0].mxu0
        %v5226 = vadd.f32 %v4894, %v5225
        %v5227 = vpop.f32.mrb[0].mxu0
        %v5228 = vadd.f32 %v4898, %v5227
        %v5229 = vpop.f32.mrb[0].mxu0
        %v5230 = vadd.f32 %v4894, %v5229
        %v5231 = vpop.f32.mrb[0].mxu0
        %v5232 = vadd.f32 %v4898, %v5231
        %5233 = vmatprep.mubr.bf16.mxu0 %v4822
        %5234 = vmatmul.mubr.bf16.gmra.mrb[0].mxu0 %v4821
        %v5235 = vpop.f32.mrb[0].mxu0
        %v5236 = vadd.f32 %v4894, %v5235
        %v5237 = vpop.f32.mrb[0].mxu0
        %v5238 = vadd.f32 %v4898, %v5237
        %v5239 = vpop.f32.mrb[0].mxu0
        %v5240 = vadd.f32 %v4894, %v5239
        %v5241 = vpop.f32.mrb[0].mxu0
        %v5242 = vadd.f32 %v4898, %v5241
        %5243 = vmatprep.mubr.bf16.mxu0 %v4824
        %5244 = vmatmul.mubr.bf16.gmra.mrb[0].mxu0 %v4823
        %v5245 = vpop.f32.mrb[0].mxu0
        %v5246 = vadd.f32 %v4894, %v5245
        %v5247 = vpop.f32.mrb[0].mxu0
        %v5248 = vadd.f32 %v4898, %v5247
        %v5249 = vpop.f32.mrb[0].mxu0
        %v5250 = vadd.f32 %v4894, %v5249
        %v5251 = vpop.f32.mrb[0].mxu0
        %v5252 = vadd.f32 %v4898, %v5251
        %5253 = vmatprep.mubr.bf16.mxu0 %v4826
        %5254 = vmatmul.mubr.bf16.gmra.mrb[0].mxu0 %v4825
        %v5255 = vpop.f32.mrb[0].mxu0
        %v5256 = vadd.f32 %v4894, %v5255
        %v5257 = vpop.f32.mrb[0].mxu0
        %v5258 = vadd.f32 %v4898, %v5257
        %v5259 = vpop.f32.mrb[0].mxu0
        %v5260 = vadd.f32 %v4894, %v5259
        %v5261 = vpop.f32.mrb[0].mxu0
        %v5262 = vadd.f32 %v4898, %v5261
        %5263 = vmatprep.mubr.bf16.mxu0 %v4828
        %5264 = vmatmul.mubr.bf16.gmra.mrb[0].mxu0 %v4827
        %v5265 = vpop.f32.mrb[0].mxu0
        %v5266 = vadd.f32 %v4894, %v5265
        %v5267 = vpop.f32.mrb[0].mxu0
        %v5268 = vadd.f32 %v4898, %v5267
        %v5269 = vpop.f32.mrb[0].mxu0
        %v5270 = vadd.f32 %v4894, %v5269
        %v5271 = vpop.f32.mrb[0].mxu0
        %v5272 = vadd.f32 %v4898, %v5271
        %5273 = vmatprep.mubr.bf16.mxu0 %v4830
        %5274 = vmatmul.mubr.bf16.gmra.mrb[0].mxu0 %v4829
        %v5275 = vpop.f32.mrb[0].mxu0
        %v5276 = vadd.f32 %v4894, %v5275
        %v5277 = vpop.f32.mrb[0].mxu0
        %v5278 = vadd.f32 %v4898, %v5277
        %v5279 = vpop.f32.mrb[0].mxu0
        %v5280 = vadd.f32 %v4894, %v5279
        %v5281 = vpop.f32.mrb[0].mxu0
        %v5282 = vadd.f32 %v4898, %v5281
        %5283 = vmatprep.mubr.bf16.mxu0 %v4832
        %5284 = vmatmul.mubr.bf16.gmra.mrb[0].mxu0 %v4831
        %v5285 = vpop.f32.mrb[0].mxu0
        %v5286 = vadd.f32 %v4894, %v5285
        %v5287 = vpop.f32.mrb[0].mxu0
        %v5288 = vadd.f32 %v4898, %v5287
        %v5289 = vpop.f32.mrb[0].mxu0
        %v5290 = vadd.f32 %v4894, %v5289
        %v5291 = vpop.f32.mrb[0].mxu0
        %v5292 = vadd.f32 %v4898, %v5291
        %5293 = vmatprep.mubr.bf16.mxu0 %v4834
        %5294 = vmatmul.mubr.bf16.gmra.mrb[0].mxu0 %v4833
        %v5295 = vpop.f32.mrb[0].mxu0
        %v5296 = vadd.f32 %v4894, %v5295
        %v5297 = vpop.f32.mrb[0].mxu0
        %v5298 = vadd.f32 %v4898, %v5297
        %v5299 = vpop.f32.mrb[0].mxu0
        %v5300 = vadd.f32 %v4894, %v5299
        %v5301 = vpop.f32.mrb[0].mxu0
        %v5302 = vadd.f32 %v4898, %v5301
        %5303 = vmatprep.mubr.bf16.mxu0 %v4836
        %5304 = vmatmul.mubr.bf16.gmra.mrb[0].mxu0 %v4835
        %v5305 = vpop.f32.mrb[0].mxu0
        %v5306 = vadd.f32 %v4894, %v5305
        %v5307 = vpop.f32.mrb[0].mxu0
        %v5308 = vadd.f32 %v4898, %v5307
        %v5309 = vpop.f32.mrb[0].mxu0
        %v5310 = vadd.f32 %v4894, %v5309
        %v5311 = vpop.f32.mrb[0].mxu0
        %v5312 = vadd.f32 %v4898, %v5311
        %5313 = vmatprep.mubr.bf16.mxu0 %v4838
        %5314 = vmatmul.mubr.bf16.gmra.mrb[0].mxu0 %v4837
        %v5315 = vpop.f32.mrb[0].mxu0
        %v5316 = vadd.f32 %v4894, %v5315
        %v5317 = vpop.f32.mrb[0].mxu0
        %v5318 = vadd.f32 %v4898, %v5317
        %v5319 = vpop.f32.mrb[0].mxu0
        %v5320 = vadd.f32 %v4894, %v5319
        %v5321 = vpop.f32.mrb[0].mxu0
        %v5322 = vadd.f32 %v4898, %v5321
        %5323 = vmatprep.mubr.bf16.mxu0 %v4840
        %5324 = vmatmul.mubr.bf16.gmra.mrb[0].mxu0 %v4839
        %v5325 = vpop.f32.mrb[0].mxu0
        %v5326 = vadd.f32 %v4894, %v5325
        %v5327 = vpop.f32.mrb[0].mxu0
        %v5328 = vadd.f32 %v4898, %v5327
        %v5329 = vpop.f32.mrb[0].mxu0
        %v5330 = vadd.f32 %v4894, %v5329
        %v5331 = vpop.f32.mrb[0].mxu0
        %v5332 = vadd.f32 %v4898, %v5331
        %5333 = vmatprep.mubr.bf16.mxu0 %v4842
        %5334 = vmatmul.mubr.bf16.gmra.mrb[0].mxu0 %v4841
        %v5335 = vpop.f32.mrb[0].mxu0
        %v5336 = vadd.f32 %v4894, %v5335
        %v5337 = vpop.f32.mrb[0].mxu0
        %v5338 = vadd.f32 %v4898, %v5337
        %v5339 = vpop.f32.mrb[0].mxu0
        %v5340 = vadd.f32 %v4894, %v5339
        %v5341 = vpop.f32.mrb[0].mxu0
        %v5342 = vadd.f32 %v4898, %v5341
        %5343 = vmatprep.mubr.bf16.mxu0 %v4844
        %5344 = vmatmul.mubr.bf16.gmra.mrb[0].mxu0 %v4843
        %v5345 = vpop.f32.mrb[0].mxu0
        %v5346 = vadd.f32 %v4894, %v5345
        %v5347 = vpop.f32.mrb[0].mxu0
        %v5348 = vadd.f32 %v4898, %v5347
        %v5349 = vpop.f32.mrb[0].mxu0
        %v5350 = vadd.f32 %v4894, %v5349
        %v5351 = vpop.f32.mrb[0].mxu0
        %v5352 = vadd.f32 %v4898, %v5351
        %5353 = vmatprep.mubr.bf16.mxu0 %v4846
        %5354 = vmatmul.mubr.bf16.gmra.mrb[0].mxu0 %v4845
        %v5355 = vpop.f32.mrb[0].mxu0
        %v5356 = vadd.f32 %v4894, %v5355
        %v5357 = vpop.f32.mrb[0].mxu0
        %v5358 = vadd.f32 %v4898, %v5357
        %v5359 = vpop.f32.mrb[0].mxu0
        %v5360 = vadd.f32 %v4894, %v5359
        %v5361 = vpop.f32.mrb[0].mxu0
        %v5362 = vadd.f32 %v4898, %v5361
        %5363 = vmatprep.mubr.bf16.mxu0 %v4848
        %5364 = vmatmul.mubr.bf16.gmra.mrb[0].mxu0 %v4847
        %v5365 = vpop.f32.mrb[0].mxu0
        %v5366 = vadd.f32 %v4894, %v5365
        %v5367 = vpop.f32.mrb[0].mxu0
        %v5368 = vadd.f32 %v4898, %v5367
        %v5369 = vpop.f32.mrb[0].mxu0
        %v5370 = vadd.f32 %v4894, %v5369
        %v5371 = vpop.f32.mrb[0].mxu0
        %v5372 = vadd.f32 %v4898, %v5371
        %5373 = vmatprep.mubr.bf16.mxu0 %v4850
        %5374 = vmatmul.mubr.bf16.gmra.mrb[0].mxu0 %v4849
        %v5375 = vpop.f32.mrb[0].mxu0
        %v5376 = vadd.f32 %v4894, %v5375
        %v5377 = vpop.f32.mrb[0].mxu0
        %v5378 = vadd.f32 %v4898, %v5377
        %v5379 = vpop.f32.mrb[0].mxu0
        %v5380 = vadd.f32 %v4894, %v5379
        %v5381 = vpop.f32.mrb[0].mxu0
        %v5382 = vadd.f32 %v4898, %v5381
        %5383 = vmatprep.mubr.bf16.mxu0 %v4852
        %5384 = vmatmul.mubr.bf16.gmra.mrb[0].mxu0 %v4851
        %v5385 = vpop.f32.mrb[0].mxu0
        %v5386 = vadd.f32 %v4894, %v5385
        %v5387 = vpop.f32.mrb[0].mxu0
        %v5388 = vadd.f32 %v4898, %v5387
        %v5389 = vpop.f32.mrb[0].mxu0
        %v5390 = vadd.f32 %v4894, %v5389
        %v5391 = vpop.f32.mrb[0].mxu0
        %v5392 = vadd.f32 %v4898, %v5391
        %5393 = vmatprep.mubr.bf16.mxu0 %v4854
        %5394 = vmatmul.mubr.bf16.gmra.mrb[0].mxu0 %v4853
        %v5395 = vpop.f32.mrb[0].mxu0
        %v5396 = vadd.f32 %v4894, %v5395
        %v5397 = vpop.f32.mrb[0].mxu0
        %v5398 = vadd.f32 %v4898, %v5397
        %v5399 = vpop.f32.mrb[0].mxu0
        %v5400 = vadd.f32 %v4894, %v5399
        %v5401 = vpop.f32.mrb[0].mxu0
        %v5402 = vadd.f32 %v4898, %v5401
        %5403 = vmatprep.mubr.bf16.mxu0 %v4856
        %5404 = vmatmul.mubr.bf16.gmra.mrb[0].mxu0 %v4855
        %v5405 = vpop.f32.mrb[0].mxu0
        %v5406 = vadd.f32 %v4894, %v5405
        %v5407 = vpop.f32.mrb[0].mxu0
        %v5408 = vadd.f32 %v4898, %v5407
        %v5409 = vpop.f32.mrb[0].mxu0
        %v5410 = vadd.f32 %v4894, %v5409
        %v5411 = vpop.f32.mrb[0].mxu0
        %v5412 = vadd.f32 %v4898, %v5411
        %5413 = vdwg.mxu0
        %v5414 = vld [vmem:[#allocation22] sm:$0xff]
        %v5415 = vld [vmem:[#allocation22 + $0x8] sm:$0xff]
        %v5416 = vld [vmem:[#allocation22 + $0x10] sm:$0xff]
        %v5417 = vld [vmem:[#allocation22 + $0x18] sm:$0xff]
        %v5418 = vld [vmem:[#allocation22 + $0x20] sm:$0xff]
        %v5419 = vld [vmem:[#allocation22 + $0x28] sm:$0xff]
        %v5420 = vld [vmem:[#allocation22 + $0x30] sm:$0xff]
        %v5421 = vld [vmem:[#allocation22 + $0x38] sm:$0xff]
        %v5422 = vld [vmem:[#allocation22 + $0x40] sm:$0xff]
        %v5423 = vld [vmem:[#allocation22 + $0x48] sm:$0xff]
        %v5424 = vld [vmem:[#allocation22 + $0x50] sm:$0xff]
        %v5425 = vld [vmem:[#allocation22 + $0x58] sm:$0xff]
        %v5426 = vld [vmem:[#allocation22 + $0x60] sm:$0xff]
        %v5427 = vld [vmem:[#allocation22 + $0x68] sm:$0xff]
        %v5428 = vld [vmem:[#allocation22 + $0x70] sm:$0xff]
        %v5429 = vld [vmem:[#allocation22 + $0x78] sm:$0xff]
        %v5446 = vunpack.c.l.b16 %v5414
        %v5447 = vunpack.c.h.b16 %v5414
        %v5448 = vunpack.c.l.b16 %v5415
        %v5449 = vunpack.c.h.b16 %v5415
        %v5450 = vunpack.c.l.b16 %v5416
        %v5451 = vunpack.c.h.b16 %v5416
        %v5452 = vunpack.c.l.b16 %v5417
        %v5453 = vunpack.c.h.b16 %v5417
        %v5454 = vunpack.c.l.b16 %v5418
        %v5455 = vunpack.c.h.b16 %v5418
        %v5456 = vunpack.c.l.b16 %v5419
        %v5457 = vunpack.c.h.b16 %v5419
        %v5458 = vunpack.c.l.b16 %v5420
        %v5459 = vunpack.c.h.b16 %v5420
        %v5460 = vunpack.c.l.b16 %v5421
        %v5461 = vunpack.c.h.b16 %v5421
        %v5462 = vunpack.c.l.b16 %v5422
        %v5463 = vunpack.c.h.b16 %v5422
        %v5464 = vunpack.c.l.b16 %v5423
        %v5465 = vunpack.c.h.b16 %v5423
        %v5466 = vunpack.c.l.b16 %v5424
        %v5467 = vunpack.c.h.b16 %v5424
        %v5468 = vunpack.c.l.b16 %v5425
        %v5469 = vunpack.c.h.b16 %v5425
        %v5470 = vunpack.c.l.b16 %v5426
        %v5471 = vunpack.c.h.b16 %v5426
        %v5472 = vunpack.c.l.b16 %v5427
        %v5473 = vunpack.c.h.b16 %v5427
        %v5474 = vunpack.c.l.b16 %v5428
        %v5475 = vunpack.c.h.b16 %v5428
        %v5476 = vunpack.c.l.b16 %v5429
        %v5477 = vunpack.c.h.b16 %v5429
        %v5478 = vpack.c.b16 %v5448, %v5446
        %v5479 = vpack.c.b16 %v5449, %v5447
        %v5480 = vpack.c.b16 %v5452, %v5450
        %v5481 = vpack.c.b16 %v5453, %v5451
        %v5482 = vpack.c.b16 %v5456, %v5454
        %v5483 = vpack.c.b16 %v5457, %v5455
        %v5484 = vpack.c.b16 %v5460, %v5458
        %v5485 = vpack.c.b16 %v5461, %v5459
        %v5486 = vpack.c.b16 %v5464, %v5462
        %v5487 = vpack.c.b16 %v5465, %v5463
        %v5488 = vpack.c.b16 %v5468, %v5466
        %v5489 = vpack.c.b16 %v5469, %v5467
        %v5490 = vpack.c.b16 %v5472, %v5470
        %v5491 = vpack.c.b16 %v5473, %v5471
        %v5492 = vpack.c.b16 %v5476, %v5474
        %v5493 = vpack.c.b16 %v5477, %v5475
        %5510 = vmatprep.subr.bf16.mxu0 %v5479
        %5511 = vmatpush1.bf16.msra.mxu0 %v5478
        %5512 = vmatprep.subr.bf16.mxu0 %v5481
        %5513 = vmatpush1.bf16.msra.mxu0 %v5480
        %5514 = vmatprep.subr.bf16.mxu0 %v5483
        %5515 = vmatpush1.bf16.msra.mxu0 %v5482
        %5516 = vmatprep.subr.bf16.mxu0 %v5485
        %5517 = vmatpush1.bf16.msra.mxu0 %v5484
        %5518 = vmatprep.subr.bf16.mxu0 %v5487
        %5519 = vmatpush1.bf16.msra.mxu0 %v5486
        %5520 = vmatprep.subr.bf16.mxu0 %v5489
        %5521 = vmatpush1.bf16.msra.mxu0 %v5488
        %5522 = vmatprep.subr.bf16.mxu0 %v5491
        %5523 = vmatpush1.bf16.msra.mxu0 %v5490
        %5524 = vmatprep.subr.bf16.mxu0 %v5493
        %5525 = vmatpush1.bf16.msra.mxu0 %v5492
        %5526 = vmatprep.subr.bf16.mxu0 0
        %5527 = vmatpush1.bf16.msra.mxu0 0
        %5528 = vmatprep.subr.bf16.mxu0 0
        %5529 = vmatpush1.bf16.msra.mxu0 0
        %5530 = vmatprep.subr.bf16.mxu0 0
        %5531 = vmatpush1.bf16.msra.mxu0 0
        %5532 = vmatprep.subr.bf16.mxu0 0
        %5533 = vmatpush1.bf16.msra.mxu0 0
        %5534 = vmatprep.subr.bf16.mxu0 0
        %5535 = vmatpush1.bf16.msra.mxu0 0
        %5536 = vmatprep.subr.bf16.mxu0 0
        %5537 = vmatpush1.bf16.msra.mxu0 0
        %5538 = vmatprep.subr.bf16.mxu0 0
        %5539 = vmatpush1.bf16.msra.mxu0 0
        %5540 = vmatprep.subr.bf16.mxu0 0
        %5541 = vmatpush1.bf16.msra.mxu0 0
        %5542 = vmatprep.mubr.bf16.mxu0 0
        %5543 = vmatmul.mubr.bf16.gmra.mrb[0].mxu0 %v1176
        %v5544 = vpop.f32.mrb[0].mxu0
        %v5545 = vadd.f32 0.0, %v5544
        %v5546 = vpop.f32.mrb[0].mxu0
        %v5547 = vadd.f32 0.0, %v5546
        %v5548 = vpop.f32.mrb[0].mxu0
        %v5549 = vadd.f32 0.0, %v5548
        %v5550 = vpop.f32.mrb[0].mxu0
        %v5551 = vadd.f32 0.0, %v5550
        %5552 = vmatprep.mubr.bf16.mxu0 0
        %5553 = vmatmul.mubr.bf16.gmra.mrb[0].mxu0 %v1177
        %v5554 = vpop.f32.mrb[0].mxu0
        %v5555 = vadd.f32 0.0, %v5554
        %v5556 = vpop.f32.mrb[0].mxu0
        %v5557 = vadd.f32 0.0, %v5556
        %v5558 = vpop.f32.mrb[0].mxu0
        %v5559 = vadd.f32 0.0, %v5558
        %v5560 = vpop.f32.mrb[0].mxu0
        %v5561 = vadd.f32 0.0, %v5560
        %5562 = vmatprep.mubr.bf16.mxu0 0
        %5563 = vmatmul.mubr.bf16.gmra.mrb[0].mxu0 %v1178
        %v5564 = vpop.f32.mrb[0].mxu0
        %v5565 = vadd.f32 0.0, %v5564
        %v5566 = vpop.f32.mrb[0].mxu0
        %v5567 = vadd.f32 0.0, %v5566
        %v5568 = vpop.f32.mrb[0].mxu0
        %v5569 = vadd.f32 0.0, %v5568
        %v5570 = vpop.f32.mrb[0].mxu0
        %v5571 = vadd.f32 0.0, %v5570
        %5572 = vmatprep.mubr.bf16.mxu0 0
        %5573 = vmatmul.mubr.bf16.gmra.mrb[0].mxu0 %v1179
        %v5574 = vpop.f32.mrb[0].mxu0
        %v5575 = vadd.f32 0.0, %v5574
        %v5576 = vpop.f32.mrb[0].mxu0
        %v5577 = vadd.f32 0.0, %v5576
        %v5578 = vpop.f32.mrb[0].mxu0
        %v5579 = vadd.f32 0.0, %v5578
        %v5580 = vpop.f32.mrb[0].mxu0
        %v5581 = vadd.f32 0.0, %v5580
        %5582 = vmatprep.mubr.bf16.mxu0 0
        %5583 = vmatmul.mubr.bf16.gmra.mrb[0].mxu0 %v1180
        %v5584 = vpop.f32.mrb[0].mxu0
        %v5585 = vadd.f32 0.0, %v5584
        %v5586 = vpop.f32.mrb[0].mxu0
        %v5587 = vadd.f32 0.0, %v5586
        %v5588 = vpop.f32.mrb[0].mxu0
        %v5589 = vadd.f32 0.0, %v5588
        %v5590 = vpop.f32.mrb[0].mxu0
        %v5591 = vadd.f32 0.0, %v5590
        %5592 = vmatprep.mubr.bf16.mxu0 0
        %5593 = vmatmul.mubr.bf16.gmra.mrb[0].mxu0 %v1181
        %v5594 = vpop.f32.mrb[0].mxu0
        %v5595 = vadd.f32 0.0, %v5594
        %v5596 = vpop.f32.mrb[0].mxu0
        %v5597 = vadd.f32 0.0, %v5596
        %v5598 = vpop.f32.mrb[0].mxu0
        %v5599 = vadd.f32 0.0, %v5598
        %v5600 = vpop.f32.mrb[0].mxu0
        %v5601 = vadd.f32 0.0, %v5600
        %5602 = vmatprep.mubr.bf16.mxu0 0
        %5603 = vmatmul.mubr.bf16.gmra.mrb[0].mxu0 %v1182
        %v5604 = vpop.f32.mrb[0].mxu0
        %v5605 = vadd.f32 0.0, %v5604
        %v5606 = vpop.f32.mrb[0].mxu0
        %v5607 = vadd.f32 0.0, %v5606
        %v5608 = vpop.f32.mrb[0].mxu0
        %v5609 = vadd.f32 0.0, %v5608
        %v5610 = vpop.f32.mrb[0].mxu0
        %v5611 = vadd.f32 0.0, %v5610
        %5612 = vmatprep.mubr.bf16.mxu0 0
        %5613 = vmatmul.mubr.bf16.gmra.mrb[0].mxu0 %v1183
        %v5614 = vpop.f32.mrb[0].mxu0
        %v5615 = vadd.f32 0.0, %v5614
        %v5616 = vpop.f32.mrb[0].mxu0
        %v5617 = vadd.f32 0.0, %v5616
        %v5618 = vpop.f32.mrb[0].mxu0
        %v5619 = vadd.f32 0.0, %v5618
        %v5620 = vpop.f32.mrb[0].mxu0
        %v5621 = vadd.f32 0.0, %v5620
        %5622 = vmatprep.mubr.bf16.mxu0 0
        %5623 = vmatmul.mubr.bf16.gmra.mrb[0].mxu0 %v1184
        %v5624 = vpop.f32.mrb[0].mxu0
        %v5625 = vadd.f32 0.0, %v5624
        %v5626 = vpop.f32.mrb[0].mxu0
        %v5627 = vadd.f32 0.0, %v5626
        %v5628 = vpop.f32.mrb[0].mxu0
        %v5629 = vadd.f32 0.0, %v5628
        %v5630 = vpop.f32.mrb[0].mxu0
        %v5631 = vadd.f32 0.0, %v5630
        %5632 = vmatprep.mubr.bf16.mxu0 0
        %5633 = vmatmul.mubr.bf16.gmra.mrb[0].mxu0 %v1185
        %v5634 = vpop.f32.mrb[0].mxu0
        %v5635 = vadd.f32 0.0, %v5634
        %v5636 = vpop.f32.mrb[0].mxu0
        %v5637 = vadd.f32 0.0, %v5636
        %v5638 = vpop.f32.mrb[0].mxu0
        %v5639 = vadd.f32 0.0, %v5638
        %v5640 = vpop.f32.mrb[0].mxu0
        %v5641 = vadd.f32 0.0, %v5640
        %5642 = vmatprep.mubr.bf16.mxu0 0
        %5643 = vmatmul.mubr.bf16.gmra.mrb[0].mxu0 %v1186
        %v5644 = vpop.f32.mrb[0].mxu0
        %v5645 = vadd.f32 0.0, %v5644
        %v5646 = vpop.f32.mrb[0].mxu0
        %v5647 = vadd.f32 0.0, %v5646
        %v5648 = vpop.f32.mrb[0].mxu0
        %v5649 = vadd.f32 0.0, %v5648
        %v5650 = vpop.f32.mrb[0].mxu0
        %v5651 = vadd.f32 0.0, %v5650
        %5652 = vmatprep.mubr.bf16.mxu0 0
        %5653 = vmatmul.mubr.bf16.gmra.mrb[0].mxu0 %v1187
        %v5654 = vpop.f32.mrb[0].mxu0
        %v5655 = vadd.f32 0.0, %v5654
        %v5656 = vpop.f32.mrb[0].mxu0
        %v5657 = vadd.f32 0.0, %v5656
        %v5658 = vpop.f32.mrb[0].mxu0
        %v5659 = vadd.f32 0.0, %v5658
        %v5660 = vpop.f32.mrb[0].mxu0
        %v5661 = vadd.f32 0.0, %v5660
        %5662 = vmatprep.mubr.bf16.mxu0 0
        %5663 = vmatmul.mubr.bf16.gmra.mrb[0].mxu0 %v1188
        %v5664 = vpop.f32.mrb[0].mxu0
        %v5665 = vadd.f32 0.0, %v5664
        %v5666 = vpop.f32.mrb[0].mxu0
        %v5667 = vadd.f32 0.0, %v5666
        %v5668 = vpop.f32.mrb[0].mxu0
        %v5669 = vadd.f32 0.0, %v5668
        %v5670 = vpop.f32.mrb[0].mxu0
        %v5671 = vadd.f32 0.0, %v5670
        %5672 = vmatprep.mubr.bf16.mxu0 0
        %5673 = vmatmul.mubr.bf16.gmra.mrb[0].mxu0 %v1189
        %v5674 = vpop.f32.mrb[0].mxu0
        %v5675 = vadd.f32 0.0, %v5674
        %v5676 = vpop.f32.mrb[0].mxu0
        %v5677 = vadd.f32 0.0, %v5676
        %v5678 = vpop.f32.mrb[0].mxu0
        %v5679 = vadd.f32 0.0, %v5678
        %v5680 = vpop.f32.mrb[0].mxu0
        %v5681 = vadd.f32 0.0, %v5680
        %5682 = vmatprep.mubr.bf16.mxu0 0
        %5683 = vmatmul.mubr.bf16.gmra.mrb[0].mxu0 %v1190
        %v5684 = vpop.f32.mrb[0].mxu0
        %v5685 = vadd.f32 0.0, %v5684
        %v5686 = vpop.f32.mrb[0].mxu0
        %v5687 = vadd.f32 0.0, %v5686
        %v5688 = vpop.f32.mrb[0].mxu0
        %v5689 = vadd.f32 0.0, %v5688
        %v5690 = vpop.f32.mrb[0].mxu0
        %v5691 = vadd.f32 0.0, %v5690
        %5692 = vmatprep.mubr.bf16.mxu0 0
        %5693 = vmatmul.mubr.bf16.gmra.mrb[0].mxu0 %v1191
        %v5694 = vpop.f32.mrb[0].mxu0
        %v5695 = vadd.f32 0.0, %v5694
        %v5696 = vpop.f32.mrb[0].mxu0
        %v5697 = vadd.f32 0.0, %v5696
        %v5698 = vpop.f32.mrb[0].mxu0
        %v5699 = vadd.f32 0.0, %v5698
        %v5700 = vpop.f32.mrb[0].mxu0
        %v5701 = vadd.f32 0.0, %v5700
        %5702 = vmatprep.mubr.bf16.mxu0 0
        %5703 = vmatmul.mubr.bf16.gmra.mrb[0].mxu0 %v1192
        %v5704 = vpop.f32.mrb[0].mxu0
        %v5705 = vadd.f32 0.0, %v5704
        %v5706 = vpop.f32.mrb[0].mxu0
        %v5707 = vadd.f32 0.0, %v5706
        %v5708 = vpop.f32.mrb[0].mxu0
        %v5709 = vadd.f32 0.0, %v5708
        %v5710 = vpop.f32.mrb[0].mxu0
        %v5711 = vadd.f32 0.0, %v5710
        %5712 = vmatprep.mubr.bf16.mxu0 0
        %5713 = vmatmul.mubr.bf16.gmra.mrb[0].mxu0 %v1193
        %v5714 = vpop.f32.mrb[0].mxu0
        %v5715 = vadd.f32 0.0, %v5714
        %v5716 = vpop.f32.mrb[0].mxu0
        %v5717 = vadd.f32 0.0, %v5716
        %v5718 = vpop.f32.mrb[0].mxu0
        %v5719 = vadd.f32 0.0, %v5718
        %v5720 = vpop.f32.mrb[0].mxu0
        %v5721 = vadd.f32 0.0, %v5720
        %5722 = vmatprep.mubr.bf16.mxu0 0
        %5723 = vmatmul.mubr.bf16.gmra.mrb[0].mxu0 %v1194
        %v5724 = vpop.f32.mrb[0].mxu0
        %v5725 = vadd.f32 0.0, %v5724
        %v5726 = vpop.f32.mrb[0].mxu0
        %v5727 = vadd.f32 0.0, %v5726
        %v5728 = vpop.f32.mrb[0].mxu0
        %v5729 = vadd.f32 0.0, %v5728
        %v5730 = vpop.f32.mrb[0].mxu0
        %v5731 = vadd.f32 0.0, %v5730
        %5732 = vmatprep.mubr.bf16.mxu0 0
        %5733 = vmatmul.mubr.bf16.gmra.mrb[0].mxu0 %v1195
        %v5734 = vpop.f32.mrb[0].mxu0
        %v5735 = vadd.f32 0.0, %v5734
        %v5736 = vpop.f32.mrb[0].mxu0
        %v5737 = vadd.f32 0.0, %v5736
        %v5738 = vpop.f32.mrb[0].mxu0
        %v5739 = vadd.f32 0.0, %v5738
        %v5740 = vpop.f32.mrb[0].mxu0
        %v5741 = vadd.f32 0.0, %v5740
        %5742 = vmatprep.mubr.bf16.mxu0 0
        %5743 = vmatmul.mubr.bf16.gmra.mrb[0].mxu0 %v1196
        %v5744 = vpop.f32.mrb[0].mxu0
        %v5745 = vadd.f32 0.0, %v5744
        %v5746 = vpop.f32.mrb[0].mxu0
        %v5747 = vadd.f32 0.0, %v5746
        %v5748 = vpop.f32.mrb[0].mxu0
        %v5749 = vadd.f32 0.0, %v5748
        %v5750 = vpop.f32.mrb[0].mxu0
        %v5751 = vadd.f32 0.0, %v5750
        %5752 = vmatprep.mubr.bf16.mxu0 0
        %5753 = vmatmul.mubr.bf16.gmra.mrb[0].mxu0 %v1197
        %v5754 = vpop.f32.mrb[0].mxu0
        %v5755 = vadd.f32 0.0, %v5754
        %v5756 = vpop.f32.mrb[0].mxu0
        %v5757 = vadd.f32 0.0, %v5756
        %v5758 = vpop.f32.mrb[0].mxu0
        %v5759 = vadd.f32 0.0, %v5758
        %v5760 = vpop.f32.mrb[0].mxu0
        %v5761 = vadd.f32 0.0, %v5760
        %5762 = vmatprep.mubr.bf16.mxu0 0
        %5763 = vmatmul.mubr.bf16.gmra.mrb[0].mxu0 %v1198
        %v5764 = vpop.f32.mrb[0].mxu0
        %v5765 = vadd.f32 0.0, %v5764
        %v5766 = vpop.f32.mrb[0].mxu0
        %v5767 = vadd.f32 0.0, %v5766
        %v5768 = vpop.f32.mrb[0].mxu0
        %v5769 = vadd.f32 0.0, %v5768
        %v5770 = vpop.f32.mrb[0].mxu0
        %v5771 = vadd.f32 0.0, %v5770
        %5772 = vmatprep.mubr.bf16.mxu0 0
        %5773 = vmatmul.mubr.bf16.gmra.mrb[0].mxu0 %v1199
        %v5774 = vpop.f32.mrb[0].mxu0
        %v5775 = vadd.f32 0.0, %v5774
        %v5776 = vpop.f32.mrb[0].mxu0
        %v5777 = vadd.f32 0.0, %v5776
        %v5778 = vpop.f32.mrb[0].mxu0
        %v5779 = vadd.f32 0.0, %v5778
        %v5780 = vpop.f32.mrb[0].mxu0
        %v5781 = vadd.f32 0.0, %v5780
        %5782 = vmatprep.mubr.bf16.mxu0 0
        %5783 = vmatmul.mubr.bf16.gmra.mrb[0].mxu0 %v1200
        %v5784 = vpop.f32.mrb[0].mxu0
        %v5785 = vadd.f32 0.0, %v5784
        %v5786 = vpop.f32.mrb[0].mxu0
        %v5787 = vadd.f32 0.0, %v5786
        %v5788 = vpop.f32.mrb[0].mxu0
        %v5789 = vadd.f32 0.0, %v5788
        %v5790 = vpop.f32.mrb[0].mxu0
        %v5791 = vadd.f32 0.0, %v5790
        %5792 = vmatprep.mubr.bf16.mxu0 0
        %5793 = vmatmul.mubr.bf16.gmra.mrb[0].mxu0 %v1201
        %v5794 = vpop.f32.mrb[0].mxu0
        %v5795 = vadd.f32 0.0, %v5794
        %v5796 = vpop.f32.mrb[0].mxu0
        %v5797 = vadd.f32 0.0, %v5796
        %v5798 = vpop.f32.mrb[0].mxu0
        %v5799 = vadd.f32 0.0, %v5798
        %v5800 = vpop.f32.mrb[0].mxu0
        %v5801 = vadd.f32 0.0, %v5800
        %5802 = vmatprep.mubr.bf16.mxu0 0
        %5803 = vmatmul.mubr.bf16.gmra.mrb[0].mxu0 %v1202
        %v5804 = vpop.f32.mrb[0].mxu0
        %v5805 = vadd.f32 0.0, %v5804
        %v5806 = vpop.f32.mrb[0].mxu0
        %v5807 = vadd.f32 0.0, %v5806
        %v5808 = vpop.f32.mrb[0].mxu0
        %v5809 = vadd.f32 0.0, %v5808
        %v5810 = vpop.f32.mrb[0].mxu0
        %v5811 = vadd.f32 0.0, %v5810
        %5812 = vmatprep.mubr.bf16.mxu0 0
        %5813 = vmatmul.mubr.bf16.gmra.mrb[0].mxu0 %v1203
        %v5814 = vpop.f32.mrb[0].mxu0
        %v5815 = vadd.f32 0.0, %v5814
        %v5816 = vpop.f32.mrb[0].mxu0
        %v5817 = vadd.f32 0.0, %v5816
        %v5818 = vpop.f32.mrb[0].mxu0
        %v5819 = vadd.f32 0.0, %v5818
        %v5820 = vpop.f32.mrb[0].mxu0
        %v5821 = vadd.f32 0.0, %v5820
        %5822 = vmatprep.mubr.bf16.mxu0 0
        %5823 = vmatmul.mubr.bf16.gmra.mrb[0].mxu0 %v1204
        %v5824 = vpop.f32.mrb[0].mxu0
        %v5825 = vadd.f32 0.0, %v5824
        %v5826 = vpop.f32.mrb[0].mxu0
        %v5827 = vadd.f32 0.0, %v5826
        %v5828 = vpop.f32.mrb[0].mxu0
        %v5829 = vadd.f32 0.0, %v5828
        %v5830 = vpop.f32.mrb[0].mxu0
        %v5831 = vadd.f32 0.0, %v5830
        %5832 = vmatprep.mubr.bf16.mxu0 0
        %5833 = vmatmul.mubr.bf16.gmra.mrb[0].mxu0 %v1205
        %v5834 = vpop.f32.mrb[0].mxu0
        %v5835 = vadd.f32 0.0, %v5834
        %v5836 = vpop.f32.mrb[0].mxu0
        %v5837 = vadd.f32 0.0, %v5836
        %v5838 = vpop.f32.mrb[0].mxu0
        %v5839 = vadd.f32 0.0, %v5838
        %v5840 = vpop.f32.mrb[0].mxu0
        %v5841 = vadd.f32 0.0, %v5840
        %5842 = vmatprep.mubr.bf16.mxu0 0
        %5843 = vmatmul.mubr.bf16.gmra.mrb[0].mxu0 %v1206
        %v5844 = vpop.f32.mrb[0].mxu0
        %v5845 = vadd.f32 0.0, %v5844
        %v5846 = vpop.f32.mrb[0].mxu0
        %v5847 = vadd.f32 0.0, %v5846
        %v5848 = vpop.f32.mrb[0].mxu0
        %v5849 = vadd.f32 0.0, %v5848
        %v5850 = vpop.f32.mrb[0].mxu0
        %v5851 = vadd.f32 0.0, %v5850
        %5852 = vmatprep.mubr.bf16.mxu0 0
        %5853 = vmatmul.mubr.bf16.gmra.mrb[0].mxu0 %v1207
        %v5854 = vpop.f32.mrb[0].mxu0
        %v5855 = vadd.f32 0.0, %v5854
        %v5856 = vpop.f32.mrb[0].mxu0
        %v5857 = vadd.f32 0.0, %v5856
        %v5858 = vpop.f32.mrb[0].mxu0
        %v5859 = vadd.f32 0.0, %v5858
        %v5860 = vpop.f32.mrb[0].mxu0
        %v5861 = vadd.f32 0.0, %v5860
        %5862 = vdwg.mxu0
        %v5863 = vadd.f32 %v5096, %v5545
        %v5864 = vadd.f32 %v5098, %v5547
        %v5865 = vadd.f32 %v5100, %v5549
        %v5866 = vadd.f32 %v5102, %v5551
        %v5867 = vadd.f32 %v5106, %v5555
        %v5868 = vadd.f32 %v5108, %v5557
        %v5869 = vadd.f32 %v5110, %v5559
        %v5870 = vadd.f32 %v5112, %v5561
        %v5871 = vadd.f32 %v5116, %v5565
        %v5872 = vadd.f32 %v5118, %v5567
        %v5873 = vadd.f32 %v5120, %v5569
        %v5874 = vadd.f32 %v5122, %v5571
        %v5875 = vadd.f32 %v5126, %v5575
        %v5876 = vadd.f32 %v5128, %v5577
        %v5877 = vadd.f32 %v5130, %v5579
        %v5878 = vadd.f32 %v5132, %v5581
        %v5879 = vadd.f32 %v5136, %v5585
        %v5880 = vadd.f32 %v5138, %v5587
        %v5881 = vadd.f32 %v5140, %v5589
        %v5882 = vadd.f32 %v5142, %v5591
        %v5883 = vadd.f32 %v5146, %v5595
        %v5884 = vadd.f32 %v5148, %v5597
        %v5885 = vadd.f32 %v5150, %v5599
        %v5886 = vadd.f32 %v5152, %v5601
        %v5887 = vadd.f32 %v5156, %v5605
        %v5888 = vadd.f32 %v5158, %v5607
        %v5889 = vadd.f32 %v5160, %v5609
        %v5890 = vadd.f32 %v5162, %v5611
        %v5891 = vadd.f32 %v5166, %v5615
        %v5892 = vadd.f32 %v5168, %v5617
        %v5893 = vadd.f32 %v5170, %v5619
        %v5894 = vadd.f32 %v5172, %v5621
        %v5895 = vadd.f32 %v5176, %v5625
        %v5896 = vadd.f32 %v5178, %v5627
        %v5897 = vadd.f32 %v5180, %v5629
        %v5898 = vadd.f32 %v5182, %v5631
        %v5899 = vadd.f32 %v5186, %v5635
        %v5900 = vadd.f32 %v5188, %v5637
        %v5901 = vadd.f32 %v5190, %v5639
        %v5902 = vadd.f32 %v5192, %v5641
        %v5903 = vadd.f32 %v5196, %v5645
        %v5904 = vadd.f32 %v5198, %v5647
        %v5905 = vadd.f32 %v5200, %v5649
        %v5906 = vadd.f32 %v5202, %v5651
        %v5907 = vadd.f32 %v5206, %v5655
        %v5908 = vadd.f32 %v5208, %v5657
        %v5909 = vadd.f32 %v5210, %v5659
        %v5910 = vadd.f32 %v5212, %v5661
        %v5911 = vadd.f32 %v5216, %v5665
        %v5912 = vadd.f32 %v5218, %v5667
        %v5913 = vadd.f32 %v5220, %v5669
        %v5914 = vadd.f32 %v5222, %v5671
        %v5915 = vadd.f32 %v5226, %v5675
        %v5916 = vadd.f32 %v5228, %v5677
        %v5917 = vadd.f32 %v5230, %v5679
        %v5918 = vadd.f32 %v5232, %v5681
        %v5919 = vadd.f32 %v5236, %v5685
        %v5920 = vadd.f32 %v5238, %v5687
        %v5921 = vadd.f32 %v5240, %v5689
        %v5922 = vadd.f32 %v5242, %v5691
        %v5923 = vadd.f32 %v5246, %v5695
        %v5924 = vadd.f32 %v5248, %v5697
        %v5925 = vadd.f32 %v5250, %v5699
        %v5926 = vadd.f32 %v5252, %v5701
        %v5927 = vadd.f32 %v5256, %v5705
        %v5928 = vadd.f32 %v5258, %v5707
        %v5929 = vadd.f32 %v5260, %v5709
        %v5930 = vadd.f32 %v5262, %v5711
        %v5931 = vadd.f32 %v5266, %v5715
        %v5932 = vadd.f32 %v5268, %v5717
        %v5933 = vadd.f32 %v5270, %v5719
        %v5934 = vadd.f32 %v5272, %v5721
        %v5935 = vadd.f32 %v5276, %v5725
        %v5936 = vadd.f32 %v5278, %v5727
        %v5937 = vadd.f32 %v5280, %v5729
        %v5938 = vadd.f32 %v5282, %v5731
        %v5939 = vadd.f32 %v5286, %v5735
        %v5940 = vadd.f32 %v5288, %v5737
        %v5941 = vadd.f32 %v5290, %v5739
        %v5942 = vadd.f32 %v5292, %v5741
        %v5943 = vadd.f32 %v5296, %v5745
        %v5944 = vadd.f32 %v5298, %v5747
        %v5945 = vadd.f32 %v5300, %v5749
        %v5946 = vadd.f32 %v5302, %v5751
        %v5947 = vadd.f32 %v5306, %v5755
        %v5948 = vadd.f32 %v5308, %v5757
        %v5949 = vadd.f32 %v5310, %v5759
        %v5950 = vadd.f32 %v5312, %v5761
        %v5951 = vadd.f32 %v5316, %v5765
        %v5952 = vadd.f32 %v5318, %v5767
        %v5953 = vadd.f32 %v5320, %v5769
        %v5954 = vadd.f32 %v5322, %v5771
        %v5955 = vadd.f32 %v5326, %v5775
        %v5956 = vadd.f32 %v5328, %v5777
        %v5957 = vadd.f32 %v5330, %v5779
        %v5958 = vadd.f32 %v5332, %v5781
        %v5959 = vadd.f32 %v5336, %v5785
        %v5960 = vadd.f32 %v5338, %v5787
        %v5961 = vadd.f32 %v5340, %v5789
        %v5962 = vadd.f32 %v5342, %v5791
        %v5963 = vadd.f32 %v5346, %v5795
        %v5964 = vadd.f32 %v5348, %v5797
        %v5965 = vadd.f32 %v5350, %v5799
        %v5966 = vadd.f32 %v5352, %v5801
        %v5967 = vadd.f32 %v5356, %v5805
        %v5968 = vadd.f32 %v5358, %v5807
        %v5969 = vadd.f32 %v5360, %v5809
        %v5970 = vadd.f32 %v5362, %v5811
        %v5971 = vadd.f32 %v5366, %v5815
        %v5972 = vadd.f32 %v5368, %v5817
        %v5973 = vadd.f32 %v5370, %v5819
        %v5974 = vadd.f32 %v5372, %v5821
        %v5975 = vadd.f32 %v5376, %v5825
        %v5976 = vadd.f32 %v5378, %v5827
        %v5977 = vadd.f32 %v5380, %v5829
        %v5978 = vadd.f32 %v5382, %v5831
        %v5979 = vadd.f32 %v5386, %v5835
        %v5980 = vadd.f32 %v5388, %v5837
        %v5981 = vadd.f32 %v5390, %v5839
        %v5982 = vadd.f32 %v5392, %v5841
        %v5983 = vadd.f32 %v5396, %v5845
        %v5984 = vadd.f32 %v5398, %v5847
        %v5985 = vadd.f32 %v5400, %v5849
        %v5986 = vadd.f32 %v5402, %v5851
        %v5987 = vadd.f32 %v5406, %v5855
        %v5988 = vadd.f32 %v5408, %v5857
        %v5989 = vadd.f32 %v5410, %v5859
        %v5990 = vadd.f32 %v5412, %v5861
        %v5991 = vmax.f32 %v5863, 0.0
        %v5992 = vmax.f32 %v5864, 0.0
        %v5993 = vmax.f32 %v5865, 0.0
        %v5994 = vmax.f32 %v5866, 0.0
        %v5995 = vmax.f32 %v5867, 0.0
        %v5996 = vmax.f32 %v5868, 0.0
        %v5997 = vmax.f32 %v5869, 0.0
        %v5998 = vmax.f32 %v5870, 0.0
        %v5999 = vmax.f32 %v5871, 0.0
        %v6000 = vmax.f32 %v5872, 0.0
        %v6001 = vmax.f32 %v5873, 0.0
        %v6002 = vmax.f32 %v5874, 0.0
        %v6003 = vmax.f32 %v5875, 0.0
        %v6004 = vmax.f32 %v5876, 0.0
        %v6005 = vmax.f32 %v5877, 0.0
        %v6006 = vmax.f32 %v5878, 0.0
        %v6007 = vmax.f32 %v5879, 0.0
        %v6008 = vmax.f32 %v5880, 0.0
        %v6009 = vmax.f32 %v5881, 0.0
        %v6010 = vmax.f32 %v5882, 0.0
        %v6011 = vmax.f32 %v5883, 0.0
        %v6012 = vmax.f32 %v5884, 0.0
        %v6013 = vmax.f32 %v5885, 0.0
        %v6014 = vmax.f32 %v5886, 0.0
        %v6015 = vmax.f32 %v5887, 0.0
        %v6016 = vmax.f32 %v5888, 0.0
        %v6017 = vmax.f32 %v5889, 0.0
        %v6018 = vmax.f32 %v5890, 0.0
        %v6019 = vmax.f32 %v5891, 0.0
        %v6020 = vmax.f32 %v5892, 0.0
        %v6021 = vmax.f32 %v5893, 0.0
        %v6022 = vmax.f32 %v5894, 0.0
        %v6023 = vmax.f32 %v5895, 0.0
        %v6024 = vmax.f32 %v5896, 0.0
        %v6025 = vmax.f32 %v5897, 0.0
        %v6026 = vmax.f32 %v5898, 0.0
        %v6027 = vmax.f32 %v5899, 0.0
        %v6028 = vmax.f32 %v5900, 0.0
        %v6029 = vmax.f32 %v5901, 0.0
        %v6030 = vmax.f32 %v5902, 0.0
        %v6031 = vmax.f32 %v5903, 0.0
        %v6032 = vmax.f32 %v5904, 0.0
        %v6033 = vmax.f32 %v5905, 0.0
        %v6034 = vmax.f32 %v5906, 0.0
        %v6035 = vmax.f32 %v5907, 0.0
        %v6036 = vmax.f32 %v5908, 0.0
        %v6037 = vmax.f32 %v5909, 0.0
        %v6038 = vmax.f32 %v5910, 0.0
        %v6039 = vmax.f32 %v5911, 0.0
        %v6040 = vmax.f32 %v5912, 0.0
        %v6041 = vmax.f32 %v5913, 0.0
        %v6042 = vmax.f32 %v5914, 0.0
        %v6043 = vmax.f32 %v5915, 0.0
        %v6044 = vmax.f32 %v5916, 0.0
        %v6045 = vmax.f32 %v5917, 0.0
        %v6046 = vmax.f32 %v5918, 0.0
        %v6047 = vmax.f32 %v5919, 0.0
        %v6048 = vmax.f32 %v5920, 0.0
        %v6049 = vmax.f32 %v5921, 0.0
        %v6050 = vmax.f32 %v5922, 0.0
        %v6051 = vmax.f32 %v5923, 0.0
        %v6052 = vmax.f32 %v5924, 0.0
        %v6053 = vmax.f32 %v5925, 0.0
        %v6054 = vmax.f32 %v5926, 0.0
        %v6055 = vmax.f32 %v5927, 0.0
        %v6056 = vmax.f32 %v5928, 0.0
        %v6057 = vmax.f32 %v5929, 0.0
        %v6058 = vmax.f32 %v5930, 0.0
        %v6059 = vmax.f32 %v5931, 0.0
        %v6060 = vmax.f32 %v5932, 0.0
        %v6061 = vmax.f32 %v5933, 0.0
        %v6062 = vmax.f32 %v5934, 0.0
        %v6063 = vmax.f32 %v5935, 0.0
        %v6064 = vmax.f32 %v5936, 0.0
        %v6065 = vmax.f32 %v5937, 0.0
        %v6066 = vmax.f32 %v5938, 0.0
        %v6067 = vmax.f32 %v5939, 0.0
        %v6068 = vmax.f32 %v5940, 0.0
        %v6069 = vmax.f32 %v5941, 0.0
        %v6070 = vmax.f32 %v5942, 0.0
        %v6071 = vmax.f32 %v5943, 0.0
        %v6072 = vmax.f32 %v5944, 0.0
        %v6073 = vmax.f32 %v5945, 0.0
        %v6074 = vmax.f32 %v5946, 0.0
        %v6075 = vmax.f32 %v5947, 0.0
        %v6076 = vmax.f32 %v5948, 0.0
        %v6077 = vmax.f32 %v5949, 0.0
        %v6078 = vmax.f32 %v5950, 0.0
        %v6079 = vmax.f32 %v5951, 0.0
        %v6080 = vmax.f32 %v5952, 0.0
        %v6081 = vmax.f32 %v5953, 0.0
        %v6082 = vmax.f32 %v5954, 0.0
        %v6083 = vmax.f32 %v5955, 0.0
        %v6084 = vmax.f32 %v5956, 0.0
        %v6085 = vmax.f32 %v5957, 0.0
        %v6086 = vmax.f32 %v5958, 0.0
        %v6087 = vmax.f32 %v5959, 0.0
        %v6088 = vmax.f32 %v5960, 0.0
        %v6089 = vmax.f32 %v5961, 0.0
        %v6090 = vmax.f32 %v5962, 0.0
        %v6091 = vmax.f32 %v5963, 0.0
        %v6092 = vmax.f32 %v5964, 0.0
        %v6093 = vmax.f32 %v5965, 0.0
        %v6094 = vmax.f32 %v5966, 0.0
        %v6095 = vmax.f32 %v5967, 0.0
        %v6096 = vmax.f32 %v5968, 0.0
        %v6097 = vmax.f32 %v5969, 0.0
        %v6098 = vmax.f32 %v5970, 0.0
        %v6099 = vmax.f32 %v5971, 0.0
        %v6100 = vmax.f32 %v5972, 0.0
        %v6101 = vmax.f32 %v5973, 0.0
        %v6102 = vmax.f32 %v5974, 0.0
        %v6103 = vmax.f32 %v5975, 0.0
        %v6104 = vmax.f32 %v5976, 0.0
        %v6105 = vmax.f32 %v5977, 0.0
        %v6106 = vmax.f32 %v5978, 0.0
        %v6107 = vmax.f32 %v5979, 0.0
        %v6108 = vmax.f32 %v5980, 0.0
        %v6109 = vmax.f32 %v5981, 0.0
        %v6110 = vmax.f32 %v5982, 0.0
        %v6111 = vmax.f32 %v5983, 0.0
        %v6112 = vmax.f32 %v5984, 0.0
        %v6113 = vmax.f32 %v5985, 0.0
        %v6114 = vmax.f32 %v5986, 0.0
        %v6115 = vmax.f32 %v5987, 0.0
        %v6116 = vmax.f32 %v5988, 0.0
        %v6117 = vmax.f32 %v5989, 0.0
        %v6118 = vmax.f32 %v5990, 0.0
        %v6119 = vpack.c.bf16 %v5993, %v5991
        %v6120 = vpack.c.bf16 %v5994, %v5992
        %v6121 = vpack.c.bf16 %v5997, %v5995
        %v6122 = vpack.c.bf16 %v5998, %v5996
        %v6123 = vpack.c.bf16 %v6001, %v5999
        %v6124 = vpack.c.bf16 %v6002, %v6000
        %v6125 = vpack.c.bf16 %v6005, %v6003
        %v6126 = vpack.c.bf16 %v6006, %v6004
        %v6127 = vpack.c.bf16 %v6009, %v6007
        %v6128 = vpack.c.bf16 %v6010, %v6008
        %v6129 = vpack.c.bf16 %v6013, %v6011
        %v6130 = vpack.c.bf16 %v6014, %v6012
        %v6131 = vpack.c.bf16 %v6017, %v6015
        %v6132 = vpack.c.bf16 %v6018, %v6016
        %v6133 = vpack.c.bf16 %v6021, %v6019
        %v6134 = vpack.c.bf16 %v6022, %v6020
        %v6135 = vpack.c.bf16 %v6025, %v6023
        %v6136 = vpack.c.bf16 %v6026, %v6024
        %v6137 = vpack.c.bf16 %v6029, %v6027
        %v6138 = vpack.c.bf16 %v6030, %v6028
        %v6139 = vpack.c.bf16 %v6033, %v6031
        %v6140 = vpack.c.bf16 %v6034, %v6032
        %v6141 = vpack.c.bf16 %v6037, %v6035
        %v6142 = vpack.c.bf16 %v6038, %v6036
        %v6143 = vpack.c.bf16 %v6041, %v6039
        %v6144 = vpack.c.bf16 %v6042, %v6040
        %v6145 = vpack.c.bf16 %v6045, %v6043
        %v6146 = vpack.c.bf16 %v6046, %v6044
        %v6147 = vpack.c.bf16 %v6049, %v6047
        %v6148 = vpack.c.bf16 %v6050, %v6048
        %v6149 = vpack.c.bf16 %v6053, %v6051
        %v6150 = vpack.c.bf16 %v6054, %v6052
        %v6151 = vpack.c.bf16 %v6057, %v6055
        %v6152 = vpack.c.bf16 %v6058, %v6056
        %v6153 = vpack.c.bf16 %v6061, %v6059
        %v6154 = vpack.c.bf16 %v6062, %v6060
        %v6155 = vpack.c.bf16 %v6065, %v6063
        %v6156 = vpack.c.bf16 %v6066, %v6064
        %v6157 = vpack.c.bf16 %v6069, %v6067
        %v6158 = vpack.c.bf16 %v6070, %v6068
        %v6159 = vpack.c.bf16 %v6073, %v6071
        %v6160 = vpack.c.bf16 %v6074, %v6072
        %v6161 = vpack.c.bf16 %v6077, %v6075
        %v6162 = vpack.c.bf16 %v6078, %v6076
        %v6163 = vpack.c.bf16 %v6081, %v6079
        %v6164 = vpack.c.bf16 %v6082, %v6080
        %v6165 = vpack.c.bf16 %v6085, %v6083
        %v6166 = vpack.c.bf16 %v6086, %v6084
        %v6167 = vpack.c.bf16 %v6089, %v6087
        %v6168 = vpack.c.bf16 %v6090, %v6088
        %v6169 = vpack.c.bf16 %v6093, %v6091
        %v6170 = vpack.c.bf16 %v6094, %v6092
        %v6171 = vpack.c.bf16 %v6097, %v6095
        %v6172 = vpack.c.bf16 %v6098, %v6096
        %v6173 = vpack.c.bf16 %v6101, %v6099
        %v6174 = vpack.c.bf16 %v6102, %v6100
        %v6175 = vpack.c.bf16 %v6105, %v6103
        %v6176 = vpack.c.bf16 %v6106, %v6104
        %v6177 = vpack.c.bf16 %v6109, %v6107
        %v6178 = vpack.c.bf16 %v6110, %v6108
        %v6179 = vpack.c.bf16 %v6113, %v6111
        %v6180 = vpack.c.bf16 %v6114, %v6112
        %v6181 = vpack.c.bf16 %v6117, %v6115
        %v6182 = vpack.c.bf16 %v6118, %v6116
        %v6183 = vld [vmem:[#allocation25] sm:$0xff]
        %v6184 = vld [vmem:[#allocation25 + $0x8] sm:$0xff]
        %v6185 = vld [vmem:[#allocation25 + $0x10] sm:$0xff]
        %v6186 = vld [vmem:[#allocation25 + $0x18] sm:$0xff]
        %v6187 = vld [vmem:[#allocation25 + $0x20] sm:$0xff]
        %v6188 = vld [vmem:[#allocation25 + $0x28] sm:$0xff]
        %v6189 = vld [vmem:[#allocation25 + $0x30] sm:$0xff]
        %v6190 = vld [vmem:[#allocation25 + $0x38] sm:$0xff]
        %v6191 = vld [vmem:[#allocation25 + $0x40] sm:$0xff]
        %v6192 = vld [vmem:[#allocation25 + $0x48] sm:$0xff]
        %v6193 = vld [vmem:[#allocation25 + $0x50] sm:$0xff]
        %v6194 = vld [vmem:[#allocation25 + $0x58] sm:$0xff]
        %v6195 = vld [vmem:[#allocation25 + $0x60] sm:$0xff]
        %v6196 = vld [vmem:[#allocation25 + $0x68] sm:$0xff]
        %v6197 = vld [vmem:[#allocation25 + $0x70] sm:$0xff]
        %v6198 = vld [vmem:[#allocation25 + $0x78] sm:$0xff]
        %v6199 = vld [vmem:[#allocation25 + $0x80] sm:$0xff]
        %v6200 = vld [vmem:[#allocation25 + $0x88] sm:$0xff]
        %v6201 = vld [vmem:[#allocation25 + $0x90] sm:$0xff]
        %v6202 = vld [vmem:[#allocation25 + $0x98] sm:$0xff]
        %v6203 = vld [vmem:[#allocation25 + $0xa0] sm:$0xff]
        %v6204 = vld [vmem:[#allocation25 + $0xa8] sm:$0xff]
        %v6205 = vld [vmem:[#allocation25 + $0xb0] sm:$0xff]
        %v6206 = vld [vmem:[#allocation25 + $0xb8] sm:$0xff]
        %v6207 = vld [vmem:[#allocation25 + $0xc0] sm:$0xff]
        %v6208 = vld [vmem:[#allocation25 + $0xc8] sm:$0xff]
        %v6209 = vld [vmem:[#allocation25 + $0xd0] sm:$0xff]
        %v6210 = vld [vmem:[#allocation25 + $0xd8] sm:$0xff]
        %v6211 = vld [vmem:[#allocation25 + $0xe0] sm:$0xff]
        %v6212 = vld [vmem:[#allocation25 + $0xe8] sm:$0xff]
        %v6213 = vld [vmem:[#allocation25 + $0xf0] sm:$0xff]
        %v6214 = vld [vmem:[#allocation25 + $0xf8] sm:$0xff]
        %v6215 = vld [vmem:[#allocation26] sm:$0x3]
        %v6217 = vlaneseq
        %v6218 = vshrl.u32 %v6217, 7
        %v6219 = vsub.s32 0, %v6218
        %v6220 = vrot.slane %v6215, %v6219
        %v6221 = vlaneseq
        %v6222 = vshrl.u32 %v6221, 7
        %v6223 = vsub.s32 1, %v6222
        %v6224 = vrot.slane %v6215, %v6223
        %v6259 = vunpack.c.l.b16 %v6183
        %v6260 = vunpack.c.h.b16 %v6183
        %v6261 = vunpack.c.l.b16 %v6184
        %v6262 = vunpack.c.h.b16 %v6184
        %v6263 = vunpack.c.l.b16 %v6185
        %v6264 = vunpack.c.h.b16 %v6185
        %v6265 = vunpack.c.l.b16 %v6186
        %v6266 = vunpack.c.h.b16 %v6186
        %v6267 = vunpack.c.l.b16 %v6187
        %v6268 = vunpack.c.h.b16 %v6187
        %v6269 = vunpack.c.l.b16 %v6188
        %v6270 = vunpack.c.h.b16 %v6188
        %v6271 = vunpack.c.l.b16 %v6189
        %v6272 = vunpack.c.h.b16 %v6189
        %v6273 = vunpack.c.l.b16 %v6190
        %v6274 = vunpack.c.h.b16 %v6190
        %v6275 = vunpack.c.l.b16 %v6191
        %v6276 = vunpack.c.h.b16 %v6191
        %v6277 = vunpack.c.l.b16 %v6192
        %v6278 = vunpack.c.h.b16 %v6192
        %v6279 = vunpack.c.l.b16 %v6193
        %v6280 = vunpack.c.h.b16 %v6193
        %v6281 = vunpack.c.l.b16 %v6194
        %v6282 = vunpack.c.h.b16 %v6194
        %v6283 = vunpack.c.l.b16 %v6195
        %v6284 = vunpack.c.h.b16 %v6195
        %v6285 = vunpack.c.l.b16 %v6196
        %v6286 = vunpack.c.h.b16 %v6196
        %v6287 = vunpack.c.l.b16 %v6197
        %v6288 = vunpack.c.h.b16 %v6197
        %v6289 = vunpack.c.l.b16 %v6198
        %v6290 = vunpack.c.h.b16 %v6198
        %v6291 = vunpack.c.l.b16 %v6199
        %v6292 = vunpack.c.h.b16 %v6199
        %v6293 = vunpack.c.l.b16 %v6200
        %v6294 = vunpack.c.h.b16 %v6200
        %v6295 = vunpack.c.l.b16 %v6201
        %v6296 = vunpack.c.h.b16 %v6201
        %v6297 = vunpack.c.l.b16 %v6202
        %v6298 = vunpack.c.h.b16 %v6202
        %v6299 = vunpack.c.l.b16 %v6203
        %v6300 = vunpack.c.h.b16 %v6203
        %v6301 = vunpack.c.l.b16 %v6204
        %v6302 = vunpack.c.h.b16 %v6204
        %v6303 = vunpack.c.l.b16 %v6205
        %v6304 = vunpack.c.h.b16 %v6205
        %v6305 = vunpack.c.l.b16 %v6206
        %v6306 = vunpack.c.h.b16 %v6206
        %v6307 = vunpack.c.l.b16 %v6207
        %v6308 = vunpack.c.h.b16 %v6207
        %v6309 = vunpack.c.l.b16 %v6208
        %v6310 = vunpack.c.h.b16 %v6208
        %v6311 = vunpack.c.l.b16 %v6209
        %v6312 = vunpack.c.h.b16 %v6209
        %v6313 = vunpack.c.l.b16 %v6210
        %v6314 = vunpack.c.h.b16 %v6210
        %v6315 = vunpack.c.l.b16 %v6211
        %v6316 = vunpack.c.h.b16 %v6211
        %v6317 = vunpack.c.l.b16 %v6212
        %v6318 = vunpack.c.h.b16 %v6212
        %v6319 = vunpack.c.l.b16 %v6213
        %v6320 = vunpack.c.h.b16 %v6213
        %v6321 = vunpack.c.l.b16 %v6214
        %v6322 = vunpack.c.h.b16 %v6214
        %v6323 = vpack.c.b16 %v6261, %v6259
        %v6324 = vpack.c.b16 %v6262, %v6260
        %v6325 = vpack.c.b16 %v6265, %v6263
        %v6326 = vpack.c.b16 %v6266, %v6264
        %v6327 = vpack.c.b16 %v6269, %v6267
        %v6328 = vpack.c.b16 %v6270, %v6268
        %v6329 = vpack.c.b16 %v6273, %v6271
        %v6330 = vpack.c.b16 %v6274, %v6272
        %v6331 = vpack.c.b16 %v6277, %v6275
        %v6332 = vpack.c.b16 %v6278, %v6276
        %v6333 = vpack.c.b16 %v6281, %v6279
        %v6334 = vpack.c.b16 %v6282, %v6280
        %v6335 = vpack.c.b16 %v6285, %v6283
        %v6336 = vpack.c.b16 %v6286, %v6284
        %v6337 = vpack.c.b16 %v6289, %v6287
        %v6338 = vpack.c.b16 %v6290, %v6288
        %v6339 = vpack.c.b16 %v6293, %v6291
        %v6340 = vpack.c.b16 %v6294, %v6292
        %v6341 = vpack.c.b16 %v6297, %v6295
        %v6342 = vpack.c.b16 %v6298, %v6296
        %v6343 = vpack.c.b16 %v6301, %v6299
        %v6344 = vpack.c.b16 %v6302, %v6300
        %v6345 = vpack.c.b16 %v6305, %v6303
        %v6346 = vpack.c.b16 %v6306, %v6304
        %v6347 = vpack.c.b16 %v6309, %v6307
        %v6348 = vpack.c.b16 %v6310, %v6308
        %v6349 = vpack.c.b16 %v6313, %v6311
        %v6350 = vpack.c.b16 %v6314, %v6312
        %v6351 = vpack.c.b16 %v6317, %v6315
        %v6352 = vpack.c.b16 %v6318, %v6316
        %v6353 = vpack.c.b16 %v6321, %v6319
        %v6354 = vpack.c.b16 %v6322, %v6320
        %6387 = vmatprep.subr.bf16.mxu0 %v6324
        %6388 = vmatpush1.bf16.msra.mxu0 %v6323
        %6389 = vmatprep.subr.bf16.mxu0 %v6326
        %6390 = vmatpush1.bf16.msra.mxu0 %v6325
        %6391 = vmatprep.subr.bf16.mxu0 %v6328
        %6392 = vmatpush1.bf16.msra.mxu0 %v6327
        %6393 = vmatprep.subr.bf16.mxu0 %v6330
        %6394 = vmatpush1.bf16.msra.mxu0 %v6329
        %6395 = vmatprep.subr.bf16.mxu0 %v6332
        %6396 = vmatpush1.bf16.msra.mxu0 %v6331
        %6397 = vmatprep.subr.bf16.mxu0 %v6334
        %6398 = vmatpush1.bf16.msra.mxu0 %v6333
        %6399 = vmatprep.subr.bf16.mxu0 %v6336
        %6400 = vmatpush1.bf16.msra.mxu0 %v6335
        %6401 = vmatprep.subr.bf16.mxu0 %v6338
        %6402 = vmatpush1.bf16.msra.mxu0 %v6337
        %6403 = vmatprep.subr.bf16.mxu0 %v6340
        %6404 = vmatpush1.bf16.msra.mxu0 %v6339
        %6405 = vmatprep.subr.bf16.mxu0 %v6342
        %6406 = vmatpush1.bf16.msra.mxu0 %v6341
        %6407 = vmatprep.subr.bf16.mxu0 %v6344
        %6408 = vmatpush1.bf16.msra.mxu0 %v6343
        %6409 = vmatprep.subr.bf16.mxu0 %v6346
        %6410 = vmatpush1.bf16.msra.mxu0 %v6345
        %6411 = vmatprep.subr.bf16.mxu0 %v6348
        %6412 = vmatpush1.bf16.msra.mxu0 %v6347
        %6413 = vmatprep.subr.bf16.mxu0 %v6350
        %6414 = vmatpush1.bf16.msra.mxu0 %v6349
        %6415 = vmatprep.subr.bf16.mxu0 %v6352
        %6416 = vmatpush1.bf16.msra.mxu0 %v6351
        %6417 = vmatprep.subr.bf16.mxu0 %v6354
        %6418 = vmatpush1.bf16.msra.mxu0 %v6353
        %6419 = vmatprep.mubr.bf16.mxu0 %v6120
        %6420 = vmatmul.mubr.bf16.gmra.mrb[0].mxu0 %v6119
        %v6421 = vpop.f32.mrb[0].mxu0
        %v6422 = vadd.f32 %v6220, %v6421
        %v6423 = vpop.f32.mrb[0].mxu0
        %v6424 = vadd.f32 %v6224, %v6423
        %v6425 = vpop.f32.mrb[0].mxu0
        %v6426 = vadd.f32 %v6220, %v6425
        %v6427 = vpop.f32.mrb[0].mxu0
        %v6428 = vadd.f32 %v6224, %v6427
        %6429 = vmatprep.mubr.bf16.mxu0 %v6122
        %6430 = vmatmul.mubr.bf16.gmra.mrb[0].mxu0 %v6121
        %v6431 = vpop.f32.mrb[0].mxu0
        %v6432 = vadd.f32 %v6220, %v6431
        %v6433 = vpop.f32.mrb[0].mxu0
        %v6434 = vadd.f32 %v6224, %v6433
        %v6435 = vpop.f32.mrb[0].mxu0
        %v6436 = vadd.f32 %v6220, %v6435
        %v6437 = vpop.f32.mrb[0].mxu0
        %v6438 = vadd.f32 %v6224, %v6437
        %6439 = vmatprep.mubr.bf16.mxu0 %v6124
        %6440 = vmatmul.mubr.bf16.gmra.mrb[0].mxu0 %v6123
        %v6441 = vpop.f32.mrb[0].mxu0
        %v6442 = vadd.f32 %v6220, %v6441
        %v6443 = vpop.f32.mrb[0].mxu0
        %v6444 = vadd.f32 %v6224, %v6443
        %v6445 = vpop.f32.mrb[0].mxu0
        %v6446 = vadd.f32 %v6220, %v6445
        %v6447 = vpop.f32.mrb[0].mxu0
        %v6448 = vadd.f32 %v6224, %v6447
        %6449 = vmatprep.mubr.bf16.mxu0 %v6126
        %6450 = vmatmul.mubr.bf16.gmra.mrb[0].mxu0 %v6125
        %v6451 = vpop.f32.mrb[0].mxu0
        %v6452 = vadd.f32 %v6220, %v6451
        %v6453 = vpop.f32.mrb[0].mxu0
        %v6454 = vadd.f32 %v6224, %v6453
        %v6455 = vpop.f32.mrb[0].mxu0
        %v6456 = vadd.f32 %v6220, %v6455
        %v6457 = vpop.f32.mrb[0].mxu0
        %v6458 = vadd.f32 %v6224, %v6457
        %6459 = vmatprep.mubr.bf16.mxu0 %v6128
        %6460 = vmatmul.mubr.bf16.gmra.mrb[0].mxu0 %v6127
        %v6461 = vpop.f32.mrb[0].mxu0
        %v6462 = vadd.f32 %v6220, %v6461
        %v6463 = vpop.f32.mrb[0].mxu0
        %v6464 = vadd.f32 %v6224, %v6463
        %v6465 = vpop.f32.mrb[0].mxu0
        %v6466 = vadd.f32 %v6220, %v6465
        %v6467 = vpop.f32.mrb[0].mxu0
        %v6468 = vadd.f32 %v6224, %v6467
        %6469 = vmatprep.mubr.bf16.mxu0 %v6130
        %6470 = vmatmul.mubr.bf16.gmra.mrb[0].mxu0 %v6129
        %v6471 = vpop.f32.mrb[0].mxu0
        %v6472 = vadd.f32 %v6220, %v6471
        %v6473 = vpop.f32.mrb[0].mxu0
        %v6474 = vadd.f32 %v6224, %v6473
        %v6475 = vpop.f32.mrb[0].mxu0
        %v6476 = vadd.f32 %v6220, %v6475
        %v6477 = vpop.f32.mrb[0].mxu0
        %v6478 = vadd.f32 %v6224, %v6477
        %6479 = vmatprep.mubr.bf16.mxu0 %v6132
        %6480 = vmatmul.mubr.bf16.gmra.mrb[0].mxu0 %v6131
        %v6481 = vpop.f32.mrb[0].mxu0
        %v6482 = vadd.f32 %v6220, %v6481
        %v6483 = vpop.f32.mrb[0].mxu0
        %v6484 = vadd.f32 %v6224, %v6483
        %v6485 = vpop.f32.mrb[0].mxu0
        %v6486 = vadd.f32 %v6220, %v6485
        %v6487 = vpop.f32.mrb[0].mxu0
        %v6488 = vadd.f32 %v6224, %v6487
        %6489 = vmatprep.mubr.bf16.mxu0 %v6134
        %6490 = vmatmul.mubr.bf16.gmra.mrb[0].mxu0 %v6133
        %v6491 = vpop.f32.mrb[0].mxu0
        %v6492 = vadd.f32 %v6220, %v6491
        %v6493 = vpop.f32.mrb[0].mxu0
        %v6494 = vadd.f32 %v6224, %v6493
        %v6495 = vpop.f32.mrb[0].mxu0
        %v6496 = vadd.f32 %v6220, %v6495
        %v6497 = vpop.f32.mrb[0].mxu0
        %v6498 = vadd.f32 %v6224, %v6497
        %6499 = vmatprep.mubr.bf16.mxu0 %v6136
        %6500 = vmatmul.mubr.bf16.gmra.mrb[0].mxu0 %v6135
        %v6501 = vpop.f32.mrb[0].mxu0
        %v6502 = vadd.f32 %v6220, %v6501
        %v6503 = vpop.f32.mrb[0].mxu0
        %v6504 = vadd.f32 %v6224, %v6503
        %v6505 = vpop.f32.mrb[0].mxu0
        %v6506 = vadd.f32 %v6220, %v6505
        %v6507 = vpop.f32.mrb[0].mxu0
        %v6508 = vadd.f32 %v6224, %v6507
        %6509 = vmatprep.mubr.bf16.mxu0 %v6138
        %6510 = vmatmul.mubr.bf16.gmra.mrb[0].mxu0 %v6137
        %v6511 = vpop.f32.mrb[0].mxu0
        %v6512 = vadd.f32 %v6220, %v6511
        %v6513 = vpop.f32.mrb[0].mxu0
        %v6514 = vadd.f32 %v6224, %v6513
        %v6515 = vpop.f32.mrb[0].mxu0
        %v6516 = vadd.f32 %v6220, %v6515
        %v6517 = vpop.f32.mrb[0].mxu0
        %v6518 = vadd.f32 %v6224, %v6517
        %6519 = vmatprep.mubr.bf16.mxu0 %v6140
        %6520 = vmatmul.mubr.bf16.gmra.mrb[0].mxu0 %v6139
        %v6521 = vpop.f32.mrb[0].mxu0
        %v6522 = vadd.f32 %v6220, %v6521
        %v6523 = vpop.f32.mrb[0].mxu0
        %v6524 = vadd.f32 %v6224, %v6523
        %v6525 = vpop.f32.mrb[0].mxu0
        %v6526 = vadd.f32 %v6220, %v6525
        %v6527 = vpop.f32.mrb[0].mxu0
        %v6528 = vadd.f32 %v6224, %v6527
        %6529 = vmatprep.mubr.bf16.mxu0 %v6142
        %6530 = vmatmul.mubr.bf16.gmra.mrb[0].mxu0 %v6141
        %v6531 = vpop.f32.mrb[0].mxu0
        %v6532 = vadd.f32 %v6220, %v6531
        %v6533 = vpop.f32.mrb[0].mxu0
        %v6534 = vadd.f32 %v6224, %v6533
        %v6535 = vpop.f32.mrb[0].mxu0
        %v6536 = vadd.f32 %v6220, %v6535
        %v6537 = vpop.f32.mrb[0].mxu0
        %v6538 = vadd.f32 %v6224, %v6537
        %6539 = vmatprep.mubr.bf16.mxu0 %v6144
        %6540 = vmatmul.mubr.bf16.gmra.mrb[0].mxu0 %v6143
        %v6541 = vpop.f32.mrb[0].mxu0
        %v6542 = vadd.f32 %v6220, %v6541
        %v6543 = vpop.f32.mrb[0].mxu0
        %v6544 = vadd.f32 %v6224, %v6543
        %v6545 = vpop.f32.mrb[0].mxu0
        %v6546 = vadd.f32 %v6220, %v6545
        %v6547 = vpop.f32.mrb[0].mxu0
        %v6548 = vadd.f32 %v6224, %v6547
        %6549 = vmatprep.mubr.bf16.mxu0 %v6146
        %6550 = vmatmul.mubr.bf16.gmra.mrb[0].mxu0 %v6145
        %v6551 = vpop.f32.mrb[0].mxu0
        %v6552 = vadd.f32 %v6220, %v6551
        %v6553 = vpop.f32.mrb[0].mxu0
        %v6554 = vadd.f32 %v6224, %v6553
        %v6555 = vpop.f32.mrb[0].mxu0
        %v6556 = vadd.f32 %v6220, %v6555
        %v6557 = vpop.f32.mrb[0].mxu0
        %v6558 = vadd.f32 %v6224, %v6557
        %6559 = vmatprep.mubr.bf16.mxu0 %v6148
        %6560 = vmatmul.mubr.bf16.gmra.mrb[0].mxu0 %v6147
        %v6561 = vpop.f32.mrb[0].mxu0
        %v6562 = vadd.f32 %v6220, %v6561
        %v6563 = vpop.f32.mrb[0].mxu0
        %v6564 = vadd.f32 %v6224, %v6563
        %v6565 = vpop.f32.mrb[0].mxu0
        %v6566 = vadd.f32 %v6220, %v6565
        %v6567 = vpop.f32.mrb[0].mxu0
        %v6568 = vadd.f32 %v6224, %v6567
        %6569 = vmatprep.mubr.bf16.mxu0 %v6150
        %6570 = vmatmul.mubr.bf16.gmra.mrb[0].mxu0 %v6149
        %v6571 = vpop.f32.mrb[0].mxu0
        %v6572 = vadd.f32 %v6220, %v6571
        %v6573 = vpop.f32.mrb[0].mxu0
        %v6574 = vadd.f32 %v6224, %v6573
        %v6575 = vpop.f32.mrb[0].mxu0
        %v6576 = vadd.f32 %v6220, %v6575
        %v6577 = vpop.f32.mrb[0].mxu0
        %v6578 = vadd.f32 %v6224, %v6577
        %6579 = vmatprep.mubr.bf16.mxu0 %v6152
        %6580 = vmatmul.mubr.bf16.gmra.mrb[0].mxu0 %v6151
        %v6581 = vpop.f32.mrb[0].mxu0
        %v6582 = vadd.f32 %v6220, %v6581
        %v6583 = vpop.f32.mrb[0].mxu0
        %v6584 = vadd.f32 %v6224, %v6583
        %v6585 = vpop.f32.mrb[0].mxu0
        %v6586 = vadd.f32 %v6220, %v6585
        %v6587 = vpop.f32.mrb[0].mxu0
        %v6588 = vadd.f32 %v6224, %v6587
        %6589 = vmatprep.mubr.bf16.mxu0 %v6154
        %6590 = vmatmul.mubr.bf16.gmra.mrb[0].mxu0 %v6153
        %v6591 = vpop.f32.mrb[0].mxu0
        %v6592 = vadd.f32 %v6220, %v6591
        %v6593 = vpop.f32.mrb[0].mxu0
        %v6594 = vadd.f32 %v6224, %v6593
        %v6595 = vpop.f32.mrb[0].mxu0
        %v6596 = vadd.f32 %v6220, %v6595
        %v6597 = vpop.f32.mrb[0].mxu0
        %v6598 = vadd.f32 %v6224, %v6597
        %6599 = vmatprep.mubr.bf16.mxu0 %v6156
        %6600 = vmatmul.mubr.bf16.gmra.mrb[0].mxu0 %v6155
        %v6601 = vpop.f32.mrb[0].mxu0
        %v6602 = vadd.f32 %v6220, %v6601
        %v6603 = vpop.f32.mrb[0].mxu0
        %v6604 = vadd.f32 %v6224, %v6603
        %v6605 = vpop.f32.mrb[0].mxu0
        %v6606 = vadd.f32 %v6220, %v6605
        %v6607 = vpop.f32.mrb[0].mxu0
        %v6608 = vadd.f32 %v6224, %v6607
        %6609 = vmatprep.mubr.bf16.mxu0 %v6158
        %6610 = vmatmul.mubr.bf16.gmra.mrb[0].mxu0 %v6157
        %v6611 = vpop.f32.mrb[0].mxu0
        %v6612 = vadd.f32 %v6220, %v6611
        %v6613 = vpop.f32.mrb[0].mxu0
        %v6614 = vadd.f32 %v6224, %v6613
        %v6615 = vpop.f32.mrb[0].mxu0
        %v6616 = vadd.f32 %v6220, %v6615
        %v6617 = vpop.f32.mrb[0].mxu0
        %v6618 = vadd.f32 %v6224, %v6617
        %6619 = vmatprep.mubr.bf16.mxu0 %v6160
        %6620 = vmatmul.mubr.bf16.gmra.mrb[0].mxu0 %v6159
        %v6621 = vpop.f32.mrb[0].mxu0
        %v6622 = vadd.f32 %v6220, %v6621
        %v6623 = vpop.f32.mrb[0].mxu0
        %v6624 = vadd.f32 %v6224, %v6623
        %v6625 = vpop.f32.mrb[0].mxu0
        %v6626 = vadd.f32 %v6220, %v6625
        %v6627 = vpop.f32.mrb[0].mxu0
        %v6628 = vadd.f32 %v6224, %v6627
        %6629 = vmatprep.mubr.bf16.mxu0 %v6162
        %6630 = vmatmul.mubr.bf16.gmra.mrb[0].mxu0 %v6161
        %v6631 = vpop.f32.mrb[0].mxu0
        %v6632 = vadd.f32 %v6220, %v6631
        %v6633 = vpop.f32.mrb[0].mxu0
        %v6634 = vadd.f32 %v6224, %v6633
        %v6635 = vpop.f32.mrb[0].mxu0
        %v6636 = vadd.f32 %v6220, %v6635
        %v6637 = vpop.f32.mrb[0].mxu0
        %v6638 = vadd.f32 %v6224, %v6637
        %6639 = vmatprep.mubr.bf16.mxu0 %v6164
        %6640 = vmatmul.mubr.bf16.gmra.mrb[0].mxu0 %v6163
        %v6641 = vpop.f32.mrb[0].mxu0
        %v6642 = vadd.f32 %v6220, %v6641
        %v6643 = vpop.f32.mrb[0].mxu0
        %v6644 = vadd.f32 %v6224, %v6643
        %v6645 = vpop.f32.mrb[0].mxu0
        %v6646 = vadd.f32 %v6220, %v6645
        %v6647 = vpop.f32.mrb[0].mxu0
        %v6648 = vadd.f32 %v6224, %v6647
        %6649 = vmatprep.mubr.bf16.mxu0 %v6166
        %6650 = vmatmul.mubr.bf16.gmra.mrb[0].mxu0 %v6165
        %v6651 = vpop.f32.mrb[0].mxu0
        %v6652 = vadd.f32 %v6220, %v6651
        %v6653 = vpop.f32.mrb[0].mxu0
        %v6654 = vadd.f32 %v6224, %v6653
        %v6655 = vpop.f32.mrb[0].mxu0
        %v6656 = vadd.f32 %v6220, %v6655
        %v6657 = vpop.f32.mrb[0].mxu0
        %v6658 = vadd.f32 %v6224, %v6657
        %6659 = vmatprep.mubr.bf16.mxu0 %v6168
        %6660 = vmatmul.mubr.bf16.gmra.mrb[0].mxu0 %v6167
        %v6661 = vpop.f32.mrb[0].mxu0
        %v6662 = vadd.f32 %v6220, %v6661
        %v6663 = vpop.f32.mrb[0].mxu0
        %v6664 = vadd.f32 %v6224, %v6663
        %v6665 = vpop.f32.mrb[0].mxu0
        %v6666 = vadd.f32 %v6220, %v6665
        %v6667 = vpop.f32.mrb[0].mxu0
        %v6668 = vadd.f32 %v6224, %v6667
        %6669 = vmatprep.mubr.bf16.mxu0 %v6170
        %6670 = vmatmul.mubr.bf16.gmra.mrb[0].mxu0 %v6169
        %v6671 = vpop.f32.mrb[0].mxu0
        %v6672 = vadd.f32 %v6220, %v6671
        %v6673 = vpop.f32.mrb[0].mxu0
        %v6674 = vadd.f32 %v6224, %v6673
        %v6675 = vpop.f32.mrb[0].mxu0
        %v6676 = vadd.f32 %v6220, %v6675
        %v6677 = vpop.f32.mrb[0].mxu0
        %v6678 = vadd.f32 %v6224, %v6677
        %6679 = vmatprep.mubr.bf16.mxu0 %v6172
        %6680 = vmatmul.mubr.bf16.gmra.mrb[0].mxu0 %v6171
        %v6681 = vpop.f32.mrb[0].mxu0
        %v6682 = vadd.f32 %v6220, %v6681
        %v6683 = vpop.f32.mrb[0].mxu0
        %v6684 = vadd.f32 %v6224, %v6683
        %v6685 = vpop.f32.mrb[0].mxu0
        %v6686 = vadd.f32 %v6220, %v6685
        %v6687 = vpop.f32.mrb[0].mxu0
        %v6688 = vadd.f32 %v6224, %v6687
        %6689 = vmatprep.mubr.bf16.mxu0 %v6174
        %6690 = vmatmul.mubr.bf16.gmra.mrb[0].mxu0 %v6173
        %v6691 = vpop.f32.mrb[0].mxu0
        %v6692 = vadd.f32 %v6220, %v6691
        %v6693 = vpop.f32.mrb[0].mxu0
        %v6694 = vadd.f32 %v6224, %v6693
        %v6695 = vpop.f32.mrb[0].mxu0
        %v6696 = vadd.f32 %v6220, %v6695
        %v6697 = vpop.f32.mrb[0].mxu0
        %v6698 = vadd.f32 %v6224, %v6697
        %6699 = vmatprep.mubr.bf16.mxu0 %v6176
        %6700 = vmatmul.mubr.bf16.gmra.mrb[0].mxu0 %v6175
        %v6701 = vpop.f32.mrb[0].mxu0
        %v6702 = vadd.f32 %v6220, %v6701
        %v6703 = vpop.f32.mrb[0].mxu0
        %v6704 = vadd.f32 %v6224, %v6703
        %v6705 = vpop.f32.mrb[0].mxu0
        %v6706 = vadd.f32 %v6220, %v6705
        %v6707 = vpop.f32.mrb[0].mxu0
        %v6708 = vadd.f32 %v6224, %v6707
        %6709 = vmatprep.mubr.bf16.mxu0 %v6178
        %6710 = vmatmul.mubr.bf16.gmra.mrb[0].mxu0 %v6177
        %v6711 = vpop.f32.mrb[0].mxu0
        %v6712 = vadd.f32 %v6220, %v6711
        %v6713 = vpop.f32.mrb[0].mxu0
        %v6714 = vadd.f32 %v6224, %v6713
        %v6715 = vpop.f32.mrb[0].mxu0
        %v6716 = vadd.f32 %v6220, %v6715
        %v6717 = vpop.f32.mrb[0].mxu0
        %v6718 = vadd.f32 %v6224, %v6717
        %6719 = vmatprep.mubr.bf16.mxu0 %v6180
        %6720 = vmatmul.mubr.bf16.gmra.mrb[0].mxu0 %v6179
        %v6721 = vpop.f32.mrb[0].mxu0
        %v6722 = vadd.f32 %v6220, %v6721
        %v6723 = vpop.f32.mrb[0].mxu0
        %v6724 = vadd.f32 %v6224, %v6723
        %v6725 = vpop.f32.mrb[0].mxu0
        %v6726 = vadd.f32 %v6220, %v6725
        %v6727 = vpop.f32.mrb[0].mxu0
        %v6728 = vadd.f32 %v6224, %v6727
        %6729 = vmatprep.mubr.bf16.mxu0 %v6182
        %6730 = vmatmul.mubr.bf16.gmra.mrb[0].mxu0 %v6181
        %v6731 = vpop.f32.mrb[0].mxu0
        %v6732 = vadd.f32 %v6220, %v6731
        %v6733 = vpop.f32.mrb[0].mxu0
        %v6734 = vadd.f32 %v6224, %v6733
        %v6735 = vpop.f32.mrb[0].mxu0
        %v6736 = vadd.f32 %v6220, %v6735
        %v6737 = vpop.f32.mrb[0].mxu0
        %v6738 = vadd.f32 %v6224, %v6737
        %6739 = vdwg.mxu0
        %v6740 = vmax.f32 %v6422, 0.0
        %v6741 = vmax.f32 %v6424, 0.0
        %v6742 = vmax.f32 %v6426, 0.0
        %v6743 = vmax.f32 %v6428, 0.0
        %v6744 = vmax.f32 %v6432, 0.0
        %v6745 = vmax.f32 %v6434, 0.0
        %v6746 = vmax.f32 %v6436, 0.0
        %v6747 = vmax.f32 %v6438, 0.0
        %v6748 = vmax.f32 %v6442, 0.0
        %v6749 = vmax.f32 %v6444, 0.0
        %v6750 = vmax.f32 %v6446, 0.0
        %v6751 = vmax.f32 %v6448, 0.0
        %v6752 = vmax.f32 %v6452, 0.0
        %v6753 = vmax.f32 %v6454, 0.0
        %v6754 = vmax.f32 %v6456, 0.0
        %v6755 = vmax.f32 %v6458, 0.0
        %v6756 = vmax.f32 %v6462, 0.0
        %v6757 = vmax.f32 %v6464, 0.0
        %v6758 = vmax.f32 %v6466, 0.0
        %v6759 = vmax.f32 %v6468, 0.0
        %v6760 = vmax.f32 %v6472, 0.0
        %v6761 = vmax.f32 %v6474, 0.0
        %v6762 = vmax.f32 %v6476, 0.0
        %v6763 = vmax.f32 %v6478, 0.0
        %v6764 = vmax.f32 %v6482, 0.0
        %v6765 = vmax.f32 %v6484, 0.0
        %v6766 = vmax.f32 %v6486, 0.0
        %v6767 = vmax.f32 %v6488, 0.0
        %v6768 = vmax.f32 %v6492, 0.0
        %v6769 = vmax.f32 %v6494, 0.0
        %v6770 = vmax.f32 %v6496, 0.0
        %v6771 = vmax.f32 %v6498, 0.0
        %v6772 = vmax.f32 %v6502, 0.0
        %v6773 = vmax.f32 %v6504, 0.0
        %v6774 = vmax.f32 %v6506, 0.0
        %v6775 = vmax.f32 %v6508, 0.0
        %v6776 = vmax.f32 %v6512, 0.0
        %v6777 = vmax.f32 %v6514, 0.0
        %v6778 = vmax.f32 %v6516, 0.0
        %v6779 = vmax.f32 %v6518, 0.0
        %v6780 = vmax.f32 %v6522, 0.0
        %v6781 = vmax.f32 %v6524, 0.0
        %v6782 = vmax.f32 %v6526, 0.0
        %v6783 = vmax.f32 %v6528, 0.0
        %v6784 = vmax.f32 %v6532, 0.0
        %v6785 = vmax.f32 %v6534, 0.0
        %v6786 = vmax.f32 %v6536, 0.0
        %v6787 = vmax.f32 %v6538, 0.0
        %v6788 = vmax.f32 %v6542, 0.0
        %v6789 = vmax.f32 %v6544, 0.0
        %v6790 = vmax.f32 %v6546, 0.0
        %v6791 = vmax.f32 %v6548, 0.0
        %v6792 = vmax.f32 %v6552, 0.0
        %v6793 = vmax.f32 %v6554, 0.0
        %v6794 = vmax.f32 %v6556, 0.0
        %v6795 = vmax.f32 %v6558, 0.0
        %v6796 = vmax.f32 %v6562, 0.0
        %v6797 = vmax.f32 %v6564, 0.0
        %v6798 = vmax.f32 %v6566, 0.0
        %v6799 = vmax.f32 %v6568, 0.0
        %v6800 = vmax.f32 %v6572, 0.0
        %v6801 = vmax.f32 %v6574, 0.0
        %v6802 = vmax.f32 %v6576, 0.0
        %v6803 = vmax.f32 %v6578, 0.0
        %v6804 = vmax.f32 %v6582, 0.0
        %v6805 = vmax.f32 %v6584, 0.0
        %v6806 = vmax.f32 %v6586, 0.0
        %v6807 = vmax.f32 %v6588, 0.0
        %v6808 = vmax.f32 %v6592, 0.0
        %v6809 = vmax.f32 %v6594, 0.0
        %v6810 = vmax.f32 %v6596, 0.0
        %v6811 = vmax.f32 %v6598, 0.0
        %v6812 = vmax.f32 %v6602, 0.0
        %v6813 = vmax.f32 %v6604, 0.0
        %v6814 = vmax.f32 %v6606, 0.0
        %v6815 = vmax.f32 %v6608, 0.0
        %v6816 = vmax.f32 %v6612, 0.0
        %v6817 = vmax.f32 %v6614, 0.0
        %v6818 = vmax.f32 %v6616, 0.0
        %v6819 = vmax.f32 %v6618, 0.0
        %v6820 = vmax.f32 %v6622, 0.0
        %v6821 = vmax.f32 %v6624, 0.0
        %v6822 = vmax.f32 %v6626, 0.0
        %v6823 = vmax.f32 %v6628, 0.0
        %v6824 = vmax.f32 %v6632, 0.0
        %v6825 = vmax.f32 %v6634, 0.0
        %v6826 = vmax.f32 %v6636, 0.0
        %v6827 = vmax.f32 %v6638, 0.0
        %v6828 = vmax.f32 %v6642, 0.0
        %v6829 = vmax.f32 %v6644, 0.0
        %v6830 = vmax.f32 %v6646, 0.0
        %v6831 = vmax.f32 %v6648, 0.0
        %v6832 = vmax.f32 %v6652, 0.0
        %v6833 = vmax.f32 %v6654, 0.0
        %v6834 = vmax.f32 %v6656, 0.0
        %v6835 = vmax.f32 %v6658, 0.0
        %v6836 = vmax.f32 %v6662, 0.0
        %v6837 = vmax.f32 %v6664, 0.0
        %v6838 = vmax.f32 %v6666, 0.0
        %v6839 = vmax.f32 %v6668, 0.0
        %v6840 = vmax.f32 %v6672, 0.0
        %v6841 = vmax.f32 %v6674, 0.0
        %v6842 = vmax.f32 %v6676, 0.0
        %v6843 = vmax.f32 %v6678, 0.0
        %v6844 = vmax.f32 %v6682, 0.0
        %v6845 = vmax.f32 %v6684, 0.0
        %v6846 = vmax.f32 %v6686, 0.0
        %v6847 = vmax.f32 %v6688, 0.0
        %v6848 = vmax.f32 %v6692, 0.0
        %v6849 = vmax.f32 %v6694, 0.0
        %v6850 = vmax.f32 %v6696, 0.0
        %v6851 = vmax.f32 %v6698, 0.0
        %v6852 = vmax.f32 %v6702, 0.0
        %v6853 = vmax.f32 %v6704, 0.0
        %v6854 = vmax.f32 %v6706, 0.0
        %v6855 = vmax.f32 %v6708, 0.0
        %v6856 = vmax.f32 %v6712, 0.0
        %v6857 = vmax.f32 %v6714, 0.0
        %v6858 = vmax.f32 %v6716, 0.0
        %v6859 = vmax.f32 %v6718, 0.0
        %v6860 = vmax.f32 %v6722, 0.0
        %v6861 = vmax.f32 %v6724, 0.0
        %v6862 = vmax.f32 %v6726, 0.0
        %v6863 = vmax.f32 %v6728, 0.0
        %v6864 = vmax.f32 %v6732, 0.0
        %v6865 = vmax.f32 %v6734, 0.0
        %v6866 = vmax.f32 %v6736, 0.0
        %v6867 = vmax.f32 %v6738, 0.0
        %v6868 = vpack.c.bf16 %v6742, %v6740
        %v6869 = vpack.c.bf16 %v6743, %v6741
        %v6870 = vpack.c.bf16 %v6746, %v6744
        %v6871 = vpack.c.bf16 %v6747, %v6745
        %v6872 = vpack.c.bf16 %v6750, %v6748
        %v6873 = vpack.c.bf16 %v6751, %v6749
        %v6874 = vpack.c.bf16 %v6754, %v6752
        %v6875 = vpack.c.bf16 %v6755, %v6753
        %v6876 = vpack.c.bf16 %v6758, %v6756
        %v6877 = vpack.c.bf16 %v6759, %v6757
        %v6878 = vpack.c.bf16 %v6762, %v6760
        %v6879 = vpack.c.bf16 %v6763, %v6761
        %v6880 = vpack.c.bf16 %v6766, %v6764
        %v6881 = vpack.c.bf16 %v6767, %v6765
        %v6882 = vpack.c.bf16 %v6770, %v6768
        %v6883 = vpack.c.bf16 %v6771, %v6769
        %v6884 = vpack.c.bf16 %v6774, %v6772
        %v6885 = vpack.c.bf16 %v6775, %v6773
        %v6886 = vpack.c.bf16 %v6778, %v6776
        %v6887 = vpack.c.bf16 %v6779, %v6777
        %v6888 = vpack.c.bf16 %v6782, %v6780
        %v6889 = vpack.c.bf16 %v6783, %v6781
        %v6890 = vpack.c.bf16 %v6786, %v6784
        %v6891 = vpack.c.bf16 %v6787, %v6785
        %v6892 = vpack.c.bf16 %v6790, %v6788
        %v6893 = vpack.c.bf16 %v6791, %v6789
        %v6894 = vpack.c.bf16 %v6794, %v6792
        %v6895 = vpack.c.bf16 %v6795, %v6793
        %v6896 = vpack.c.bf16 %v6798, %v6796
        %v6897 = vpack.c.bf16 %v6799, %v6797
        %v6898 = vpack.c.bf16 %v6802, %v6800
        %v6899 = vpack.c.bf16 %v6803, %v6801
        %v6900 = vpack.c.bf16 %v6806, %v6804
        %v6901 = vpack.c.bf16 %v6807, %v6805
        %v6902 = vpack.c.bf16 %v6810, %v6808
        %v6903 = vpack.c.bf16 %v6811, %v6809
        %v6904 = vpack.c.bf16 %v6814, %v6812
        %v6905 = vpack.c.bf16 %v6815, %v6813
        %v6906 = vpack.c.bf16 %v6818, %v6816
        %v6907 = vpack.c.bf16 %v6819, %v6817
        %v6908 = vpack.c.bf16 %v6822, %v6820
        %v6909 = vpack.c.bf16 %v6823, %v6821
        %v6910 = vpack.c.bf16 %v6826, %v6824
        %v6911 = vpack.c.bf16 %v6827, %v6825
        %v6912 = vpack.c.bf16 %v6830, %v6828
        %v6913 = vpack.c.bf16 %v6831, %v6829
        %v6914 = vpack.c.bf16 %v6834, %v6832
        %v6915 = vpack.c.bf16 %v6835, %v6833
        %v6916 = vpack.c.bf16 %v6838, %v6836
        %v6917 = vpack.c.bf16 %v6839, %v6837
        %v6918 = vpack.c.bf16 %v6842, %v6840
        %v6919 = vpack.c.bf16 %v6843, %v6841
        %v6920 = vpack.c.bf16 %v6846, %v6844
        %v6921 = vpack.c.bf16 %v6847, %v6845
        %v6922 = vpack.c.bf16 %v6850, %v6848
        %v6923 = vpack.c.bf16 %v6851, %v6849
        %v6924 = vpack.c.bf16 %v6854, %v6852
        %v6925 = vpack.c.bf16 %v6855, %v6853
        %v6926 = vpack.c.bf16 %v6858, %v6856
        %v6927 = vpack.c.bf16 %v6859, %v6857
        %v6928 = vpack.c.bf16 %v6862, %v6860
        %v6929 = vpack.c.bf16 %v6863, %v6861
        %v6930 = vpack.c.bf16 %v6866, %v6864
        %v6931 = vpack.c.bf16 %v6867, %v6865
        %v6932 = vld [vmem:[#allocation28] sm:$0xff]
        %v6933 = vld [vmem:[#allocation28 + $0x8] sm:$0xff]
        %v6934 = vld [vmem:[#allocation28 + $0x10] sm:$0xff]
        %v6935 = vld [vmem:[#allocation28 + $0x18] sm:$0xff]
        %v6936 = vld [vmem:[#allocation28 + $0x20] sm:$0xff]
        %v6937 = vld [vmem:[#allocation28 + $0x28] sm:$0xff]
        %v6938 = vld [vmem:[#allocation28 + $0x30] sm:$0xff]
        %v6939 = vld [vmem:[#allocation28 + $0x38] sm:$0xff]
        %v6940 = vld [vmem:[#allocation28 + $0x40] sm:$0xff]
        %v6941 = vld [vmem:[#allocation28 + $0x48] sm:$0xff]
        %v6942 = vld [vmem:[#allocation28 + $0x50] sm:$0xff]
        %v6943 = vld [vmem:[#allocation28 + $0x58] sm:$0xff]
        %v6944 = vld [vmem:[#allocation28 + $0x60] sm:$0xff]
        %v6945 = vld [vmem:[#allocation28 + $0x68] sm:$0xff]
        %v6946 = vld [vmem:[#allocation28 + $0x70] sm:$0xff]
        %v6947 = vld [vmem:[#allocation28 + $0x78] sm:$0xff]
        %v6948 = vld [vmem:[#allocation28 + $0x80] sm:$0xff]
        %v6949 = vld [vmem:[#allocation28 + $0x88] sm:$0xff]
        %v6950 = vld [vmem:[#allocation28 + $0x90] sm:$0xff]
        %v6951 = vld [vmem:[#allocation28 + $0x98] sm:$0xff]
        %v6952 = vld [vmem:[#allocation28 + $0xa0] sm:$0xff]
        %v6953 = vld [vmem:[#allocation28 + $0xa8] sm:$0xff]
        %v6954 = vld [vmem:[#allocation28 + $0xb0] sm:$0xff]
        %v6955 = vld [vmem:[#allocation28 + $0xb8] sm:$0xff]
        %v6956 = vld [vmem:[#allocation28 + $0xc0] sm:$0xff]
        %v6957 = vld [vmem:[#allocation28 + $0xc8] sm:$0xff]
        %v6958 = vld [vmem:[#allocation28 + $0xd0] sm:$0xff]
        %v6959 = vld [vmem:[#allocation28 + $0xd8] sm:$0xff]
        %v6960 = vld [vmem:[#allocation28 + $0xe0] sm:$0xff]
        %v6961 = vld [vmem:[#allocation28 + $0xe8] sm:$0xff]
        %v6962 = vld [vmem:[#allocation28 + $0xf0] sm:$0xff]
        %v6963 = vld [vmem:[#allocation28 + $0xf8] sm:$0xff]
        %v6964 = vld [vmem:[#allocation29] sm:$0x3]
        %v6966 = vlaneseq
        %v6967 = vshrl.u32 %v6966, 7
        %v6968 = vsub.s32 0, %v6967
        %v6969 = vrot.slane %v6964, %v6968
        %v6970 = vlaneseq
        %v6971 = vshrl.u32 %v6970, 7
        %v6972 = vsub.s32 1, %v6971
        %v6973 = vrot.slane %v6964, %v6972
        %v7008 = vunpack.c.l.b16 %v6932
        %v7009 = vunpack.c.h.b16 %v6932
        %v7010 = vunpack.c.l.b16 %v6933
        %v7011 = vunpack.c.h.b16 %v6933
        %v7012 = vunpack.c.l.b16 %v6934
        %v7013 = vunpack.c.h.b16 %v6934
        %v7014 = vunpack.c.l.b16 %v6935
        %v7015 = vunpack.c.h.b16 %v6935
        %v7016 = vunpack.c.l.b16 %v6936
        %v7017 = vunpack.c.h.b16 %v6936
        %v7018 = vunpack.c.l.b16 %v6937
        %v7019 = vunpack.c.h.b16 %v6937
        %v7020 = vunpack.c.l.b16 %v6938
        %v7021 = vunpack.c.h.b16 %v6938
        %v7022 = vunpack.c.l.b16 %v6939
        %v7023 = vunpack.c.h.b16 %v6939
        %v7024 = vunpack.c.l.b16 %v6940
        %v7025 = vunpack.c.h.b16 %v6940
        %v7026 = vunpack.c.l.b16 %v6941
        %v7027 = vunpack.c.h.b16 %v6941
        %v7028 = vunpack.c.l.b16 %v6942
        %v7029 = vunpack.c.h.b16 %v6942
        %v7030 = vunpack.c.l.b16 %v6943
        %v7031 = vunpack.c.h.b16 %v6943
        %v7032 = vunpack.c.l.b16 %v6944
        %v7033 = vunpack.c.h.b16 %v6944
        %v7034 = vunpack.c.l.b16 %v6945
        %v7035 = vunpack.c.h.b16 %v6945
        %v7036 = vunpack.c.l.b16 %v6946
        %v7037 = vunpack.c.h.b16 %v6946
        %v7038 = vunpack.c.l.b16 %v6947
        %v7039 = vunpack.c.h.b16 %v6947
        %v7040 = vunpack.c.l.b16 %v6948
        %v7041 = vunpack.c.h.b16 %v6948
        %v7042 = vunpack.c.l.b16 %v6949
        %v7043 = vunpack.c.h.b16 %v6949
        %v7044 = vunpack.c.l.b16 %v6950
        %v7045 = vunpack.c.h.b16 %v6950
        %v7046 = vunpack.c.l.b16 %v6951
        %v7047 = vunpack.c.h.b16 %v6951
        %v7048 = vunpack.c.l.b16 %v6952
        %v7049 = vunpack.c.h.b16 %v6952
        %v7050 = vunpack.c.l.b16 %v6953
        %v7051 = vunpack.c.h.b16 %v6953
        %v7052 = vunpack.c.l.b16 %v6954
        %v7053 = vunpack.c.h.b16 %v6954
        %v7054 = vunpack.c.l.b16 %v6955
        %v7055 = vunpack.c.h.b16 %v6955
        %v7056 = vunpack.c.l.b16 %v6956
        %v7057 = vunpack.c.h.b16 %v6956
        %v7058 = vunpack.c.l.b16 %v6957
        %v7059 = vunpack.c.h.b16 %v6957
        %v7060 = vunpack.c.l.b16 %v6958
        %v7061 = vunpack.c.h.b16 %v6958
        %v7062 = vunpack.c.l.b16 %v6959
        %v7063 = vunpack.c.h.b16 %v6959
        %v7064 = vunpack.c.l.b16 %v6960
        %v7065 = vunpack.c.h.b16 %v6960
        %v7066 = vunpack.c.l.b16 %v6961
        %v7067 = vunpack.c.h.b16 %v6961
        %v7068 = vunpack.c.l.b16 %v6962
        %v7069 = vunpack.c.h.b16 %v6962
        %v7070 = vunpack.c.l.b16 %v6963
        %v7071 = vunpack.c.h.b16 %v6963
        %v7072 = vpack.c.b16 %v7010, %v7008
        %v7073 = vpack.c.b16 %v7011, %v7009
        %v7074 = vpack.c.b16 %v7014, %v7012
        %v7075 = vpack.c.b16 %v7015, %v7013
        %v7076 = vpack.c.b16 %v7018, %v7016
        %v7077 = vpack.c.b16 %v7019, %v7017
        %v7078 = vpack.c.b16 %v7022, %v7020
        %v7079 = vpack.c.b16 %v7023, %v7021
        %v7080 = vpack.c.b16 %v7026, %v7024
        %v7081 = vpack.c.b16 %v7027, %v7025
        %v7082 = vpack.c.b16 %v7030, %v7028
        %v7083 = vpack.c.b16 %v7031, %v7029
        %v7084 = vpack.c.b16 %v7034, %v7032
        %v7085 = vpack.c.b16 %v7035, %v7033
        %v7086 = vpack.c.b16 %v7038, %v7036
        %v7087 = vpack.c.b16 %v7039, %v7037
        %v7088 = vpack.c.b16 %v7042, %v7040
        %v7089 = vpack.c.b16 %v7043, %v7041
        %v7090 = vpack.c.b16 %v7046, %v7044
        %v7091 = vpack.c.b16 %v7047, %v7045
        %v7092 = vpack.c.b16 %v7050, %v7048
        %v7093 = vpack.c.b16 %v7051, %v7049
        %v7094 = vpack.c.b16 %v7054, %v7052
        %v7095 = vpack.c.b16 %v7055, %v7053
        %v7096 = vpack.c.b16 %v7058, %v7056
        %v7097 = vpack.c.b16 %v7059, %v7057
        %v7098 = vpack.c.b16 %v7062, %v7060
        %v7099 = vpack.c.b16 %v7063, %v7061
        %v7100 = vpack.c.b16 %v7066, %v7064
        %v7101 = vpack.c.b16 %v7067, %v7065
        %v7102 = vpack.c.b16 %v7070, %v7068
        %v7103 = vpack.c.b16 %v7071, %v7069
        %7136 = vmatprep.subr.bf16.mxu0 %v7073
        %7137 = vmatpush1.bf16.msra.mxu0 %v7072
        %7138 = vmatprep.subr.bf16.mxu0 %v7075
        %7139 = vmatpush1.bf16.msra.mxu0 %v7074
        %7140 = vmatprep.subr.bf16.mxu0 %v7077
        %7141 = vmatpush1.bf16.msra.mxu0 %v7076
        %7142 = vmatprep.subr.bf16.mxu0 %v7079
        %7143 = vmatpush1.bf16.msra.mxu0 %v7078
        %7144 = vmatprep.subr.bf16.mxu0 %v7081
        %7145 = vmatpush1.bf16.msra.mxu0 %v7080
        %7146 = vmatprep.subr.bf16.mxu0 %v7083
        %7147 = vmatpush1.bf16.msra.mxu0 %v7082
        %7148 = vmatprep.subr.bf16.mxu0 %v7085
        %7149 = vmatpush1.bf16.msra.mxu0 %v7084
        %7150 = vmatprep.subr.bf16.mxu0 %v7087
        %7151 = vmatpush1.bf16.msra.mxu0 %v7086
        %7152 = vmatprep.subr.bf16.mxu0 %v7089
        %7153 = vmatpush1.bf16.msra.mxu0 %v7088
        %7154 = vmatprep.subr.bf16.mxu0 %v7091
        %7155 = vmatpush1.bf16.msra.mxu0 %v7090
        %7156 = vmatprep.subr.bf16.mxu0 %v7093
        %7157 = vmatpush1.bf16.msra.mxu0 %v7092
        %7158 = vmatprep.subr.bf16.mxu0 %v7095
        %7159 = vmatpush1.bf16.msra.mxu0 %v7094
        %7160 = vmatprep.subr.bf16.mxu0 %v7097
        %7161 = vmatpush1.bf16.msra.mxu0 %v7096
        %7162 = vmatprep.subr.bf16.mxu0 %v7099
        %7163 = vmatpush1.bf16.msra.mxu0 %v7098
        %7164 = vmatprep.subr.bf16.mxu0 %v7101
        %7165 = vmatpush1.bf16.msra.mxu0 %v7100
        %7166 = vmatprep.subr.bf16.mxu0 %v7103
        %7167 = vmatpush1.bf16.msra.mxu0 %v7102
        %7168 = vmatprep.mubr.bf16.mxu0 %v6869
        %7169 = vmatmul.mubr.bf16.gmra.mrb[0].mxu0 %v6868
        %v7170 = vpop.f32.mrb[0].mxu0
        %v7171 = vadd.f32 %v6969, %v7170
        %v7172 = vpop.f32.mrb[0].mxu0
        %v7173 = vadd.f32 %v6973, %v7172
        %v7174 = vpop.f32.mrb[0].mxu0
        %v7175 = vadd.f32 %v6969, %v7174
        %v7176 = vpop.f32.mrb[0].mxu0
        %v7177 = vadd.f32 %v6973, %v7176
        %7178 = vmatprep.mubr.bf16.mxu0 %v6871
        %7179 = vmatmul.mubr.bf16.gmra.mrb[0].mxu0 %v6870
        %v7180 = vpop.f32.mrb[0].mxu0
        %v7181 = vadd.f32 %v6969, %v7180
        %v7182 = vpop.f32.mrb[0].mxu0
        %v7183 = vadd.f32 %v6973, %v7182
        %v7184 = vpop.f32.mrb[0].mxu0
        %v7185 = vadd.f32 %v6969, %v7184
        %v7186 = vpop.f32.mrb[0].mxu0
        %v7187 = vadd.f32 %v6973, %v7186
        %7188 = vmatprep.mubr.bf16.mxu0 %v6873
        %7189 = vmatmul.mubr.bf16.gmra.mrb[0].mxu0 %v6872
        %v7190 = vpop.f32.mrb[0].mxu0
        %v7191 = vadd.f32 %v6969, %v7190
        %v7192 = vpop.f32.mrb[0].mxu0
        %v7193 = vadd.f32 %v6973, %v7192
        %v7194 = vpop.f32.mrb[0].mxu0
        %v7195 = vadd.f32 %v6969, %v7194
        %v7196 = vpop.f32.mrb[0].mxu0
        %v7197 = vadd.f32 %v6973, %v7196
        %7198 = vmatprep.mubr.bf16.mxu0 %v6875
        %7199 = vmatmul.mubr.bf16.gmra.mrb[0].mxu0 %v6874
        %v7200 = vpop.f32.mrb[0].mxu0
        %v7201 = vadd.f32 %v6969, %v7200
        %v7202 = vpop.f32.mrb[0].mxu0
        %v7203 = vadd.f32 %v6973, %v7202
        %v7204 = vpop.f32.mrb[0].mxu0
        %v7205 = vadd.f32 %v6969, %v7204
        %v7206 = vpop.f32.mrb[0].mxu0
        %v7207 = vadd.f32 %v6973, %v7206
        %7208 = vmatprep.mubr.bf16.mxu0 %v6877
        %7209 = vmatmul.mubr.bf16.gmra.mrb[0].mxu0 %v6876
        %v7210 = vpop.f32.mrb[0].mxu0
        %v7211 = vadd.f32 %v6969, %v7210
        %v7212 = vpop.f32.mrb[0].mxu0
        %v7213 = vadd.f32 %v6973, %v7212
        %v7214 = vpop.f32.mrb[0].mxu0
        %v7215 = vadd.f32 %v6969, %v7214
        %v7216 = vpop.f32.mrb[0].mxu0
        %v7217 = vadd.f32 %v6973, %v7216
        %7218 = vmatprep.mubr.bf16.mxu0 %v6879
        %7219 = vmatmul.mubr.bf16.gmra.mrb[0].mxu0 %v6878
        %v7220 = vpop.f32.mrb[0].mxu0
        %v7221 = vadd.f32 %v6969, %v7220
        %v7222 = vpop.f32.mrb[0].mxu0
        %v7223 = vadd.f32 %v6973, %v7222
        %v7224 = vpop.f32.mrb[0].mxu0
        %v7225 = vadd.f32 %v6969, %v7224
        %v7226 = vpop.f32.mrb[0].mxu0
        %v7227 = vadd.f32 %v6973, %v7226
        %7228 = vmatprep.mubr.bf16.mxu0 %v6881
        %7229 = vmatmul.mubr.bf16.gmra.mrb[0].mxu0 %v6880
        %v7230 = vpop.f32.mrb[0].mxu0
        %v7231 = vadd.f32 %v6969, %v7230
        %v7232 = vpop.f32.mrb[0].mxu0
        %v7233 = vadd.f32 %v6973, %v7232
        %v7234 = vpop.f32.mrb[0].mxu0
        %v7235 = vadd.f32 %v6969, %v7234
        %v7236 = vpop.f32.mrb[0].mxu0
        %v7237 = vadd.f32 %v6973, %v7236
        %7238 = vmatprep.mubr.bf16.mxu0 %v6883
        %7239 = vmatmul.mubr.bf16.gmra.mrb[0].mxu0 %v6882
        %v7240 = vpop.f32.mrb[0].mxu0
        %v7241 = vadd.f32 %v6969, %v7240
        %v7242 = vpop.f32.mrb[0].mxu0
        %v7243 = vadd.f32 %v6973, %v7242
        %v7244 = vpop.f32.mrb[0].mxu0
        %v7245 = vadd.f32 %v6969, %v7244
        %v7246 = vpop.f32.mrb[0].mxu0
        %v7247 = vadd.f32 %v6973, %v7246
        %7248 = vmatprep.mubr.bf16.mxu0 %v6885
        %7249 = vmatmul.mubr.bf16.gmra.mrb[0].mxu0 %v6884
        %v7250 = vpop.f32.mrb[0].mxu0
        %v7251 = vadd.f32 %v6969, %v7250
        %v7252 = vpop.f32.mrb[0].mxu0
        %v7253 = vadd.f32 %v6973, %v7252
        %v7254 = vpop.f32.mrb[0].mxu0
        %v7255 = vadd.f32 %v6969, %v7254
        %v7256 = vpop.f32.mrb[0].mxu0
        %v7257 = vadd.f32 %v6973, %v7256
        %7258 = vmatprep.mubr.bf16.mxu0 %v6887
        %7259 = vmatmul.mubr.bf16.gmra.mrb[0].mxu0 %v6886
        %v7260 = vpop.f32.mrb[0].mxu0
        %v7261 = vadd.f32 %v6969, %v7260
        %v7262 = vpop.f32.mrb[0].mxu0
        %v7263 = vadd.f32 %v6973, %v7262
        %v7264 = vpop.f32.mrb[0].mxu0
        %v7265 = vadd.f32 %v6969, %v7264
        %v7266 = vpop.f32.mrb[0].mxu0
        %v7267 = vadd.f32 %v6973, %v7266
        %7268 = vmatprep.mubr.bf16.mxu0 %v6889
        %7269 = vmatmul.mubr.bf16.gmra.mrb[0].mxu0 %v6888
        %v7270 = vpop.f32.mrb[0].mxu0
        %v7271 = vadd.f32 %v6969, %v7270
        %v7272 = vpop.f32.mrb[0].mxu0
        %v7273 = vadd.f32 %v6973, %v7272
        %v7274 = vpop.f32.mrb[0].mxu0
        %v7275 = vadd.f32 %v6969, %v7274
        %v7276 = vpop.f32.mrb[0].mxu0
        %v7277 = vadd.f32 %v6973, %v7276
        %7278 = vmatprep.mubr.bf16.mxu0 %v6891
        %7279 = vmatmul.mubr.bf16.gmra.mrb[0].mxu0 %v6890
        %v7280 = vpop.f32.mrb[0].mxu0
        %v7281 = vadd.f32 %v6969, %v7280
        %v7282 = vpop.f32.mrb[0].mxu0
        %v7283 = vadd.f32 %v6973, %v7282
        %v7284 = vpop.f32.mrb[0].mxu0
        %v7285 = vadd.f32 %v6969, %v7284
        %v7286 = vpop.f32.mrb[0].mxu0
        %v7287 = vadd.f32 %v6973, %v7286
        %7288 = vmatprep.mubr.bf16.mxu0 %v6893
        %7289 = vmatmul.mubr.bf16.gmra.mrb[0].mxu0 %v6892
        %v7290 = vpop.f32.mrb[0].mxu0
        %v7291 = vadd.f32 %v6969, %v7290
        %v7292 = vpop.f32.mrb[0].mxu0
        %v7293 = vadd.f32 %v6973, %v7292
        %v7294 = vpop.f32.mrb[0].mxu0
        %v7295 = vadd.f32 %v6969, %v7294
        %v7296 = vpop.f32.mrb[0].mxu0
        %v7297 = vadd.f32 %v6973, %v7296
        %7298 = vmatprep.mubr.bf16.mxu0 %v6895
        %7299 = vmatmul.mubr.bf16.gmra.mrb[0].mxu0 %v6894
        %v7300 = vpop.f32.mrb[0].mxu0
        %v7301 = vadd.f32 %v6969, %v7300
        %v7302 = vpop.f32.mrb[0].mxu0
        %v7303 = vadd.f32 %v6973, %v7302
        %v7304 = vpop.f32.mrb[0].mxu0
        %v7305 = vadd.f32 %v6969, %v7304
        %v7306 = vpop.f32.mrb[0].mxu0
        %v7307 = vadd.f32 %v6973, %v7306
        %7308 = vmatprep.mubr.bf16.mxu0 %v6897
        %7309 = vmatmul.mubr.bf16.gmra.mrb[0].mxu0 %v6896
        %v7310 = vpop.f32.mrb[0].mxu0
        %v7311 = vadd.f32 %v6969, %v7310
        %v7312 = vpop.f32.mrb[0].mxu0
        %v7313 = vadd.f32 %v6973, %v7312
        %v7314 = vpop.f32.mrb[0].mxu0
        %v7315 = vadd.f32 %v6969, %v7314
        %v7316 = vpop.f32.mrb[0].mxu0
        %v7317 = vadd.f32 %v6973, %v7316
        %7318 = vmatprep.mubr.bf16.mxu0 %v6899
        %7319 = vmatmul.mubr.bf16.gmra.mrb[0].mxu0 %v6898
        %v7320 = vpop.f32.mrb[0].mxu0
        %v7321 = vadd.f32 %v6969, %v7320
        %v7322 = vpop.f32.mrb[0].mxu0
        %v7323 = vadd.f32 %v6973, %v7322
        %v7324 = vpop.f32.mrb[0].mxu0
        %v7325 = vadd.f32 %v6969, %v7324
        %v7326 = vpop.f32.mrb[0].mxu0
        %v7327 = vadd.f32 %v6973, %v7326
        %7328 = vmatprep.mubr.bf16.mxu0 %v6901
        %7329 = vmatmul.mubr.bf16.gmra.mrb[0].mxu0 %v6900
        %v7330 = vpop.f32.mrb[0].mxu0
        %v7331 = vadd.f32 %v6969, %v7330
        %v7332 = vpop.f32.mrb[0].mxu0
        %v7333 = vadd.f32 %v6973, %v7332
        %v7334 = vpop.f32.mrb[0].mxu0
        %v7335 = vadd.f32 %v6969, %v7334
        %v7336 = vpop.f32.mrb[0].mxu0
        %v7337 = vadd.f32 %v6973, %v7336
        %7338 = vmatprep.mubr.bf16.mxu0 %v6903
        %7339 = vmatmul.mubr.bf16.gmra.mrb[0].mxu0 %v6902
        %v7340 = vpop.f32.mrb[0].mxu0
        %v7341 = vadd.f32 %v6969, %v7340
        %v7342 = vpop.f32.mrb[0].mxu0
        %v7343 = vadd.f32 %v6973, %v7342
        %v7344 = vpop.f32.mrb[0].mxu0
        %v7345 = vadd.f32 %v6969, %v7344
        %v7346 = vpop.f32.mrb[0].mxu0
        %v7347 = vadd.f32 %v6973, %v7346
        %7348 = vmatprep.mubr.bf16.mxu0 %v6905
        %7349 = vmatmul.mubr.bf16.gmra.mrb[0].mxu0 %v6904
        %v7350 = vpop.f32.mrb[0].mxu0
        %v7351 = vadd.f32 %v6969, %v7350
        %v7352 = vpop.f32.mrb[0].mxu0
        %v7353 = vadd.f32 %v6973, %v7352
        %v7354 = vpop.f32.mrb[0].mxu0
        %v7355 = vadd.f32 %v6969, %v7354
        %v7356 = vpop.f32.mrb[0].mxu0
        %v7357 = vadd.f32 %v6973, %v7356
        %7358 = vmatprep.mubr.bf16.mxu0 %v6907
        %7359 = vmatmul.mubr.bf16.gmra.mrb[0].mxu0 %v6906
        %v7360 = vpop.f32.mrb[0].mxu0
        %v7361 = vadd.f32 %v6969, %v7360
        %v7362 = vpop.f32.mrb[0].mxu0
        %v7363 = vadd.f32 %v6973, %v7362
        %v7364 = vpop.f32.mrb[0].mxu0
        %v7365 = vadd.f32 %v6969, %v7364
        %v7366 = vpop.f32.mrb[0].mxu0
        %v7367 = vadd.f32 %v6973, %v7366
        %7368 = vmatprep.mubr.bf16.mxu0 %v6909
        %7369 = vmatmul.mubr.bf16.gmra.mrb[0].mxu0 %v6908
        %v7370 = vpop.f32.mrb[0].mxu0
        %v7371 = vadd.f32 %v6969, %v7370
        %v7372 = vpop.f32.mrb[0].mxu0
        %v7373 = vadd.f32 %v6973, %v7372
        %v7374 = vpop.f32.mrb[0].mxu0
        %v7375 = vadd.f32 %v6969, %v7374
        %v7376 = vpop.f32.mrb[0].mxu0
        %v7377 = vadd.f32 %v6973, %v7376
        %7378 = vmatprep.mubr.bf16.mxu0 %v6911
        %7379 = vmatmul.mubr.bf16.gmra.mrb[0].mxu0 %v6910
        %v7380 = vpop.f32.mrb[0].mxu0
        %v7381 = vadd.f32 %v6969, %v7380
        %v7382 = vpop.f32.mrb[0].mxu0
        %v7383 = vadd.f32 %v6973, %v7382
        %v7384 = vpop.f32.mrb[0].mxu0
        %v7385 = vadd.f32 %v6969, %v7384
        %v7386 = vpop.f32.mrb[0].mxu0
        %v7387 = vadd.f32 %v6973, %v7386
        %7388 = vmatprep.mubr.bf16.mxu0 %v6913
        %7389 = vmatmul.mubr.bf16.gmra.mrb[0].mxu0 %v6912
        %v7390 = vpop.f32.mrb[0].mxu0
        %v7391 = vadd.f32 %v6969, %v7390
        %v7392 = vpop.f32.mrb[0].mxu0
        %v7393 = vadd.f32 %v6973, %v7392
        %v7394 = vpop.f32.mrb[0].mxu0
        %v7395 = vadd.f32 %v6969, %v7394
        %v7396 = vpop.f32.mrb[0].mxu0
        %v7397 = vadd.f32 %v6973, %v7396
        %7398 = vmatprep.mubr.bf16.mxu0 %v6915
        %7399 = vmatmul.mubr.bf16.gmra.mrb[0].mxu0 %v6914
        %v7400 = vpop.f32.mrb[0].mxu0
        %v7401 = vadd.f32 %v6969, %v7400
        %v7402 = vpop.f32.mrb[0].mxu0
        %v7403 = vadd.f32 %v6973, %v7402
        %v7404 = vpop.f32.mrb[0].mxu0
        %v7405 = vadd.f32 %v6969, %v7404
        %v7406 = vpop.f32.mrb[0].mxu0
        %v7407 = vadd.f32 %v6973, %v7406
        %7408 = vmatprep.mubr.bf16.mxu0 %v6917
        %7409 = vmatmul.mubr.bf16.gmra.mrb[0].mxu0 %v6916
        %v7410 = vpop.f32.mrb[0].mxu0
        %v7411 = vadd.f32 %v6969, %v7410
        %v7412 = vpop.f32.mrb[0].mxu0
        %v7413 = vadd.f32 %v6973, %v7412
        %v7414 = vpop.f32.mrb[0].mxu0
        %v7415 = vadd.f32 %v6969, %v7414
        %v7416 = vpop.f32.mrb[0].mxu0
        %v7417 = vadd.f32 %v6973, %v7416
        %7418 = vmatprep.mubr.bf16.mxu0 %v6919
        %7419 = vmatmul.mubr.bf16.gmra.mrb[0].mxu0 %v6918
        %v7420 = vpop.f32.mrb[0].mxu0
        %v7421 = vadd.f32 %v6969, %v7420
        %v7422 = vpop.f32.mrb[0].mxu0
        %v7423 = vadd.f32 %v6973, %v7422
        %v7424 = vpop.f32.mrb[0].mxu0
        %v7425 = vadd.f32 %v6969, %v7424
        %v7426 = vpop.f32.mrb[0].mxu0
        %v7427 = vadd.f32 %v6973, %v7426
        %7428 = vmatprep.mubr.bf16.mxu0 %v6921
        %7429 = vmatmul.mubr.bf16.gmra.mrb[0].mxu0 %v6920
        %v7430 = vpop.f32.mrb[0].mxu0
        %v7431 = vadd.f32 %v6969, %v7430
        %v7432 = vpop.f32.mrb[0].mxu0
        %v7433 = vadd.f32 %v6973, %v7432
        %v7434 = vpop.f32.mrb[0].mxu0
        %v7435 = vadd.f32 %v6969, %v7434
        %v7436 = vpop.f32.mrb[0].mxu0
        %v7437 = vadd.f32 %v6973, %v7436
        %7438 = vmatprep.mubr.bf16.mxu0 %v6923
        %7439 = vmatmul.mubr.bf16.gmra.mrb[0].mxu0 %v6922
        %v7440 = vpop.f32.mrb[0].mxu0
        %v7441 = vadd.f32 %v6969, %v7440
        %v7442 = vpop.f32.mrb[0].mxu0
        %v7443 = vadd.f32 %v6973, %v7442
        %v7444 = vpop.f32.mrb[0].mxu0
        %v7445 = vadd.f32 %v6969, %v7444
        %v7446 = vpop.f32.mrb[0].mxu0
        %v7447 = vadd.f32 %v6973, %v7446
        %7448 = vmatprep.mubr.bf16.mxu0 %v6925
        %7449 = vmatmul.mubr.bf16.gmra.mrb[0].mxu0 %v6924
        %v7450 = vpop.f32.mrb[0].mxu0
        %v7451 = vadd.f32 %v6969, %v7450
        %v7452 = vpop.f32.mrb[0].mxu0
        %v7453 = vadd.f32 %v6973, %v7452
        %v7454 = vpop.f32.mrb[0].mxu0
        %v7455 = vadd.f32 %v6969, %v7454
        %v7456 = vpop.f32.mrb[0].mxu0
        %v7457 = vadd.f32 %v6973, %v7456
        %7458 = vmatprep.mubr.bf16.mxu0 %v6927
        %7459 = vmatmul.mubr.bf16.gmra.mrb[0].mxu0 %v6926
        %v7460 = vpop.f32.mrb[0].mxu0
        %v7461 = vadd.f32 %v6969, %v7460
        %v7462 = vpop.f32.mrb[0].mxu0
        %v7463 = vadd.f32 %v6973, %v7462
        %v7464 = vpop.f32.mrb[0].mxu0
        %v7465 = vadd.f32 %v6969, %v7464
        %v7466 = vpop.f32.mrb[0].mxu0
        %v7467 = vadd.f32 %v6973, %v7466
        %7468 = vmatprep.mubr.bf16.mxu0 %v6929
        %7469 = vmatmul.mubr.bf16.gmra.mrb[0].mxu0 %v6928
        %v7470 = vpop.f32.mrb[0].mxu0
        %v7471 = vadd.f32 %v6969, %v7470
        %v7472 = vpop.f32.mrb[0].mxu0
        %v7473 = vadd.f32 %v6973, %v7472
        %v7474 = vpop.f32.mrb[0].mxu0
        %v7475 = vadd.f32 %v6969, %v7474
        %v7476 = vpop.f32.mrb[0].mxu0
        %v7477 = vadd.f32 %v6973, %v7476
        %7478 = vmatprep.mubr.bf16.mxu0 %v6931
        %7479 = vmatmul.mubr.bf16.gmra.mrb[0].mxu0 %v6930
        %v7480 = vpop.f32.mrb[0].mxu0
        %v7481 = vadd.f32 %v6969, %v7480
        %v7482 = vpop.f32.mrb[0].mxu0
        %v7483 = vadd.f32 %v6973, %v7482
        %v7484 = vpop.f32.mrb[0].mxu0
        %v7485 = vadd.f32 %v6969, %v7484
        %v7486 = vpop.f32.mrb[0].mxu0
        %v7487 = vadd.f32 %v6973, %v7486
        %7488 = vdwg.mxu0
        %v7489 = vmax.f32 %v7171, 0.0
        %v7490 = vmax.f32 %v7173, 0.0
        %v7491 = vmax.f32 %v7175, 0.0
        %v7492 = vmax.f32 %v7177, 0.0
        %v7493 = vmax.f32 %v7181, 0.0
        %v7494 = vmax.f32 %v7183, 0.0
        %v7495 = vmax.f32 %v7185, 0.0
        %v7496 = vmax.f32 %v7187, 0.0
        %v7497 = vmax.f32 %v7191, 0.0
        %v7498 = vmax.f32 %v7193, 0.0
        %v7499 = vmax.f32 %v7195, 0.0
        %v7500 = vmax.f32 %v7197, 0.0
        %v7501 = vmax.f32 %v7201, 0.0
        %v7502 = vmax.f32 %v7203, 0.0
        %v7503 = vmax.f32 %v7205, 0.0
        %v7504 = vmax.f32 %v7207, 0.0
        %v7505 = vmax.f32 %v7211, 0.0
        %v7506 = vmax.f32 %v7213, 0.0
        %v7507 = vmax.f32 %v7215, 0.0
        %v7508 = vmax.f32 %v7217, 0.0
        %v7509 = vmax.f32 %v7221, 0.0
        %v7510 = vmax.f32 %v7223, 0.0
        %v7511 = vmax.f32 %v7225, 0.0
        %v7512 = vmax.f32 %v7227, 0.0
        %v7513 = vmax.f32 %v7231, 0.0
        %v7514 = vmax.f32 %v7233, 0.0
        %v7515 = vmax.f32 %v7235, 0.0
        %v7516 = vmax.f32 %v7237, 0.0
        %v7517 = vmax.f32 %v7241, 0.0
        %v7518 = vmax.f32 %v7243, 0.0
        %v7519 = vmax.f32 %v7245, 0.0
        %v7520 = vmax.f32 %v7247, 0.0
        %v7521 = vmax.f32 %v7251, 0.0
        %v7522 = vmax.f32 %v7253, 0.0
        %v7523 = vmax.f32 %v7255, 0.0
        %v7524 = vmax.f32 %v7257, 0.0
        %v7525 = vmax.f32 %v7261, 0.0
        %v7526 = vmax.f32 %v7263, 0.0
        %v7527 = vmax.f32 %v7265, 0.0
        %v7528 = vmax.f32 %v7267, 0.0
        %v7529 = vmax.f32 %v7271, 0.0
        %v7530 = vmax.f32 %v7273, 0.0
        %v7531 = vmax.f32 %v7275, 0.0
        %v7532 = vmax.f32 %v7277, 0.0
        %v7533 = vmax.f32 %v7281, 0.0
        %v7534 = vmax.f32 %v7283, 0.0
        %v7535 = vmax.f32 %v7285, 0.0
        %v7536 = vmax.f32 %v7287, 0.0
        %v7537 = vmax.f32 %v7291, 0.0
        %v7538 = vmax.f32 %v7293, 0.0
        %v7539 = vmax.f32 %v7295, 0.0
        %v7540 = vmax.f32 %v7297, 0.0
        %v7541 = vmax.f32 %v7301, 0.0
        %v7542 = vmax.f32 %v7303, 0.0
        %v7543 = vmax.f32 %v7305, 0.0
        %v7544 = vmax.f32 %v7307, 0.0
        %v7545 = vmax.f32 %v7311, 0.0
        %v7546 = vmax.f32 %v7313, 0.0
        %v7547 = vmax.f32 %v7315, 0.0
        %v7548 = vmax.f32 %v7317, 0.0
        %v7549 = vmax.f32 %v7321, 0.0
        %v7550 = vmax.f32 %v7323, 0.0
        %v7551 = vmax.f32 %v7325, 0.0
        %v7552 = vmax.f32 %v7327, 0.0
        %v7553 = vmax.f32 %v7331, 0.0
        %v7554 = vmax.f32 %v7333, 0.0
        %v7555 = vmax.f32 %v7335, 0.0
        %v7556 = vmax.f32 %v7337, 0.0
        %v7557 = vmax.f32 %v7341, 0.0
        %v7558 = vmax.f32 %v7343, 0.0
        %v7559 = vmax.f32 %v7345, 0.0
        %v7560 = vmax.f32 %v7347, 0.0
        %v7561 = vmax.f32 %v7351, 0.0
        %v7562 = vmax.f32 %v7353, 0.0
        %v7563 = vmax.f32 %v7355, 0.0
        %v7564 = vmax.f32 %v7357, 0.0
        %v7565 = vmax.f32 %v7361, 0.0
        %v7566 = vmax.f32 %v7363, 0.0
        %v7567 = vmax.f32 %v7365, 0.0
        %v7568 = vmax.f32 %v7367, 0.0
        %v7569 = vmax.f32 %v7371, 0.0
        %v7570 = vmax.f32 %v7373, 0.0
        %v7571 = vmax.f32 %v7375, 0.0
        %v7572 = vmax.f32 %v7377, 0.0
        %v7573 = vmax.f32 %v7381, 0.0
        %v7574 = vmax.f32 %v7383, 0.0
        %v7575 = vmax.f32 %v7385, 0.0
        %v7576 = vmax.f32 %v7387, 0.0
        %v7577 = vmax.f32 %v7391, 0.0
        %v7578 = vmax.f32 %v7393, 0.0
        %v7579 = vmax.f32 %v7395, 0.0
        %v7580 = vmax.f32 %v7397, 0.0
        %v7581 = vmax.f32 %v7401, 0.0
        %v7582 = vmax.f32 %v7403, 0.0
        %v7583 = vmax.f32 %v7405, 0.0
        %v7584 = vmax.f32 %v7407, 0.0
        %v7585 = vmax.f32 %v7411, 0.0
        %v7586 = vmax.f32 %v7413, 0.0
        %v7587 = vmax.f32 %v7415, 0.0
        %v7588 = vmax.f32 %v7417, 0.0
        %v7589 = vmax.f32 %v7421, 0.0
        %v7590 = vmax.f32 %v7423, 0.0
        %v7591 = vmax.f32 %v7425, 0.0
        %v7592 = vmax.f32 %v7427, 0.0
        %v7593 = vmax.f32 %v7431, 0.0
        %v7594 = vmax.f32 %v7433, 0.0
        %v7595 = vmax.f32 %v7435, 0.0
        %v7596 = vmax.f32 %v7437, 0.0
        %v7597 = vmax.f32 %v7441, 0.0
        %v7598 = vmax.f32 %v7443, 0.0
        %v7599 = vmax.f32 %v7445, 0.0
        %v7600 = vmax.f32 %v7447, 0.0
        %v7601 = vmax.f32 %v7451, 0.0
        %v7602 = vmax.f32 %v7453, 0.0
        %v7603 = vmax.f32 %v7455, 0.0
        %v7604 = vmax.f32 %v7457, 0.0
        %v7605 = vmax.f32 %v7461, 0.0
        %v7606 = vmax.f32 %v7463, 0.0
        %v7607 = vmax.f32 %v7465, 0.0
        %v7608 = vmax.f32 %v7467, 0.0
        %v7609 = vmax.f32 %v7471, 0.0
        %v7610 = vmax.f32 %v7473, 0.0
        %v7611 = vmax.f32 %v7475, 0.0
        %v7612 = vmax.f32 %v7477, 0.0
        %v7613 = vmax.f32 %v7481, 0.0
        %v7614 = vmax.f32 %v7483, 0.0
        %v7615 = vmax.f32 %v7485, 0.0
        %v7616 = vmax.f32 %v7487, 0.0
        %v7617 = vpack.c.bf16 %v7491, %v7489
        %v7618 = vpack.c.bf16 %v7492, %v7490
        %v7619 = vpack.c.bf16 %v7495, %v7493
        %v7620 = vpack.c.bf16 %v7496, %v7494
        %v7621 = vpack.c.bf16 %v7499, %v7497
        %v7622 = vpack.c.bf16 %v7500, %v7498
        %v7623 = vpack.c.bf16 %v7503, %v7501
        %v7624 = vpack.c.bf16 %v7504, %v7502
        %v7625 = vpack.c.bf16 %v7507, %v7505
        %v7626 = vpack.c.bf16 %v7508, %v7506
        %v7627 = vpack.c.bf16 %v7511, %v7509
        %v7628 = vpack.c.bf16 %v7512, %v7510
        %v7629 = vpack.c.bf16 %v7515, %v7513
        %v7630 = vpack.c.bf16 %v7516, %v7514
        %v7631 = vpack.c.bf16 %v7519, %v7517
        %v7632 = vpack.c.bf16 %v7520, %v7518
        %v7633 = vpack.c.bf16 %v7523, %v7521
        %v7634 = vpack.c.bf16 %v7524, %v7522
        %v7635 = vpack.c.bf16 %v7527, %v7525
        %v7636 = vpack.c.bf16 %v7528, %v7526
        %v7637 = vpack.c.bf16 %v7531, %v7529
        %v7638 = vpack.c.bf16 %v7532, %v7530
        %v7639 = vpack.c.bf16 %v7535, %v7533
        %v7640 = vpack.c.bf16 %v7536, %v7534
        %v7641 = vpack.c.bf16 %v7539, %v7537
        %v7642 = vpack.c.bf16 %v7540, %v7538
        %v7643 = vpack.c.bf16 %v7543, %v7541
        %v7644 = vpack.c.bf16 %v7544, %v7542
        %v7645 = vpack.c.bf16 %v7547, %v7545
        %v7646 = vpack.c.bf16 %v7548, %v7546
        %v7647 = vpack.c.bf16 %v7551, %v7549
        %v7648 = vpack.c.bf16 %v7552, %v7550
        %v7649 = vpack.c.bf16 %v7555, %v7553
        %v7650 = vpack.c.bf16 %v7556, %v7554
        %v7651 = vpack.c.bf16 %v7559, %v7557
        %v7652 = vpack.c.bf16 %v7560, %v7558
        %v7653 = vpack.c.bf16 %v7563, %v7561
        %v7654 = vpack.c.bf16 %v7564, %v7562
        %v7655 = vpack.c.bf16 %v7567, %v7565
        %v7656 = vpack.c.bf16 %v7568, %v7566
        %v7657 = vpack.c.bf16 %v7571, %v7569
        %v7658 = vpack.c.bf16 %v7572, %v7570
        %v7659 = vpack.c.bf16 %v7575, %v7573
        %v7660 = vpack.c.bf16 %v7576, %v7574
        %v7661 = vpack.c.bf16 %v7579, %v7577
        %v7662 = vpack.c.bf16 %v7580, %v7578
        %v7663 = vpack.c.bf16 %v7583, %v7581
        %v7664 = vpack.c.bf16 %v7584, %v7582
        %v7665 = vpack.c.bf16 %v7587, %v7585
        %v7666 = vpack.c.bf16 %v7588, %v7586
        %v7667 = vpack.c.bf16 %v7591, %v7589
        %v7668 = vpack.c.bf16 %v7592, %v7590
        %v7669 = vpack.c.bf16 %v7595, %v7593
        %v7670 = vpack.c.bf16 %v7596, %v7594
        %v7671 = vpack.c.bf16 %v7599, %v7597
        %v7672 = vpack.c.bf16 %v7600, %v7598
        %v7673 = vpack.c.bf16 %v7603, %v7601
        %v7674 = vpack.c.bf16 %v7604, %v7602
        %v7675 = vpack.c.bf16 %v7607, %v7605
        %v7676 = vpack.c.bf16 %v7608, %v7606
        %v7677 = vpack.c.bf16 %v7611, %v7609
        %v7678 = vpack.c.bf16 %v7612, %v7610
        %v7679 = vpack.c.bf16 %v7615, %v7613
        %v7680 = vpack.c.bf16 %v7616, %v7614
        %v7681 = vld [vmem:[#allocation31] sm:$0xff]
        %v7682 = vld [vmem:[#allocation31 + $0x8] sm:$0xf]
        %v7683 = vld [vmem:[#allocation31 + $0xc] sm:$0xff]
        %v7684 = vld [vmem:[#allocation31 + $0x14] sm:$0xf]
        %v7685 = vld [vmem:[#allocation31 + $0x18] sm:$0xff]
        %v7686 = vld [vmem:[#allocation31 + $0x20] sm:$0xf]
        %v7687 = vld [vmem:[#allocation31 + $0x24] sm:$0xff]
        %v7688 = vld [vmem:[#allocation31 + $0x2c] sm:$0xf]
        %v7689 = vld [vmem:[#allocation31 + $0x30] sm:$0xff]
        %v7690 = vld [vmem:[#allocation31 + $0x38] sm:$0xf]
        %v7691 = vld [vmem:[#allocation31 + $0x3c] sm:$0xff]
        %v7692 = vld [vmem:[#allocation31 + $0x44] sm:$0xf]
        %v7693 = vld [vmem:[#allocation31 + $0x48] sm:$0xff]
        %v7694 = vld [vmem:[#allocation31 + $0x50] sm:$0xf]
        %v7695 = vld [vmem:[#allocation31 + $0x54] sm:$0xff]
        %v7696 = vld [vmem:[#allocation31 + $0x5c] sm:$0xf]
        %v7697 = vld [vmem:[#allocation31 + $0x60] sm:$0xff]
        %v7698 = vld [vmem:[#allocation31 + $0x68] sm:$0xf]
        %v7699 = vld [vmem:[#allocation31 + $0x6c] sm:$0xff]
        %v7700 = vld [vmem:[#allocation31 + $0x74] sm:$0xf]
        %v7701 = vld [vmem:[#allocation31 + $0x78] sm:$0xff]
        %v7702 = vld [vmem:[#allocation31 + $0x80] sm:$0xf]
        %v7703 = vld [vmem:[#allocation31 + $0x84] sm:$0xff]
        %v7704 = vld [vmem:[#allocation31 + $0x8c] sm:$0xf]
        %v7705 = vld [vmem:[#allocation31 + $0x90] sm:$0xff]
        %v7706 = vld [vmem:[#allocation31 + $0x98] sm:$0xf]
        %v7707 = vld [vmem:[#allocation31 + $0x9c] sm:$0xff]
        %v7708 = vld [vmem:[#allocation31 + $0xa4] sm:$0xf]
        %v7709 = vld [vmem:[#allocation31 + $0xa8] sm:$0xff]
        %v7710 = vld [vmem:[#allocation31 + $0xb0] sm:$0xf]
        %v7711 = vld [vmem:[#allocation31 + $0xb4] sm:$0xff]
        %v7712 = vld [vmem:[#allocation31 + $0xbc] sm:$0xf]
        %v7713 = vld [vmem:[#allocation31 + $0xc0] sm:$0xff]
        %v7714 = vld [vmem:[#allocation31 + $0xc8] sm:$0xf]
        %v7715 = vld [vmem:[#allocation31 + $0xcc] sm:$0xff]
        %v7716 = vld [vmem:[#allocation31 + $0xd4] sm:$0xf]
        %v7717 = vld [vmem:[#allocation31 + $0xd8] sm:$0xff]
        %v7718 = vld [vmem:[#allocation31 + $0xe0] sm:$0xf]
        %v7719 = vld [vmem:[#allocation31 + $0xe4] sm:$0xff]
        %v7720 = vld [vmem:[#allocation31 + $0xec] sm:$0xf]
        %v7721 = vld [vmem:[#allocation31 + $0xf0] sm:$0xff]
        %v7722 = vld [vmem:[#allocation31 + $0xf8] sm:$0xf]
        %v7723 = vld [vmem:[#allocation31 + $0xfc] sm:$0xff]
        %v7724 = vld [vmem:[#allocation31 + $0x104] sm:$0xf]
        %v7725 = vld [vmem:[#allocation31 + $0x108] sm:$0xff]
        %v7726 = vld [vmem:[#allocation31 + $0x110] sm:$0xf]
        %v7727 = vld [vmem:[#allocation31 + $0x114] sm:$0xff]
        %v7728 = vld [vmem:[#allocation31 + $0x11c] sm:$0xf]
        %v7729 = vld [vmem:[#allocation31 + $0x120] sm:$0xff]
        %v7730 = vld [vmem:[#allocation31 + $0x128] sm:$0xf]
        %v7731 = vld [vmem:[#allocation31 + $0x12c] sm:$0xff]
        %v7732 = vld [vmem:[#allocation31 + $0x134] sm:$0xf]
        %v7733 = vld [vmem:[#allocation31 + $0x138] sm:$0xff]
        %v7734 = vld [vmem:[#allocation31 + $0x140] sm:$0xf]
        %v7735 = vld [vmem:[#allocation31 + $0x144] sm:$0xff]
        %v7736 = vld [vmem:[#allocation31 + $0x14c] sm:$0xf]
        %v7737 = vld [vmem:[#allocation31 + $0x150] sm:$0xff]
        %v7738 = vld [vmem:[#allocation31 + $0x158] sm:$0xf]
        %v7739 = vld [vmem:[#allocation31 + $0x15c] sm:$0xff]
        %v7740 = vld [vmem:[#allocation31 + $0x164] sm:$0xf]
        %v7741 = vld [vmem:[#allocation31 + $0x168] sm:$0xff]
        %v7742 = vld [vmem:[#allocation31 + $0x170] sm:$0xf]
        %v7743 = vld [vmem:[#allocation31 + $0x174] sm:$0xff]
        %v7744 = vld [vmem:[#allocation31 + $0x17c] sm:$0xf]
        %v7745 = vld [vmem:[#allocation32] sm:$0x7]
        %v7747 = vlaneseq
        %v7748 = vshrl.u32 %v7747, 7
        %v7749 = vsub.s32 0, %v7748
        %v7750 = vrot.slane %v7745, %v7749
        %v7751 = vlaneseq
        %v7752 = vshrl.u32 %v7751, 7
        %v7753 = vsub.s32 1, %v7752
        %v7754 = vrot.slane %v7745, %v7753
        %v7755 = vlaneseq
        %v7756 = vshrl.u32 %v7755, 7
        %v7757 = vsub.s32 2, %v7756
        %v7758 = vrot.slane %v7745, %v7757
        %v7826 = vunpack.c.l.b16 %v7681
        %v7827 = vunpack.c.h.b16 %v7681
        %v7828 = vunpack.c.l.b16 %v7682
        %v7829 = vunpack.c.l.b16 %v7683
        %v7830 = vunpack.c.h.b16 %v7683
        %v7831 = vunpack.c.l.b16 %v7684
        %v7832 = vunpack.c.l.b16 %v7685
        %v7833 = vunpack.c.h.b16 %v7685
        %v7834 = vunpack.c.l.b16 %v7686
        %v7835 = vunpack.c.l.b16 %v7687
        %v7836 = vunpack.c.h.b16 %v7687
        %v7837 = vunpack.c.l.b16 %v7688
        %v7838 = vunpack.c.l.b16 %v7689
        %v7839 = vunpack.c.h.b16 %v7689
        %v7840 = vunpack.c.l.b16 %v7690
        %v7841 = vunpack.c.l.b16 %v7691
        %v7842 = vunpack.c.h.b16 %v7691
        %v7843 = vunpack.c.l.b16 %v7692
        %v7844 = vunpack.c.l.b16 %v7693
        %v7845 = vunpack.c.h.b16 %v7693
        %v7846 = vunpack.c.l.b16 %v7694
        %v7847 = vunpack.c.l.b16 %v7695
        %v7848 = vunpack.c.h.b16 %v7695
        %v7849 = vunpack.c.l.b16 %v7696
        %v7850 = vunpack.c.l.b16 %v7697
        %v7851 = vunpack.c.h.b16 %v7697
        %v7852 = vunpack.c.l.b16 %v7698
        %v7853 = vunpack.c.l.b16 %v7699
        %v7854 = vunpack.c.h.b16 %v7699
        %v7855 = vunpack.c.l.b16 %v7700
        %v7856 = vunpack.c.l.b16 %v7701
        %v7857 = vunpack.c.h.b16 %v7701
        %v7858 = vunpack.c.l.b16 %v7702
        %v7859 = vunpack.c.l.b16 %v7703
        %v7860 = vunpack.c.h.b16 %v7703
        %v7861 = vunpack.c.l.b16 %v7704
        %v7862 = vunpack.c.l.b16 %v7705
        %v7863 = vunpack.c.h.b16 %v7705
        %v7864 = vunpack.c.l.b16 %v7706
        %v7865 = vunpack.c.l.b16 %v7707
        %v7866 = vunpack.c.h.b16 %v7707
        %v7867 = vunpack.c.l.b16 %v7708
        %v7868 = vunpack.c.l.b16 %v7709
        %v7869 = vunpack.c.h.b16 %v7709
        %v7870 = vunpack.c.l.b16 %v7710
        %v7871 = vunpack.c.l.b16 %v7711
        %v7872 = vunpack.c.h.b16 %v7711
        %v7873 = vunpack.c.l.b16 %v7712
        %v7874 = vunpack.c.l.b16 %v7713
        %v7875 = vunpack.c.h.b16 %v7713
        %v7876 = vunpack.c.l.b16 %v7714
        %v7877 = vunpack.c.l.b16 %v7715
        %v7878 = vunpack.c.h.b16 %v7715
        %v7879 = vunpack.c.l.b16 %v7716
        %v7880 = vunpack.c.l.b16 %v7717
        %v7881 = vunpack.c.h.b16 %v7717
        %v7882 = vunpack.c.l.b16 %v7718
        %v7883 = vunpack.c.l.b16 %v7719
        %v7884 = vunpack.c.h.b16 %v7719
        %v7885 = vunpack.c.l.b16 %v7720
        %v7886 = vunpack.c.l.b16 %v7721
        %v7887 = vunpack.c.h.b16 %v7721
        %v7888 = vunpack.c.l.b16 %v7722
        %v7889 = vunpack.c.l.b16 %v7723
        %v7890 = vunpack.c.h.b16 %v7723
        %v7891 = vunpack.c.l.b16 %v7724
        %v7892 = vunpack.c.l.b16 %v7725
        %v7893 = vunpack.c.h.b16 %v7725
        %v7894 = vunpack.c.l.b16 %v7726
        %v7895 = vunpack.c.l.b16 %v7727
        %v7896 = vunpack.c.h.b16 %v7727
        %v7897 = vunpack.c.l.b16 %v7728
        %v7898 = vunpack.c.l.b16 %v7729
        %v7899 = vunpack.c.h.b16 %v7729
        %v7900 = vunpack.c.l.b16 %v7730
        %v7901 = vunpack.c.l.b16 %v7731
        %v7902 = vunpack.c.h.b16 %v7731
        %v7903 = vunpack.c.l.b16 %v7732
        %v7904 = vunpack.c.l.b16 %v7733
        %v7905 = vunpack.c.h.b16 %v7733
        %v7906 = vunpack.c.l.b16 %v7734
        %v7907 = vunpack.c.l.b16 %v7735
        %v7908 = vunpack.c.h.b16 %v7735
        %v7909 = vunpack.c.l.b16 %v7736
        %v7910 = vunpack.c.l.b16 %v7737
        %v7911 = vunpack.c.h.b16 %v7737
        %v7912 = vunpack.c.l.b16 %v7738
        %v7913 = vunpack.c.l.b16 %v7739
        %v7914 = vunpack.c.h.b16 %v7739
        %v7915 = vunpack.c.l.b16 %v7740
        %v7916 = vunpack.c.l.b16 %v7741
        %v7917 = vunpack.c.h.b16 %v7741
        %v7918 = vunpack.c.l.b16 %v7742
        %v7919 = vunpack.c.l.b16 %v7743
        %v7920 = vunpack.c.h.b16 %v7743
        %v7921 = vunpack.c.l.b16 %v7744
        %v7922 = vpack.c.b16 %v7829, %v7826
        %v7923 = vpack.c.b16 %v7830, %v7827
        %v7924 = vpack.c.b16 %v7831, %v7828
        %v7925 = vpack.c.b16 %v7835, %v7832
        %v7926 = vpack.c.b16 %v7836, %v7833
        %v7927 = vpack.c.b16 %v7837, %v7834
        %v7928 = vpack.c.b16 %v7841, %v7838
        %v7929 = vpack.c.b16 %v7842, %v7839
        %v7930 = vpack.c.b16 %v7843, %v7840
        %v7931 = vpack.c.b16 %v7847, %v7844
        %v7932 = vpack.c.b16 %v7848, %v7845
        %v7933 = vpack.c.b16 %v7849, %v7846
        %v7934 = vpack.c.b16 %v7853, %v7850
        %v7935 = vpack.c.b16 %v7854, %v7851
        %v7936 = vpack.c.b16 %v7855, %v7852
        %v7937 = vpack.c.b16 %v7859, %v7856
        %v7938 = vpack.c.b16 %v7860, %v7857
        %v7939 = vpack.c.b16 %v7861, %v7858
        %v7940 = vpack.c.b16 %v7865, %v7862
        %v7941 = vpack.c.b16 %v7866, %v7863
        %v7942 = vpack.c.b16 %v7867, %v7864
        %v7943 = vpack.c.b16 %v7871, %v7868
        %v7944 = vpack.c.b16 %v7872, %v7869
        %v7945 = vpack.c.b16 %v7873, %v7870
        %v7946 = vpack.c.b16 %v7877, %v7874
        %v7947 = vpack.c.b16 %v7878, %v7875
        %v7948 = vpack.c.b16 %v7879, %v7876
        %v7949 = vpack.c.b16 %v7883, %v7880
        %v7950 = vpack.c.b16 %v7884, %v7881
        %v7951 = vpack.c.b16 %v7885, %v7882
        %v7952 = vpack.c.b16 %v7889, %v7886
        %v7953 = vpack.c.b16 %v7890, %v7887
        %v7954 = vpack.c.b16 %v7891, %v7888
        %v7955 = vpack.c.b16 %v7895, %v7892
        %v7956 = vpack.c.b16 %v7896, %v7893
        %v7957 = vpack.c.b16 %v7897, %v7894
        %v7958 = vpack.c.b16 %v7901, %v7898
        %v7959 = vpack.c.b16 %v7902, %v7899
        %v7960 = vpack.c.b16 %v7903, %v7900
        %v7961 = vpack.c.b16 %v7907, %v7904
        %v7962 = vpack.c.b16 %v7908, %v7905
        %v7963 = vpack.c.b16 %v7909, %v7906
        %v7964 = vpack.c.b16 %v7913, %v7910
        %v7965 = vpack.c.b16 %v7914, %v7911
        %v7966 = vpack.c.b16 %v7915, %v7912
        %v7967 = vpack.c.b16 %v7919, %v7916
        %v7968 = vpack.c.b16 %v7920, %v7917
        %v7969 = vpack.c.b16 %v7921, %v7918
        %8018 = vmatprep.subr.bf16.mxu0 %v7923
        %8019 = vmatpush1.bf16.msra.mxu0 %v7922
        %8020 = vmatprep.subr.bf16.mxu0 %v7926
        %8021 = vmatpush1.bf16.msra.mxu0 %v7925
        %8022 = vmatprep.subr.bf16.mxu0 %v7929
        %8023 = vmatpush1.bf16.msra.mxu0 %v7928
        %8024 = vmatprep.subr.bf16.mxu0 %v7932
        %8025 = vmatpush1.bf16.msra.mxu0 %v7931
        %8026 = vmatprep.subr.bf16.mxu0 %v7935
        %8027 = vmatpush1.bf16.msra.mxu0 %v7934
        %8028 = vmatprep.subr.bf16.mxu0 %v7938
        %8029 = vmatpush1.bf16.msra.mxu0 %v7937
        %8030 = vmatprep.subr.bf16.mxu0 %v7941
        %8031 = vmatpush1.bf16.msra.mxu0 %v7940
        %8032 = vmatprep.subr.bf16.mxu0 %v7944
        %8033 = vmatpush1.bf16.msra.mxu0 %v7943
        %8034 = vmatprep.subr.bf16.mxu0 %v7947
        %8035 = vmatpush1.bf16.msra.mxu0 %v7946
        %8036 = vmatprep.subr.bf16.mxu0 %v7950
        %8037 = vmatpush1.bf16.msra.mxu0 %v7949
        %8038 = vmatprep.subr.bf16.mxu0 %v7953
        %8039 = vmatpush1.bf16.msra.mxu0 %v7952
        %8040 = vmatprep.subr.bf16.mxu0 %v7956
        %8041 = vmatpush1.bf16.msra.mxu0 %v7955
        %8042 = vmatprep.subr.bf16.mxu0 %v7959
        %8043 = vmatpush1.bf16.msra.mxu0 %v7958
        %8044 = vmatprep.subr.bf16.mxu0 %v7962
        %8045 = vmatpush1.bf16.msra.mxu0 %v7961
        %8046 = vmatprep.subr.bf16.mxu0 %v7965
        %8047 = vmatpush1.bf16.msra.mxu0 %v7964
        %8048 = vmatprep.subr.bf16.mxu0 %v7968
        %8049 = vmatpush1.bf16.msra.mxu0 %v7967
        %8050 = vmatprep.mubr.bf16.mxu0 %v7618
        %8051 = vmatmul.mubr.bf16.gmra.mrb[0].mxu0 %v7617
        %v8052 = vpop.f32.mrb[0].mxu0
        %v8053 = vadd.f32 %v7750, %v8052
        %v8054 = vpop.f32.mrb[0].mxu0
        %v8055 = vadd.f32 %v7754, %v8054
        %v8056 = vpop.f32.mrb[0].mxu0
        %v8057 = vadd.f32 %v7750, %v8056
        %v8058 = vpop.f32.mrb[0].mxu0
        %v8059 = vadd.f32 %v7754, %v8058
        %8060 = vmatprep.mubr.bf16.mxu0 %v7620
        %8061 = vmatmul.mubr.bf16.gmra.mrb[0].mxu0 %v7619
        %v8062 = vpop.f32.mrb[0].mxu0
        %v8063 = vadd.f32 %v7750, %v8062
        %v8064 = vpop.f32.mrb[0].mxu0
        %v8065 = vadd.f32 %v7754, %v8064
        %v8066 = vpop.f32.mrb[0].mxu0
        %v8067 = vadd.f32 %v7750, %v8066
        %v8068 = vpop.f32.mrb[0].mxu0
        %v8069 = vadd.f32 %v7754, %v8068
        %8070 = vmatprep.mubr.bf16.mxu0 %v7622
        %8071 = vmatmul.mubr.bf16.gmra.mrb[0].mxu0 %v7621
        %v8072 = vpop.f32.mrb[0].mxu0
        %v8073 = vadd.f32 %v7750, %v8072
        %v8074 = vpop.f32.mrb[0].mxu0
        %v8075 = vadd.f32 %v7754, %v8074
        %v8076 = vpop.f32.mrb[0].mxu0
        %v8077 = vadd.f32 %v7750, %v8076
        %v8078 = vpop.f32.mrb[0].mxu0
        %v8079 = vadd.f32 %v7754, %v8078
        %8080 = vmatprep.mubr.bf16.mxu0 %v7624
        %8081 = vmatmul.mubr.bf16.gmra.mrb[0].mxu0 %v7623
        %v8082 = vpop.f32.mrb[0].mxu0
        %v8083 = vadd.f32 %v7750, %v8082
        %v8084 = vpop.f32.mrb[0].mxu0
        %v8085 = vadd.f32 %v7754, %v8084
        %v8086 = vpop.f32.mrb[0].mxu0
        %v8087 = vadd.f32 %v7750, %v8086
        %v8088 = vpop.f32.mrb[0].mxu0
        %v8089 = vadd.f32 %v7754, %v8088
        %8090 = vmatprep.mubr.bf16.mxu0 %v7626
        %8091 = vmatmul.mubr.bf16.gmra.mrb[0].mxu0 %v7625
        %v8092 = vpop.f32.mrb[0].mxu0
        %v8093 = vadd.f32 %v7750, %v8092
        %v8094 = vpop.f32.mrb[0].mxu0
        %v8095 = vadd.f32 %v7754, %v8094
        %v8096 = vpop.f32.mrb[0].mxu0
        %v8097 = vadd.f32 %v7750, %v8096
        %v8098 = vpop.f32.mrb[0].mxu0
        %v8099 = vadd.f32 %v7754, %v8098
        %8100 = vmatprep.mubr.bf16.mxu0 %v7628
        %8101 = vmatmul.mubr.bf16.gmra.mrb[0].mxu0 %v7627
        %v8102 = vpop.f32.mrb[0].mxu0
        %v8103 = vadd.f32 %v7750, %v8102
        %v8104 = vpop.f32.mrb[0].mxu0
        %v8105 = vadd.f32 %v7754, %v8104
        %v8106 = vpop.f32.mrb[0].mxu0
        %v8107 = vadd.f32 %v7750, %v8106
        %v8108 = vpop.f32.mrb[0].mxu0
        %v8109 = vadd.f32 %v7754, %v8108
        %8110 = vmatprep.mubr.bf16.mxu0 %v7630
        %8111 = vmatmul.mubr.bf16.gmra.mrb[0].mxu0 %v7629
        %v8112 = vpop.f32.mrb[0].mxu0
        %v8113 = vadd.f32 %v7750, %v8112
        %v8114 = vpop.f32.mrb[0].mxu0
        %v8115 = vadd.f32 %v7754, %v8114
        %v8116 = vpop.f32.mrb[0].mxu0
        %v8117 = vadd.f32 %v7750, %v8116
        %v8118 = vpop.f32.mrb[0].mxu0
        %v8119 = vadd.f32 %v7754, %v8118
        %8120 = vmatprep.mubr.bf16.mxu0 %v7632
        %8121 = vmatmul.mubr.bf16.gmra.mrb[0].mxu0 %v7631
        %v8122 = vpop.f32.mrb[0].mxu0
        %v8123 = vadd.f32 %v7750, %v8122
        %v8124 = vpop.f32.mrb[0].mxu0
        %v8125 = vadd.f32 %v7754, %v8124
        %v8126 = vpop.f32.mrb[0].mxu0
        %v8127 = vadd.f32 %v7750, %v8126
        %v8128 = vpop.f32.mrb[0].mxu0
        %v8129 = vadd.f32 %v7754, %v8128
        %8130 = vmatprep.mubr.bf16.mxu0 %v7634
        %8131 = vmatmul.mubr.bf16.gmra.mrb[0].mxu0 %v7633
        %v8132 = vpop.f32.mrb[0].mxu0
        %v8133 = vadd.f32 %v7750, %v8132
        %v8134 = vpop.f32.mrb[0].mxu0
        %v8135 = vadd.f32 %v7754, %v8134
        %v8136 = vpop.f32.mrb[0].mxu0
        %v8137 = vadd.f32 %v7750, %v8136
        %v8138 = vpop.f32.mrb[0].mxu0
        %v8139 = vadd.f32 %v7754, %v8138
        %8140 = vmatprep.mubr.bf16.mxu0 %v7636
        %8141 = vmatmul.mubr.bf16.gmra.mrb[0].mxu0 %v7635
        %v8142 = vpop.f32.mrb[0].mxu0
        %v8143 = vadd.f32 %v7750, %v8142
        %v8144 = vpop.f32.mrb[0].mxu0
        %v8145 = vadd.f32 %v7754, %v8144
        %v8146 = vpop.f32.mrb[0].mxu0
        %v8147 = vadd.f32 %v7750, %v8146
        %v8148 = vpop.f32.mrb[0].mxu0
        %v8149 = vadd.f32 %v7754, %v8148
        %8150 = vmatprep.mubr.bf16.mxu0 %v7638
        %8151 = vmatmul.mubr.bf16.gmra.mrb[0].mxu0 %v7637
        %v8152 = vpop.f32.mrb[0].mxu0
        %v8153 = vadd.f32 %v7750, %v8152
        %v8154 = vpop.f32.mrb[0].mxu0
        %v8155 = vadd.f32 %v7754, %v8154
        %v8156 = vpop.f32.mrb[0].mxu0
        %v8157 = vadd.f32 %v7750, %v8156
        %v8158 = vpop.f32.mrb[0].mxu0
        %v8159 = vadd.f32 %v7754, %v8158
        %8160 = vmatprep.mubr.bf16.mxu0 %v7640
        %8161 = vmatmul.mubr.bf16.gmra.mrb[0].mxu0 %v7639
        %v8162 = vpop.f32.mrb[0].mxu0
        %v8163 = vadd.f32 %v7750, %v8162
        %v8164 = vpop.f32.mrb[0].mxu0
        %v8165 = vadd.f32 %v7754, %v8164
        %v8166 = vpop.f32.mrb[0].mxu0
        %v8167 = vadd.f32 %v7750, %v8166
        %v8168 = vpop.f32.mrb[0].mxu0
        %v8169 = vadd.f32 %v7754, %v8168
        %8170 = vmatprep.mubr.bf16.mxu0 %v7642
        %8171 = vmatmul.mubr.bf16.gmra.mrb[0].mxu0 %v7641
        %v8172 = vpop.f32.mrb[0].mxu0
        %v8173 = vadd.f32 %v7750, %v8172
        %v8174 = vpop.f32.mrb[0].mxu0
        %v8175 = vadd.f32 %v7754, %v8174
        %v8176 = vpop.f32.mrb[0].mxu0
        %v8177 = vadd.f32 %v7750, %v8176
        %v8178 = vpop.f32.mrb[0].mxu0
        %v8179 = vadd.f32 %v7754, %v8178
        %8180 = vmatprep.mubr.bf16.mxu0 %v7644
        %8181 = vmatmul.mubr.bf16.gmra.mrb[0].mxu0 %v7643
        %v8182 = vpop.f32.mrb[0].mxu0
        %v8183 = vadd.f32 %v7750, %v8182
        %v8184 = vpop.f32.mrb[0].mxu0
        %v8185 = vadd.f32 %v7754, %v8184
        %v8186 = vpop.f32.mrb[0].mxu0
        %v8187 = vadd.f32 %v7750, %v8186
        %v8188 = vpop.f32.mrb[0].mxu0
        %v8189 = vadd.f32 %v7754, %v8188
        %8190 = vmatprep.mubr.bf16.mxu0 %v7646
        %8191 = vmatmul.mubr.bf16.gmra.mrb[0].mxu0 %v7645
        %v8192 = vpop.f32.mrb[0].mxu0
        %v8193 = vadd.f32 %v7750, %v8192
        %v8194 = vpop.f32.mrb[0].mxu0
        %v8195 = vadd.f32 %v7754, %v8194
        %v8196 = vpop.f32.mrb[0].mxu0
        %v8197 = vadd.f32 %v7750, %v8196
        %v8198 = vpop.f32.mrb[0].mxu0
        %v8199 = vadd.f32 %v7754, %v8198
        %8200 = vmatprep.mubr.bf16.mxu0 %v7648
        %8201 = vmatmul.mubr.bf16.gmra.mrb[0].mxu0 %v7647
        %v8202 = vpop.f32.mrb[0].mxu0
        %v8203 = vadd.f32 %v7750, %v8202
        %v8204 = vpop.f32.mrb[0].mxu0
        %v8205 = vadd.f32 %v7754, %v8204
        %v8206 = vpop.f32.mrb[0].mxu0
        %v8207 = vadd.f32 %v7750, %v8206
        %v8208 = vpop.f32.mrb[0].mxu0
        %v8209 = vadd.f32 %v7754, %v8208
        %8210 = vmatprep.mubr.bf16.mxu0 %v7650
        %8211 = vmatmul.mubr.bf16.gmra.mrb[0].mxu0 %v7649
        %v8212 = vpop.f32.mrb[0].mxu0
        %v8213 = vadd.f32 %v7750, %v8212
        %v8214 = vpop.f32.mrb[0].mxu0
        %v8215 = vadd.f32 %v7754, %v8214
        %v8216 = vpop.f32.mrb[0].mxu0
        %v8217 = vadd.f32 %v7750, %v8216
        %v8218 = vpop.f32.mrb[0].mxu0
        %v8219 = vadd.f32 %v7754, %v8218
        %8220 = vmatprep.mubr.bf16.mxu0 %v7652
        %8221 = vmatmul.mubr.bf16.gmra.mrb[0].mxu0 %v7651
        %v8222 = vpop.f32.mrb[0].mxu0
        %v8223 = vadd.f32 %v7750, %v8222
        %v8224 = vpop.f32.mrb[0].mxu0
        %v8225 = vadd.f32 %v7754, %v8224
        %v8226 = vpop.f32.mrb[0].mxu0
        %v8227 = vadd.f32 %v7750, %v8226
        %v8228 = vpop.f32.mrb[0].mxu0
        %v8229 = vadd.f32 %v7754, %v8228
        %8230 = vmatprep.mubr.bf16.mxu0 %v7654
        %8231 = vmatmul.mubr.bf16.gmra.mrb[0].mxu0 %v7653
        %v8232 = vpop.f32.mrb[0].mxu0
        %v8233 = vadd.f32 %v7750, %v8232
        %v8234 = vpop.f32.mrb[0].mxu0
        %v8235 = vadd.f32 %v7754, %v8234
        %v8236 = vpop.f32.mrb[0].mxu0
        %v8237 = vadd.f32 %v7750, %v8236
        %v8238 = vpop.f32.mrb[0].mxu0
        %v8239 = vadd.f32 %v7754, %v8238
        %8240 = vmatprep.mubr.bf16.mxu0 %v7656
        %8241 = vmatmul.mubr.bf16.gmra.mrb[0].mxu0 %v7655
        %v8242 = vpop.f32.mrb[0].mxu0
        %v8243 = vadd.f32 %v7750, %v8242
        %v8244 = vpop.f32.mrb[0].mxu0
        %v8245 = vadd.f32 %v7754, %v8244
        %v8246 = vpop.f32.mrb[0].mxu0
        %v8247 = vadd.f32 %v7750, %v8246
        %v8248 = vpop.f32.mrb[0].mxu0
        %v8249 = vadd.f32 %v7754, %v8248
        %8250 = vmatprep.mubr.bf16.mxu0 %v7658
        %8251 = vmatmul.mubr.bf16.gmra.mrb[0].mxu0 %v7657
        %v8252 = vpop.f32.mrb[0].mxu0
        %v8253 = vadd.f32 %v7750, %v8252
        %v8254 = vpop.f32.mrb[0].mxu0
        %v8255 = vadd.f32 %v7754, %v8254
        %v8256 = vpop.f32.mrb[0].mxu0
        %v8257 = vadd.f32 %v7750, %v8256
        %v8258 = vpop.f32.mrb[0].mxu0
        %v8259 = vadd.f32 %v7754, %v8258
        %8260 = vmatprep.mubr.bf16.mxu0 %v7660
        %8261 = vmatmul.mubr.bf16.gmra.mrb[0].mxu0 %v7659
        %v8262 = vpop.f32.mrb[0].mxu0
        %v8263 = vadd.f32 %v7750, %v8262
        %v8264 = vpop.f32.mrb[0].mxu0
        %v8265 = vadd.f32 %v7754, %v8264
        %v8266 = vpop.f32.mrb[0].mxu0
        %v8267 = vadd.f32 %v7750, %v8266
        %v8268 = vpop.f32.mrb[0].mxu0
        %v8269 = vadd.f32 %v7754, %v8268
        %8270 = vmatprep.mubr.bf16.mxu0 %v7662
        %8271 = vmatmul.mubr.bf16.gmra.mrb[0].mxu0 %v7661
        %v8272 = vpop.f32.mrb[0].mxu0
        %v8273 = vadd.f32 %v7750, %v8272
        %v8274 = vpop.f32.mrb[0].mxu0
        %v8275 = vadd.f32 %v7754, %v8274
        %v8276 = vpop.f32.mrb[0].mxu0
        %v8277 = vadd.f32 %v7750, %v8276
        %v8278 = vpop.f32.mrb[0].mxu0
        %v8279 = vadd.f32 %v7754, %v8278
        %8280 = vmatprep.mubr.bf16.mxu0 %v7664
        %8281 = vmatmul.mubr.bf16.gmra.mrb[0].mxu0 %v7663
        %v8282 = vpop.f32.mrb[0].mxu0
        %v8283 = vadd.f32 %v7750, %v8282
        %v8284 = vpop.f32.mrb[0].mxu0
        %v8285 = vadd.f32 %v7754, %v8284
        %v8286 = vpop.f32.mrb[0].mxu0
        %v8287 = vadd.f32 %v7750, %v8286
        %v8288 = vpop.f32.mrb[0].mxu0
        %v8289 = vadd.f32 %v7754, %v8288
        %8290 = vmatprep.mubr.bf16.mxu0 %v7666
        %8291 = vmatmul.mubr.bf16.gmra.mrb[0].mxu0 %v7665
        %v8292 = vpop.f32.mrb[0].mxu0
        %v8293 = vadd.f32 %v7750, %v8292
        %v8294 = vpop.f32.mrb[0].mxu0
        %v8295 = vadd.f32 %v7754, %v8294
        %v8296 = vpop.f32.mrb[0].mxu0
        %v8297 = vadd.f32 %v7750, %v8296
        %v8298 = vpop.f32.mrb[0].mxu0
        %v8299 = vadd.f32 %v7754, %v8298
        %8300 = vmatprep.mubr.bf16.mxu0 %v7668
        %8301 = vmatmul.mubr.bf16.gmra.mrb[0].mxu0 %v7667
        %v8302 = vpop.f32.mrb[0].mxu0
        %v8303 = vadd.f32 %v7750, %v8302
        %v8304 = vpop.f32.mrb[0].mxu0
        %v8305 = vadd.f32 %v7754, %v8304
        %v8306 = vpop.f32.mrb[0].mxu0
        %v8307 = vadd.f32 %v7750, %v8306
        %v8308 = vpop.f32.mrb[0].mxu0
        %v8309 = vadd.f32 %v7754, %v8308
        %8310 = vmatprep.mubr.bf16.mxu0 %v7670
        %8311 = vmatmul.mubr.bf16.gmra.mrb[0].mxu0 %v7669
        %v8312 = vpop.f32.mrb[0].mxu0
        %v8313 = vadd.f32 %v7750, %v8312
        %v8314 = vpop.f32.mrb[0].mxu0
        %v8315 = vadd.f32 %v7754, %v8314
        %v8316 = vpop.f32.mrb[0].mxu0
        %v8317 = vadd.f32 %v7750, %v8316
        %v8318 = vpop.f32.mrb[0].mxu0
        %v8319 = vadd.f32 %v7754, %v8318
        %8320 = vmatprep.mubr.bf16.mxu0 %v7672
        %8321 = vmatmul.mubr.bf16.gmra.mrb[0].mxu0 %v7671
        %v8322 = vpop.f32.mrb[0].mxu0
        %v8323 = vadd.f32 %v7750, %v8322
        %v8324 = vpop.f32.mrb[0].mxu0
        %v8325 = vadd.f32 %v7754, %v8324
        %v8326 = vpop.f32.mrb[0].mxu0
        %v8327 = vadd.f32 %v7750, %v8326
        %v8328 = vpop.f32.mrb[0].mxu0
        %v8329 = vadd.f32 %v7754, %v8328
        %8330 = vmatprep.mubr.bf16.mxu0 %v7674
        %8331 = vmatmul.mubr.bf16.gmra.mrb[0].mxu0 %v7673
        %v8332 = vpop.f32.mrb[0].mxu0
        %v8333 = vadd.f32 %v7750, %v8332
        %v8334 = vpop.f32.mrb[0].mxu0
        %v8335 = vadd.f32 %v7754, %v8334
        %v8336 = vpop.f32.mrb[0].mxu0
        %v8337 = vadd.f32 %v7750, %v8336
        %v8338 = vpop.f32.mrb[0].mxu0
        %v8339 = vadd.f32 %v7754, %v8338
        %8340 = vmatprep.mubr.bf16.mxu0 %v7676
        %8341 = vmatmul.mubr.bf16.gmra.mrb[0].mxu0 %v7675
        %v8342 = vpop.f32.mrb[0].mxu0
        %v8343 = vadd.f32 %v7750, %v8342
        %v8344 = vpop.f32.mrb[0].mxu0
        %v8345 = vadd.f32 %v7754, %v8344
        %v8346 = vpop.f32.mrb[0].mxu0
        %v8347 = vadd.f32 %v7750, %v8346
        %v8348 = vpop.f32.mrb[0].mxu0
        %v8349 = vadd.f32 %v7754, %v8348
        %8350 = vmatprep.mubr.bf16.mxu0 %v7678
        %8351 = vmatmul.mubr.bf16.gmra.mrb[0].mxu0 %v7677
        %v8352 = vpop.f32.mrb[0].mxu0
        %v8353 = vadd.f32 %v7750, %v8352
        %v8354 = vpop.f32.mrb[0].mxu0
        %v8355 = vadd.f32 %v7754, %v8354
        %v8356 = vpop.f32.mrb[0].mxu0
        %v8357 = vadd.f32 %v7750, %v8356
        %v8358 = vpop.f32.mrb[0].mxu0
        %v8359 = vadd.f32 %v7754, %v8358
        %8360 = vmatprep.mubr.bf16.mxu0 %v7680
        %8361 = vmatmul.mubr.bf16.gmra.mrb[0].mxu0 %v7679
        %v8362 = vpop.f32.mrb[0].mxu0
        %v8363 = vadd.f32 %v7750, %v8362
        %v8364 = vpop.f32.mrb[0].mxu0
        %v8365 = vadd.f32 %v7754, %v8364
        %v8366 = vpop.f32.mrb[0].mxu0
        %v8367 = vadd.f32 %v7750, %v8366
        %v8368 = vpop.f32.mrb[0].mxu0
        %v8369 = vadd.f32 %v7754, %v8368
        %8370 = vdwg.mxu0
        %8371 = vmatprep.subr.bf16.mxu0 0
        %8372 = vmatpush1.bf16.msra.mxu0 %v7924
        %8373 = vmatprep.subr.bf16.mxu0 0
        %8374 = vmatpush1.bf16.msra.mxu0 %v7927
        %8375 = vmatprep.subr.bf16.mxu0 0
        %8376 = vmatpush1.bf16.msra.mxu0 %v7930
        %8377 = vmatprep.subr.bf16.mxu0 0
        %8378 = vmatpush1.bf16.msra.mxu0 %v7933
        %8379 = vmatprep.subr.bf16.mxu0 0
        %8380 = vmatpush1.bf16.msra.mxu0 %v7936
        %8381 = vmatprep.subr.bf16.mxu0 0
        %8382 = vmatpush1.bf16.msra.mxu0 %v7939
        %8383 = vmatprep.subr.bf16.mxu0 0
        %8384 = vmatpush1.bf16.msra.mxu0 %v7942
        %8385 = vmatprep.subr.bf16.mxu0 0
        %8386 = vmatpush1.bf16.msra.mxu0 %v7945
        %8387 = vmatprep.subr.bf16.mxu0 0
        %8388 = vmatpush1.bf16.msra.mxu0 %v7948
        %8389 = vmatprep.subr.bf16.mxu0 0
        %8390 = vmatpush1.bf16.msra.mxu0 %v7951
        %8391 = vmatprep.subr.bf16.mxu0 0
        %8392 = vmatpush1.bf16.msra.mxu0 %v7954
        %8393 = vmatprep.subr.bf16.mxu0 0
        %8394 = vmatpush1.bf16.msra.mxu0 %v7957
        %8395 = vmatprep.subr.bf16.mxu0 0
        %8396 = vmatpush1.bf16.msra.mxu0 %v7960
        %8397 = vmatprep.subr.bf16.mxu0 0
        %8398 = vmatpush1.bf16.msra.mxu0 %v7963
        %8399 = vmatprep.subr.bf16.mxu0 0
        %8400 = vmatpush1.bf16.msra.mxu0 %v7966
        %8401 = vmatprep.subr.bf16.mxu0 0
        %8402 = vmatpush1.bf16.msra.mxu0 %v7969
        %8403 = vmatprep.mubr.bf16.mxu0 %v7618
        %8404 = vmatmul.mubr.bf16.gmra.mrb[0].mxu0 %v7617
        %v8405 = vpop.f32.mrb[0].mxu0
        %v8406 = vadd.f32 %v7758, %v8405
        %v8407 = vpop.f32.mrb[0].mxu0
        %v8408 = vpop.f32.mrb[0].mxu0
        %v8409 = vadd.f32 %v7758, %v8408
        %v8410 = vpop.f32.mrb[0].mxu0
        %8411 = vmatprep.mubr.bf16.mxu0 %v7620
        %8412 = vmatmul.mubr.bf16.gmra.mrb[0].mxu0 %v7619
        %v8413 = vpop.f32.mrb[0].mxu0
        %v8414 = vadd.f32 %v7758, %v8413
        %v8415 = vpop.f32.mrb[0].mxu0
        %v8416 = vpop.f32.mrb[0].mxu0
        %v8417 = vadd.f32 %v7758, %v8416
        %v8418 = vpop.f32.mrb[0].mxu0
        %8419 = vmatprep.mubr.bf16.mxu0 %v7622
        %8420 = vmatmul.mubr.bf16.gmra.mrb[0].mxu0 %v7621
        %v8421 = vpop.f32.mrb[0].mxu0
        %v8422 = vadd.f32 %v7758, %v8421
        %v8423 = vpop.f32.mrb[0].mxu0
        %v8424 = vpop.f32.mrb[0].mxu0
        %v8425 = vadd.f32 %v7758, %v8424
        %v8426 = vpop.f32.mrb[0].mxu0
        %8427 = vmatprep.mubr.bf16.mxu0 %v7624
        %8428 = vmatmul.mubr.bf16.gmra.mrb[0].mxu0 %v7623
        %v8429 = vpop.f32.mrb[0].mxu0
        %v8430 = vadd.f32 %v7758, %v8429
        %v8431 = vpop.f32.mrb[0].mxu0
        %v8432 = vpop.f32.mrb[0].mxu0
        %v8433 = vadd.f32 %v7758, %v8432
        %v8434 = vpop.f32.mrb[0].mxu0
        %8435 = vmatprep.mubr.bf16.mxu0 %v7626
        %8436 = vmatmul.mubr.bf16.gmra.mrb[0].mxu0 %v7625
        %v8437 = vpop.f32.mrb[0].mxu0
        %v8438 = vadd.f32 %v7758, %v8437
        %v8439 = vpop.f32.mrb[0].mxu0
        %v8440 = vpop.f32.mrb[0].mxu0
        %v8441 = vadd.f32 %v7758, %v8440
        %v8442 = vpop.f32.mrb[0].mxu0
        %8443 = vmatprep.mubr.bf16.mxu0 %v7628
        %8444 = vmatmul.mubr.bf16.gmra.mrb[0].mxu0 %v7627
        %v8445 = vpop.f32.mrb[0].mxu0
        %v8446 = vadd.f32 %v7758, %v8445
        %v8447 = vpop.f32.mrb[0].mxu0
        %v8448 = vpop.f32.mrb[0].mxu0
        %v8449 = vadd.f32 %v7758, %v8448
        %v8450 = vpop.f32.mrb[0].mxu0
        %8451 = vmatprep.mubr.bf16.mxu0 %v7630
        %8452 = vmatmul.mubr.bf16.gmra.mrb[0].mxu0 %v7629
        %v8453 = vpop.f32.mrb[0].mxu0
        %v8454 = vadd.f32 %v7758, %v8453
        %v8455 = vpop.f32.mrb[0].mxu0
        %v8456 = vpop.f32.mrb[0].mxu0
        %v8457 = vadd.f32 %v7758, %v8456
        %v8458 = vpop.f32.mrb[0].mxu0
        %8459 = vmatprep.mubr.bf16.mxu0 %v7632
        %8460 = vmatmul.mubr.bf16.gmra.mrb[0].mxu0 %v7631
        %v8461 = vpop.f32.mrb[0].mxu0
        %v8462 = vadd.f32 %v7758, %v8461
        %v8463 = vpop.f32.mrb[0].mxu0
        %v8464 = vpop.f32.mrb[0].mxu0
        %v8465 = vadd.f32 %v7758, %v8464
        %v8466 = vpop.f32.mrb[0].mxu0
        %8467 = vmatprep.mubr.bf16.mxu0 %v7634
        %8468 = vmatmul.mubr.bf16.gmra.mrb[0].mxu0 %v7633
        %v8469 = vpop.f32.mrb[0].mxu0
        %v8470 = vadd.f32 %v7758, %v8469
        %v8471 = vpop.f32.mrb[0].mxu0
        %v8472 = vpop.f32.mrb[0].mxu0
        %v8473 = vadd.f32 %v7758, %v8472
        %v8474 = vpop.f32.mrb[0].mxu0
        %8475 = vmatprep.mubr.bf16.mxu0 %v7636
        %8476 = vmatmul.mubr.bf16.gmra.mrb[0].mxu0 %v7635
        %v8477 = vpop.f32.mrb[0].mxu0
        %v8478 = vadd.f32 %v7758, %v8477
        %v8479 = vpop.f32.mrb[0].mxu0
        %v8480 = vpop.f32.mrb[0].mxu0
        %v8481 = vadd.f32 %v7758, %v8480
        %v8482 = vpop.f32.mrb[0].mxu0
        %8483 = vmatprep.mubr.bf16.mxu0 %v7638
        %8484 = vmatmul.mubr.bf16.gmra.mrb[0].mxu0 %v7637
        %v8485 = vpop.f32.mrb[0].mxu0
        %v8486 = vadd.f32 %v7758, %v8485
        %v8487 = vpop.f32.mrb[0].mxu0
        %v8488 = vpop.f32.mrb[0].mxu0
        %v8489 = vadd.f32 %v7758, %v8488
        %v8490 = vpop.f32.mrb[0].mxu0
        %8491 = vmatprep.mubr.bf16.mxu0 %v7640
        %8492 = vmatmul.mubr.bf16.gmra.mrb[0].mxu0 %v7639
        %v8493 = vpop.f32.mrb[0].mxu0
        %v8494 = vadd.f32 %v7758, %v8493
        %v8495 = vpop.f32.mrb[0].mxu0
        %v8496 = vpop.f32.mrb[0].mxu0
        %v8497 = vadd.f32 %v7758, %v8496
        %v8498 = vpop.f32.mrb[0].mxu0
        %8499 = vmatprep.mubr.bf16.mxu0 %v7642
        %8500 = vmatmul.mubr.bf16.gmra.mrb[0].mxu0 %v7641
        %v8501 = vpop.f32.mrb[0].mxu0
        %v8502 = vadd.f32 %v7758, %v8501
        %v8503 = vpop.f32.mrb[0].mxu0
        %v8504 = vpop.f32.mrb[0].mxu0
        %v8505 = vadd.f32 %v7758, %v8504
        %v8506 = vpop.f32.mrb[0].mxu0
        %8507 = vmatprep.mubr.bf16.mxu0 %v7644
        %8508 = vmatmul.mubr.bf16.gmra.mrb[0].mxu0 %v7643
        %v8509 = vpop.f32.mrb[0].mxu0
        %v8510 = vadd.f32 %v7758, %v8509
        %v8511 = vpop.f32.mrb[0].mxu0
        %v8512 = vpop.f32.mrb[0].mxu0
        %v8513 = vadd.f32 %v7758, %v8512
        %v8514 = vpop.f32.mrb[0].mxu0
        %8515 = vmatprep.mubr.bf16.mxu0 %v7646
        %8516 = vmatmul.mubr.bf16.gmra.mrb[0].mxu0 %v7645
        %v8517 = vpop.f32.mrb[0].mxu0
        %v8518 = vadd.f32 %v7758, %v8517
        %v8519 = vpop.f32.mrb[0].mxu0
        %v8520 = vpop.f32.mrb[0].mxu0
        %v8521 = vadd.f32 %v7758, %v8520
        %v8522 = vpop.f32.mrb[0].mxu0
        %8523 = vmatprep.mubr.bf16.mxu0 %v7648
        %8524 = vmatmul.mubr.bf16.gmra.mrb[0].mxu0 %v7647
        %v8525 = vpop.f32.mrb[0].mxu0
        %v8526 = vadd.f32 %v7758, %v8525
        %v8527 = vpop.f32.mrb[0].mxu0
        %v8528 = vpop.f32.mrb[0].mxu0
        %v8529 = vadd.f32 %v7758, %v8528
        %v8530 = vpop.f32.mrb[0].mxu0
        %8531 = vmatprep.mubr.bf16.mxu0 %v7650
        %8532 = vmatmul.mubr.bf16.gmra.mrb[0].mxu0 %v7649
        %v8533 = vpop.f32.mrb[0].mxu0
        %v8534 = vadd.f32 %v7758, %v8533
        %v8535 = vpop.f32.mrb[0].mxu0
        %v8536 = vpop.f32.mrb[0].mxu0
        %v8537 = vadd.f32 %v7758, %v8536
        %v8538 = vpop.f32.mrb[0].mxu0
        %8539 = vmatprep.mubr.bf16.mxu0 %v7652
        %8540 = vmatmul.mubr.bf16.gmra.mrb[0].mxu0 %v7651
        %v8541 = vpop.f32.mrb[0].mxu0
        %v8542 = vadd.f32 %v7758, %v8541
        %v8543 = vpop.f32.mrb[0].mxu0
        %v8544 = vpop.f32.mrb[0].mxu0
        %v8545 = vadd.f32 %v7758, %v8544
        %v8546 = vpop.f32.mrb[0].mxu0
        %8547 = vmatprep.mubr.bf16.mxu0 %v7654
        %8548 = vmatmul.mubr.bf16.gmra.mrb[0].mxu0 %v7653
        %v8549 = vpop.f32.mrb[0].mxu0
        %v8550 = vadd.f32 %v7758, %v8549
        %v8551 = vpop.f32.mrb[0].mxu0
        %v8552 = vpop.f32.mrb[0].mxu0
        %v8553 = vadd.f32 %v7758, %v8552
        %v8554 = vpop.f32.mrb[0].mxu0
        %8555 = vmatprep.mubr.bf16.mxu0 %v7656
        %8556 = vmatmul.mubr.bf16.gmra.mrb[0].mxu0 %v7655
        %v8557 = vpop.f32.mrb[0].mxu0
        %v8558 = vadd.f32 %v7758, %v8557
        %v8559 = vpop.f32.mrb[0].mxu0
        %v8560 = vpop.f32.mrb[0].mxu0
        %v8561 = vadd.f32 %v7758, %v8560
        %v8562 = vpop.f32.mrb[0].mxu0
        %8563 = vmatprep.mubr.bf16.mxu0 %v7658
        %8564 = vmatmul.mubr.bf16.gmra.mrb[0].mxu0 %v7657
        %v8565 = vpop.f32.mrb[0].mxu0
        %v8566 = vadd.f32 %v7758, %v8565
        %v8567 = vpop.f32.mrb[0].mxu0
        %v8568 = vpop.f32.mrb[0].mxu0
        %v8569 = vadd.f32 %v7758, %v8568
        %v8570 = vpop.f32.mrb[0].mxu0
        %8571 = vmatprep.mubr.bf16.mxu0 %v7660
        %8572 = vmatmul.mubr.bf16.gmra.mrb[0].mxu0 %v7659
        %v8573 = vpop.f32.mrb[0].mxu0
        %v8574 = vadd.f32 %v7758, %v8573
        %v8575 = vpop.f32.mrb[0].mxu0
        %v8576 = vpop.f32.mrb[0].mxu0
        %v8577 = vadd.f32 %v7758, %v8576
        %v8578 = vpop.f32.mrb[0].mxu0
        %8579 = vmatprep.mubr.bf16.mxu0 %v7662
        %8580 = vmatmul.mubr.bf16.gmra.mrb[0].mxu0 %v7661
        %v8581 = vpop.f32.mrb[0].mxu0
        %v8582 = vadd.f32 %v7758, %v8581
        %v8583 = vpop.f32.mrb[0].mxu0
        %v8584 = vpop.f32.mrb[0].mxu0
        %v8585 = vadd.f32 %v7758, %v8584
        %v8586 = vpop.f32.mrb[0].mxu0
        %8587 = vmatprep.mubr.bf16.mxu0 %v7664
        %8588 = vmatmul.mubr.bf16.gmra.mrb[0].mxu0 %v7663
        %v8589 = vpop.f32.mrb[0].mxu0
        %v8590 = vadd.f32 %v7758, %v8589
        %v8591 = vpop.f32.mrb[0].mxu0
        %v8592 = vpop.f32.mrb[0].mxu0
        %v8593 = vadd.f32 %v7758, %v8592
        %v8594 = vpop.f32.mrb[0].mxu0
        %8595 = vmatprep.mubr.bf16.mxu0 %v7666
        %8596 = vmatmul.mubr.bf16.gmra.mrb[0].mxu0 %v7665
        %v8597 = vpop.f32.mrb[0].mxu0
        %v8598 = vadd.f32 %v7758, %v8597
        %v8599 = vpop.f32.mrb[0].mxu0
        %v8600 = vpop.f32.mrb[0].mxu0
        %v8601 = vadd.f32 %v7758, %v8600
        %v8602 = vpop.f32.mrb[0].mxu0
        %8603 = vmatprep.mubr.bf16.mxu0 %v7668
        %8604 = vmatmul.mubr.bf16.gmra.mrb[0].mxu0 %v7667
        %v8605 = vpop.f32.mrb[0].mxu0
        %v8606 = vadd.f32 %v7758, %v8605
        %v8607 = vpop.f32.mrb[0].mxu0
        %v8608 = vpop.f32.mrb[0].mxu0
        %v8609 = vadd.f32 %v7758, %v8608
        %v8610 = vpop.f32.mrb[0].mxu0
        %8611 = vmatprep.mubr.bf16.mxu0 %v7670
        %8612 = vmatmul.mubr.bf16.gmra.mrb[0].mxu0 %v7669
        %v8613 = vpop.f32.mrb[0].mxu0
        %v8614 = vadd.f32 %v7758, %v8613
        %v8615 = vpop.f32.mrb[0].mxu0
        %v8616 = vpop.f32.mrb[0].mxu0
        %v8617 = vadd.f32 %v7758, %v8616
        %v8618 = vpop.f32.mrb[0].mxu0
        %8619 = vmatprep.mubr.bf16.mxu0 %v7672
        %8620 = vmatmul.mubr.bf16.gmra.mrb[0].mxu0 %v7671
        %v8621 = vpop.f32.mrb[0].mxu0
        %v8622 = vadd.f32 %v7758, %v8621
        %v8623 = vpop.f32.mrb[0].mxu0
        %v8624 = vpop.f32.mrb[0].mxu0
        %v8625 = vadd.f32 %v7758, %v8624
        %v8626 = vpop.f32.mrb[0].mxu0
        %8627 = vmatprep.mubr.bf16.mxu0 %v7674
        %8628 = vmatmul.mubr.bf16.gmra.mrb[0].mxu0 %v7673
        %v8629 = vpop.f32.mrb[0].mxu0
        %v8630 = vadd.f32 %v7758, %v8629
        %v8631 = vpop.f32.mrb[0].mxu0
        %v8632 = vpop.f32.mrb[0].mxu0
        %v8633 = vadd.f32 %v7758, %v8632
        %v8634 = vpop.f32.mrb[0].mxu0
        %8635 = vmatprep.mubr.bf16.mxu0 %v7676
        %8636 = vmatmul.mubr.bf16.gmra.mrb[0].mxu0 %v7675
        %v8637 = vpop.f32.mrb[0].mxu0
        %v8638 = vadd.f32 %v7758, %v8637
        %v8639 = vpop.f32.mrb[0].mxu0
        %v8640 = vpop.f32.mrb[0].mxu0
        %v8641 = vadd.f32 %v7758, %v8640
        %v8642 = vpop.f32.mrb[0].mxu0
        %8643 = vmatprep.mubr.bf16.mxu0 %v7678
        %8644 = vmatmul.mubr.bf16.gmra.mrb[0].mxu0 %v7677
        %v8645 = vpop.f32.mrb[0].mxu0
        %v8646 = vadd.f32 %v7758, %v8645
        %v8647 = vpop.f32.mrb[0].mxu0
        %v8648 = vpop.f32.mrb[0].mxu0
        %v8649 = vadd.f32 %v7758, %v8648
        %v8650 = vpop.f32.mrb[0].mxu0
        %8651 = vmatprep.mubr.bf16.mxu0 %v7680
        %8652 = vmatmul.mubr.bf16.gmra.mrb[0].mxu0 %v7679
        %v8653 = vpop.f32.mrb[0].mxu0
        %v8654 = vadd.f32 %v7758, %v8653
        %v8655 = vpop.f32.mrb[0].mxu0
        %v8656 = vpop.f32.mrb[0].mxu0
        %v8657 = vadd.f32 %v7758, %v8656
        %v8658 = vpop.f32.mrb[0].mxu0
        %8659 = vdwg.mxu0
        %v8660 = vpack.c.bf16 %v8057, %v8053
        %v8661 = vpack.c.bf16 %v8059, %v8055
        %v8662 = vpack.c.bf16 %v8067, %v8063
        %v8663 = vpack.c.bf16 %v8069, %v8065
        %v8664 = vpack.c.bf16 %v8077, %v8073
        %v8665 = vpack.c.bf16 %v8079, %v8075
        %v8666 = vpack.c.bf16 %v8087, %v8083
        %v8667 = vpack.c.bf16 %v8089, %v8085
        %v8668 = vpack.c.bf16 %v8097, %v8093
        %v8669 = vpack.c.bf16 %v8099, %v8095
        %v8670 = vpack.c.bf16 %v8107, %v8103
        %v8671 = vpack.c.bf16 %v8109, %v8105
        %v8672 = vpack.c.bf16 %v8117, %v8113
        %v8673 = vpack.c.bf16 %v8119, %v8115
        %v8674 = vpack.c.bf16 %v8127, %v8123
        %v8675 = vpack.c.bf16 %v8129, %v8125
        %v8676 = vpack.c.bf16 %v8137, %v8133
        %v8677 = vpack.c.bf16 %v8139, %v8135
        %v8678 = vpack.c.bf16 %v8147, %v8143
        %v8679 = vpack.c.bf16 %v8149, %v8145
        %v8680 = vpack.c.bf16 %v8157, %v8153
        %v8681 = vpack.c.bf16 %v8159, %v8155
        %v8682 = vpack.c.bf16 %v8167, %v8163
        %v8683 = vpack.c.bf16 %v8169, %v8165
        %v8684 = vpack.c.bf16 %v8177, %v8173
        %v8685 = vpack.c.bf16 %v8179, %v8175
        %v8686 = vpack.c.bf16 %v8187, %v8183
        %v8687 = vpack.c.bf16 %v8189, %v8185
        %v8688 = vpack.c.bf16 %v8197, %v8193
        %v8689 = vpack.c.bf16 %v8199, %v8195
        %v8690 = vpack.c.bf16 %v8207, %v8203
        %v8691 = vpack.c.bf16 %v8209, %v8205
        %v8692 = vpack.c.bf16 %v8217, %v8213
        %v8693 = vpack.c.bf16 %v8219, %v8215
        %v8694 = vpack.c.bf16 %v8227, %v8223
        %v8695 = vpack.c.bf16 %v8229, %v8225
        %v8696 = vpack.c.bf16 %v8237, %v8233
        %v8697 = vpack.c.bf16 %v8239, %v8235
        %v8698 = vpack.c.bf16 %v8247, %v8243
        %v8699 = vpack.c.bf16 %v8249, %v8245
        %v8700 = vpack.c.bf16 %v8257, %v8253
        %v8701 = vpack.c.bf16 %v8259, %v8255
        %v8702 = vpack.c.bf16 %v8267, %v8263
        %v8703 = vpack.c.bf16 %v8269, %v8265
        %v8704 = vpack.c.bf16 %v8277, %v8273
        %v8705 = vpack.c.bf16 %v8279, %v8275
        %v8706 = vpack.c.bf16 %v8287, %v8283
        %v8707 = vpack.c.bf16 %v8289, %v8285
        %v8708 = vpack.c.bf16 %v8297, %v8293
        %v8709 = vpack.c.bf16 %v8299, %v8295
        %v8710 = vpack.c.bf16 %v8307, %v8303
        %v8711 = vpack.c.bf16 %v8309, %v8305
        %v8712 = vpack.c.bf16 %v8317, %v8313
        %v8713 = vpack.c.bf16 %v8319, %v8315
        %v8714 = vpack.c.bf16 %v8327, %v8323
        %v8715 = vpack.c.bf16 %v8329, %v8325
        %v8716 = vpack.c.bf16 %v8337, %v8333
        %v8717 = vpack.c.bf16 %v8339, %v8335
        %v8718 = vpack.c.bf16 %v8347, %v8343
        %v8719 = vpack.c.bf16 %v8349, %v8345
        %v8720 = vpack.c.bf16 %v8357, %v8353
        %v8721 = vpack.c.bf16 %v8359, %v8355
        %v8722 = vpack.c.bf16 %v8367, %v8363
        %v8723 = vpack.c.bf16 %v8369, %v8365
        %v8724 = vld [vmem:[#allocation34] sm:$0xf]
        %v8725 = vld [vmem:[#allocation34 + $0x4] sm:$0xf]
        %v8726 = vld [vmem:[#allocation34 + $0x8] sm:$0xf]
        %v8727 = vld [vmem:[#allocation34 + $0xc] sm:$0xf]
        %v8728 = vld [vmem:[#allocation34 + $0x10] sm:$0xf]
        %v8729 = vld [vmem:[#allocation34 + $0x14] sm:$0xf]
        %v8730 = vld [vmem:[#allocation34 + $0x18] sm:$0xf]
        %v8731 = vld [vmem:[#allocation34 + $0x1c] sm:$0xf]
        %v8732 = vld [vmem:[#allocation34 + $0x20] sm:$0xf]
        %v8733 = vld [vmem:[#allocation34 + $0x24] sm:$0xf]
        %v8734 = vld [vmem:[#allocation34 + $0x28] sm:$0xf]
        %v8735 = vld [vmem:[#allocation34 + $0x2c] sm:$0xf]
        %v8736 = vld [vmem:[#allocation34 + $0x30] sm:$0xf]
        %v8737 = vld [vmem:[#allocation34 + $0x34] sm:$0xf]
        %v8738 = vld [vmem:[#allocation34 + $0x38] sm:$0xf]
        %v8739 = vld [vmem:[#allocation34 + $0x3c] sm:$0xf]
        %v8740 = vld [vmem:[#allocation34 + $0x40] sm:$0xf]
        %v8741 = vld [vmem:[#allocation34 + $0x44] sm:$0xf]
        %v8742 = vld [vmem:[#allocation34 + $0x48] sm:$0xf]
        %v8743 = vld [vmem:[#allocation34 + $0x4c] sm:$0xf]
        %v8744 = vld [vmem:[#allocation34 + $0x50] sm:$0xf]
        %v8745 = vld [vmem:[#allocation34 + $0x54] sm:$0xf]
        %v8746 = vld [vmem:[#allocation34 + $0x58] sm:$0xf]
        %v8747 = vld [vmem:[#allocation34 + $0x5c] sm:$0xf]
        %v8748 = vld [vmem:[#allocation34 + $0x60] sm:$0xf]
        %v8749 = vld [vmem:[#allocation34 + $0x64] sm:$0xf]
        %v8750 = vld [vmem:[#allocation34 + $0x68] sm:$0xf]
        %v8751 = vld [vmem:[#allocation34 + $0x6c] sm:$0xf]
        %v8752 = vld [vmem:[#allocation34 + $0x70] sm:$0xf]
        %v8753 = vld [vmem:[#allocation34 + $0x74] sm:$0xf]
        %v8754 = vld [vmem:[#allocation34 + $0x78] sm:$0xf]
        %v8755 = vld [vmem:[#allocation34 + $0x7c] sm:$0xf]
        %v8756 = vld [vmem:[#allocation37] sm:$0x1]
        %v8758 = vlaneseq
        %v8759 = vshrl.u32 %v8758, 7
        %v8760 = vsub.s32 0, %v8759
        %v8761 = vrot.slane %v8756, %v8760
        %v8795 = vunpack.c.l.b16 %v8724
        %v8796 = vunpack.c.l.b16 %v8725
        %v8797 = vunpack.c.l.b16 %v8726
        %v8798 = vunpack.c.l.b16 %v8727
        %v8799 = vunpack.c.l.b16 %v8728
        %v8800 = vunpack.c.l.b16 %v8729
        %v8801 = vunpack.c.l.b16 %v8730
        %v8802 = vunpack.c.l.b16 %v8731
        %v8803 = vunpack.c.l.b16 %v8732
        %v8804 = vunpack.c.l.b16 %v8733
        %v8805 = vunpack.c.l.b16 %v8734
        %v8806 = vunpack.c.l.b16 %v8735
        %v8807 = vunpack.c.l.b16 %v8736
        %v8808 = vunpack.c.l.b16 %v8737
        %v8809 = vunpack.c.l.b16 %v8738
        %v8810 = vunpack.c.l.b16 %v8739
        %v8811 = vunpack.c.l.b16 %v8740
        %v8812 = vunpack.c.l.b16 %v8741
        %v8813 = vunpack.c.l.b16 %v8742
        %v8814 = vunpack.c.l.b16 %v8743
        %v8815 = vunpack.c.l.b16 %v8744
        %v8816 = vunpack.c.l.b16 %v8745
        %v8817 = vunpack.c.l.b16 %v8746
        %v8818 = vunpack.c.l.b16 %v8747
        %v8819 = vunpack.c.l.b16 %v8748
        %v8820 = vunpack.c.l.b16 %v8749
        %v8821 = vunpack.c.l.b16 %v8750
        %v8822 = vunpack.c.l.b16 %v8751
        %v8823 = vunpack.c.l.b16 %v8752
        %v8824 = vunpack.c.l.b16 %v8753
        %v8825 = vunpack.c.l.b16 %v8754
        %v8826 = vunpack.c.l.b16 %v8755
        %v8827 = vpack.c.b16 %v8796, %v8795
        %v8828 = vpack.c.b16 %v8798, %v8797
        %v8829 = vpack.c.b16 %v8800, %v8799
        %v8830 = vpack.c.b16 %v8802, %v8801
        %v8831 = vpack.c.b16 %v8804, %v8803
        %v8832 = vpack.c.b16 %v8806, %v8805
        %v8833 = vpack.c.b16 %v8808, %v8807
        %v8834 = vpack.c.b16 %v8810, %v8809
        %v8835 = vpack.c.b16 %v8812, %v8811
        %v8836 = vpack.c.b16 %v8814, %v8813
        %v8837 = vpack.c.b16 %v8816, %v8815
        %v8838 = vpack.c.b16 %v8818, %v8817
        %v8839 = vpack.c.b16 %v8820, %v8819
        %v8840 = vpack.c.b16 %v8822, %v8821
        %v8841 = vpack.c.b16 %v8824, %v8823
        %v8842 = vpack.c.b16 %v8826, %v8825
        %8859 = vmatprep.subr.bf16.mxu0 0
        %8860 = vmatpush1.bf16.msra.mxu0 %v8827
        %8861 = vmatprep.subr.bf16.mxu0 0
        %8862 = vmatpush1.bf16.msra.mxu0 %v8828
        %8863 = vmatprep.subr.bf16.mxu0 0
        %8864 = vmatpush1.bf16.msra.mxu0 %v8829
        %8865 = vmatprep.subr.bf16.mxu0 0
        %8866 = vmatpush1.bf16.msra.mxu0 %v8830
        %8867 = vmatprep.subr.bf16.mxu0 0
        %8868 = vmatpush1.bf16.msra.mxu0 %v8831
        %8869 = vmatprep.subr.bf16.mxu0 0
        %8870 = vmatpush1.bf16.msra.mxu0 %v8832
        %8871 = vmatprep.subr.bf16.mxu0 0
        %8872 = vmatpush1.bf16.msra.mxu0 %v8833
        %8873 = vmatprep.subr.bf16.mxu0 0
        %8874 = vmatpush1.bf16.msra.mxu0 %v8834
        %8875 = vmatprep.subr.bf16.mxu0 0
        %8876 = vmatpush1.bf16.msra.mxu0 %v8835
        %8877 = vmatprep.subr.bf16.mxu0 0
        %8878 = vmatpush1.bf16.msra.mxu0 %v8836
        %8879 = vmatprep.subr.bf16.mxu0 0
        %8880 = vmatpush1.bf16.msra.mxu0 %v8837
        %8881 = vmatprep.subr.bf16.mxu0 0
        %8882 = vmatpush1.bf16.msra.mxu0 %v8838
        %8883 = vmatprep.subr.bf16.mxu0 0
        %8884 = vmatpush1.bf16.msra.mxu0 %v8839
        %8885 = vmatprep.subr.bf16.mxu0 0
        %8886 = vmatpush1.bf16.msra.mxu0 %v8840
        %8887 = vmatprep.subr.bf16.mxu0 0
        %8888 = vmatpush1.bf16.msra.mxu0 %v8841
        %8889 = vmatprep.subr.bf16.mxu0 0
        %8890 = vmatpush1.bf16.msra.mxu0 %v8842
        %8891 = vmatprep.mubr.bf16.mxu0 %v8661
        %8892 = vmatmul.mubr.bf16.gmra.mrb[0].mxu0 %v8660
        %v8893 = vpop.f32.mrb[0].mxu0
        %v8894 = vadd.f32 %v8761, %v8893
        %v8895 = vpop.f32.mrb[0].mxu0
        %v8896 = vpop.f32.mrb[0].mxu0
        %v8897 = vadd.f32 %v8761, %v8896
        %v8898 = vpop.f32.mrb[0].mxu0
        %8899 = vmatprep.mubr.bf16.mxu0 %v8663
        %8900 = vmatmul.mubr.bf16.gmra.mrb[0].mxu0 %v8662
        %v8901 = vpop.f32.mrb[0].mxu0
        %v8902 = vadd.f32 %v8761, %v8901
        %v8903 = vpop.f32.mrb[0].mxu0
        %v8904 = vpop.f32.mrb[0].mxu0
        %v8905 = vadd.f32 %v8761, %v8904
        %v8906 = vpop.f32.mrb[0].mxu0
        %8907 = vmatprep.mubr.bf16.mxu0 %v8665
        %8908 = vmatmul.mubr.bf16.gmra.mrb[0].mxu0 %v8664
        %v8909 = vpop.f32.mrb[0].mxu0
        %v8910 = vadd.f32 %v8761, %v8909
        %v8911 = vpop.f32.mrb[0].mxu0
        %v8912 = vpop.f32.mrb[0].mxu0
        %v8913 = vadd.f32 %v8761, %v8912
        %v8914 = vpop.f32.mrb[0].mxu0
        %8915 = vmatprep.mubr.bf16.mxu0 %v8667
        %8916 = vmatmul.mubr.bf16.gmra.mrb[0].mxu0 %v8666
        %v8917 = vpop.f32.mrb[0].mxu0
        %v8918 = vadd.f32 %v8761, %v8917
        %v8919 = vpop.f32.mrb[0].mxu0
        %v8920 = vpop.f32.mrb[0].mxu0
        %v8921 = vadd.f32 %v8761, %v8920
        %v8922 = vpop.f32.mrb[0].mxu0
        %8923 = vmatprep.mubr.bf16.mxu0 %v8669
        %8924 = vmatmul.mubr.bf16.gmra.mrb[0].mxu0 %v8668
        %v8925 = vpop.f32.mrb[0].mxu0
        %v8926 = vadd.f32 %v8761, %v8925
        %v8927 = vpop.f32.mrb[0].mxu0
        %v8928 = vpop.f32.mrb[0].mxu0
        %v8929 = vadd.f32 %v8761, %v8928
        %v8930 = vpop.f32.mrb[0].mxu0
        %8931 = vmatprep.mubr.bf16.mxu0 %v8671
        %8932 = vmatmul.mubr.bf16.gmra.mrb[0].mxu0 %v8670
        %v8933 = vpop.f32.mrb[0].mxu0
        %v8934 = vadd.f32 %v8761, %v8933
        %v8935 = vpop.f32.mrb[0].mxu0
        %v8936 = vpop.f32.mrb[0].mxu0
        %v8937 = vadd.f32 %v8761, %v8936
        %v8938 = vpop.f32.mrb[0].mxu0
        %8939 = vmatprep.mubr.bf16.mxu0 %v8673
        %8940 = vmatmul.mubr.bf16.gmra.mrb[0].mxu0 %v8672
        %v8941 = vpop.f32.mrb[0].mxu0
        %v8942 = vadd.f32 %v8761, %v8941
        %v8943 = vpop.f32.mrb[0].mxu0
        %v8944 = vpop.f32.mrb[0].mxu0
        %v8945 = vadd.f32 %v8761, %v8944
        %v8946 = vpop.f32.mrb[0].mxu0
        %8947 = vmatprep.mubr.bf16.mxu0 %v8675
        %8948 = vmatmul.mubr.bf16.gmra.mrb[0].mxu0 %v8674
        %v8949 = vpop.f32.mrb[0].mxu0
        %v8950 = vadd.f32 %v8761, %v8949
        %v8951 = vpop.f32.mrb[0].mxu0
        %v8952 = vpop.f32.mrb[0].mxu0
        %v8953 = vadd.f32 %v8761, %v8952
        %v8954 = vpop.f32.mrb[0].mxu0
        %8955 = vmatprep.mubr.bf16.mxu0 %v8677
        %8956 = vmatmul.mubr.bf16.gmra.mrb[0].mxu0 %v8676
        %v8957 = vpop.f32.mrb[0].mxu0
        %v8958 = vadd.f32 %v8761, %v8957
        %v8959 = vpop.f32.mrb[0].mxu0
        %v8960 = vpop.f32.mrb[0].mxu0
        %v8961 = vadd.f32 %v8761, %v8960
        %v8962 = vpop.f32.mrb[0].mxu0
        %8963 = vmatprep.mubr.bf16.mxu0 %v8679
        %8964 = vmatmul.mubr.bf16.gmra.mrb[0].mxu0 %v8678
        %v8965 = vpop.f32.mrb[0].mxu0
        %v8966 = vadd.f32 %v8761, %v8965
        %v8967 = vpop.f32.mrb[0].mxu0
        %v8968 = vpop.f32.mrb[0].mxu0
        %v8969 = vadd.f32 %v8761, %v8968
        %v8970 = vpop.f32.mrb[0].mxu0
        %8971 = vmatprep.mubr.bf16.mxu0 %v8681
        %8972 = vmatmul.mubr.bf16.gmra.mrb[0].mxu0 %v8680
        %v8973 = vpop.f32.mrb[0].mxu0
        %v8974 = vadd.f32 %v8761, %v8973
        %v8975 = vpop.f32.mrb[0].mxu0
        %v8976 = vpop.f32.mrb[0].mxu0
        %v8977 = vadd.f32 %v8761, %v8976
        %v8978 = vpop.f32.mrb[0].mxu0
        %8979 = vmatprep.mubr.bf16.mxu0 %v8683
        %8980 = vmatmul.mubr.bf16.gmra.mrb[0].mxu0 %v8682
        %v8981 = vpop.f32.mrb[0].mxu0
        %v8982 = vadd.f32 %v8761, %v8981
        %v8983 = vpop.f32.mrb[0].mxu0
        %v8984 = vpop.f32.mrb[0].mxu0
        %v8985 = vadd.f32 %v8761, %v8984
        %v8986 = vpop.f32.mrb[0].mxu0
        %8987 = vmatprep.mubr.bf16.mxu0 %v8685
        %8988 = vmatmul.mubr.bf16.gmra.mrb[0].mxu0 %v8684
        %v8989 = vpop.f32.mrb[0].mxu0
        %v8990 = vadd.f32 %v8761, %v8989
        %v8991 = vpop.f32.mrb[0].mxu0
        %v8992 = vpop.f32.mrb[0].mxu0
        %v8993 = vadd.f32 %v8761, %v8992
        %v8994 = vpop.f32.mrb[0].mxu0
        %8995 = vmatprep.mubr.bf16.mxu0 %v8687
        %8996 = vmatmul.mubr.bf16.gmra.mrb[0].mxu0 %v8686
        %v8997 = vpop.f32.mrb[0].mxu0
        %v8998 = vadd.f32 %v8761, %v8997
        %v8999 = vpop.f32.mrb[0].mxu0
        %v9000 = vpop.f32.mrb[0].mxu0
        %v9001 = vadd.f32 %v8761, %v9000
        %v9002 = vpop.f32.mrb[0].mxu0
        %9003 = vmatprep.mubr.bf16.mxu0 %v8689
        %9004 = vmatmul.mubr.bf16.gmra.mrb[0].mxu0 %v8688
        %v9005 = vpop.f32.mrb[0].mxu0
        %v9006 = vadd.f32 %v8761, %v9005
        %v9007 = vpop.f32.mrb[0].mxu0
        %v9008 = vpop.f32.mrb[0].mxu0
        %v9009 = vadd.f32 %v8761, %v9008
        %v9010 = vpop.f32.mrb[0].mxu0
        %9011 = vmatprep.mubr.bf16.mxu0 %v8691
        %9012 = vmatmul.mubr.bf16.gmra.mrb[0].mxu0 %v8690
        %v9013 = vpop.f32.mrb[0].mxu0
        %v9014 = vadd.f32 %v8761, %v9013
        %v9015 = vpop.f32.mrb[0].mxu0
        %v9016 = vpop.f32.mrb[0].mxu0
        %v9017 = vadd.f32 %v8761, %v9016
        %v9018 = vpop.f32.mrb[0].mxu0
        %9019 = vmatprep.mubr.bf16.mxu0 %v8693
        %9020 = vmatmul.mubr.bf16.gmra.mrb[0].mxu0 %v8692
        %v9021 = vpop.f32.mrb[0].mxu0
        %v9022 = vadd.f32 %v8761, %v9021
        %v9023 = vpop.f32.mrb[0].mxu0
        %v9024 = vpop.f32.mrb[0].mxu0
        %v9025 = vadd.f32 %v8761, %v9024
        %v9026 = vpop.f32.mrb[0].mxu0
        %9027 = vmatprep.mubr.bf16.mxu0 %v8695
        %9028 = vmatmul.mubr.bf16.gmra.mrb[0].mxu0 %v8694
        %v9029 = vpop.f32.mrb[0].mxu0
        %v9030 = vadd.f32 %v8761, %v9029
        %v9031 = vpop.f32.mrb[0].mxu0
        %v9032 = vpop.f32.mrb[0].mxu0
        %v9033 = vadd.f32 %v8761, %v9032
        %v9034 = vpop.f32.mrb[0].mxu0
        %9035 = vmatprep.mubr.bf16.mxu0 %v8697
        %9036 = vmatmul.mubr.bf16.gmra.mrb[0].mxu0 %v8696
        %v9037 = vpop.f32.mrb[0].mxu0
        %v9038 = vadd.f32 %v8761, %v9037
        %v9039 = vpop.f32.mrb[0].mxu0
        %v9040 = vpop.f32.mrb[0].mxu0
        %v9041 = vadd.f32 %v8761, %v9040
        %v9042 = vpop.f32.mrb[0].mxu0
        %9043 = vmatprep.mubr.bf16.mxu0 %v8699
        %9044 = vmatmul.mubr.bf16.gmra.mrb[0].mxu0 %v8698
        %v9045 = vpop.f32.mrb[0].mxu0
        %v9046 = vadd.f32 %v8761, %v9045
        %v9047 = vpop.f32.mrb[0].mxu0
        %v9048 = vpop.f32.mrb[0].mxu0
        %v9049 = vadd.f32 %v8761, %v9048
        %v9050 = vpop.f32.mrb[0].mxu0
        %9051 = vmatprep.mubr.bf16.mxu0 %v8701
        %9052 = vmatmul.mubr.bf16.gmra.mrb[0].mxu0 %v8700
        %v9053 = vpop.f32.mrb[0].mxu0
        %v9054 = vadd.f32 %v8761, %v9053
        %v9055 = vpop.f32.mrb[0].mxu0
        %v9056 = vpop.f32.mrb[0].mxu0
        %v9057 = vadd.f32 %v8761, %v9056
        %v9058 = vpop.f32.mrb[0].mxu0
        %9059 = vmatprep.mubr.bf16.mxu0 %v8703
        %9060 = vmatmul.mubr.bf16.gmra.mrb[0].mxu0 %v8702
        %v9061 = vpop.f32.mrb[0].mxu0
        %v9062 = vadd.f32 %v8761, %v9061
        %v9063 = vpop.f32.mrb[0].mxu0
        %v9064 = vpop.f32.mrb[0].mxu0
        %v9065 = vadd.f32 %v8761, %v9064
        %v9066 = vpop.f32.mrb[0].mxu0
        %9067 = vmatprep.mubr.bf16.mxu0 %v8705
        %9068 = vmatmul.mubr.bf16.gmra.mrb[0].mxu0 %v8704
        %v9069 = vpop.f32.mrb[0].mxu0
        %v9070 = vadd.f32 %v8761, %v9069
        %v9071 = vpop.f32.mrb[0].mxu0
        %v9072 = vpop.f32.mrb[0].mxu0
        %v9073 = vadd.f32 %v8761, %v9072
        %v9074 = vpop.f32.mrb[0].mxu0
        %9075 = vmatprep.mubr.bf16.mxu0 %v8707
        %9076 = vmatmul.mubr.bf16.gmra.mrb[0].mxu0 %v8706
        %v9077 = vpop.f32.mrb[0].mxu0
        %v9078 = vadd.f32 %v8761, %v9077
        %v9079 = vpop.f32.mrb[0].mxu0
        %v9080 = vpop.f32.mrb[0].mxu0
        %v9081 = vadd.f32 %v8761, %v9080
        %v9082 = vpop.f32.mrb[0].mxu0
        %9083 = vmatprep.mubr.bf16.mxu0 %v8709
        %9084 = vmatmul.mubr.bf16.gmra.mrb[0].mxu0 %v8708
        %v9085 = vpop.f32.mrb[0].mxu0
        %v9086 = vadd.f32 %v8761, %v9085
        %v9087 = vpop.f32.mrb[0].mxu0
        %v9088 = vpop.f32.mrb[0].mxu0
        %v9089 = vadd.f32 %v8761, %v9088
        %v9090 = vpop.f32.mrb[0].mxu0
        %9091 = vmatprep.mubr.bf16.mxu0 %v8711
        %9092 = vmatmul.mubr.bf16.gmra.mrb[0].mxu0 %v8710
        %v9093 = vpop.f32.mrb[0].mxu0
        %v9094 = vadd.f32 %v8761, %v9093
        %v9095 = vpop.f32.mrb[0].mxu0
        %v9096 = vpop.f32.mrb[0].mxu0
        %v9097 = vadd.f32 %v8761, %v9096
        %v9098 = vpop.f32.mrb[0].mxu0
        %9099 = vmatprep.mubr.bf16.mxu0 %v8713
        %9100 = vmatmul.mubr.bf16.gmra.mrb[0].mxu0 %v8712
        %v9101 = vpop.f32.mrb[0].mxu0
        %v9102 = vadd.f32 %v8761, %v9101
        %v9103 = vpop.f32.mrb[0].mxu0
        %v9104 = vpop.f32.mrb[0].mxu0
        %v9105 = vadd.f32 %v8761, %v9104
        %v9106 = vpop.f32.mrb[0].mxu0
        %9107 = vmatprep.mubr.bf16.mxu0 %v8715
        %9108 = vmatmul.mubr.bf16.gmra.mrb[0].mxu0 %v8714
        %v9109 = vpop.f32.mrb[0].mxu0
        %v9110 = vadd.f32 %v8761, %v9109
        %v9111 = vpop.f32.mrb[0].mxu0
        %v9112 = vpop.f32.mrb[0].mxu0
        %v9113 = vadd.f32 %v8761, %v9112
        %v9114 = vpop.f32.mrb[0].mxu0
        %9115 = vmatprep.mubr.bf16.mxu0 %v8717
        %9116 = vmatmul.mubr.bf16.gmra.mrb[0].mxu0 %v8716
        %v9117 = vpop.f32.mrb[0].mxu0
        %v9118 = vadd.f32 %v8761, %v9117
        %v9119 = vpop.f32.mrb[0].mxu0
        %v9120 = vpop.f32.mrb[0].mxu0
        %v9121 = vadd.f32 %v8761, %v9120
        %v9122 = vpop.f32.mrb[0].mxu0
        %9123 = vmatprep.mubr.bf16.mxu0 %v8719
        %9124 = vmatmul.mubr.bf16.gmra.mrb[0].mxu0 %v8718
        %v9125 = vpop.f32.mrb[0].mxu0
        %v9126 = vadd.f32 %v8761, %v9125
        %v9127 = vpop.f32.mrb[0].mxu0
        %v9128 = vpop.f32.mrb[0].mxu0
        %v9129 = vadd.f32 %v8761, %v9128
        %v9130 = vpop.f32.mrb[0].mxu0
        %9131 = vmatprep.mubr.bf16.mxu0 %v8721
        %9132 = vmatmul.mubr.bf16.gmra.mrb[0].mxu0 %v8720
        %v9133 = vpop.f32.mrb[0].mxu0
        %v9134 = vadd.f32 %v8761, %v9133
        %v9135 = vpop.f32.mrb[0].mxu0
        %v9136 = vpop.f32.mrb[0].mxu0
        %v9137 = vadd.f32 %v8761, %v9136
        %v9138 = vpop.f32.mrb[0].mxu0
        %9139 = vmatprep.mubr.bf16.mxu0 %v8723
        %9140 = vmatmul.mubr.bf16.gmra.mrb[0].mxu0 %v8722
        %v9141 = vpop.f32.mrb[0].mxu0
        %v9142 = vadd.f32 %v8761, %v9141
        %v9143 = vpop.f32.mrb[0].mxu0
        %v9144 = vpop.f32.mrb[0].mxu0
        %v9145 = vadd.f32 %v8761, %v9144
        %v9146 = vpop.f32.mrb[0].mxu0
        %9147 = vdwg.mxu0
        %v9148 = vld [vmem:[#allocation35] sm:$0xf]
        %v9149 = vld [vmem:[#allocation35 + $0x4] sm:$0xf]
        %v9150 = vld [vmem:[#allocation35 + $0x8] sm:$0xf]
        %v9151 = vld [vmem:[#allocation35 + $0xc] sm:$0xf]
        %v9152 = vld [vmem:[#allocation35 + $0x10] sm:$0xf]
        %v9153 = vld [vmem:[#allocation35 + $0x14] sm:$0xf]
        %v9154 = vld [vmem:[#allocation35 + $0x18] sm:$0xf]
        %v9155 = vld [vmem:[#allocation35 + $0x1c] sm:$0xf]
        %v9156 = vld [vmem:[#allocation35 + $0x20] sm:$0xf]
        %v9157 = vld [vmem:[#allocation35 + $0x24] sm:$0xf]
        %v9158 = vld [vmem:[#allocation35 + $0x28] sm:$0xf]
        %v9159 = vld [vmem:[#allocation35 + $0x2c] sm:$0xf]
        %v9160 = vld [vmem:[#allocation35 + $0x30] sm:$0xf]
        %v9161 = vld [vmem:[#allocation35 + $0x34] sm:$0xf]
        %v9162 = vld [vmem:[#allocation35 + $0x38] sm:$0xf]
        %v9163 = vld [vmem:[#allocation35 + $0x3c] sm:$0xf]
        %v9180 = vunpack.c.l.b16 %v9148
        %v9181 = vunpack.c.l.b16 %v9149
        %v9182 = vunpack.c.l.b16 %v9150
        %v9183 = vunpack.c.l.b16 %v9151
        %v9184 = vunpack.c.l.b16 %v9152
        %v9185 = vunpack.c.l.b16 %v9153
        %v9186 = vunpack.c.l.b16 %v9154
        %v9187 = vunpack.c.l.b16 %v9155
        %v9188 = vunpack.c.l.b16 %v9156
        %v9189 = vunpack.c.l.b16 %v9157
        %v9190 = vunpack.c.l.b16 %v9158
        %v9191 = vunpack.c.l.b16 %v9159
        %v9192 = vunpack.c.l.b16 %v9160
        %v9193 = vunpack.c.l.b16 %v9161
        %v9194 = vunpack.c.l.b16 %v9162
        %v9195 = vunpack.c.l.b16 %v9163
        %v9196 = vpack.c.b16 %v9181, %v9180
        %v9197 = vpack.c.b16 %v9183, %v9182
        %v9198 = vpack.c.b16 %v9185, %v9184
        %v9199 = vpack.c.b16 %v9187, %v9186
        %v9200 = vpack.c.b16 %v9189, %v9188
        %v9201 = vpack.c.b16 %v9191, %v9190
        %v9202 = vpack.c.b16 %v9193, %v9192
        %v9203 = vpack.c.b16 %v9195, %v9194
        %9212 = vmatprep.subr.bf16.mxu0 0
        %9213 = vmatpush1.bf16.msra.mxu0 %v9196
        %9214 = vmatprep.subr.bf16.mxu0 0
        %9215 = vmatpush1.bf16.msra.mxu0 %v9197
        %9216 = vmatprep.subr.bf16.mxu0 0
        %9217 = vmatpush1.bf16.msra.mxu0 %v9198
        %9218 = vmatprep.subr.bf16.mxu0 0
        %9219 = vmatpush1.bf16.msra.mxu0 %v9199
        %9220 = vmatprep.subr.bf16.mxu0 0
        %9221 = vmatpush1.bf16.msra.mxu0 %v9200
        %9222 = vmatprep.subr.bf16.mxu0 0
        %9223 = vmatpush1.bf16.msra.mxu0 %v9201
        %9224 = vmatprep.subr.bf16.mxu0 0
        %9225 = vmatpush1.bf16.msra.mxu0 %v9202
        %9226 = vmatprep.subr.bf16.mxu0 0
        %9227 = vmatpush1.bf16.msra.mxu0 %v9203
        %9228 = vmatprep.subr.bf16.mxu0 0
        %9229 = vmatpush1.bf16.msra.mxu0 0
        %9230 = vmatprep.subr.bf16.mxu0 0
        %9231 = vmatpush1.bf16.msra.mxu0 0
        %9232 = vmatprep.subr.bf16.mxu0 0
        %9233 = vmatpush1.bf16.msra.mxu0 0
        %9234 = vmatprep.subr.bf16.mxu0 0
        %9235 = vmatpush1.bf16.msra.mxu0 0
        %9236 = vmatprep.subr.bf16.mxu0 0
        %9237 = vmatpush1.bf16.msra.mxu0 0
        %9238 = vmatprep.subr.bf16.mxu0 0
        %9239 = vmatpush1.bf16.msra.mxu0 0
        %9240 = vmatprep.subr.bf16.mxu0 0
        %9241 = vmatpush1.bf16.msra.mxu0 0
        %9242 = vmatprep.subr.bf16.mxu0 0
        %9243 = vmatpush1.bf16.msra.mxu0 0
        %9244 = vmatprep.mubr.bf16.mxu0 0
        %9245 = vmatmul.mubr.bf16.gmra.mrb[0].mxu0 %v1176
        %v9246 = vpop.f32.mrb[0].mxu0
        %v9247 = vadd.f32 0.0, %v9246
        %v9248 = vpop.f32.mrb[0].mxu0
        %v9249 = vpop.f32.mrb[0].mxu0
        %v9250 = vadd.f32 0.0, %v9249
        %v9251 = vpop.f32.mrb[0].mxu0
        %9252 = vmatprep.mubr.bf16.mxu0 0
        %9253 = vmatmul.mubr.bf16.gmra.mrb[0].mxu0 %v1177
        %v9254 = vpop.f32.mrb[0].mxu0
        %v9255 = vadd.f32 0.0, %v9254
        %v9256 = vpop.f32.mrb[0].mxu0
        %v9257 = vpop.f32.mrb[0].mxu0
        %v9258 = vadd.f32 0.0, %v9257
        %v9259 = vpop.f32.mrb[0].mxu0
        %9260 = vmatprep.mubr.bf16.mxu0 0
        %9261 = vmatmul.mubr.bf16.gmra.mrb[0].mxu0 %v1178
        %v9262 = vpop.f32.mrb[0].mxu0
        %v9263 = vadd.f32 0.0, %v9262
        %v9264 = vpop.f32.mrb[0].mxu0
        %v9265 = vpop.f32.mrb[0].mxu0
        %v9266 = vadd.f32 0.0, %v9265
        %v9267 = vpop.f32.mrb[0].mxu0
        %9268 = vmatprep.mubr.bf16.mxu0 0
        %9269 = vmatmul.mubr.bf16.gmra.mrb[0].mxu0 %v1179
        %v9270 = vpop.f32.mrb[0].mxu0
        %v9271 = vadd.f32 0.0, %v9270
        %v9272 = vpop.f32.mrb[0].mxu0
        %v9273 = vpop.f32.mrb[0].mxu0
        %v9274 = vadd.f32 0.0, %v9273
        %v9275 = vpop.f32.mrb[0].mxu0
        %9276 = vmatprep.mubr.bf16.mxu0 0
        %9277 = vmatmul.mubr.bf16.gmra.mrb[0].mxu0 %v1180
        %v9278 = vpop.f32.mrb[0].mxu0
        %v9279 = vadd.f32 0.0, %v9278
        %v9280 = vpop.f32.mrb[0].mxu0
        %v9281 = vpop.f32.mrb[0].mxu0
        %v9282 = vadd.f32 0.0, %v9281
        %v9283 = vpop.f32.mrb[0].mxu0
        %9284 = vmatprep.mubr.bf16.mxu0 0
        %9285 = vmatmul.mubr.bf16.gmra.mrb[0].mxu0 %v1181
        %v9286 = vpop.f32.mrb[0].mxu0
        %v9287 = vadd.f32 0.0, %v9286
        %v9288 = vpop.f32.mrb[0].mxu0
        %v9289 = vpop.f32.mrb[0].mxu0
        %v9290 = vadd.f32 0.0, %v9289
        %v9291 = vpop.f32.mrb[0].mxu0
        %9292 = vmatprep.mubr.bf16.mxu0 0
        %9293 = vmatmul.mubr.bf16.gmra.mrb[0].mxu0 %v1182
        %v9294 = vpop.f32.mrb[0].mxu0
        %v9295 = vadd.f32 0.0, %v9294
        %v9296 = vpop.f32.mrb[0].mxu0
        %v9297 = vpop.f32.mrb[0].mxu0
        %v9298 = vadd.f32 0.0, %v9297
        %v9299 = vpop.f32.mrb[0].mxu0
        %9300 = vmatprep.mubr.bf16.mxu0 0
        %9301 = vmatmul.mubr.bf16.gmra.mrb[0].mxu0 %v1183
        %v9302 = vpop.f32.mrb[0].mxu0
        %v9303 = vadd.f32 0.0, %v9302
        %v9304 = vpop.f32.mrb[0].mxu0
        %v9305 = vpop.f32.mrb[0].mxu0
        %v9306 = vadd.f32 0.0, %v9305
        %v9307 = vpop.f32.mrb[0].mxu0
        %9308 = vmatprep.mubr.bf16.mxu0 0
        %9309 = vmatmul.mubr.bf16.gmra.mrb[0].mxu0 %v1184
        %v9310 = vpop.f32.mrb[0].mxu0
        %v9311 = vadd.f32 0.0, %v9310
        %v9312 = vpop.f32.mrb[0].mxu0
        %v9313 = vpop.f32.mrb[0].mxu0
        %v9314 = vadd.f32 0.0, %v9313
        %v9315 = vpop.f32.mrb[0].mxu0
        %9316 = vmatprep.mubr.bf16.mxu0 0
        %9317 = vmatmul.mubr.bf16.gmra.mrb[0].mxu0 %v1185
        %v9318 = vpop.f32.mrb[0].mxu0
        %v9319 = vadd.f32 0.0, %v9318
        %v9320 = vpop.f32.mrb[0].mxu0
        %v9321 = vpop.f32.mrb[0].mxu0
        %v9322 = vadd.f32 0.0, %v9321
        %v9323 = vpop.f32.mrb[0].mxu0
        %9324 = vmatprep.mubr.bf16.mxu0 0
        %9325 = vmatmul.mubr.bf16.gmra.mrb[0].mxu0 %v1186
        %v9326 = vpop.f32.mrb[0].mxu0
        %v9327 = vadd.f32 0.0, %v9326
        %v9328 = vpop.f32.mrb[0].mxu0
        %v9329 = vpop.f32.mrb[0].mxu0
        %v9330 = vadd.f32 0.0, %v9329
        %v9331 = vpop.f32.mrb[0].mxu0
        %9332 = vmatprep.mubr.bf16.mxu0 0
        %9333 = vmatmul.mubr.bf16.gmra.mrb[0].mxu0 %v1187
        %v9334 = vpop.f32.mrb[0].mxu0
        %v9335 = vadd.f32 0.0, %v9334
        %v9336 = vpop.f32.mrb[0].mxu0
        %v9337 = vpop.f32.mrb[0].mxu0
        %v9338 = vadd.f32 0.0, %v9337
        %v9339 = vpop.f32.mrb[0].mxu0
        %9340 = vmatprep.mubr.bf16.mxu0 0
        %9341 = vmatmul.mubr.bf16.gmra.mrb[0].mxu0 %v1188
        %v9342 = vpop.f32.mrb[0].mxu0
        %v9343 = vadd.f32 0.0, %v9342
        %v9344 = vpop.f32.mrb[0].mxu0
        %v9345 = vpop.f32.mrb[0].mxu0
        %v9346 = vadd.f32 0.0, %v9345
        %v9347 = vpop.f32.mrb[0].mxu0
        %9348 = vmatprep.mubr.bf16.mxu0 0
        %9349 = vmatmul.mubr.bf16.gmra.mrb[0].mxu0 %v1189
        %v9350 = vpop.f32.mrb[0].mxu0
        %v9351 = vadd.f32 0.0, %v9350
        %v9352 = vpop.f32.mrb[0].mxu0
        %v9353 = vpop.f32.mrb[0].mxu0
        %v9354 = vadd.f32 0.0, %v9353
        %v9355 = vpop.f32.mrb[0].mxu0
        %9356 = vmatprep.mubr.bf16.mxu0 0
        %9357 = vmatmul.mubr.bf16.gmra.mrb[0].mxu0 %v1190
        %v9358 = vpop.f32.mrb[0].mxu0
        %v9359 = vadd.f32 0.0, %v9358
        %v9360 = vpop.f32.mrb[0].mxu0
        %v9361 = vpop.f32.mrb[0].mxu0
        %v9362 = vadd.f32 0.0, %v9361
        %v9363 = vpop.f32.mrb[0].mxu0
        %9364 = vmatprep.mubr.bf16.mxu0 0
        %9365 = vmatmul.mubr.bf16.gmra.mrb[0].mxu0 %v1191
        %v9366 = vpop.f32.mrb[0].mxu0
        %v9367 = vadd.f32 0.0, %v9366
        %v9368 = vpop.f32.mrb[0].mxu0
        %v9369 = vpop.f32.mrb[0].mxu0
        %v9370 = vadd.f32 0.0, %v9369
        %v9371 = vpop.f32.mrb[0].mxu0
        %9372 = vmatprep.mubr.bf16.mxu0 0
        %9373 = vmatmul.mubr.bf16.gmra.mrb[0].mxu0 %v1192
        %v9374 = vpop.f32.mrb[0].mxu0
        %v9375 = vadd.f32 0.0, %v9374
        %v9376 = vpop.f32.mrb[0].mxu0
        %v9377 = vpop.f32.mrb[0].mxu0
        %v9378 = vadd.f32 0.0, %v9377
        %v9379 = vpop.f32.mrb[0].mxu0
        %9380 = vmatprep.mubr.bf16.mxu0 0
        %9381 = vmatmul.mubr.bf16.gmra.mrb[0].mxu0 %v1193
        %v9382 = vpop.f32.mrb[0].mxu0
        %v9383 = vadd.f32 0.0, %v9382
        %v9384 = vpop.f32.mrb[0].mxu0
        %v9385 = vpop.f32.mrb[0].mxu0
        %v9386 = vadd.f32 0.0, %v9385
        %v9387 = vpop.f32.mrb[0].mxu0
        %9388 = vmatprep.mubr.bf16.mxu0 0
        %9389 = vmatmul.mubr.bf16.gmra.mrb[0].mxu0 %v1194
        %v9390 = vpop.f32.mrb[0].mxu0
        %v9391 = vadd.f32 0.0, %v9390
        %v9392 = vpop.f32.mrb[0].mxu0
        %v9393 = vpop.f32.mrb[0].mxu0
        %v9394 = vadd.f32 0.0, %v9393
        %v9395 = vpop.f32.mrb[0].mxu0
        %9396 = vmatprep.mubr.bf16.mxu0 0
        %9397 = vmatmul.mubr.bf16.gmra.mrb[0].mxu0 %v1195
        %v9398 = vpop.f32.mrb[0].mxu0
        %v9399 = vadd.f32 0.0, %v9398
        %v9400 = vpop.f32.mrb[0].mxu0
        %v9401 = vpop.f32.mrb[0].mxu0
        %v9402 = vadd.f32 0.0, %v9401
        %v9403 = vpop.f32.mrb[0].mxu0
        %9404 = vmatprep.mubr.bf16.mxu0 0
        %9405 = vmatmul.mubr.bf16.gmra.mrb[0].mxu0 %v1196
        %v9406 = vpop.f32.mrb[0].mxu0
        %v9407 = vadd.f32 0.0, %v9406
        %v9408 = vpop.f32.mrb[0].mxu0
        %v9409 = vpop.f32.mrb[0].mxu0
        %v9410 = vadd.f32 0.0, %v9409
        %v9411 = vpop.f32.mrb[0].mxu0
        %9412 = vmatprep.mubr.bf16.mxu0 0
        %9413 = vmatmul.mubr.bf16.gmra.mrb[0].mxu0 %v1197
        %v9414 = vpop.f32.mrb[0].mxu0
        %v9415 = vadd.f32 0.0, %v9414
        %v9416 = vpop.f32.mrb[0].mxu0
        %v9417 = vpop.f32.mrb[0].mxu0
        %v9418 = vadd.f32 0.0, %v9417
        %v9419 = vpop.f32.mrb[0].mxu0
        %9420 = vmatprep.mubr.bf16.mxu0 0
        %9421 = vmatmul.mubr.bf16.gmra.mrb[0].mxu0 %v1198
        %v9422 = vpop.f32.mrb[0].mxu0
        %v9423 = vadd.f32 0.0, %v9422
        %v9424 = vpop.f32.mrb[0].mxu0
        %v9425 = vpop.f32.mrb[0].mxu0
        %v9426 = vadd.f32 0.0, %v9425
        %v9427 = vpop.f32.mrb[0].mxu0
        %9428 = vmatprep.mubr.bf16.mxu0 0
        %9429 = vmatmul.mubr.bf16.gmra.mrb[0].mxu0 %v1199
        %v9430 = vpop.f32.mrb[0].mxu0
        %v9431 = vadd.f32 0.0, %v9430
        %v9432 = vpop.f32.mrb[0].mxu0
        %v9433 = vpop.f32.mrb[0].mxu0
        %v9434 = vadd.f32 0.0, %v9433
        %v9435 = vpop.f32.mrb[0].mxu0
        %9436 = vmatprep.mubr.bf16.mxu0 0
        %9437 = vmatmul.mubr.bf16.gmra.mrb[0].mxu0 %v1200
        %v9438 = vpop.f32.mrb[0].mxu0
        %v9439 = vadd.f32 0.0, %v9438
        %v9440 = vpop.f32.mrb[0].mxu0
        %v9441 = vpop.f32.mrb[0].mxu0
        %v9442 = vadd.f32 0.0, %v9441
        %v9443 = vpop.f32.mrb[0].mxu0
        %9444 = vmatprep.mubr.bf16.mxu0 0
        %9445 = vmatmul.mubr.bf16.gmra.mrb[0].mxu0 %v1201
        %v9446 = vpop.f32.mrb[0].mxu0
        %v9447 = vadd.f32 0.0, %v9446
        %v9448 = vpop.f32.mrb[0].mxu0
        %v9449 = vpop.f32.mrb[0].mxu0
        %v9450 = vadd.f32 0.0, %v9449
        %v9451 = vpop.f32.mrb[0].mxu0
        %9452 = vmatprep.mubr.bf16.mxu0 0
        %9453 = vmatmul.mubr.bf16.gmra.mrb[0].mxu0 %v1202
        %v9454 = vpop.f32.mrb[0].mxu0
        %v9455 = vadd.f32 0.0, %v9454
        %v9456 = vpop.f32.mrb[0].mxu0
        %v9457 = vpop.f32.mrb[0].mxu0
        %v9458 = vadd.f32 0.0, %v9457
        %v9459 = vpop.f32.mrb[0].mxu0
        %9460 = vmatprep.mubr.bf16.mxu0 0
        %9461 = vmatmul.mubr.bf16.gmra.mrb[0].mxu0 %v1203
        %v9462 = vpop.f32.mrb[0].mxu0
        %v9463 = vadd.f32 0.0, %v9462
        %v9464 = vpop.f32.mrb[0].mxu0
        %v9465 = vpop.f32.mrb[0].mxu0
        %v9466 = vadd.f32 0.0, %v9465
        %v9467 = vpop.f32.mrb[0].mxu0
        %9468 = vmatprep.mubr.bf16.mxu0 0
        %9469 = vmatmul.mubr.bf16.gmra.mrb[0].mxu0 %v1204
        %v9470 = vpop.f32.mrb[0].mxu0
        %v9471 = vadd.f32 0.0, %v9470
        %v9472 = vpop.f32.mrb[0].mxu0
        %v9473 = vpop.f32.mrb[0].mxu0
        %v9474 = vadd.f32 0.0, %v9473
        %v9475 = vpop.f32.mrb[0].mxu0
        %9476 = vmatprep.mubr.bf16.mxu0 0
        %9477 = vmatmul.mubr.bf16.gmra.mrb[0].mxu0 %v1205
        %v9478 = vpop.f32.mrb[0].mxu0
        %v9479 = vadd.f32 0.0, %v9478
        %v9480 = vpop.f32.mrb[0].mxu0
        %v9481 = vpop.f32.mrb[0].mxu0
        %v9482 = vadd.f32 0.0, %v9481
        %v9483 = vpop.f32.mrb[0].mxu0
        %9484 = vmatprep.mubr.bf16.mxu0 0
        %9485 = vmatmul.mubr.bf16.gmra.mrb[0].mxu0 %v1206
        %v9486 = vpop.f32.mrb[0].mxu0
        %v9487 = vadd.f32 0.0, %v9486
        %v9488 = vpop.f32.mrb[0].mxu0
        %v9489 = vpop.f32.mrb[0].mxu0
        %v9490 = vadd.f32 0.0, %v9489
        %v9491 = vpop.f32.mrb[0].mxu0
        %9492 = vmatprep.mubr.bf16.mxu0 0
        %9493 = vmatmul.mubr.bf16.gmra.mrb[0].mxu0 %v1207
        %v9494 = vpop.f32.mrb[0].mxu0
        %v9495 = vadd.f32 0.0, %v9494
        %v9496 = vpop.f32.mrb[0].mxu0
        %v9497 = vpop.f32.mrb[0].mxu0
        %v9498 = vadd.f32 0.0, %v9497
        %v9499 = vpop.f32.mrb[0].mxu0
        %9500 = vdwg.mxu0
        %v9501 = vadd.f32 %v8894, %v9247
        %v9502 = vadd.f32 %v8897, %v9250
        %v9503 = vadd.f32 %v8902, %v9255
        %v9504 = vadd.f32 %v8905, %v9258
        %v9505 = vadd.f32 %v8910, %v9263
        %v9506 = vadd.f32 %v8913, %v9266
        %v9507 = vadd.f32 %v8918, %v9271
        %v9508 = vadd.f32 %v8921, %v9274
        %v9509 = vadd.f32 %v8926, %v9279
        %v9510 = vadd.f32 %v8929, %v9282
        %v9511 = vadd.f32 %v8934, %v9287
        %v9512 = vadd.f32 %v8937, %v9290
        %v9513 = vadd.f32 %v8942, %v9295
        %v9514 = vadd.f32 %v8945, %v9298
        %v9515 = vadd.f32 %v8950, %v9303
        %v9516 = vadd.f32 %v8953, %v9306
        %v9517 = vadd.f32 %v8958, %v9311
        %v9518 = vadd.f32 %v8961, %v9314
        %v9519 = vadd.f32 %v8966, %v9319
        %v9520 = vadd.f32 %v8969, %v9322
        %v9521 = vadd.f32 %v8974, %v9327
        %v9522 = vadd.f32 %v8977, %v9330
        %v9523 = vadd.f32 %v8982, %v9335
        %v9524 = vadd.f32 %v8985, %v9338
        %v9525 = vadd.f32 %v8990, %v9343
        %v9526 = vadd.f32 %v8993, %v9346
        %v9527 = vadd.f32 %v8998, %v9351
        %v9528 = vadd.f32 %v9001, %v9354
        %v9529 = vadd.f32 %v9006, %v9359
        %v9530 = vadd.f32 %v9009, %v9362
        %v9531 = vadd.f32 %v9014, %v9367
        %v9532 = vadd.f32 %v9017, %v9370
        %v9533 = vadd.f32 %v9022, %v9375
        %v9534 = vadd.f32 %v9025, %v9378
        %v9535 = vadd.f32 %v9030, %v9383
        %v9536 = vadd.f32 %v9033, %v9386
        %v9537 = vadd.f32 %v9038, %v9391
        %v9538 = vadd.f32 %v9041, %v9394
        %v9539 = vadd.f32 %v9046, %v9399
        %v9540 = vadd.f32 %v9049, %v9402
        %v9541 = vadd.f32 %v9054, %v9407
        %v9542 = vadd.f32 %v9057, %v9410
        %v9543 = vadd.f32 %v9062, %v9415
        %v9544 = vadd.f32 %v9065, %v9418
        %v9545 = vadd.f32 %v9070, %v9423
        %v9546 = vadd.f32 %v9073, %v9426
        %v9547 = vadd.f32 %v9078, %v9431
        %v9548 = vadd.f32 %v9081, %v9434
        %v9549 = vadd.f32 %v9086, %v9439
        %v9550 = vadd.f32 %v9089, %v9442
        %v9551 = vadd.f32 %v9094, %v9447
        %v9552 = vadd.f32 %v9097, %v9450
        %v9553 = vadd.f32 %v9102, %v9455
        %v9554 = vadd.f32 %v9105, %v9458
        %v9555 = vadd.f32 %v9110, %v9463
        %v9556 = vadd.f32 %v9113, %v9466
        %v9557 = vadd.f32 %v9118, %v9471
        %v9558 = vadd.f32 %v9121, %v9474
        %v9559 = vadd.f32 %v9126, %v9479
        %v9560 = vadd.f32 %v9129, %v9482
        %v9561 = vadd.f32 %v9134, %v9487
        %v9562 = vadd.f32 %v9137, %v9490
        %v9563 = vadd.f32 %v9142, %v9495
        %v9564 = vadd.f32 %v9145, %v9498
        %v9565 = vmax.f32 %v9501, 0.0
        %v9566 = vmax.f32 %v9502, 0.0
        %v9567 = vmax.f32 %v9503, 0.0
        %v9568 = vmax.f32 %v9504, 0.0
        %v9569 = vmax.f32 %v9505, 0.0
        %v9570 = vmax.f32 %v9506, 0.0
        %v9571 = vmax.f32 %v9507, 0.0
        %v9572 = vmax.f32 %v9508, 0.0
        %v9573 = vmax.f32 %v9509, 0.0
        %v9574 = vmax.f32 %v9510, 0.0
        %v9575 = vmax.f32 %v9511, 0.0
        %v9576 = vmax.f32 %v9512, 0.0
        %v9577 = vmax.f32 %v9513, 0.0
        %v9578 = vmax.f32 %v9514, 0.0
        %v9579 = vmax.f32 %v9515, 0.0
        %v9580 = vmax.f32 %v9516, 0.0
        %v9581 = vmax.f32 %v9517, 0.0
        %v9582 = vmax.f32 %v9518, 0.0
        %v9583 = vmax.f32 %v9519, 0.0
        %v9584 = vmax.f32 %v9520, 0.0
        %v9585 = vmax.f32 %v9521, 0.0
        %v9586 = vmax.f32 %v9522, 0.0
        %v9587 = vmax.f32 %v9523, 0.0
        %v9588 = vmax.f32 %v9524, 0.0
        %v9589 = vmax.f32 %v9525, 0.0
        %v9590 = vmax.f32 %v9526, 0.0
        %v9591 = vmax.f32 %v9527, 0.0
        %v9592 = vmax.f32 %v9528, 0.0
        %v9593 = vmax.f32 %v9529, 0.0
        %v9594 = vmax.f32 %v9530, 0.0
        %v9595 = vmax.f32 %v9531, 0.0
        %v9596 = vmax.f32 %v9532, 0.0
        %v9597 = vmax.f32 %v9533, 0.0
        %v9598 = vmax.f32 %v9534, 0.0
        %v9599 = vmax.f32 %v9535, 0.0
        %v9600 = vmax.f32 %v9536, 0.0
        %v9601 = vmax.f32 %v9537, 0.0
        %v9602 = vmax.f32 %v9538, 0.0
        %v9603 = vmax.f32 %v9539, 0.0
        %v9604 = vmax.f32 %v9540, 0.0
        %v9605 = vmax.f32 %v9541, 0.0
        %v9606 = vmax.f32 %v9542, 0.0
        %v9607 = vmax.f32 %v9543, 0.0
        %v9608 = vmax.f32 %v9544, 0.0
        %v9609 = vmax.f32 %v9545, 0.0
        %v9610 = vmax.f32 %v9546, 0.0
        %v9611 = vmax.f32 %v9547, 0.0
        %v9612 = vmax.f32 %v9548, 0.0
        %v9613 = vmax.f32 %v9549, 0.0
        %v9614 = vmax.f32 %v9550, 0.0
        %v9615 = vmax.f32 %v9551, 0.0
        %v9616 = vmax.f32 %v9552, 0.0
        %v9617 = vmax.f32 %v9553, 0.0
        %v9618 = vmax.f32 %v9554, 0.0
        %v9619 = vmax.f32 %v9555, 0.0
        %v9620 = vmax.f32 %v9556, 0.0
        %v9621 = vmax.f32 %v9557, 0.0
        %v9622 = vmax.f32 %v9558, 0.0
        %v9623 = vmax.f32 %v9559, 0.0
        %v9624 = vmax.f32 %v9560, 0.0
        %v9625 = vmax.f32 %v9561, 0.0
        %v9626 = vmax.f32 %v9562, 0.0
        %v9627 = vmax.f32 %v9563, 0.0
        %v9628 = vmax.f32 %v9564, 0.0
        %v9629 = vpack.c.bf16 %v9566, %v9565
        %v9630 = vpack.c.bf16 %v9568, %v9567
        %v9631 = vpack.c.bf16 %v9570, %v9569
        %v9632 = vpack.c.bf16 %v9572, %v9571
        %v9633 = vpack.c.bf16 %v9574, %v9573
        %v9634 = vpack.c.bf16 %v9576, %v9575
        %v9635 = vpack.c.bf16 %v9578, %v9577
        %v9636 = vpack.c.bf16 %v9580, %v9579
        %v9637 = vpack.c.bf16 %v9582, %v9581
        %v9638 = vpack.c.bf16 %v9584, %v9583
        %v9639 = vpack.c.bf16 %v9586, %v9585
        %v9640 = vpack.c.bf16 %v9588, %v9587
        %v9641 = vpack.c.bf16 %v9590, %v9589
        %v9642 = vpack.c.bf16 %v9592, %v9591
        %v9643 = vpack.c.bf16 %v9594, %v9593
        %v9644 = vpack.c.bf16 %v9596, %v9595
        %v9645 = vpack.c.bf16 %v9598, %v9597
        %v9646 = vpack.c.bf16 %v9600, %v9599
        %v9647 = vpack.c.bf16 %v9602, %v9601
        %v9648 = vpack.c.bf16 %v9604, %v9603
        %v9649 = vpack.c.bf16 %v9606, %v9605
        %v9650 = vpack.c.bf16 %v9608, %v9607
        %v9651 = vpack.c.bf16 %v9610, %v9609
        %v9652 = vpack.c.bf16 %v9612, %v9611
        %v9653 = vpack.c.bf16 %v9614, %v9613
        %v9654 = vpack.c.bf16 %v9616, %v9615
        %v9655 = vpack.c.bf16 %v9618, %v9617
        %v9656 = vpack.c.bf16 %v9620, %v9619
        %v9657 = vpack.c.bf16 %v9622, %v9621
        %v9658 = vpack.c.bf16 %v9624, %v9623
        %v9659 = vpack.c.bf16 %v9626, %v9625
        %v9660 = vpack.c.bf16 %v9628, %v9627
        %v9661 = vld [vmem:[#allocation38] sm:$0xf]
        %v9662 = vld [vmem:[#allocation38 + $0x4] sm:$0xf]
        %v9663 = vld [vmem:[#allocation38 + $0x8] sm:$0xf]
        %v9664 = vld [vmem:[#allocation38 + $0xc] sm:$0xf]
        %v9665 = vld [vmem:[#allocation38 + $0x10] sm:$0xf]
        %v9666 = vld [vmem:[#allocation38 + $0x14] sm:$0xf]
        %v9667 = vld [vmem:[#allocation38 + $0x18] sm:$0xf]
        %v9668 = vld [vmem:[#allocation38 + $0x1c] sm:$0xf]
        %v9669 = vld [vmem:[#allocation38 + $0x20] sm:$0xf]
        %v9670 = vld [vmem:[#allocation38 + $0x24] sm:$0xf]
        %v9671 = vld [vmem:[#allocation38 + $0x28] sm:$0xf]
        %v9672 = vld [vmem:[#allocation38 + $0x2c] sm:$0xf]
        %v9673 = vld [vmem:[#allocation38 + $0x30] sm:$0xf]
        %v9674 = vld [vmem:[#allocation38 + $0x34] sm:$0xf]
        %v9675 = vld [vmem:[#allocation38 + $0x38] sm:$0xf]
        %v9676 = vld [vmem:[#allocation38 + $0x3c] sm:$0xf]
        %v9677 = vld [vmem:[#allocation40] sm:$0x1]
        %v9679 = vlaneseq
        %v9680 = vshrl.u32 %v9679, 7
        %v9681 = vsub.s32 0, %v9680
        %v9682 = vrot.slane %v9677, %v9681
        %v9700 = vunpack.c.l.b16 %v9661
        %v9701 = vunpack.c.l.b16 %v9662
        %v9702 = vunpack.c.l.b16 %v9663
        %v9703 = vunpack.c.l.b16 %v9664
        %v9704 = vunpack.c.l.b16 %v9665
        %v9705 = vunpack.c.l.b16 %v9666
        %v9706 = vunpack.c.l.b16 %v9667
        %v9707 = vunpack.c.l.b16 %v9668
        %v9708 = vunpack.c.l.b16 %v9669
        %v9709 = vunpack.c.l.b16 %v9670
        %v9710 = vunpack.c.l.b16 %v9671
        %v9711 = vunpack.c.l.b16 %v9672
        %v9712 = vunpack.c.l.b16 %v9673
        %v9713 = vunpack.c.l.b16 %v9674
        %v9714 = vunpack.c.l.b16 %v9675
        %v9715 = vunpack.c.l.b16 %v9676
        %v9716 = vpack.c.b16 %v9701, %v9700
        %v9717 = vpack.c.b16 %v9703, %v9702
        %v9718 = vpack.c.b16 %v9705, %v9704
        %v9719 = vpack.c.b16 %v9707, %v9706
        %v9720 = vpack.c.b16 %v9709, %v9708
        %v9721 = vpack.c.b16 %v9711, %v9710
        %v9722 = vpack.c.b16 %v9713, %v9712
        %v9723 = vpack.c.b16 %v9715, %v9714
        %9732 = vmatprep.subr.bf16.mxu0 0
        %9733 = vmatpush1.bf16.msra.mxu0 %v9716
        %9734 = vmatprep.subr.bf16.mxu0 0
        %9735 = vmatpush1.bf16.msra.mxu0 %v9717
        %9736 = vmatprep.subr.bf16.mxu0 0
        %9737 = vmatpush1.bf16.msra.mxu0 %v9718
        %9738 = vmatprep.subr.bf16.mxu0 0
        %9739 = vmatpush1.bf16.msra.mxu0 %v9719
        %9740 = vmatprep.subr.bf16.mxu0 0
        %9741 = vmatpush1.bf16.msra.mxu0 %v9720
        %9742 = vmatprep.subr.bf16.mxu0 0
        %9743 = vmatpush1.bf16.msra.mxu0 %v9721
        %9744 = vmatprep.subr.bf16.mxu0 0
        %9745 = vmatpush1.bf16.msra.mxu0 %v9722
        %9746 = vmatprep.subr.bf16.mxu0 0
        %9747 = vmatpush1.bf16.msra.mxu0 %v9723
        %9748 = vmatprep.subr.bf16.mxu0 0
        %9749 = vmatpush1.bf16.msra.mxu0 0
        %9750 = vmatprep.subr.bf16.mxu0 0
        %9751 = vmatpush1.bf16.msra.mxu0 0
        %9752 = vmatprep.subr.bf16.mxu0 0
        %9753 = vmatpush1.bf16.msra.mxu0 0
        %9754 = vmatprep.subr.bf16.mxu0 0
        %9755 = vmatpush1.bf16.msra.mxu0 0
        %9756 = vmatprep.subr.bf16.mxu0 0
        %9757 = vmatpush1.bf16.msra.mxu0 0
        %9758 = vmatprep.subr.bf16.mxu0 0
        %9759 = vmatpush1.bf16.msra.mxu0 0
        %9760 = vmatprep.subr.bf16.mxu0 0
        %9761 = vmatpush1.bf16.msra.mxu0 0
        %9762 = vmatprep.subr.bf16.mxu0 0
        %9763 = vmatpush1.bf16.msra.mxu0 0
        %9764 = vmatprep.mubr.bf16.mxu0 0
        %9765 = vmatmul.mubr.bf16.gmra.mrb[0].mxu0 %v9629
        %v9766 = vpop.f32.mrb[0].mxu0
        %v9767 = vadd.f32 %v9682, %v9766
        %v9768 = vpop.f32.mrb[0].mxu0
        %v9769 = vpop.f32.mrb[0].mxu0
        %v9770 = vadd.f32 %v9682, %v9769
        %v9771 = vpop.f32.mrb[0].mxu0
        %9772 = vmatprep.mubr.bf16.mxu0 0
        %9773 = vmatmul.mubr.bf16.gmra.mrb[0].mxu0 %v9630
        %v9774 = vpop.f32.mrb[0].mxu0
        %v9775 = vadd.f32 %v9682, %v9774
        %v9776 = vpop.f32.mrb[0].mxu0
        %v9777 = vpop.f32.mrb[0].mxu0
        %v9778 = vadd.f32 %v9682, %v9777
        %v9779 = vpop.f32.mrb[0].mxu0
        %9780 = vmatprep.mubr.bf16.mxu0 0
        %9781 = vmatmul.mubr.bf16.gmra.mrb[0].mxu0 %v9631
        %v9782 = vpop.f32.mrb[0].mxu0
        %v9783 = vadd.f32 %v9682, %v9782
        %v9784 = vpop.f32.mrb[0].mxu0
        %v9785 = vpop.f32.mrb[0].mxu0
        %v9786 = vadd.f32 %v9682, %v9785
        %v9787 = vpop.f32.mrb[0].mxu0
        %9788 = vmatprep.mubr.bf16.mxu0 0
        %9789 = vmatmul.mubr.bf16.gmra.mrb[0].mxu0 %v9632
        %v9790 = vpop.f32.mrb[0].mxu0
        %v9791 = vadd.f32 %v9682, %v9790
        %v9792 = vpop.f32.mrb[0].mxu0
        %v9793 = vpop.f32.mrb[0].mxu0
        %v9794 = vadd.f32 %v9682, %v9793
        %v9795 = vpop.f32.mrb[0].mxu0
        %9796 = vmatprep.mubr.bf16.mxu0 0
        %9797 = vmatmul.mubr.bf16.gmra.mrb[0].mxu0 %v9633
        %v9798 = vpop.f32.mrb[0].mxu0
        %v9799 = vadd.f32 %v9682, %v9798
        %v9800 = vpop.f32.mrb[0].mxu0
        %v9801 = vpop.f32.mrb[0].mxu0
        %v9802 = vadd.f32 %v9682, %v9801
        %v9803 = vpop.f32.mrb[0].mxu0
        %9804 = vmatprep.mubr.bf16.mxu0 0
        %9805 = vmatmul.mubr.bf16.gmra.mrb[0].mxu0 %v9634
        %v9806 = vpop.f32.mrb[0].mxu0
        %v9807 = vadd.f32 %v9682, %v9806
        %v9808 = vpop.f32.mrb[0].mxu0
        %v9809 = vpop.f32.mrb[0].mxu0
        %v9810 = vadd.f32 %v9682, %v9809
        %v9811 = vpop.f32.mrb[0].mxu0
        %9812 = vmatprep.mubr.bf16.mxu0 0
        %9813 = vmatmul.mubr.bf16.gmra.mrb[0].mxu0 %v9635
        %v9814 = vpop.f32.mrb[0].mxu0
        %v9815 = vadd.f32 %v9682, %v9814
        %v9816 = vpop.f32.mrb[0].mxu0
        %v9817 = vpop.f32.mrb[0].mxu0
        %v9818 = vadd.f32 %v9682, %v9817
        %v9819 = vpop.f32.mrb[0].mxu0
        %9820 = vmatprep.mubr.bf16.mxu0 0
        %9821 = vmatmul.mubr.bf16.gmra.mrb[0].mxu0 %v9636
        %v9822 = vpop.f32.mrb[0].mxu0
        %v9823 = vadd.f32 %v9682, %v9822
        %v9824 = vpop.f32.mrb[0].mxu0
        %v9825 = vpop.f32.mrb[0].mxu0
        %v9826 = vadd.f32 %v9682, %v9825
        %v9827 = vpop.f32.mrb[0].mxu0
        %9828 = vmatprep.mubr.bf16.mxu0 0
        %9829 = vmatmul.mubr.bf16.gmra.mrb[0].mxu0 %v9637
        %v9830 = vpop.f32.mrb[0].mxu0
        %v9831 = vadd.f32 %v9682, %v9830
        %v9832 = vpop.f32.mrb[0].mxu0
        %v9833 = vpop.f32.mrb[0].mxu0
        %v9834 = vadd.f32 %v9682, %v9833
        %v9835 = vpop.f32.mrb[0].mxu0
        %9836 = vmatprep.mubr.bf16.mxu0 0
        %9837 = vmatmul.mubr.bf16.gmra.mrb[0].mxu0 %v9638
        %v9838 = vpop.f32.mrb[0].mxu0
        %v9839 = vadd.f32 %v9682, %v9838
        %v9840 = vpop.f32.mrb[0].mxu0
        %v9841 = vpop.f32.mrb[0].mxu0
        %v9842 = vadd.f32 %v9682, %v9841
        %v9843 = vpop.f32.mrb[0].mxu0
        %9844 = vmatprep.mubr.bf16.mxu0 0
        %9845 = vmatmul.mubr.bf16.gmra.mrb[0].mxu0 %v9639
        %v9846 = vpop.f32.mrb[0].mxu0
        %v9847 = vadd.f32 %v9682, %v9846
        %v9848 = vpop.f32.mrb[0].mxu0
        %v9849 = vpop.f32.mrb[0].mxu0
        %v9850 = vadd.f32 %v9682, %v9849
        %v9851 = vpop.f32.mrb[0].mxu0
        %9852 = vmatprep.mubr.bf16.mxu0 0
        %9853 = vmatmul.mubr.bf16.gmra.mrb[0].mxu0 %v9640
        %v9854 = vpop.f32.mrb[0].mxu0
        %v9855 = vadd.f32 %v9682, %v9854
        %v9856 = vpop.f32.mrb[0].mxu0
        %v9857 = vpop.f32.mrb[0].mxu0
        %v9858 = vadd.f32 %v9682, %v9857
        %v9859 = vpop.f32.mrb[0].mxu0
        %9860 = vmatprep.mubr.bf16.mxu0 0
        %9861 = vmatmul.mubr.bf16.gmra.mrb[0].mxu0 %v9641
        %v9862 = vpop.f32.mrb[0].mxu0
        %v9863 = vadd.f32 %v9682, %v9862
        %v9864 = vpop.f32.mrb[0].mxu0
        %v9865 = vpop.f32.mrb[0].mxu0
        %v9866 = vadd.f32 %v9682, %v9865
        %v9867 = vpop.f32.mrb[0].mxu0
        %9868 = vmatprep.mubr.bf16.mxu0 0
        %9869 = vmatmul.mubr.bf16.gmra.mrb[0].mxu0 %v9642
        %v9870 = vpop.f32.mrb[0].mxu0
        %v9871 = vadd.f32 %v9682, %v9870
        %v9872 = vpop.f32.mrb[0].mxu0
        %v9873 = vpop.f32.mrb[0].mxu0
        %v9874 = vadd.f32 %v9682, %v9873
        %v9875 = vpop.f32.mrb[0].mxu0
        %9876 = vmatprep.mubr.bf16.mxu0 0
        %9877 = vmatmul.mubr.bf16.gmra.mrb[0].mxu0 %v9643
        %v9878 = vpop.f32.mrb[0].mxu0
        %v9879 = vadd.f32 %v9682, %v9878
        %v9880 = vpop.f32.mrb[0].mxu0
        %v9881 = vpop.f32.mrb[0].mxu0
        %v9882 = vadd.f32 %v9682, %v9881
        %v9883 = vpop.f32.mrb[0].mxu0
        %9884 = vmatprep.mubr.bf16.mxu0 0
        %9885 = vmatmul.mubr.bf16.gmra.mrb[0].mxu0 %v9644
        %v9886 = vpop.f32.mrb[0].mxu0
        %v9887 = vadd.f32 %v9682, %v9886
        %v9888 = vpop.f32.mrb[0].mxu0
        %v9889 = vpop.f32.mrb[0].mxu0
        %v9890 = vadd.f32 %v9682, %v9889
        %v9891 = vpop.f32.mrb[0].mxu0
        %9892 = vmatprep.mubr.bf16.mxu0 0
        %9893 = vmatmul.mubr.bf16.gmra.mrb[0].mxu0 %v9645
        %v9894 = vpop.f32.mrb[0].mxu0
        %v9895 = vadd.f32 %v9682, %v9894
        %v9896 = vpop.f32.mrb[0].mxu0
        %v9897 = vpop.f32.mrb[0].mxu0
        %v9898 = vadd.f32 %v9682, %v9897
        %v9899 = vpop.f32.mrb[0].mxu0
        %9900 = vmatprep.mubr.bf16.mxu0 0
        %9901 = vmatmul.mubr.bf16.gmra.mrb[0].mxu0 %v9646
        %v9902 = vpop.f32.mrb[0].mxu0
        %v9903 = vadd.f32 %v9682, %v9902
        %v9904 = vpop.f32.mrb[0].mxu0
        %v9905 = vpop.f32.mrb[0].mxu0
        %v9906 = vadd.f32 %v9682, %v9905
        %v9907 = vpop.f32.mrb[0].mxu0
        %9908 = vmatprep.mubr.bf16.mxu0 0
        %9909 = vmatmul.mubr.bf16.gmra.mrb[0].mxu0 %v9647
        %v9910 = vpop.f32.mrb[0].mxu0
        %v9911 = vadd.f32 %v9682, %v9910
        %v9912 = vpop.f32.mrb[0].mxu0
        %v9913 = vpop.f32.mrb[0].mxu0
        %v9914 = vadd.f32 %v9682, %v9913
        %v9915 = vpop.f32.mrb[0].mxu0
        %9916 = vmatprep.mubr.bf16.mxu0 0
        %9917 = vmatmul.mubr.bf16.gmra.mrb[0].mxu0 %v9648
        %v9918 = vpop.f32.mrb[0].mxu0
        %v9919 = vadd.f32 %v9682, %v9918
        %v9920 = vpop.f32.mrb[0].mxu0
        %v9921 = vpop.f32.mrb[0].mxu0
        %v9922 = vadd.f32 %v9682, %v9921
        %v9923 = vpop.f32.mrb[0].mxu0
        %9924 = vmatprep.mubr.bf16.mxu0 0
        %9925 = vmatmul.mubr.bf16.gmra.mrb[0].mxu0 %v9649
        %v9926 = vpop.f32.mrb[0].mxu0
        %v9927 = vadd.f32 %v9682, %v9926
        %v9928 = vpop.f32.mrb[0].mxu0
        %v9929 = vpop.f32.mrb[0].mxu0
        %v9930 = vadd.f32 %v9682, %v9929
        %v9931 = vpop.f32.mrb[0].mxu0
        %9932 = vmatprep.mubr.bf16.mxu0 0
        %9933 = vmatmul.mubr.bf16.gmra.mrb[0].mxu0 %v9650
        %v9934 = vpop.f32.mrb[0].mxu0
        %v9935 = vadd.f32 %v9682, %v9934
        %v9936 = vpop.f32.mrb[0].mxu0
        %v9937 = vpop.f32.mrb[0].mxu0
        %v9938 = vadd.f32 %v9682, %v9937
        %v9939 = vpop.f32.mrb[0].mxu0
        %9940 = vmatprep.mubr.bf16.mxu0 0
        %9941 = vmatmul.mubr.bf16.gmra.mrb[0].mxu0 %v9651
        %v9942 = vpop.f32.mrb[0].mxu0
        %v9943 = vadd.f32 %v9682, %v9942
        %v9944 = vpop.f32.mrb[0].mxu0
        %v9945 = vpop.f32.mrb[0].mxu0
        %v9946 = vadd.f32 %v9682, %v9945
        %v9947 = vpop.f32.mrb[0].mxu0
        %9948 = vmatprep.mubr.bf16.mxu0 0
        %9949 = vmatmul.mubr.bf16.gmra.mrb[0].mxu0 %v9652
        %v9950 = vpop.f32.mrb[0].mxu0
        %v9951 = vadd.f32 %v9682, %v9950
        %v9952 = vpop.f32.mrb[0].mxu0
        %v9953 = vpop.f32.mrb[0].mxu0
        %v9954 = vadd.f32 %v9682, %v9953
        %v9955 = vpop.f32.mrb[0].mxu0
        %9956 = vmatprep.mubr.bf16.mxu0 0
        %9957 = vmatmul.mubr.bf16.gmra.mrb[0].mxu0 %v9653
        %v9958 = vpop.f32.mrb[0].mxu0
        %v9959 = vadd.f32 %v9682, %v9958
        %v9960 = vpop.f32.mrb[0].mxu0
        %v9961 = vpop.f32.mrb[0].mxu0
        %v9962 = vadd.f32 %v9682, %v9961
        %v9963 = vpop.f32.mrb[0].mxu0
        %9964 = vmatprep.mubr.bf16.mxu0 0
        %9965 = vmatmul.mubr.bf16.gmra.mrb[0].mxu0 %v9654
        %v9966 = vpop.f32.mrb[0].mxu0
        %v9967 = vadd.f32 %v9682, %v9966
        %v9968 = vpop.f32.mrb[0].mxu0
        %v9969 = vpop.f32.mrb[0].mxu0
        %v9970 = vadd.f32 %v9682, %v9969
        %v9971 = vpop.f32.mrb[0].mxu0
        %9972 = vmatprep.mubr.bf16.mxu0 0
        %9973 = vmatmul.mubr.bf16.gmra.mrb[0].mxu0 %v9655
        %v9974 = vpop.f32.mrb[0].mxu0
        %v9975 = vadd.f32 %v9682, %v9974
        %v9976 = vpop.f32.mrb[0].mxu0
        %v9977 = vpop.f32.mrb[0].mxu0
        %v9978 = vadd.f32 %v9682, %v9977
        %v9979 = vpop.f32.mrb[0].mxu0
        %9980 = vmatprep.mubr.bf16.mxu0 0
        %9981 = vmatmul.mubr.bf16.gmra.mrb[0].mxu0 %v9656
        %v9982 = vpop.f32.mrb[0].mxu0
        %v9983 = vadd.f32 %v9682, %v9982
        %v9984 = vpop.f32.mrb[0].mxu0
        %v9985 = vpop.f32.mrb[0].mxu0
        %v9986 = vadd.f32 %v9682, %v9985
        %v9987 = vpop.f32.mrb[0].mxu0
        %9988 = vmatprep.mubr.bf16.mxu0 0
        %9989 = vmatmul.mubr.bf16.gmra.mrb[0].mxu0 %v9657
        %v9990 = vpop.f32.mrb[0].mxu0
        %v9991 = vadd.f32 %v9682, %v9990
        %v9992 = vpop.f32.mrb[0].mxu0
        %v9993 = vpop.f32.mrb[0].mxu0
        %v9994 = vadd.f32 %v9682, %v9993
        %v9995 = vpop.f32.mrb[0].mxu0
        %9996 = vmatprep.mubr.bf16.mxu0 0
        %9997 = vmatmul.mubr.bf16.gmra.mrb[0].mxu0 %v9658
        %v9998 = vpop.f32.mrb[0].mxu0
        %v9999 = vadd.f32 %v9682, %v9998
        %v10000 = vpop.f32.mrb[0].mxu0
        %v10001 = vpop.f32.mrb[0].mxu0
        %v10002 = vadd.f32 %v9682, %v10001
        %v10003 = vpop.f32.mrb[0].mxu0
        %10004 = vmatprep.mubr.bf16.mxu0 0
        %10005 = vmatmul.mubr.bf16.gmra.mrb[0].mxu0 %v9659
        %v10006 = vpop.f32.mrb[0].mxu0
        %v10007 = vadd.f32 %v9682, %v10006
        %v10008 = vpop.f32.mrb[0].mxu0
        %v10009 = vpop.f32.mrb[0].mxu0
        %v10010 = vadd.f32 %v9682, %v10009
        %v10011 = vpop.f32.mrb[0].mxu0
        %10012 = vmatprep.mubr.bf16.mxu0 0
        %10013 = vmatmul.mubr.bf16.gmra.mrb[0].mxu0 %v9660
        %v10014 = vpop.f32.mrb[0].mxu0
        %v10015 = vadd.f32 %v9682, %v10014
        %v10016 = vpop.f32.mrb[0].mxu0
        %v10017 = vpop.f32.mrb[0].mxu0
        %v10018 = vadd.f32 %v9682, %v10017
        %v10019 = vpop.f32.mrb[0].mxu0
        %10020 = vdwg.mxu0
        %v10021 = vxor.u32 %v9767, 2147483648
        %v10022 = vxor.u32 %v9770, 2147483648
        %v10023 = vxor.u32 %v9775, 2147483648
        %v10024 = vxor.u32 %v9778, 2147483648
        %v10025 = vxor.u32 %v9783, 2147483648
        %v10026 = vxor.u32 %v9786, 2147483648
        %v10027 = vxor.u32 %v9791, 2147483648
        %v10028 = vxor.u32 %v9794, 2147483648
        %v10029 = vxor.u32 %v9799, 2147483648
        %v10030 = vxor.u32 %v9802, 2147483648
        %v10031 = vxor.u32 %v9807, 2147483648
        %v10032 = vxor.u32 %v9810, 2147483648
        %v10033 = vxor.u32 %v9815, 2147483648
        %v10034 = vxor.u32 %v9818, 2147483648
        %v10035 = vxor.u32 %v9823, 2147483648
        %v10036 = vxor.u32 %v9826, 2147483648
        %v10037 = vxor.u32 %v9831, 2147483648
        %v10038 = vxor.u32 %v9834, 2147483648
        %v10039 = vxor.u32 %v9839, 2147483648
        %v10040 = vxor.u32 %v9842, 2147483648
        %v10041 = vxor.u32 %v9847, 2147483648
        %v10042 = vxor.u32 %v9850, 2147483648
        %v10043 = vxor.u32 %v9855, 2147483648
        %v10044 = vxor.u32 %v9858, 2147483648
        %v10045 = vxor.u32 %v9863, 2147483648
        %v10046 = vxor.u32 %v9866, 2147483648
        %v10047 = vxor.u32 %v9871, 2147483648
        %v10048 = vxor.u32 %v9874, 2147483648
        %v10049 = vxor.u32 %v9879, 2147483648
        %v10050 = vxor.u32 %v9882, 2147483648
        %v10051 = vxor.u32 %v9887, 2147483648
        %v10052 = vxor.u32 %v9890, 2147483648
        %v10053 = vxor.u32 %v9895, 2147483648
        %v10054 = vxor.u32 %v9898, 2147483648
        %v10055 = vxor.u32 %v9903, 2147483648
        %v10056 = vxor.u32 %v9906, 2147483648
        %v10057 = vxor.u32 %v9911, 2147483648
        %v10058 = vxor.u32 %v9914, 2147483648
        %v10059 = vxor.u32 %v9919, 2147483648
        %v10060 = vxor.u32 %v9922, 2147483648
        %v10061 = vxor.u32 %v9927, 2147483648
        %v10062 = vxor.u32 %v9930, 2147483648
        %v10063 = vxor.u32 %v9935, 2147483648
        %v10064 = vxor.u32 %v9938, 2147483648
        %v10065 = vxor.u32 %v9943, 2147483648
        %v10066 = vxor.u32 %v9946, 2147483648
        %v10067 = vxor.u32 %v9951, 2147483648
        %v10068 = vxor.u32 %v9954, 2147483648
        %v10069 = vxor.u32 %v9959, 2147483648
        %v10070 = vxor.u32 %v9962, 2147483648
        %v10071 = vxor.u32 %v9967, 2147483648
        %v10072 = vxor.u32 %v9970, 2147483648
        %v10073 = vxor.u32 %v9975, 2147483648
        %v10074 = vxor.u32 %v9978, 2147483648
        %v10075 = vxor.u32 %v9983, 2147483648
        %v10076 = vxor.u32 %v9986, 2147483648
        %v10077 = vxor.u32 %v9991, 2147483648
        %v10078 = vxor.u32 %v9994, 2147483648
        %v10079 = vxor.u32 %v9999, 2147483648
        %v10080 = vxor.u32 %v10002, 2147483648
        %v10081 = vxor.u32 %v10007, 2147483648
        %v10082 = vxor.u32 %v10010, 2147483648
        %v10083 = vxor.u32 %v10015, 2147483648
        %v10084 = vxor.u32 %v10018, 2147483648
        %v10085 = vmul.f32 %v10021, 1.442695
        %v10086 = vpow.pop %v10085
        %v10087 = vmul.f32 %v10022, 1.442695
        %v10088 = vpow.pop %v10087
        %v10089 = vmul.f32 %v10023, 1.442695
        %v10090 = vpow.pop %v10089
        %v10091 = vmul.f32 %v10024, 1.442695
        %v10092 = vpow.pop %v10091
        %v10093 = vmul.f32 %v10025, 1.442695
        %v10094 = vpow.pop %v10093
        %v10095 = vmul.f32 %v10026, 1.442695
        %v10096 = vpow.pop %v10095
        %v10097 = vmul.f32 %v10027, 1.442695
        %v10098 = vpow.pop %v10097
        %v10099 = vmul.f32 %v10028, 1.442695
        %v10100 = vpow.pop %v10099
        %v10101 = vmul.f32 %v10029, 1.442695
        %v10102 = vpow.pop %v10101
        %v10103 = vmul.f32 %v10030, 1.442695
        %v10104 = vpow.pop %v10103
        %v10105 = vmul.f32 %v10031, 1.442695
        %v10106 = vpow.pop %v10105
        %v10107 = vmul.f32 %v10032, 1.442695
        %v10108 = vpow.pop %v10107
        %v10109 = vmul.f32 %v10033, 1.442695
        %v10110 = vpow.pop %v10109
        %v10111 = vmul.f32 %v10034, 1.442695
        %v10112 = vpow.pop %v10111
        %v10113 = vmul.f32 %v10035, 1.442695
        %v10114 = vpow.pop %v10113
        %v10115 = vmul.f32 %v10036, 1.442695
        %v10116 = vpow.pop %v10115
        %v10117 = vmul.f32 %v10037, 1.442695
        %v10118 = vpow.pop %v10117
        %v10119 = vmul.f32 %v10038, 1.442695
        %v10120 = vpow.pop %v10119
        %v10121 = vmul.f32 %v10039, 1.442695
        %v10122 = vpow.pop %v10121
        %v10123 = vmul.f32 %v10040, 1.442695
        %v10124 = vpow.pop %v10123
        %v10125 = vmul.f32 %v10041, 1.442695
        %v10126 = vpow.pop %v10125
        %v10127 = vmul.f32 %v10042, 1.442695
        %v10128 = vpow.pop %v10127
        %v10129 = vmul.f32 %v10043, 1.442695
        %v10130 = vpow.pop %v10129
        %v10131 = vmul.f32 %v10044, 1.442695
        %v10132 = vpow.pop %v10131
        %v10133 = vmul.f32 %v10045, 1.442695
        %v10134 = vpow.pop %v10133
        %v10135 = vmul.f32 %v10046, 1.442695
        %v10136 = vpow.pop %v10135
        %v10137 = vmul.f32 %v10047, 1.442695
        %v10138 = vpow.pop %v10137
        %v10139 = vmul.f32 %v10048, 1.442695
        %v10140 = vpow.pop %v10139
        %v10141 = vmul.f32 %v10049, 1.442695
        %v10142 = vpow.pop %v10141
        %v10143 = vmul.f32 %v10050, 1.442695
        %v10144 = vpow.pop %v10143
        %v10145 = vmul.f32 %v10051, 1.442695
        %v10146 = vpow.pop %v10145
        %v10147 = vmul.f32 %v10052, 1.442695
        %v10148 = vpow.pop %v10147
        %v10149 = vmul.f32 %v10053, 1.442695
        %v10150 = vpow.pop %v10149
        %v10151 = vmul.f32 %v10054, 1.442695
        %v10152 = vpow.pop %v10151
        %v10153 = vmul.f32 %v10055, 1.442695
        %v10154 = vpow.pop %v10153
        %v10155 = vmul.f32 %v10056, 1.442695
        %v10156 = vpow.pop %v10155
        %v10157 = vmul.f32 %v10057, 1.442695
        %v10158 = vpow.pop %v10157
        %v10159 = vmul.f32 %v10058, 1.442695
        %v10160 = vpow.pop %v10159
        %v10161 = vmul.f32 %v10059, 1.442695
        %v10162 = vpow.pop %v10161
        %v10163 = vmul.f32 %v10060, 1.442695
        %v10164 = vpow.pop %v10163
        %v10165 = vmul.f32 %v10061, 1.442695
        %v10166 = vpow.pop %v10165
        %v10167 = vmul.f32 %v10062, 1.442695
        %v10168 = vpow.pop %v10167
        %v10169 = vmul.f32 %v10063, 1.442695
        %v10170 = vpow.pop %v10169
        %v10171 = vmul.f32 %v10064, 1.442695
        %v10172 = vpow.pop %v10171
        %v10173 = vmul.f32 %v10065, 1.442695
        %v10174 = vpow.pop %v10173
        %v10175 = vmul.f32 %v10066, 1.442695
        %v10176 = vpow.pop %v10175
        %v10177 = vmul.f32 %v10067, 1.442695
        %v10178 = vpow.pop %v10177
        %v10179 = vmul.f32 %v10068, 1.442695
        %v10180 = vpow.pop %v10179
        %v10181 = vmul.f32 %v10069, 1.442695
        %v10182 = vpow.pop %v10181
        %v10183 = vmul.f32 %v10070, 1.442695
        %v10184 = vpow.pop %v10183
        %v10185 = vmul.f32 %v10071, 1.442695
        %v10186 = vpow.pop %v10185
        %v10187 = vmul.f32 %v10072, 1.442695
        %v10188 = vpow.pop %v10187
        %v10189 = vmul.f32 %v10073, 1.442695
        %v10190 = vpow.pop %v10189
        %v10191 = vmul.f32 %v10074, 1.442695
        %v10192 = vpow.pop %v10191
        %v10193 = vmul.f32 %v10075, 1.442695
        %v10194 = vpow.pop %v10193
        %v10195 = vmul.f32 %v10076, 1.442695
        %v10196 = vpow.pop %v10195
        %v10197 = vmul.f32 %v10077, 1.442695
        %v10198 = vpow.pop %v10197
        %v10199 = vmul.f32 %v10078, 1.442695
        %v10200 = vpow.pop %v10199
        %v10201 = vmul.f32 %v10079, 1.442695
        %v10202 = vpow.pop %v10201
        %v10203 = vmul.f32 %v10080, 1.442695
        %v10204 = vpow.pop %v10203
        %v10205 = vmul.f32 %v10081, 1.442695
        %v10206 = vpow.pop %v10205
        %v10207 = vmul.f32 %v10082, 1.442695
        %v10208 = vpow.pop %v10207
        %v10209 = vmul.f32 %v10083, 1.442695
        %v10210 = vpow.pop %v10209
        %v10211 = vmul.f32 %v10084, 1.442695
        %v10212 = vpow.pop %v10211
        %v10213 = vadd.f32 %v10086, 1.0
        %v10214 = vadd.f32 %v10088, 1.0
        %v10215 = vadd.f32 %v10090, 1.0
        %v10216 = vadd.f32 %v10092, 1.0
        %v10217 = vadd.f32 %v10094, 1.0
        %v10218 = vadd.f32 %v10096, 1.0
        %v10219 = vadd.f32 %v10098, 1.0
        %v10220 = vadd.f32 %v10100, 1.0
        %v10221 = vadd.f32 %v10102, 1.0
        %v10222 = vadd.f32 %v10104, 1.0
        %v10223 = vadd.f32 %v10106, 1.0
        %v10224 = vadd.f32 %v10108, 1.0
        %v10225 = vadd.f32 %v10110, 1.0
        %v10226 = vadd.f32 %v10112, 1.0
        %v10227 = vadd.f32 %v10114, 1.0
        %v10228 = vadd.f32 %v10116, 1.0
        %v10229 = vadd.f32 %v10118, 1.0
        %v10230 = vadd.f32 %v10120, 1.0
        %v10231 = vadd.f32 %v10122, 1.0
        %v10232 = vadd.f32 %v10124, 1.0
        %v10233 = vadd.f32 %v10126, 1.0
        %v10234 = vadd.f32 %v10128, 1.0
        %v10235 = vadd.f32 %v10130, 1.0
        %v10236 = vadd.f32 %v10132, 1.0
        %v10237 = vadd.f32 %v10134, 1.0
        %v10238 = vadd.f32 %v10136, 1.0
        %v10239 = vadd.f32 %v10138, 1.0
        %v10240 = vadd.f32 %v10140, 1.0
        %v10241 = vadd.f32 %v10142, 1.0
        %v10242 = vadd.f32 %v10144, 1.0
        %v10243 = vadd.f32 %v10146, 1.0
        %v10244 = vadd.f32 %v10148, 1.0
        %v10245 = vadd.f32 %v10150, 1.0
        %v10246 = vadd.f32 %v10152, 1.0
        %v10247 = vadd.f32 %v10154, 1.0
        %v10248 = vadd.f32 %v10156, 1.0
        %v10249 = vadd.f32 %v10158, 1.0
        %v10250 = vadd.f32 %v10160, 1.0
        %v10251 = vadd.f32 %v10162, 1.0
        %v10252 = vadd.f32 %v10164, 1.0
        %v10253 = vadd.f32 %v10166, 1.0
        %v10254 = vadd.f32 %v10168, 1.0
        %v10255 = vadd.f32 %v10170, 1.0
        %v10256 = vadd.f32 %v10172, 1.0
        %v10257 = vadd.f32 %v10174, 1.0
        %v10258 = vadd.f32 %v10176, 1.0
        %v10259 = vadd.f32 %v10178, 1.0
        %v10260 = vadd.f32 %v10180, 1.0
        %v10261 = vadd.f32 %v10182, 1.0
        %v10262 = vadd.f32 %v10184, 1.0
        %v10263 = vadd.f32 %v10186, 1.0
        %v10264 = vadd.f32 %v10188, 1.0
        %v10265 = vadd.f32 %v10190, 1.0
        %v10266 = vadd.f32 %v10192, 1.0
        %v10267 = vadd.f32 %v10194, 1.0
        %v10268 = vadd.f32 %v10196, 1.0
        %v10269 = vadd.f32 %v10198, 1.0
        %v10270 = vadd.f32 %v10200, 1.0
        %v10271 = vadd.f32 %v10202, 1.0
        %v10272 = vadd.f32 %v10204, 1.0
        %v10273 = vadd.f32 %v10206, 1.0
        %v10274 = vadd.f32 %v10208, 1.0
        %v10275 = vadd.f32 %v10210, 1.0
        %v10276 = vadd.f32 %v10212, 1.0
        %v10277 = vrcp.pop %v10213
        %v10278 = vmul.f32 1.0, %v10277
        %v10279 = vrcp.pop %v10214
        %v10280 = vmul.f32 1.0, %v10279
        %v10281 = vrcp.pop %v10215
        %v10282 = vmul.f32 1.0, %v10281
        %v10283 = vrcp.pop %v10216
        %v10284 = vmul.f32 1.0, %v10283
        %v10285 = vrcp.pop %v10217
        %v10286 = vmul.f32 1.0, %v10285
        %v10287 = vrcp.pop %v10218
        %v10288 = vmul.f32 1.0, %v10287
        %v10289 = vrcp.pop %v10219
        %v10290 = vmul.f32 1.0, %v10289
        %v10291 = vrcp.pop %v10220
        %v10292 = vmul.f32 1.0, %v10291
        %v10293 = vrcp.pop %v10221
        %v10294 = vmul.f32 1.0, %v10293
        %v10295 = vrcp.pop %v10222
        %v10296 = vmul.f32 1.0, %v10295
        %v10297 = vrcp.pop %v10223
        %v10298 = vmul.f32 1.0, %v10297
        %v10299 = vrcp.pop %v10224
        %v10300 = vmul.f32 1.0, %v10299
        %v10301 = vrcp.pop %v10225
        %v10302 = vmul.f32 1.0, %v10301
        %v10303 = vrcp.pop %v10226
        %v10304 = vmul.f32 1.0, %v10303
        %v10305 = vrcp.pop %v10227
        %v10306 = vmul.f32 1.0, %v10305
        %v10307 = vrcp.pop %v10228
        %v10308 = vmul.f32 1.0, %v10307
        %v10309 = vrcp.pop %v10229
        %v10310 = vmul.f32 1.0, %v10309
        %v10311 = vrcp.pop %v10230
        %v10312 = vmul.f32 1.0, %v10311
        %v10313 = vrcp.pop %v10231
        %v10314 = vmul.f32 1.0, %v10313
        %v10315 = vrcp.pop %v10232
        %v10316 = vmul.f32 1.0, %v10315
        %v10317 = vrcp.pop %v10233
        %v10318 = vmul.f32 1.0, %v10317
        %v10319 = vrcp.pop %v10234
        %v10320 = vmul.f32 1.0, %v10319
        %v10321 = vrcp.pop %v10235
        %v10322 = vmul.f32 1.0, %v10321
        %v10323 = vrcp.pop %v10236
        %v10324 = vmul.f32 1.0, %v10323
        %v10325 = vrcp.pop %v10237
        %v10326 = vmul.f32 1.0, %v10325
        %v10327 = vrcp.pop %v10238
        %v10328 = vmul.f32 1.0, %v10327
        %v10329 = vrcp.pop %v10239
        %v10330 = vmul.f32 1.0, %v10329
        %v10331 = vrcp.pop %v10240
        %v10332 = vmul.f32 1.0, %v10331
        %v10333 = vrcp.pop %v10241
        %v10334 = vmul.f32 1.0, %v10333
        %v10335 = vrcp.pop %v10242
        %v10336 = vmul.f32 1.0, %v10335
        %v10337 = vrcp.pop %v10243
        %v10338 = vmul.f32 1.0, %v10337
        %v10339 = vrcp.pop %v10244
        %v10340 = vmul.f32 1.0, %v10339
        %v10341 = vrcp.pop %v10245
        %v10342 = vmul.f32 1.0, %v10341
        %v10343 = vrcp.pop %v10246
        %v10344 = vmul.f32 1.0, %v10343
        %v10345 = vrcp.pop %v10247
        %v10346 = vmul.f32 1.0, %v10345
        %v10347 = vrcp.pop %v10248
        %v10348 = vmul.f32 1.0, %v10347
        %v10349 = vrcp.pop %v10249
        %v10350 = vmul.f32 1.0, %v10349
        %v10351 = vrcp.pop %v10250
        %v10352 = vmul.f32 1.0, %v10351
        %v10353 = vrcp.pop %v10251
        %v10354 = vmul.f32 1.0, %v10353
        %v10355 = vrcp.pop %v10252
        %v10356 = vmul.f32 1.0, %v10355
        %v10357 = vrcp.pop %v10253
        %v10358 = vmul.f32 1.0, %v10357
        %v10359 = vrcp.pop %v10254
        %v10360 = vmul.f32 1.0, %v10359
        %v10361 = vrcp.pop %v10255
        %v10362 = vmul.f32 1.0, %v10361
        %v10363 = vrcp.pop %v10256
        %v10364 = vmul.f32 1.0, %v10363
        %v10365 = vrcp.pop %v10257
        %v10366 = vmul.f32 1.0, %v10365
        %v10367 = vrcp.pop %v10258
        %v10368 = vmul.f32 1.0, %v10367
        %v10369 = vrcp.pop %v10259
        %v10370 = vmul.f32 1.0, %v10369
        %v10371 = vrcp.pop %v10260
        %v10372 = vmul.f32 1.0, %v10371
        %v10373 = vrcp.pop %v10261
        %v10374 = vmul.f32 1.0, %v10373
        %v10375 = vrcp.pop %v10262
        %v10376 = vmul.f32 1.0, %v10375
        %v10377 = vrcp.pop %v10263
        %v10378 = vmul.f32 1.0, %v10377
        %v10379 = vrcp.pop %v10264
        %v10380 = vmul.f32 1.0, %v10379
        %v10381 = vrcp.pop %v10265
        %v10382 = vmul.f32 1.0, %v10381
        %v10383 = vrcp.pop %v10266
        %v10384 = vmul.f32 1.0, %v10383
        %v10385 = vrcp.pop %v10267
        %v10386 = vmul.f32 1.0, %v10385
        %v10387 = vrcp.pop %v10268
        %v10388 = vmul.f32 1.0, %v10387
        %v10389 = vrcp.pop %v10269
        %v10390 = vmul.f32 1.0, %v10389
        %v10391 = vrcp.pop %v10270
        %v10392 = vmul.f32 1.0, %v10391
        %v10393 = vrcp.pop %v10271
        %v10394 = vmul.f32 1.0, %v10393
        %v10395 = vrcp.pop %v10272
        %v10396 = vmul.f32 1.0, %v10395
        %v10397 = vrcp.pop %v10273
        %v10398 = vmul.f32 1.0, %v10397
        %v10399 = vrcp.pop %v10274
        %v10400 = vmul.f32 1.0, %v10399
        %v10401 = vrcp.pop %v10275
        %v10402 = vmul.f32 1.0, %v10401
        %v10403 = vrcp.pop %v10276
        %v10404 = vmul.f32 1.0, %v10403
        %v10405 = vlaneseq
        %v10406 = vand.u32 %v10405, 127
        %vm10407 = vcmp.lt.s32.totalorder %v10406, 3
        %10409 = vset.pattern.permute.xlu0 0
        %10410 = vperm.xlu0 %10409, %v8406
        %v10411 = vpop.permute.xlu0 %10410
        %10414 = vset.pattern.permute.xlu0 0
        %10415 = vperm.xlu0 %10414, %v8409
        %v10416 = vpop.permute.xlu0 %10415
        %10419 = vset.pattern.permute.xlu0 0
        %10420 = vperm.xlu0 %10419, %v8414
        %v10421 = vpop.permute.xlu0 %10420
        %10424 = vset.pattern.permute.xlu0 0
        %10425 = vperm.xlu0 %10424, %v8417
        %v10426 = vpop.permute.xlu0 %10425
        %10429 = vset.pattern.permute.xlu0 0
        %10430 = vperm.xlu0 %10429, %v8422
        %v10431 = vpop.permute.xlu0 %10430
        %10434 = vset.pattern.permute.xlu0 0
        %10435 = vperm.xlu0 %10434, %v8425
        %v10436 = vpop.permute.xlu0 %10435
        %10439 = vset.pattern.permute.xlu0 0
        %10440 = vperm.xlu0 %10439, %v8430
        %v10441 = vpop.permute.xlu0 %10440
        %10444 = vset.pattern.permute.xlu0 0
        %10445 = vperm.xlu0 %10444, %v8433
        %v10446 = vpop.permute.xlu0 %10445
        %10449 = vset.pattern.permute.xlu0 0
        %10450 = vperm.xlu0 %10449, %v8438
        %v10451 = vpop.permute.xlu0 %10450
        %10454 = vset.pattern.permute.xlu0 0
        %10455 = vperm.xlu0 %10454, %v8441
        %v10456 = vpop.permute.xlu0 %10455
        %10459 = vset.pattern.permute.xlu0 0
        %10460 = vperm.xlu0 %10459, %v8446
        %v10461 = vpop.permute.xlu0 %10460
        %10464 = vset.pattern.permute.xlu0 0
        %10465 = vperm.xlu0 %10464, %v8449
        %v10466 = vpop.permute.xlu0 %10465
        %10469 = vset.pattern.permute.xlu0 0
        %10470 = vperm.xlu0 %10469, %v8454
        %v10471 = vpop.permute.xlu0 %10470
        %10474 = vset.pattern.permute.xlu0 0
        %10475 = vperm.xlu0 %10474, %v8457
        %v10476 = vpop.permute.xlu0 %10475
        %10479 = vset.pattern.permute.xlu0 0
        %10480 = vperm.xlu0 %10479, %v8462
        %v10481 = vpop.permute.xlu0 %10480
        %10484 = vset.pattern.permute.xlu0 0
        %10485 = vperm.xlu0 %10484, %v8465
        %v10486 = vpop.permute.xlu0 %10485
        %10489 = vset.pattern.permute.xlu0 0
        %10490 = vperm.xlu0 %10489, %v8470
        %v10491 = vpop.permute.xlu0 %10490
        %10494 = vset.pattern.permute.xlu0 0
        %10495 = vperm.xlu0 %10494, %v8473
        %v10496 = vpop.permute.xlu0 %10495
        %10499 = vset.pattern.permute.xlu0 0
        %10500 = vperm.xlu0 %10499, %v8478
        %v10501 = vpop.permute.xlu0 %10500
        %10504 = vset.pattern.permute.xlu0 0
        %10505 = vperm.xlu0 %10504, %v8481
        %v10506 = vpop.permute.xlu0 %10505
        %10509 = vset.pattern.permute.xlu0 0
        %10510 = vperm.xlu0 %10509, %v8486
        %v10511 = vpop.permute.xlu0 %10510
        %10514 = vset.pattern.permute.xlu0 0
        %10515 = vperm.xlu0 %10514, %v8489
        %v10516 = vpop.permute.xlu0 %10515
        %10519 = vset.pattern.permute.xlu0 0
        %10520 = vperm.xlu0 %10519, %v8494
        %v10521 = vpop.permute.xlu0 %10520
        %10524 = vset.pattern.permute.xlu0 0
        %10525 = vperm.xlu0 %10524, %v8497
        %v10526 = vpop.permute.xlu0 %10525
        %10529 = vset.pattern.permute.xlu0 0
        %10530 = vperm.xlu0 %10529, %v8502
        %v10531 = vpop.permute.xlu0 %10530
        %10534 = vset.pattern.permute.xlu0 0
        %10535 = vperm.xlu0 %10534, %v8505
        %v10536 = vpop.permute.xlu0 %10535
        %10539 = vset.pattern.permute.xlu0 0
        %10540 = vperm.xlu0 %10539, %v8510
        %v10541 = vpop.permute.xlu0 %10540
        %10544 = vset.pattern.permute.xlu0 0
        %10545 = vperm.xlu0 %10544, %v8513
        %v10546 = vpop.permute.xlu0 %10545
        %10549 = vset.pattern.permute.xlu0 0
        %10550 = vperm.xlu0 %10549, %v8518
        %v10551 = vpop.permute.xlu0 %10550
        %10554 = vset.pattern.permute.xlu0 0
        %10555 = vperm.xlu0 %10554, %v8521
        %v10556 = vpop.permute.xlu0 %10555
        %10559 = vset.pattern.permute.xlu0 0
        %10560 = vperm.xlu0 %10559, %v8526
        %v10561 = vpop.permute.xlu0 %10560
        %10564 = vset.pattern.permute.xlu0 0
        %10565 = vperm.xlu0 %10564, %v8529
        %v10566 = vpop.permute.xlu0 %10565
        %10569 = vset.pattern.permute.xlu0 0
        %10570 = vperm.xlu0 %10569, %v8534
        %v10571 = vpop.permute.xlu0 %10570
        %10574 = vset.pattern.permute.xlu0 0
        %10575 = vperm.xlu0 %10574, %v8537
        %v10576 = vpop.permute.xlu0 %10575
        %10579 = vset.pattern.permute.xlu0 0
        %10580 = vperm.xlu0 %10579, %v8542
        %v10581 = vpop.permute.xlu0 %10580
        %10584 = vset.pattern.permute.xlu0 0
        %10585 = vperm.xlu0 %10584, %v8545
        %v10586 = vpop.permute.xlu0 %10585
        %10589 = vset.pattern.permute.xlu0 0
        %10590 = vperm.xlu0 %10589, %v8550
        %v10591 = vpop.permute.xlu0 %10590
        %10594 = vset.pattern.permute.xlu0 0
        %10595 = vperm.xlu0 %10594, %v8553
        %v10596 = vpop.permute.xlu0 %10595
        %10599 = vset.pattern.permute.xlu0 0
        %10600 = vperm.xlu0 %10599, %v8558
        %v10601 = vpop.permute.xlu0 %10600
        %10604 = vset.pattern.permute.xlu0 0
        %10605 = vperm.xlu0 %10604, %v8561
        %v10606 = vpop.permute.xlu0 %10605
        %10609 = vset.pattern.permute.xlu0 0
        %10610 = vperm.xlu0 %10609, %v8566
        %v10611 = vpop.permute.xlu0 %10610
        %10614 = vset.pattern.permute.xlu0 0
        %10615 = vperm.xlu0 %10614, %v8569
        %v10616 = vpop.permute.xlu0 %10615
        %10619 = vset.pattern.permute.xlu0 0
        %10620 = vperm.xlu0 %10619, %v8574
        %v10621 = vpop.permute.xlu0 %10620
        %10624 = vset.pattern.permute.xlu0 0
        %10625 = vperm.xlu0 %10624, %v8577
        %v10626 = vpop.permute.xlu0 %10625
        %10629 = vset.pattern.permute.xlu0 0
        %10630 = vperm.xlu0 %10629, %v8582
        %v10631 = vpop.permute.xlu0 %10630
        %10634 = vset.pattern.permute.xlu0 0
        %10635 = vperm.xlu0 %10634, %v8585
        %v10636 = vpop.permute.xlu0 %10635
        %10639 = vset.pattern.permute.xlu0 0
        %10640 = vperm.xlu0 %10639, %v8590
        %v10641 = vpop.permute.xlu0 %10640
        %10644 = vset.pattern.permute.xlu0 0
        %10645 = vperm.xlu0 %10644, %v8593
        %v10646 = vpop.permute.xlu0 %10645
        %10649 = vset.pattern.permute.xlu0 0
        %10650 = vperm.xlu0 %10649, %v8598
        %v10651 = vpop.permute.xlu0 %10650
        %10654 = vset.pattern.permute.xlu0 0
        %10655 = vperm.xlu0 %10654, %v8601
        %v10656 = vpop.permute.xlu0 %10655
        %10659 = vset.pattern.permute.xlu0 0
        %10660 = vperm.xlu0 %10659, %v8606
        %v10661 = vpop.permute.xlu0 %10660
        %10664 = vset.pattern.permute.xlu0 0
        %10665 = vperm.xlu0 %10664, %v8609
        %v10666 = vpop.permute.xlu0 %10665
        %10669 = vset.pattern.permute.xlu0 0
        %10670 = vperm.xlu0 %10669, %v8614
        %v10671 = vpop.permute.xlu0 %10670
        %10674 = vset.pattern.permute.xlu0 0
        %10675 = vperm.xlu0 %10674, %v8617
        %v10676 = vpop.permute.xlu0 %10675
        %10679 = vset.pattern.permute.xlu0 0
        %10680 = vperm.xlu0 %10679, %v8622
        %v10681 = vpop.permute.xlu0 %10680
        %10684 = vset.pattern.permute.xlu0 0
        %10685 = vperm.xlu0 %10684, %v8625
        %v10686 = vpop.permute.xlu0 %10685
        %10689 = vset.pattern.permute.xlu0 0
        %10690 = vperm.xlu0 %10689, %v8630
        %v10691 = vpop.permute.xlu0 %10690
        %10694 = vset.pattern.permute.xlu0 0
        %10695 = vperm.xlu0 %10694, %v8633
        %v10696 = vpop.permute.xlu0 %10695
        %10699 = vset.pattern.permute.xlu0 0
        %10700 = vperm.xlu0 %10699, %v8638
        %v10701 = vpop.permute.xlu0 %10700
        %10704 = vset.pattern.permute.xlu0 0
        %10705 = vperm.xlu0 %10704, %v8641
        %v10706 = vpop.permute.xlu0 %10705
        %10709 = vset.pattern.permute.xlu0 0
        %10710 = vperm.xlu0 %10709, %v8646
        %v10711 = vpop.permute.xlu0 %10710
        %10714 = vset.pattern.permute.xlu0 0
        %10715 = vperm.xlu0 %10714, %v8649
        %v10716 = vpop.permute.xlu0 %10715
        %10719 = vset.pattern.permute.xlu0 0
        %10720 = vperm.xlu0 %10719, %v8654
        %v10721 = vpop.permute.xlu0 %10720
        %10724 = vset.pattern.permute.xlu0 0
        %10725 = vperm.xlu0 %10724, %v8657
        %v10726 = vpop.permute.xlu0 %10725
        %v10728 = vsel %vm10407, %v10278, %v10411
        %v10729 = vsel %vm10407, %v10280, %v10416
        %v10730 = vsel %vm10407, %v10282, %v10421
        %v10731 = vsel %vm10407, %v10284, %v10426
        %v10732 = vsel %vm10407, %v10286, %v10431
        %v10733 = vsel %vm10407, %v10288, %v10436
        %v10734 = vsel %vm10407, %v10290, %v10441
        %v10735 = vsel %vm10407, %v10292, %v10446
        %v10736 = vsel %vm10407, %v10294, %v10451
        %v10737 = vsel %vm10407, %v10296, %v10456
        %v10738 = vsel %vm10407, %v10298, %v10461
        %v10739 = vsel %vm10407, %v10300, %v10466
        %v10740 = vsel %vm10407, %v10302, %v10471
        %v10741 = vsel %vm10407, %v10304, %v10476
        %v10742 = vsel %vm10407, %v10306, %v10481
        %v10743 = vsel %vm10407, %v10308, %v10486
        %v10744 = vsel %vm10407, %v10310, %v10491
        %v10745 = vsel %vm10407, %v10312, %v10496
        %v10746 = vsel %vm10407, %v10314, %v10501
        %v10747 = vsel %vm10407, %v10316, %v10506
        %v10748 = vsel %vm10407, %v10318, %v10511
        %v10749 = vsel %vm10407, %v10320, %v10516
        %v10750 = vsel %vm10407, %v10322, %v10521
        %v10751 = vsel %vm10407, %v10324, %v10526
        %v10752 = vsel %vm10407, %v10326, %v10531
        %v10753 = vsel %vm10407, %v10328, %v10536
        %v10754 = vsel %vm10407, %v10330, %v10541
        %v10755 = vsel %vm10407, %v10332, %v10546
        %v10756 = vsel %vm10407, %v10334, %v10551
        %v10757 = vsel %vm10407, %v10336, %v10556
        %v10758 = vsel %vm10407, %v10338, %v10561
        %v10759 = vsel %vm10407, %v10340, %v10566
        %v10760 = vsel %vm10407, %v10342, %v10571
        %v10761 = vsel %vm10407, %v10344, %v10576
        %v10762 = vsel %vm10407, %v10346, %v10581
        %v10763 = vsel %vm10407, %v10348, %v10586
        %v10764 = vsel %vm10407, %v10350, %v10591
        %v10765 = vsel %vm10407, %v10352, %v10596
        %v10766 = vsel %vm10407, %v10354, %v10601
        %v10767 = vsel %vm10407, %v10356, %v10606
        %v10768 = vsel %vm10407, %v10358, %v10611
        %v10769 = vsel %vm10407, %v10360, %v10616
        %v10770 = vsel %vm10407, %v10362, %v10621
        %v10771 = vsel %vm10407, %v10364, %v10626
        %v10772 = vsel %vm10407, %v10366, %v10631
        %v10773 = vsel %vm10407, %v10368, %v10636
        %v10774 = vsel %vm10407, %v10370, %v10641
        %v10775 = vsel %vm10407, %v10372, %v10646
        %v10776 = vsel %vm10407, %v10374, %v10651
        %v10777 = vsel %vm10407, %v10376, %v10656
        %v10778 = vsel %vm10407, %v10378, %v10661
        %v10779 = vsel %vm10407, %v10380, %v10666
        %v10780 = vsel %vm10407, %v10382, %v10671
        %v10781 = vsel %vm10407, %v10384, %v10676
        %v10782 = vsel %vm10407, %v10386, %v10681
        %v10783 = vsel %vm10407, %v10388, %v10686
        %v10784 = vsel %vm10407, %v10390, %v10691
        %v10785 = vsel %vm10407, %v10392, %v10696
        %v10786 = vsel %vm10407, %v10394, %v10701
        %v10787 = vsel %vm10407, %v10396, %v10706
        %v10788 = vsel %vm10407, %v10398, %v10711
        %v10789 = vsel %vm10407, %v10400, %v10716
        %v10790 = vsel %vm10407, %v10402, %v10721
        %v10791 = vsel %vm10407, %v10404, %v10726
        %10792 = vst [vmem:[%s1108] sm:$0xff] %v10728
        %10793 = vst [vmem:[%s1108 + $0x8] sm:$0xff] %v10729
        %10794 = vst [vmem:[%s1108 + $0x10] sm:$0xff] %v10730
        %10795 = vst [vmem:[%s1108 + $0x18] sm:$0xff] %v10731
        %10796 = vst [vmem:[%s1108 + $0x20] sm:$0xff] %v10732
        %10797 = vst [vmem:[%s1108 + $0x28] sm:$0xff] %v10733
        %10798 = vst [vmem:[%s1108 + $0x30] sm:$0xff] %v10734
        %10799 = vst [vmem:[%s1108 + $0x38] sm:$0xff] %v10735
        %10800 = vst [vmem:[%s1108 + $0x40] sm:$0xff] %v10736
        %10801 = vst [vmem:[%s1108 + $0x48] sm:$0xff] %v10737
        %10802 = vst [vmem:[%s1108 + $0x50] sm:$0xff] %v10738
        %10803 = vst [vmem:[%s1108 + $0x58] sm:$0xff] %v10739
        %10804 = vst [vmem:[%s1108 + $0x60] sm:$0xff] %v10740
        %10805 = vst [vmem:[%s1108 + $0x68] sm:$0xff] %v10741
        %10806 = vst [vmem:[%s1108 + $0x70] sm:$0xff] %v10742
        %10807 = vst [vmem:[%s1108 + $0x78] sm:$0xff] %v10743
        %10808 = vst [vmem:[%s1108 + $0x80] sm:$0xff] %v10744
        %10809 = vst [vmem:[%s1108 + $0x88] sm:$0xff] %v10745
        %10810 = vst [vmem:[%s1108 + $0x90] sm:$0xff] %v10746
        %10811 = vst [vmem:[%s1108 + $0x98] sm:$0xff] %v10747
        %10812 = vst [vmem:[%s1108 + $0xa0] sm:$0xff] %v10748
        %10813 = vst [vmem:[%s1108 + $0xa8] sm:$0xff] %v10749
        %10814 = vst [vmem:[%s1108 + $0xb0] sm:$0xff] %v10750
        %10815 = vst [vmem:[%s1108 + $0xb8] sm:$0xff] %v10751
        %10816 = vst [vmem:[%s1108 + $0xc0] sm:$0xff] %v10752
        %10817 = vst [vmem:[%s1108 + $0xc8] sm:$0xff] %v10753
        %10818 = vst [vmem:[%s1108 + $0xd0] sm:$0xff] %v10754
        %10819 = vst [vmem:[%s1108 + $0xd8] sm:$0xff] %v10755
        %10820 = vst [vmem:[%s1108 + $0xe0] sm:$0xff] %v10756
        %10821 = vst [vmem:[%s1108 + $0xe8] sm:$0xff] %v10757
        %10822 = vst [vmem:[%s1108 + $0xf0] sm:$0xff] %v10758
        %10823 = vst [vmem:[%s1108 + $0xf8] sm:$0xff] %v10759
        %10824 = vst [vmem:[%s1108 + $0x100] sm:$0xff] %v10760
        %10825 = vst [vmem:[%s1108 + $0x108] sm:$0xff] %v10761
        %10826 = vst [vmem:[%s1108 + $0x110] sm:$0xff] %v10762
        %10827 = vst [vmem:[%s1108 + $0x118] sm:$0xff] %v10763
        %10828 = vst [vmem:[%s1108 + $0x120] sm:$0xff] %v10764
        %10829 = vst [vmem:[%s1108 + $0x128] sm:$0xff] %v10765
        %10830 = vst [vmem:[%s1108 + $0x130] sm:$0xff] %v10766
        %10831 = vst [vmem:[%s1108 + $0x138] sm:$0xff] %v10767
        %10832 = vst [vmem:[%s1108 + $0x140] sm:$0xff] %v10768
        %10833 = vst [vmem:[%s1108 + $0x148] sm:$0xff] %v10769
        %10834 = vst [vmem:[%s1108 + $0x150] sm:$0xff] %v10770
        %10835 = vst [vmem:[%s1108 + $0x158] sm:$0xff] %v10771
        %10836 = vst [vmem:[%s1108 + $0x160] sm:$0xff] %v10772
        %10837 = vst [vmem:[%s1108 + $0x168] sm:$0xff] %v10773
        %10838 = vst [vmem:[%s1108 + $0x170] sm:$0xff] %v10774
        %10839 = vst [vmem:[%s1108 + $0x178] sm:$0xff] %v10775
        %10840 = vst [vmem:[%s1108 + $0x180] sm:$0xff] %v10776
        %10841 = vst [vmem:[%s1108 + $0x188] sm:$0xff] %v10777
        %10842 = vst [vmem:[%s1108 + $0x190] sm:$0xff] %v10778
        %10843 = vst [vmem:[%s1108 + $0x198] sm:$0xff] %v10779
        %10844 = vst [vmem:[%s1108 + $0x1a0] sm:$0xff] %v10780
        %10845 = vst [vmem:[%s1108 + $0x1a8] sm:$0xff] %v10781
        %10846 = vst [vmem:[%s1108 + $0x1b0] sm:$0xff] %v10782
        %10847 = vst [vmem:[%s1108 + $0x1b8] sm:$0xff] %v10783
        %10848 = vst [vmem:[%s1108 + $0x1c0] sm:$0xff] %v10784
        %10849 = vst [vmem:[%s1108 + $0x1c8] sm:$0xff] %v10785
        %10850 = vst [vmem:[%s1108 + $0x1d0] sm:$0xff] %v10786
        %10851 = vst [vmem:[%s1108 + $0x1d8] sm:$0xff] %v10787
        %10852 = vst [vmem:[%s1108 + $0x1e0] sm:$0xff] %v10788
        %10853 = vst [vmem:[%s1108 + $0x1e8] sm:$0xff] %v10789
        %10854 = vst [vmem:[%s1108 + $0x1f0] sm:$0xff] %v10790
        %10855 = vst [vmem:[%s1108 + $0x1f8] sm:$0xff] %v10791
        %s10856 = sand.u32 %s592, 1
        %s10857 = scalar_lea.sflag [#allocation4], %s10856
        %s10858 = sand.u32 %s592, 1
        %s10859 = smul.addr %s10858, 512
        %s10860 = scalar_lea.vmem [#allocation41], %s10859
        // Predicated region
        $region221: #{nerf_forward.1} parent=119 // pred_check
          %p10861 = pneg %p602
        $region222: #{nerf_forward.1} parent=119 // pred_check_branch
          %10863 = sbr.rel (%p10861) target = $region224
        $region223: #{nerf_forward.1} parent=119 // pred_region
          %s10864 = smul.u32 64, %s54
          %s10866 = ssub.s32 8192, 8192
          %10867 = vsyncadd %s10857, %s10866
          %s10868 = smul.addr %s10864, 128
          %s10869 = scalar_lea.hbm %s25, %s10868
          %s10870 = sshll.u32 %s10860, 4
          %s10871 = int_to_ptr.vmem [resolvable:$true] %s10870
          %10876 = dma.vmem_to_hbm [thread:$0]  %s10871, 8192, %s10869, %s10857, 128, 128, 8
        $region224: #{nerf_forward.1} parent=119 // pred_fallthru
          _
      $region120: #{nerf_forward.1} parent=5 // pred_fallthru
        _
      %p10877 = scmp.le.s32.totalorder 2, %s49
      // Predicated region
      $region225: #{nerf_forward.1} parent=5 // pred_check
        %p10878 = pneg %p10877
      $region226: #{nerf_forward.1} parent=5 // pred_check_branch
        %10880 = sbr.rel (%p10878) target = $region228
      $region227: #{nerf_forward.1} parent=5 // pred_region
        %s10881 = ssub.s32 %s49, 2
        // Predicated region
        $region229: #{nerf_forward.1} parent=227 // pred_check
          %p10882 = pneg %p608
        $region230: #{nerf_forward.1} parent=227 // pred_check_branch
          %10884 = sbr.rel (%p10882) target = $region232
        $region231: #{nerf_forward.1} parent=227 // pred_region
          %s10885 = sand.u32 %s593, 1
          %s10886 = scalar_lea.sflag [#allocation4], %s10885
          %s10887 = sand.u32 %s593, 1
          %s10888 = smul.addr %s10887, 512
          %s10889 = scalar_lea.vmem [#allocation41], %s10888
          %10890 = dma.done %s10886, 8192
        $region232: #{nerf_forward.1} parent=227 // pred_fallthru
          _
      $region228: #{nerf_forward.1} parent=5 // pred_fallthru
        _
    $region6: #{nerf_forward.1} parent=1 // loop_footer
      %s53 = sadd.s32 1, %s49
    $region7: #{nerf_forward.1} parent=1 // loop_footer_branch
      %48 = sbr.rel target = $region3
    $region8: #{nerf_forward.1} parent=1 // loop_exit
      _
    %10891 = vsyncpa [#allocation3], 1
    %s10892 = scalar_lea.sflag [#allocation3], 1
    %10893 = vsyncpa %s10892, 1
    %10894 = vsyncpa [#allocation6], 1
    %10895 = vsyncpa [#allocation9], 1
    %10896 = vsyncpa [#allocation12], 1
    %10897 = vsyncpa [#allocation15], 1
    %10898 = vsyncpa [#allocation18], 1
    %10899 = vsyncpa [#allocation21], 1
    %10900 = vsyncpa [#allocation24], 1
    %10901 = vsyncpa [#allocation27], 1
    %10902 = vsyncpa [#allocation30], 1
    %10903 = vsyncpa [#allocation33], 1
    %10904 = vsyncpa [#allocation36], 1
    %10905 = vsyncpa [#allocation39], 1
    %10906 = vsyncpa [#allocation4], 1
    %s10907 = scalar_lea.sflag [#allocation4], 1
    %10908 = vsyncpa %s10907, 1

</llo_original>
